<compile_context>
chip_gen: v6e
topology: v6e:2x2x1
jax: 0.10.0
libtpu: 0.0.40
codegen_flags: <defaults>
</compile_context>

<pallas_src>
import numpy as np
import jax
import jax.numpy as jnp
from jax.experimental import pallas as pl
from jax.experimental.pallas import tpu as pltpu

EPS = 1e-5
CP = 128      # lane-padded channel count (vreg lane width)
TILE = 256    # rows per in-kernel tile (multiple of 8)


def _make_kernel(R, R_pad, rpad, Hp, Wp, H, W, n_interior, tap_shifts):
    """Fused residual-block kernel for one fixed problem size.

    R          : number of real rows of the padded activation slab = B*Hp*Wp
    R_pad      : R rounded up to a multiple of TILE
    rpad       : zero halo rows above/below the haloed slabs (multiple of 8)
    tap_shifts : static row shift of each 3x3 tap in the flattened layout
    """
    NT = R_pad // TILE
    inv_n = 1.0 / float(n_interior)
    inv_hw = 1.0 / float(Hp * Wp)
    inv_w = 1.0 / float(Wp)

    def interior_mask(row0):
        # (TILE, 1) f32 mask: 1.0 at real spatial positions of the flattened
        # (b, Hp, Wp) slab layout, 0.0 at padding / tail rows.  Float floor-div
        # with a +0.5 guard is exact for row indices up to ~2e6.
        r = row0 + jax.lax.broadcasted_iota(jnp.int32, (TILE, 1), 0)
        rf = r.astype(jnp.float32)
        img = jnp.floor((rf + 0.5) * inv_hw)
        pos = rf - img * float(Hp * Wp)
        hh = jnp.floor((pos + 0.5) * inv_w)
        ww = pos - hh * float(Wp)
        ok = ((rf < float(R))
              & (hh >= 1.0) & (hh <= float(H))
              & (ww >= 1.0) & (ww <= float(W)))
        return jnp.where(ok, 1.0, 0.0).astype(jnp.float32)

    def kernel(xin_ref, w1_ref, g1_ref, b1_ref, w2_ref, g2_ref, b2_ref,
               o_ref, y1_ref):
        # Zero only the top/bottom halo rows of the y1 scratch (aligned stores).
        y1_ref[0:rpad, :] = jnp.zeros((rpad, CP), jnp.float32)
        y1_ref[rpad + R_pad:rpad + R_pad + rpad, :] = jnp.zeros((rpad, CP),
                                                                jnp.float32)

        zstat = jnp.zeros((1, CP), jnp.float32)

        # ---- pass 1: conv1 as 9 row-shifted GEMMs per tile + BN1 stats ----
        def conv1_tile(t, carry):
            s, ss = carry
            row0 = pl.multiple_of(t * TILE, TILE)
            acc = jnp.zeros((TILE, CP), jnp.float32)
            for k, d in enumerate(tap_shifts):
                xs = xin_ref[pl.ds(rpad + row0 + d, TILE), :]
                acc = acc + jnp.dot(xs, w1_ref[k],
                                    preferred_element_type=jnp.float32)
            y1_ref[pl.ds(rpad + row0, TILE), :] = acc
            am = acc * interior_mask(row0)
            return (s + jnp.sum(am, axis=0, keepdims=True),
                    ss + jnp.sum(am * acc, axis=0, keepdims=True))

        s1, ss1 = jax.lax.fori_loop(0, NT, conv1_tile, (zstat, zstat))

        # BN1 folded into per-channel scale/shift (batch statistics).
        # TODO(synk): one-pass E[x^2]-E[x]^2 is cancellation-prone for very
        #             large activations; switch to a centered second pass if
        #             that ever matters.
        mean1 = s1 * inv_n
        var1 = ss1 * inv_n - mean1 * mean1
        scale1 = g1_ref[...] * jax.lax.rsqrt(var1 + EPS)
        shift1 = b1_ref[...] - mean1 * scale1

        # ---- pass 2: apply BN1 + ReLU + interior mask, in place ----
        # (the mask also recreates the zero spatial padding conv2 needs)
        def bn1_tile(t, carry):
            row0 = pl.multiple_of(t * TILE, TILE)
            y1 = y1_ref[pl.ds(rpad + row0, TILE), :]
            y1p = jnp.maximum(y1 * scale1 + shift1, 0.0) * interior_mask(row0)
            y1_ref[pl.ds(rpad + row0, TILE), :] = y1p
            return carry

        jax.lax.fori_loop(0, NT, bn1_tile, 0)

        # ---- pass 3: conv2 per tile (raw result staged in o_ref) + BN2 stats ----
        def conv2_tile(t, carry):
            s, ss = carry
            row0 = pl.multiple_of(t * TILE, TILE)
            acc = jnp.zeros((TILE, CP), jnp.float32)
            for k, d in enumerate(tap_shifts):
                ys = y1_ref[pl.ds(rpad + row0 + d, TILE), :]
                acc = acc + jnp.dot(ys, w2_ref[k],
                                    preferred_element_type=jnp.float32)
            o_ref[pl.ds(row0, TILE), :] = acc
            am = acc * interior_mask(row0)
            return (s + jnp.sum(am, axis=0, keepdims=True),
                    ss + jnp.sum(am * acc, axis=0, keepdims=True))

        s2, ss2 = jax.lax.fori_loop(0, NT, conv2_tile, (zstat, zstat))

        mean2 = s2 * inv_n
        var2 = ss2 * inv_n - mean2 * mean2
        scale2 = g2_ref[...] * jax.lax.rsqrt(var2 + EPS)
        shift2 = b2_ref[...] - mean2 * scale2

        # ---- pass 4: BN2 + identity shortcut + final ReLU ----
        def out_tile(t, carry):
            row0 = pl.multiple_of(t * TILE, TILE)
            z = o_ref[pl.ds(row0, TILE), :]
            xres = xin_ref[pl.ds(rpad + row0, TILE), :]
            o_ref[pl.ds(row0, TILE), :] = jnp.maximum(
                z * scale2 + shift2 + xres, 0.0)
            return carry

        jax.lax.fori_loop(0, NT, out_tile, 0)

    return kernel


def residual_block_forward(x_nchw, params):
    """NCHW (PyTorch) -> lane-dense fused Pallas kernel -> NCHW."""
    w1, g1, b1, w2, g2, b2 = params
    x = jnp.transpose(x_nchw, (0, 2, 3, 1)).astype(jnp.float32)   # NHWC
    B, H, W, Cin = x.shape
    Cout = w1.shape[-1]
    assert Cin == Cout and Cout <= CP, "identity shortcut configuration only"

    Hp, Wp = H + 2, W + 2
    R = B * Hp * Wp                       # rows of the padded activation slab
    R_pad = ((R + TILE - 1) // TILE) * TILE
    n_interior = B * H * W
    rpad = ((Wp + 1 + 7) // 8) * 8        # halo rows (>= Wp+1, multiple of 8)

    # Haloed, lane-padded input slab: [rpad zeros | padded x slab | zeros].
    x_slab = jnp.pad(x, ((0, 0), (1, 1), (1, 1), (0, CP - Cin))).reshape(R, CP)
    x_in = jnp.pad(x_slab, ((rpad, rpad + R_pad - R), (0, 0)))

    # Per-tap lane-padded weights (9, CP, CP); BN params as (1, CP) rows.
    pad_w = lambda w: jnp.pad(w.reshape(9, Cin, Cout),
                              ((0, 0), (0, CP - Cin), (0, CP - Cout)))
    w1m, w2m = pad_w(w1), pad_w(w2)
    pad_row = lambda v: jnp.pad(v.reshape(1, -1), ((0, 0), (0, CP - Cout)))
    g1r, b1r, g2r, b2r = pad_row(g1), pad_row(b1), pad_row(g2), pad_row(b2)

    # Static row shift of each 3x3 tap in the flattened (B, Hp, Wp) layout.
    tap_shifts = tuple((kh - 1) * Wp + (kw - 1)
                       for kh in range(3) for kw in range(3))

    kernel = _make_kernel(R, R_pad, rpad, Hp, Wp, H, W, n_interior, tap_shifts)
    halo_rows = rpad + R_pad + rpad

    out_slab = pl.pallas_call(
        kernel,
        out_shape=jax.ShapeDtypeStruct((R_pad, CP), jnp.float32),
        grid_spec=pltpu.PrefetchScalarGridSpec(
            num_scalar_prefetch=0,
            grid=(1,),
            in_specs=[
                pl.BlockSpec((halo_rows, CP), lambda i: (0, 0)),    # x (haloed)
                pl.BlockSpec((9, CP, CP), lambda i: (0, 0, 0)),     # w1 per tap
                pl.BlockSpec((1, CP), lambda i: (0, 0)),            # g1
                pl.BlockSpec((1, CP), lambda i: (0, 0)),            # b1
                pl.BlockSpec((9, CP, CP), lambda i: (0, 0, 0)),     # w2 per tap
                pl.BlockSpec((1, CP), lambda i: (0, 0)),            # g2
                pl.BlockSpec((1, CP), lambda i: (0, 0)),            # b2
            ],
            out_specs=pl.BlockSpec((R_pad, CP), lambda i: (0, 0)),
            scratch_shapes=[pltpu.VMEM((halo_rows, CP), jnp.float32)],  # y1
        ),
        compiler_params=pltpu.CompilerParams(
            dimension_semantics=("arbitrary",),
            vmem_limit_bytes=32 * 1024 * 1024,
        ),
    )(x_in, w1m, g1r, b1r, w2m, g2r, b2r)

    out = out_slab[:R].reshape(B, Hp, Wp, CP)[:, 1:H + 1, 1:W + 1, :Cout]
    return jnp.transpose(out, (0, 3, 1, 2))                      # back to NCHW


def init_params(key, in_feats, out_feats):
    """Deterministic synthetic parameters with the module's shapes (HWIO weights)."""
    k1, k2, k3, k4, k5, k6 = jax.random.split(key, 6)
    bound1 = (6.0 / (in_feats * 9 + out_feats * 9)) ** 0.5
    bound2 = (6.0 / (out_feats * 9 + out_feats * 9)) ** 0.5
    w1 = jax.random.uniform(k1, (3, 3, in_feats, out_feats), jnp.float32,
                            -bound1, bound1)
    w2 = jax.random.uniform(k2, (3, 3, out_feats, out_feats), jnp.float32,
                            -bound2, bound2)
    g1 = jax.random.uniform(k3, (out_feats,), jnp.float32, 0.5, 1.5)
    b1 = jax.random.uniform(k4, (out_feats,), jnp.float32, -0.5, 0.5)
    g2 = jax.random.uniform(k5, (out_feats,), jnp.float32, 0.5, 1.5)
    b2 = jax.random.uniform(k6, (out_feats,), jnp.float32, -0.5, 0.5)
    return (w1, g1, b1, w2, g2, b2)


def reference_forward(x_nchw, params):
    """Pure-JAX reference (same math, NHWC convs via lax.conv)."""
    w1, g1, b1, w2, g2, b2 = params
    x = jnp.transpose(x_nchw, (0, 2, 3, 1)).astype(jnp.float32)

    def conv(a, w):
        return jax.lax.conv_general_dilated(
            a, w, window_strides=(1, 1), padding=((1, 1), (1, 1)),
            dimension_numbers=("NHWC", "HWIO", "NHWC"))

    def bn(y, g, b):
        mean = jnp.mean(y, axis=(0, 1, 2), keepdims=True)
        var = jnp.mean((y - mean) ** 2, axis=(0, 1, 2), keepdims=True)
        return (y - mean) / jnp.sqrt(var + EPS) * g.reshape(1, 1, 1, -1) \
            + b.reshape(1, 1, 1, -1)

    y = jnp.maximum(bn(conv(x, w1), g1, b1), 0.0)
    y = bn(conv(y, w2), g2, b2)
    y = jnp.maximum(y + x, 0.0)
    return jnp.transpose(y, (0, 3, 1, 2))


if __name__ == "__main__":
    key = jax.random.PRNGKey(0)
    kx, kp = jax.random.split(key)

    B, C, H, W = 2, 4, 16, 16          # in_feats == out_feats == 4, first_stride = 1
    x = jax.random.normal(kx, (B, C, H, W), jnp.float32)
    params = init_params(kp, C, C)

    out = jax.block_until_ready(residual_block_forward(x, params))

    assert out.shape == (B, C, H, W)
    ref = reference_forward(x, params)
    np.testing.assert_allclose(np.asarray(out), np.asarray(ref),
                               rtol=1e-4, atol=1e-4)
    print("KERNEL_OK")
</pallas_src>

<mosaic_0001>
module attributes {stable_mosaic.version = 11 : i64} {
  func.func @kernel(%arg0: i32, %arg1: memref<816x128xf32, #tpu.memory_space<vmem>>, %arg2: memref<9x128x128xf32, #tpu.memory_space<vmem>>, %arg3: memref<1x128xf32, #tpu.memory_space<vmem>>, %arg4: memref<1x128xf32, #tpu.memory_space<vmem>>, %arg5: memref<9x128x128xf32, #tpu.memory_space<vmem>>, %arg6: memref<1x128xf32, #tpu.memory_space<vmem>>, %arg7: memref<1x128xf32, #tpu.memory_space<vmem>>, %arg8: memref<768x128xf32, #tpu.memory_space<vmem>>, %arg9: memref<816x128xf32, #tpu.memory_space<vmem>>) attributes {dimension_semantics = [#tpu.dimension_semantics<arbitrary>], iteration_bounds = array<i64: 1>, scalar_prefetch = 0 : i64, scratch_operands = 1 : i64, tpu.core_type = #tpu.core_type<tc>, window_params = [{pipeline_mode = #tpu.pipeline_mode<synchronous>, transform_indices = @transform_0, window_bounds = array<i64: 816, 128>}, {pipeline_mode = #tpu.pipeline_mode<synchronous>, transform_indices = @transform_1, window_bounds = array<i64: 9, 128, 128>}, {pipeline_mode = #tpu.pipeline_mode<synchronous>, transform_indices = @transform_2, window_bounds = array<i64: 1, 128>}, {pipeline_mode = #tpu.pipeline_mode<synchronous>, transform_indices = @transform_3, window_bounds = array<i64: 1, 128>}, {pipeline_mode = #tpu.pipeline_mode<synchronous>, transform_indices = @transform_4, window_bounds = array<i64: 9, 128, 128>}, {pipeline_mode = #tpu.pipeline_mode<synchronous>, transform_indices = @transform_5, window_bounds = array<i64: 1, 128>}, {pipeline_mode = #tpu.pipeline_mode<synchronous>, transform_indices = @transform_6, window_bounds = array<i64: 1, 128>}, {pipeline_mode = #tpu.pipeline_mode<synchronous>, transform_indices = @transform_7, window_bounds = array<i64: 768, 128>}]} {
    %cst = arith.constant 0.000000e+00 : f32
    %0 = vector.broadcast %cst : f32 to vector<24x128xf32>
    %c0 = arith.constant 0 : index
    %c0_0 = arith.constant 0 : index
    %1 = vector.load %arg9[%c0, %c0_0] : memref<816x128xf32, #tpu.memory_space<vmem>>, vector<24x128xf32>
    tpu.vector_store %arg9[%c0, %c0_0], %0 {strides = array<i32>} : memref<816x128xf32, #tpu.memory_space<vmem>>, vector<24x128xf32>,
    %cst_1 = arith.constant 0.000000e+00 : f32
    %2 = vector.broadcast %cst_1 : f32 to vector<24x128xf32>
    %c792 = arith.constant 792 : index
    %c0_2 = arith.constant 0 : index
    %3 = vector.load %arg9[%c792, %c0_2] : memref<816x128xf32, #tpu.memory_space<vmem>>, vector<24x128xf32>
    tpu.vector_store %arg9[%c792, %c0_2], %2 {strides = array<i32>} : memref<816x128xf32, #tpu.memory_space<vmem>>, vector<24x128xf32>,
    %cst_3 = arith.constant 0.000000e+00 : f32
    %4 = vector.broadcast %cst_3 : f32 to vector<1x128xf32>
    %c0_i32 = arith.constant 0 : i32
    %c3_i32 = arith.constant 3 : i32
    %5 = arith.addi %c0_i32, %c3_i32 : i32
    %c1_i32 = arith.constant 1 : i32
    %6:2 = scf.for %arg10 = %c0_i32 to %5 step %c1_i32 iter_args(%arg11 = %4, %arg12 = %4) -> (vector<1x128xf32>, vector<1x128xf32>)  : i32 {
      %c256_i32 = arith.constant 256 : i32
      %39 = arith.muli %arg10, %c256_i32 : i32
      %40 = tpu.assume_multiple %39, 256 : i32
      %cst_31 = arith.constant 0.000000e+00 : f32
      %41 = vector.broadcast %cst_31 : f32 to vector<256x128xf32>
      %c24_i32 = arith.constant 24 : i32
      %42 = arith.addi %c24_i32, %40 : i32
      %c-19_i32 = arith.constant -19 : i32
      %43 = arith.addi %42, %c-19_i32 : i32
      %44 = arith.index_cast %43 : i32 to index
      %c0_32 = arith.constant 0 : index
      %45 = vector.load %arg1[%44, %c0_32] : memref<816x128xf32, #tpu.memory_space<vmem>>, vector<256x128xf32>
      %c0_33 = arith.constant 0 : index
      %c0_34 = arith.constant 0 : index
      %c0_35 = arith.constant 0 : index
      %46 = vector.load %arg2[%c0_33, %c0_34, %c0_35] : memref<9x128x128xf32, #tpu.memory_space<vmem>>, vector<1x128x128xf32>
      %47 = vector.shape_cast %46 : vector<1x128x128xf32> to vector<128x128xf32>
      %cst_36 = arith.constant dense<0.000000e+00> : vector<256x128xf32>
      %48 = tpu.matmul %45, %47, %cst_36 {dimension_numbers = #tpu.dot_dimension_numbers<[1], [0], [0], [1], [0, 0, 1, 1], [], []>} : vector<256x128xf32>, vector<128x128xf32>, vector<256x128xf32> -> vector<256x128xf32>
      %49 = arith.addf %41, %48 : vector<256x128xf32>
      %c24_i32_37 = arith.constant 24 : i32
      %50 = arith.addi %c24_i32_37, %40 : i32
      %c-18_i32 = arith.constant -18 : i32
      %51 = arith.addi %50, %c-18_i32 : i32
      %52 = arith.index_cast %51 : i32 to index
      %c0_38 = arith.constant 0 : index
      %53 = vector.load %arg1[%52, %c0_38] : memref<816x128xf32, #tpu.memory_space<vmem>>, vector<256x128xf32>
      %c1 = arith.constant 1 : index
      %c0_39 = arith.constant 0 : index
      %c0_40 = arith.constant 0 : index
      %54 = vector.load %arg2[%c1, %c0_39, %c0_40] : memref<9x128x128xf32, #tpu.memory_space<vmem>>, vector<1x128x128xf32>
      %55 = vector.shape_cast %54 : vector<1x128x128xf32> to vector<128x128xf32>
      %cst_41 = arith.constant dense<0.000000e+00> : vector<256x128xf32>
      %56 = tpu.matmul %53, %55, %cst_41 {dimension_numbers = #tpu.dot_dimension_numbers<[1], [0], [0], [1], [0, 0, 1, 1], [], []>} : vector<256x128xf32>, vector<128x128xf32>, vector<256x128xf32> -> vector<256x128xf32>
      %57 = arith.addf %49, %56 : vector<256x128xf32>
      %c24_i32_42 = arith.constant 24 : i32
      %58 = arith.addi %c24_i32_42, %40 : i32
      %c-17_i32 = arith.constant -17 : i32
      %59 = arith.addi %58, %c-17_i32 : i32
      %60 = arith.index_cast %59 : i32 to index
      %c0_43 = arith.constant 0 : index
      %61 = vector.load %arg1[%60, %c0_43] : memref<816x128xf32, #tpu.memory_space<vmem>>, vector<256x128xf32>
      %c2 = arith.constant 2 : index
      %c0_44 = arith.constant 0 : index
      %c0_45 = arith.constant 0 : index
      %62 = vector.load %arg2[%c2, %c0_44, %c0_45] : memref<9x128x128xf32, #tpu.memory_space<vmem>>, vector<1x128x128xf32>
      %63 = vector.shape_cast %62 : vector<1x128x128xf32> to vector<128x128xf32>
      %cst_46 = arith.constant dense<0.000000e+00> : vector<256x128xf32>
      %64 = tpu.matmul %61, %63, %cst_46 {dimension_numbers = #tpu.dot_dimension_numbers<[1], [0], [0], [1], [0, 0, 1, 1], [], []>} : vector<256x128xf32>, vector<128x128xf32>, vector<256x128xf32> -> vector<256x128xf32>
      %65 = arith.addf %57, %64 : vector<256x128xf32>
      %c24_i32_47 = arith.constant 24 : i32
      %66 = arith.addi %c24_i32_47, %40 : i32
      %c-1_i32 = arith.constant -1 : i32
      %67 = arith.addi %66, %c-1_i32 : i32
      %68 = arith.index_cast %67 : i32 to index
      %c0_48 = arith.constant 0 : index
      %69 = vector.load %arg1[%68, %c0_48] : memref<816x128xf32, #tpu.memory_space<vmem>>, vector<256x128xf32>
      %c3 = arith.constant 3 : index
      %c0_49 = arith.constant 0 : index
      %c0_50 = arith.constant 0 : index
      %70 = vector.load %arg2[%c3, %c0_49, %c0_50] : memref<9x128x128xf32, #tpu.memory_space<vmem>>, vector<1x128x128xf32>
      %71 = vector.shape_cast %70 : vector<1x128x128xf32> to vector<128x128xf32>
      %cst_51 = arith.constant dense<0.000000e+00> : vector<256x128xf32>
      %72 = tpu.matmul %69, %71, %cst_51 {dimension_numbers = #tpu.dot_dimension_numbers<[1], [0], [0], [1], [0, 0, 1, 1], [], []>} : vector<256x128xf32>, vector<128x128xf32>, vector<256x128xf32> -> vector<256x128xf32>
      %73 = arith.addf %65, %72 : vector<256x128xf32>
      %c24_i32_52 = arith.constant 24 : i32
      %74 = arith.addi %c24_i32_52, %40 : i32
      %c0_i32_53 = arith.constant 0 : i32
      %75 = arith.addi %74, %c0_i32_53 : i32
      %76 = arith.index_cast %75 : i32 to index
      %c0_54 = arith.constant 0 : index
      %77 = vector.load %arg1[%76, %c0_54] : memref<816x128xf32, #tpu.memory_space<vmem>>, vector<256x128xf32>
      %c4 = arith.constant 4 : index
      %c0_55 = arith.constant 0 : index
      %c0_56 = arith.constant 0 : index
      %78 = vector.load %arg2[%c4, %c0_55, %c0_56] : memref<9x128x128xf32, #tpu.memory_space<vmem>>, vector<1x128x128xf32>
      %79 = vector.shape_cast %78 : vector<1x128x128xf32> to vector<128x128xf32>
      %cst_57 = arith.constant dense<0.000000e+00> : vector<256x128xf32>
      %80 = tpu.matmul %77, %79, %cst_57 {dimension_numbers = #tpu.dot_dimension_numbers<[1], [0], [0], [1], [0, 0, 1, 1], [], []>} : vector<256x128xf32>, vector<128x128xf32>, vector<256x128xf32> -> vector<256x128xf32>
      %81 = arith.addf %73, %80 : vector<256x128xf32>
      %c24_i32_58 = arith.constant 24 : i32
      %82 = arith.addi %c24_i32_58, %40 : i32
      %c1_i32_59 = arith.constant 1 : i32
      %83 = arith.addi %82, %c1_i32_59 : i32
      %84 = arith.index_cast %83 : i32 to index
      %c0_60 = arith.constant 0 : index
      %85 = vector.load %arg1[%84, %c0_60] : memref<816x128xf32, #tpu.memory_space<vmem>>, vector<256x128xf32>
      %c5 = arith.constant 5 : index
      %c0_61 = arith.constant 0 : index
      %c0_62 = arith.constant 0 : index
      %86 = vector.load %arg2[%c5, %c0_61, %c0_62] : memref<9x128x128xf32, #tpu.memory_space<vmem>>, vector<1x128x128xf32>
      %87 = vector.shape_cast %86 : vector<1x128x128xf32> to vector<128x128xf32>
      %cst_63 = arith.constant dense<0.000000e+00> : vector<256x128xf32>
      %88 = tpu.matmul %85, %87, %cst_63 {dimension_numbers = #tpu.dot_dimension_numbers<[1], [0], [0], [1], [0, 0, 1, 1], [], []>} : vector<256x128xf32>, vector<128x128xf32>, vector<256x128xf32> -> vector<256x128xf32>
      %89 = arith.addf %81, %88 : vector<256x128xf32>
      %c24_i32_64 = arith.constant 24 : i32
      %90 = arith.addi %c24_i32_64, %40 : i32
      %c17_i32 = arith.constant 17 : i32
      %91 = arith.addi %90, %c17_i32 : i32
      %92 = arith.index_cast %91 : i32 to index
      %c0_65 = arith.constant 0 : index
      %93 = vector.load %arg1[%92, %c0_65] : memref<816x128xf32, #tpu.memory_space<vmem>>, vector<256x128xf32>
      %c6 = arith.constant 6 : index
      %c0_66 = arith.constant 0 : index
      %c0_67 = arith.constant 0 : index
      %94 = vector.load %arg2[%c6, %c0_66, %c0_67] : memref<9x128x128xf32, #tpu.memory_space<vmem>>, vector<1x128x128xf32>
      %95 = vector.shape_cast %94 : vector<1x128x128xf32> to vector<128x128xf32>
      %cst_68 = arith.constant dense<0.000000e+00> : vector<256x128xf32>
      %96 = tpu.matmul %93, %95, %cst_68 {dimension_numbers = #tpu.dot_dimension_numbers<[1], [0], [0], [1], [0, 0, 1, 1], [], []>} : vector<256x128xf32>, vector<128x128xf32>, vector<256x128xf32> -> vector<256x128xf32>
      %97 = arith.addf %89, %96 : vector<256x128xf32>
      %c24_i32_69 = arith.constant 24 : i32
      %98 = arith.addi %c24_i32_69, %40 : i32
      %c18_i32 = arith.constant 18 : i32
      %99 = arith.addi %98, %c18_i32 : i32
      %100 = arith.index_cast %99 : i32 to index
      %c0_70 = arith.constant 0 : index
      %101 = vector.load %arg1[%100, %c0_70] : memref<816x128xf32, #tpu.memory_space<vmem>>, vector<256x128xf32>
      %c7 = arith.constant 7 : index
      %c0_71 = arith.constant 0 : index
      %c0_72 = arith.constant 0 : index
      %102 = vector.load %arg2[%c7, %c0_71, %c0_72] : memref<9x128x128xf32, #tpu.memory_space<vmem>>, vector<1x128x128xf32>
      %103 = vector.shape_cast %102 : vector<1x128x128xf32> to vector<128x128xf32>
      %cst_73 = arith.constant dense<0.000000e+00> : vector<256x128xf32>
      %104 = tpu.matmul %101, %103, %cst_73 {dimension_numbers = #tpu.dot_dimension_numbers<[1], [0], [0], [1], [0, 0, 1, 1], [], []>} : vector<256x128xf32>, vector<128x128xf32>, vector<256x128xf32> -> vector<256x128xf32>
      %105 = arith.addf %97, %104 : vector<256x128xf32>
      %c24_i32_74 = arith.constant 24 : i32
      %106 = arith.addi %c24_i32_74, %40 : i32
      %c19_i32 = arith.constant 19 : i32
      %107 = arith.addi %106, %c19_i32 : i32
      %108 = arith.index_cast %107 : i32 to index
      %c0_75 = arith.constant 0 : index
      %109 = vector.load %arg1[%108, %c0_75] : memref<816x128xf32, #tpu.memory_space<vmem>>, vector<256x128xf32>
      %c8 = arith.constant 8 : index
      %c0_76 = arith.constant 0 : index
      %c0_77 = arith.constant 0 : index
      %110 = vector.load %arg2[%c8, %c0_76, %c0_77] : memref<9x128x128xf32, #tpu.memory_space<vmem>>, vector<1x128x128xf32>
      %111 = vector.shape_cast %110 : vector<1x128x128xf32> to vector<128x128xf32>
      %cst_78 = arith.constant dense<0.000000e+00> : vector<256x128xf32>
      %112 = tpu.matmul %109, %111, %cst_78 {dimension_numbers = #tpu.dot_dimension_numbers<[1], [0], [0], [1], [0, 0, 1, 1], [], []>} : vector<256x128xf32>, vector<128x128xf32>, vector<256x128xf32> -> vector<256x128xf32>
      %113 = arith.addf %105, %112 : vector<256x128xf32>
      %c24_i32_79 = arith.constant 24 : i32
      %114 = arith.addi %c24_i32_79, %40 : i32
      %115 = arith.index_cast %114 : i32 to index
      %c0_80 = arith.constant 0 : index
      %116 = vector.load %arg9[%115, %c0_80] : memref<816x128xf32, #tpu.memory_space<vmem>>, vector<256x128xf32>
      tpu.vector_store %arg9[%115, %c0_80], %113 {strides = array<i32>} : memref<816x128xf32, #tpu.memory_space<vmem>>, vector<256x128xf32>,
      %117 = tpu.iota {dimensions = array<i32: 0>} : vector<256x1xi32>
      %118 = vector.broadcast %40 : i32 to vector<256x1xi32>
      %119 = arith.addi %118, %117 : vector<256x1xi32>
      %120 = arith.sitofp %119 : vector<256x1xi32> to vector<256x1xf32>
      %cst_81 = arith.constant 5.000000e-01 : f32
      %121 = vector.broadcast %cst_81 : f32 to vector<256x1xf32>
      %122 = arith.addf %120, %121 : vector<256x1xf32>
      %cst_82 = arith.constant 0.00308641978 : f32
      %123 = vector.broadcast %cst_82 : f32 to vector<256x1xf32>
      %124 = arith.mulf %122, %123 : vector<256x1xf32>
      %125 = math.floor %124 : vector<256x1xf32>
      %cst_83 = arith.constant 3.240000e+02 : f32
      %126 = vector.broadcast %cst_83 : f32 to vector<256x1xf32>
      %127 = arith.mulf %125, %126 : vector<256x1xf32>
      %128 = arith.subf %120, %127 : vector<256x1xf32>
      %cst_84 = arith.constant 5.000000e-01 : f32
      %129 = vector.broadcast %cst_84 : f32 to vector<256x1xf32>
      %130 = arith.addf %128, %129 : vector<256x1xf32>
      %cst_85 = arith.constant 0.055555556 : f32
      %131 = vector.broadcast %cst_85 : f32 to vector<256x1xf32>
      %132 = arith.mulf %130, %131 : vector<256x1xf32>
      %133 = math.floor %132 : vector<256x1xf32>
      %cst_86 = arith.constant 1.800000e+01 : f32
      %134 = vector.broadcast %cst_86 : f32 to vector<256x1xf32>
      %135 = arith.mulf %133, %134 : vector<256x1xf32>
      %136 = arith.subf %128, %135 : vector<256x1xf32>
      %cst_87 = arith.constant 6.480000e+02 : f32
      %137 = vector.broadcast %cst_87 : f32 to vector<256x1xf32>
      %138 = arith.cmpf olt, %120, %137 : vector<256x1xf32>
      %cst_88 = arith.constant 1.000000e+00 : f32
      %139 = vector.broadcast %cst_88 : f32 to vector<256x1xf32>
      %140 = arith.cmpf oge, %133, %139 : vector<256x1xf32>
      %141 = arith.andi %138, %140 : vector<256x1xi1>
      %cst_89 = arith.constant 1.600000e+01 : f32
      %142 = vector.broadcast %cst_89 : f32 to vector<256x1xf32>
      %143 = arith.cmpf ole, %133, %142 : vector<256x1xf32>
      %144 = arith.andi %141, %143 : vector<256x1xi1>
      %cst_90 = arith.constant 1.000000e+00 : f32
      %145 = vector.broadcast %cst_90 : f32 to vector<256x1xf32>
      %146 = arith.cmpf oge, %136, %145 : vector<256x1xf32>
      %147 = arith.andi %144, %146 : vector<256x1xi1>
      %cst_91 = arith.constant 1.600000e+01 : f32
      %148 = vector.broadcast %cst_91 : f32 to vector<256x1xf32>
      %149 = arith.cmpf ole, %136, %148 : vector<256x1xf32>
      %150 = arith.andi %147, %149 : vector<256x1xi1>
      %cst_92 = arith.constant 1.000000e+00 : f32
      %cst_93 = arith.constant 0.000000e+00 : f32
      %151 = vector.broadcast %cst_92 : f32 to vector<256x1xf32>
      %152 = vector.broadcast %cst_93 : f32 to vector<256x1xf32>
      %153 = arith.select %150, %151, %152 : vector<256x1xi1>, vector<256x1xf32>
      %154 = vector.broadcast %153 : vector<256x1xf32> to vector<256x128xf32>
      %155 = arith.mulf %113, %154 : vector<256x128xf32>
      %cst_94 = arith.constant dense<0.000000e+00> : vector<128xf32>
      %156 = vector.multi_reduction <add>, %155, %cst_94 [0] : vector<256x128xf32> to vector<128xf32>
      %157 = vector.shape_cast %156 : vector<128xf32> to vector<1x128xf32>
      %158 = arith.addf %arg11, %157 : vector<1x128xf32>
      %159 = arith.mulf %155, %113 : vector<256x128xf32>
      %cst_95 = arith.constant dense<0.000000e+00> : vector<128xf32>
      %160 = vector.multi_reduction <add>, %159, %cst_95 [0] : vector<256x128xf32> to vector<128xf32>
      %161 = vector.shape_cast %160 : vector<128xf32> to vector<1x128xf32>
      %162 = arith.addf %arg12, %161 : vector<1x128xf32>
      scf.yield %158, %162 : vector<1x128xf32>, vector<1x128xf32>
    }
    %c3_i32_4 = arith.constant 3 : i32
    %cst_5 = arith.constant 0.001953125 : f32
    %7 = vector.broadcast %cst_5 : f32 to vector<1x128xf32>
    %8 = arith.mulf %6#0, %7 : vector<1x128xf32>
    %cst_6 = arith.constant 0.001953125 : f32
    %9 = vector.broadcast %cst_6 : f32 to vector<1x128xf32>
    %10 = arith.mulf %6#1, %9 : vector<1x128xf32>
    %11 = arith.mulf %8, %8 : vector<1x128xf32>
    %12 = arith.subf %10, %11 : vector<1x128xf32>
    %c0_7 = arith.constant 0 : index
    %c0_8 = arith.constant 0 : index
    %13 = vector.load %arg3[%c0_7, %c0_8] : memref<1x128xf32, #tpu.memory_space<vmem>>, vector<1x128xf32>
    %cst_9 = arith.constant 9.99999974E-6 : f32
    %14 = vector.broadcast %cst_9 : f32 to vector<1x128xf32>
    %15 = arith.addf %12, %14 : vector<1x128xf32>
    %16 = math.rsqrt %15 : vector<1x128xf32>
    %17 = arith.mulf %13, %16 : vector<1x128xf32>
    %c0_10 = arith.constant 0 : index
    %c0_11 = arith.constant 0 : index
    %18 = vector.load %arg4[%c0_10, %c0_11] : memref<1x128xf32, #tpu.memory_space<vmem>>, vector<1x128xf32>
    %19 = arith.mulf %8, %17 : vector<1x128xf32>
    %20 = arith.subf %18, %19 : vector<1x128xf32>
    %c0_i32_12 = arith.constant 0 : i32
    %c3_i32_13 = arith.constant 3 : i32
    %21 = arith.addi %c0_i32_12, %c3_i32_13 : i32
    %c1_i32_14 = arith.constant 1 : i32
    scf.for %arg10 = %c0_i32_12 to %21 step %c1_i32_14  : i32 {
      %c256_i32 = arith.constant 256 : i32
      %39 = arith.muli %arg10, %c256_i32 : i32
      %40 = tpu.assume_multiple %39, 256 : i32
      %c24_i32 = arith.constant 24 : i32
      %41 = arith.addi %c24_i32, %40 : i32
      %42 = arith.index_cast %41 : i32 to index
      %c0_31 = arith.constant 0 : index
      %43 = vector.load %arg9[%42, %c0_31] : memref<816x128xf32, #tpu.memory_space<vmem>>, vector<256x128xf32>
      %44 = vector.broadcast %17 : vector<1x128xf32> to vector<256x128xf32>
      %45 = arith.mulf %43, %44 : vector<256x128xf32>
      %46 = vector.broadcast %20 : vector<1x128xf32> to vector<256x128xf32>
      %47 = arith.addf %45, %46 : vector<256x128xf32>
      %cst_32 = arith.constant 0.000000e+00 : f32
      %48 = vector.broadcast %cst_32 : f32 to vector<256x128xf32>
      %49 = arith.maximumf %47, %48 : vector<256x128xf32>
      %50 = tpu.iota {dimensions = array<i32: 0>} : vector<256x1xi32>
      %51 = vector.broadcast %40 : i32 to vector<256x1xi32>
      %52 = arith.addi %51, %50 : vector<256x1xi32>
      %53 = arith.sitofp %52 : vector<256x1xi32> to vector<256x1xf32>
      %cst_33 = arith.constant 5.000000e-01 : f32
      %54 = vector.broadcast %cst_33 : f32 to vector<256x1xf32>
      %55 = arith.addf %53, %54 : vector<256x1xf32>
      %cst_34 = arith.constant 0.00308641978 : f32
      %56 = vector.broadcast %cst_34 : f32 to vector<256x1xf32>
      %57 = arith.mulf %55, %56 : vector<256x1xf32>
      %58 = math.floor %57 : vector<256x1xf32>
      %cst_35 = arith.constant 3.240000e+02 : f32
      %59 = vector.broadcast %cst_35 : f32 to vector<256x1xf32>
      %60 = arith.mulf %58, %59 : vector<256x1xf32>
      %61 = arith.subf %53, %60 : vector<256x1xf32>
      %cst_36 = arith.constant 5.000000e-01 : f32
      %62 = vector.broadcast %cst_36 : f32 to vector<256x1xf32>
      %63 = arith.addf %61, %62 : vector<256x1xf32>
      %cst_37 = arith.constant 0.055555556 : f32
      %64 = vector.broadcast %cst_37 : f32 to vector<256x1xf32>
      %65 = arith.mulf %63, %64 : vector<256x1xf32>
      %66 = math.floor %65 : vector<256x1xf32>
      %cst_38 = arith.constant 1.800000e+01 : f32
      %67 = vector.broadcast %cst_38 : f32 to vector<256x1xf32>
      %68 = arith.mulf %66, %67 : vector<256x1xf32>
      %69 = arith.subf %61, %68 : vector<256x1xf32>
      %cst_39 = arith.constant 6.480000e+02 : f32
      %70 = vector.broadcast %cst_39 : f32 to vector<256x1xf32>
      %71 = arith.cmpf olt, %53, %70 : vector<256x1xf32>
      %cst_40 = arith.constant 1.000000e+00 : f32
      %72 = vector.broadcast %cst_40 : f32 to vector<256x1xf32>
      %73 = arith.cmpf oge, %66, %72 : vector<256x1xf32>
      %74 = arith.andi %71, %73 : vector<256x1xi1>
      %cst_41 = arith.constant 1.600000e+01 : f32
      %75 = vector.broadcast %cst_41 : f32 to vector<256x1xf32>
      %76 = arith.cmpf ole, %66, %75 : vector<256x1xf32>
      %77 = arith.andi %74, %76 : vector<256x1xi1>
      %cst_42 = arith.constant 1.000000e+00 : f32
      %78 = vector.broadcast %cst_42 : f32 to vector<256x1xf32>
      %79 = arith.cmpf oge, %69, %78 : vector<256x1xf32>
      %80 = arith.andi %77, %79 : vector<256x1xi1>
      %cst_43 = arith.constant 1.600000e+01 : f32
      %81 = vector.broadcast %cst_43 : f32 to vector<256x1xf32>
      %82 = arith.cmpf ole, %69, %81 : vector<256x1xf32>
      %83 = arith.andi %80, %82 : vector<256x1xi1>
      %cst_44 = arith.constant 1.000000e+00 : f32
      %cst_45 = arith.constant 0.000000e+00 : f32
      %84 = vector.broadcast %cst_44 : f32 to vector<256x1xf32>
      %85 = vector.broadcast %cst_45 : f32 to vector<256x1xf32>
      %86 = arith.select %83, %84, %85 : vector<256x1xi1>, vector<256x1xf32>
      %87 = vector.broadcast %86 : vector<256x1xf32> to vector<256x128xf32>
      %88 = arith.mulf %49, %87 : vector<256x128xf32>
      %c24_i32_46 = arith.constant 24 : i32
      %89 = arith.addi %c24_i32_46, %40 : i32
      %90 = arith.index_cast %89 : i32 to index
      %c0_47 = arith.constant 0 : index
      %91 = vector.load %arg9[%90, %c0_47] : memref<816x128xf32, #tpu.memory_space<vmem>>, vector<256x128xf32>
      tpu.vector_store %arg9[%90, %c0_47], %88 {strides = array<i32>} : memref<816x128xf32, #tpu.memory_space<vmem>>, vector<256x128xf32>,
    }
    %c3_i32_15 = arith.constant 3 : i32
    %c0_i32_16 = arith.constant 0 : i32
    %c3_i32_17 = arith.constant 3 : i32
    %22 = arith.addi %c0_i32_16, %c3_i32_17 : i32
    %c1_i32_18 = arith.constant 1 : i32
    %23:2 = scf.for %arg10 = %c0_i32_16 to %22 step %c1_i32_18 iter_args(%arg11 = %4, %arg12 = %4) -> (vector<1x128xf32>, vector<1x128xf32>)  : i32 {
      %c256_i32 = arith.constant 256 : i32
      %39 = arith.muli %arg10, %c256_i32 : i32
      %40 = tpu.assume_multiple %39, 256 : i32
      %cst_31 = arith.constant 0.000000e+00 : f32
      %41 = vector.broadcast %cst_31 : f32 to vector<256x128xf32>
      %c24_i32 = arith.constant 24 : i32
      %42 = arith.addi %c24_i32, %40 : i32
      %c-19_i32 = arith.constant -19 : i32
      %43 = arith.addi %42, %c-19_i32 : i32
      %44 = arith.index_cast %43 : i32 to index
      %c0_32 = arith.constant 0 : index
      %45 = vector.load %arg9[%44, %c0_32] : memref<816x128xf32, #tpu.memory_space<vmem>>, vector<256x128xf32>
      %c0_33 = arith.constant 0 : index
      %c0_34 = arith.constant 0 : index
      %c0_35 = arith.constant 0 : index
      %46 = vector.load %arg5[%c0_33, %c0_34, %c0_35] : memref<9x128x128xf32, #tpu.memory_space<vmem>>, vector<1x128x128xf32>
      %47 = vector.shape_cast %46 : vector<1x128x128xf32> to vector<128x128xf32>
      %cst_36 = arith.constant dense<0.000000e+00> : vector<256x128xf32>
      %48 = tpu.matmul %45, %47, %cst_36 {dimension_numbers = #tpu.dot_dimension_numbers<[1], [0], [0], [1], [0, 0, 1, 1], [], []>} : vector<256x128xf32>, vector<128x128xf32>, vector<256x128xf32> -> vector<256x128xf32>
      %49 = arith.addf %41, %48 : vector<256x128xf32>
      %c24_i32_37 = arith.constant 24 : i32
      %50 = arith.addi %c24_i32_37, %40 : i32
      %c-18_i32 = arith.constant -18 : i32
      %51 = arith.addi %50, %c-18_i32 : i32
      %52 = arith.index_cast %51 : i32 to index
      %c0_38 = arith.constant 0 : index
      %53 = vector.load %arg9[%52, %c0_38] : memref<816x128xf32, #tpu.memory_space<vmem>>, vector<256x128xf32>
      %c1 = arith.constant 1 : index
      %c0_39 = arith.constant 0 : index
      %c0_40 = arith.constant 0 : index
      %54 = vector.load %arg5[%c1, %c0_39, %c0_40] : memref<9x128x128xf32, #tpu.memory_space<vmem>>, vector<1x128x128xf32>
      %55 = vector.shape_cast %54 : vector<1x128x128xf32> to vector<128x128xf32>
      %cst_41 = arith.constant dense<0.000000e+00> : vector<256x128xf32>
      %56 = tpu.matmul %53, %55, %cst_41 {dimension_numbers = #tpu.dot_dimension_numbers<[1], [0], [0], [1], [0, 0, 1, 1], [], []>} : vector<256x128xf32>, vector<128x128xf32>, vector<256x128xf32> -> vector<256x128xf32>
      %57 = arith.addf %49, %56 : vector<256x128xf32>
      %c24_i32_42 = arith.constant 24 : i32
      %58 = arith.addi %c24_i32_42, %40 : i32
      %c-17_i32 = arith.constant -17 : i32
      %59 = arith.addi %58, %c-17_i32 : i32
      %60 = arith.index_cast %59 : i32 to index
      %c0_43 = arith.constant 0 : index
      %61 = vector.load %arg9[%60, %c0_43] : memref<816x128xf32, #tpu.memory_space<vmem>>, vector<256x128xf32>
      %c2 = arith.constant 2 : index
      %c0_44 = arith.constant 0 : index
      %c0_45 = arith.constant 0 : index
      %62 = vector.load %arg5[%c2, %c0_44, %c0_45] : memref<9x128x128xf32, #tpu.memory_space<vmem>>, vector<1x128x128xf32>
      %63 = vector.shape_cast %62 : vector<1x128x128xf32> to vector<128x128xf32>
      %cst_46 = arith.constant dense<0.000000e+00> : vector<256x128xf32>
      %64 = tpu.matmul %61, %63, %cst_46 {dimension_numbers = #tpu.dot_dimension_numbers<[1], [0], [0], [1], [0, 0, 1, 1], [], []>} : vector<256x128xf32>, vector<128x128xf32>, vector<256x128xf32> -> vector<256x128xf32>
      %65 = arith.addf %57, %64 : vector<256x128xf32>
      %c24_i32_47 = arith.constant 24 : i32
      %66 = arith.addi %c24_i32_47, %40 : i32
      %c-1_i32 = arith.constant -1 : i32
      %67 = arith.addi %66, %c-1_i32 : i32
      %68 = arith.index_cast %67 : i32 to index
      %c0_48 = arith.constant 0 : index
      %69 = vector.load %arg9[%68, %c0_48] : memref<816x128xf32, #tpu.memory_space<vmem>>, vector<256x128xf32>
      %c3 = arith.constant 3 : index
      %c0_49 = arith.constant 0 : index
      %c0_50 = arith.constant 0 : index
      %70 = vector.load %arg5[%c3, %c0_49, %c0_50] : memref<9x128x128xf32, #tpu.memory_space<vmem>>, vector<1x128x128xf32>
      %71 = vector.shape_cast %70 : vector<1x128x128xf32> to vector<128x128xf32>
      %cst_51 = arith.constant dense<0.000000e+00> : vector<256x128xf32>
      %72 = tpu.matmul %69, %71, %cst_51 {dimension_numbers = #tpu.dot_dimension_numbers<[1], [0], [0], [1], [0, 0, 1, 1], [], []>} : vector<256x128xf32>, vector<128x128xf32>, vector<256x128xf32> -> vector<256x128xf32>
      %73 = arith.addf %65, %72 : vector<256x128xf32>
      %c24_i32_52 = arith.constant 24 : i32
      %74 = arith.addi %c24_i32_52, %40 : i32
      %c0_i32_53 = arith.constant 0 : i32
      %75 = arith.addi %74, %c0_i32_53 : i32
      %76 = arith.index_cast %75 : i32 to index
      %c0_54 = arith.constant 0 : index
      %77 = vector.load %arg9[%76, %c0_54] : memref<816x128xf32, #tpu.memory_space<vmem>>, vector<256x128xf32>
      %c4 = arith.constant 4 : index
      %c0_55 = arith.constant 0 : index
      %c0_56 = arith.constant 0 : index
      %78 = vector.load %arg5[%c4, %c0_55, %c0_56] : memref<9x128x128xf32, #tpu.memory_space<vmem>>, vector<1x128x128xf32>
      %79 = vector.shape_cast %78 : vector<1x128x128xf32> to vector<128x128xf32>
      %cst_57 = arith.constant dense<0.000000e+00> : vector<256x128xf32>
      %80 = tpu.matmul %77, %79, %cst_57 {dimension_numbers = #tpu.dot_dimension_numbers<[1], [0], [0], [1], [0, 0, 1, 1], [], []>} : vector<256x128xf32>, vector<128x128xf32>, vector<256x128xf32> -> vector<256x128xf32>
      %81 = arith.addf %73, %80 : vector<256x128xf32>
      %c24_i32_58 = arith.constant 24 : i32
      %82 = arith.addi %c24_i32_58, %40 : i32
      %c1_i32_59 = arith.constant 1 : i32
      %83 = arith.addi %82, %c1_i32_59 : i32
      %84 = arith.index_cast %83 : i32 to index
      %c0_60 = arith.constant 0 : index
      %85 = vector.load %arg9[%84, %c0_60] : memref<816x128xf32, #tpu.memory_space<vmem>>, vector<256x128xf32>
      %c5 = arith.constant 5 : index
      %c0_61 = arith.constant 0 : index
      %c0_62 = arith.constant 0 : index
      %86 = vector.load %arg5[%c5, %c0_61, %c0_62] : memref<9x128x128xf32, #tpu.memory_space<vmem>>, vector<1x128x128xf32>
      %87 = vector.shape_cast %86 : vector<1x128x128xf32> to vector<128x128xf32>
      %cst_63 = arith.constant dense<0.000000e+00> : vector<256x128xf32>
      %88 = tpu.matmul %85, %87, %cst_63 {dimension_numbers = #tpu.dot_dimension_numbers<[1], [0], [0], [1], [0, 0, 1, 1], [], []>} : vector<256x128xf32>, vector<128x128xf32>, vector<256x128xf32> -> vector<256x128xf32>
      %89 = arith.addf %81, %88 : vector<256x128xf32>
      %c24_i32_64 = arith.constant 24 : i32
      %90 = arith.addi %c24_i32_64, %40 : i32
      %c17_i32 = arith.constant 17 : i32
      %91 = arith.addi %90, %c17_i32 : i32
      %92 = arith.index_cast %91 : i32 to index
      %c0_65 = arith.constant 0 : index
      %93 = vector.load %arg9[%92, %c0_65] : memref<816x128xf32, #tpu.memory_space<vmem>>, vector<256x128xf32>
      %c6 = arith.constant 6 : index
      %c0_66 = arith.constant 0 : index
      %c0_67 = arith.constant 0 : index
      %94 = vector.load %arg5[%c6, %c0_66, %c0_67] : memref<9x128x128xf32, #tpu.memory_space<vmem>>, vector<1x128x128xf32>
      %95 = vector.shape_cast %94 : vector<1x128x128xf32> to vector<128x128xf32>
      %cst_68 = arith.constant dense<0.000000e+00> : vector<256x128xf32>
      %96 = tpu.matmul %93, %95, %cst_68 {dimension_numbers = #tpu.dot_dimension_numbers<[1], [0], [0], [1], [0, 0, 1, 1], [], []>} : vector<256x128xf32>, vector<128x128xf32>, vector<256x128xf32> -> vector<256x128xf32>
      %97 = arith.addf %89, %96 : vector<256x128xf32>
      %c24_i32_69 = arith.constant 24 : i32
      %98 = arith.addi %c24_i32_69, %40 : i32
      %c18_i32 = arith.constant 18 : i32
      %99 = arith.addi %98, %c18_i32 : i32
      %100 = arith.index_cast %99 : i32 to index
      %c0_70 = arith.constant 0 : index
      %101 = vector.load %arg9[%100, %c0_70] : memref<816x128xf32, #tpu.memory_space<vmem>>, vector<256x128xf32>
      %c7 = arith.constant 7 : index
      %c0_71 = arith.constant 0 : index
      %c0_72 = arith.constant 0 : index
      %102 = vector.load %arg5[%c7, %c0_71, %c0_72] : memref<9x128x128xf32, #tpu.memory_space<vmem>>, vector<1x128x128xf32>
      %103 = vector.shape_cast %102 : vector<1x128x128xf32> to vector<128x128xf32>
      %cst_73 = arith.constant dense<0.000000e+00> : vector<256x128xf32>
      %104 = tpu.matmul %101, %103, %cst_73 {dimension_numbers = #tpu.dot_dimension_numbers<[1], [0], [0], [1], [0, 0, 1, 1], [], []>} : vector<256x128xf32>, vector<128x128xf32>, vector<256x128xf32> -> vector<256x128xf32>
      %105 = arith.addf %97, %104 : vector<256x128xf32>
      %c24_i32_74 = arith.constant 24 : i32
      %106 = arith.addi %c24_i32_74, %40 : i32
      %c19_i32 = arith.constant 19 : i32
      %107 = arith.addi %106, %c19_i32 : i32
      %108 = arith.index_cast %107 : i32 to index
      %c0_75 = arith.constant 0 : index
      %109 = vector.load %arg9[%108, %c0_75] : memref<816x128xf32, #tpu.memory_space<vmem>>, vector<256x128xf32>
      %c8 = arith.constant 8 : index
      %c0_76 = arith.constant 0 : index
      %c0_77 = arith.constant 0 : index
      %110 = vector.load %arg5[%c8, %c0_76, %c0_77] : memref<9x128x128xf32, #tpu.memory_space<vmem>>, vector<1x128x128xf32>
      %111 = vector.shape_cast %110 : vector<1x128x128xf32> to vector<128x128xf32>
      %cst_78 = arith.constant dense<0.000000e+00> : vector<256x128xf32>
      %112 = tpu.matmul %109, %111, %cst_78 {dimension_numbers = #tpu.dot_dimension_numbers<[1], [0], [0], [1], [0, 0, 1, 1], [], []>} : vector<256x128xf32>, vector<128x128xf32>, vector<256x128xf32> -> vector<256x128xf32>
      %113 = arith.addf %105, %112 : vector<256x128xf32>
      %114 = arith.index_cast %40 : i32 to index
      %c0_79 = arith.constant 0 : index
      %115 = vector.load %arg8[%114, %c0_79] : memref<768x128xf32, #tpu.memory_space<vmem>>, vector<256x128xf32>
      tpu.vector_store %arg8[%114, %c0_79], %113 {strides = array<i32>} : memref<768x128xf32, #tpu.memory_space<vmem>>, vector<256x128xf32>,
      %116 = tpu.iota {dimensions = array<i32: 0>} : vector<256x1xi32>
      %117 = vector.broadcast %40 : i32 to vector<256x1xi32>
      %118 = arith.addi %117, %116 : vector<256x1xi32>
      %119 = arith.sitofp %118 : vector<256x1xi32> to vector<256x1xf32>
      %cst_80 = arith.constant 5.000000e-01 : f32
      %120 = vector.broadcast %cst_80 : f32 to vector<256x1xf32>
      %121 = arith.addf %119, %120 : vector<256x1xf32>
      %cst_81 = arith.constant 0.00308641978 : f32
      %122 = vector.broadcast %cst_81 : f32 to vector<256x1xf32>
      %123 = arith.mulf %121, %122 : vector<256x1xf32>
      %124 = math.floor %123 : vector<256x1xf32>
      %cst_82 = arith.constant 3.240000e+02 : f32
      %125 = vector.broadcast %cst_82 : f32 to vector<256x1xf32>
      %126 = arith.mulf %124, %125 : vector<256x1xf32>
      %127 = arith.subf %119, %126 : vector<256x1xf32>
      %cst_83 = arith.constant 5.000000e-01 : f32
      %128 = vector.broadcast %cst_83 : f32 to vector<256x1xf32>
      %129 = arith.addf %127, %128 : vector<256x1xf32>
      %cst_84 = arith.constant 0.055555556 : f32
      %130 = vector.broadcast %cst_84 : f32 to vector<256x1xf32>
      %131 = arith.mulf %129, %130 : vector<256x1xf32>
      %132 = math.floor %131 : vector<256x1xf32>
      %cst_85 = arith.constant 1.800000e+01 : f32
      %133 = vector.broadcast %cst_85 : f32 to vector<256x1xf32>
      %134 = arith.mulf %132, %133 : vector<256x1xf32>
      %135 = arith.subf %127, %134 : vector<256x1xf32>
      %cst_86 = arith.constant 6.480000e+02 : f32
      %136 = vector.broadcast %cst_86 : f32 to vector<256x1xf32>
      %137 = arith.cmpf olt, %119, %136 : vector<256x1xf32>
      %cst_87 = arith.constant 1.000000e+00 : f32
      %138 = vector.broadcast %cst_87 : f32 to vector<256x1xf32>
      %139 = arith.cmpf oge, %132, %138 : vector<256x1xf32>
      %140 = arith.andi %137, %139 : vector<256x1xi1>
      %cst_88 = arith.constant 1.600000e+01 : f32
      %141 = vector.broadcast %cst_88 : f32 to vector<256x1xf32>
      %142 = arith.cmpf ole, %132, %141 : vector<256x1xf32>
      %143 = arith.andi %140, %142 : vector<256x1xi1>
      %cst_89 = arith.constant 1.000000e+00 : f32
      %144 = vector.broadcast %cst_89 : f32 to vector<256x1xf32>
      %145 = arith.cmpf oge, %135, %144 : vector<256x1xf32>
      %146 = arith.andi %143, %145 : vector<256x1xi1>
      %cst_90 = arith.constant 1.600000e+01 : f32
      %147 = vector.broadcast %cst_90 : f32 to vector<256x1xf32>
      %148 = arith.cmpf ole, %135, %147 : vector<256x1xf32>
      %149 = arith.andi %146, %148 : vector<256x1xi1>
      %cst_91 = arith.constant 1.000000e+00 : f32
      %cst_92 = arith.constant 0.000000e+00 : f32
      %150 = vector.broadcast %cst_91 : f32 to vector<256x1xf32>
      %151 = vector.broadcast %cst_92 : f32 to vector<256x1xf32>
      %152 = arith.select %149, %150, %151 : vector<256x1xi1>, vector<256x1xf32>
      %153 = vector.broadcast %152 : vector<256x1xf32> to vector<256x128xf32>
      %154 = arith.mulf %113, %153 : vector<256x128xf32>
      %cst_93 = arith.constant dense<0.000000e+00> : vector<128xf32>
      %155 = vector.multi_reduction <add>, %154, %cst_93 [0] : vector<256x128xf32> to vector<128xf32>
      %156 = vector.shape_cast %155 : vector<128xf32> to vector<1x128xf32>
      %157 = arith.addf %arg11, %156 : vector<1x128xf32>
      %158 = arith.mulf %154, %113 : vector<256x128xf32>
      %cst_94 = arith.constant dense<0.000000e+00> : vector<128xf32>
      %159 = vector.multi_reduction <add>, %158, %cst_94 [0] : vector<256x128xf32> to vector<128xf32>
      %160 = vector.shape_cast %159 : vector<128xf32> to vector<1x128xf32>
      %161 = arith.addf %arg12, %160 : vector<1x128xf32>
      scf.yield %157, %161 : vector<1x128xf32>, vector<1x128xf32>
    }
    %c3_i32_19 = arith.constant 3 : i32
    %cst_20 = arith.constant 0.001953125 : f32
    %24 = vector.broadcast %cst_20 : f32 to vector<1x128xf32>
    %25 = arith.mulf %23#0, %24 : vector<1x128xf32>
    %cst_21 = arith.constant 0.001953125 : f32
    %26 = vector.broadcast %cst_21 : f32 to vector<1x128xf32>
    %27 = arith.mulf %23#1, %26 : vector<1x128xf32>
    %28 = arith.mulf %25, %25 : vector<1x128xf32>
    %29 = arith.subf %27, %28 : vector<1x128xf32>
    %c0_22 = arith.constant 0 : index
    %c0_23 = arith.constant 0 : index
    %30 = vector.load %arg6[%c0_22, %c0_23] : memref<1x128xf32, #tpu.memory_space<vmem>>, vector<1x128xf32>
    %cst_24 = arith.constant 9.99999974E-6 : f32
    %31 = vector.broadcast %cst_24 : f32 to vector<1x128xf32>
    %32 = arith.addf %29, %31 : vector<1x128xf32>
    %33 = math.rsqrt %32 : vector<1x128xf32>
    %34 = arith.mulf %30, %33 : vector<1x128xf32>
    %c0_25 = arith.constant 0 : index
    %c0_26 = arith.constant 0 : index
    %35 = vector.load %arg7[%c0_25, %c0_26] : memref<1x128xf32, #tpu.memory_space<vmem>>, vector<1x128xf32>
    %36 = arith.mulf %25, %34 : vector<1x128xf32>
    %37 = arith.subf %35, %36 : vector<1x128xf32>
    %c0_i32_27 = arith.constant 0 : i32
    %c3_i32_28 = arith.constant 3 : i32
    %38 = arith.addi %c0_i32_27, %c3_i32_28 : i32
    %c1_i32_29 = arith.constant 1 : i32
    scf.for %arg10 = %c0_i32_27 to %38 step %c1_i32_29  : i32 {
      %c256_i32 = arith.constant 256 : i32
      %39 = arith.muli %arg10, %c256_i32 : i32
      %40 = tpu.assume_multiple %39, 256 : i32
      %41 = arith.index_cast %40 : i32 to index
      %c0_31 = arith.constant 0 : index
      %42 = vector.load %arg8[%41, %c0_31] : memref<768x128xf32, #tpu.memory_space<vmem>>, vector<256x128xf32>
      %c24_i32 = arith.constant 24 : i32
      %43 = arith.addi %c24_i32, %40 : i32
      %44 = arith.index_cast %43 : i32 to index
      %c0_32 = arith.constant 0 : index
      %45 = vector.load %arg1[%44, %c0_32] : memref<816x128xf32, #tpu.memory_space<vmem>>, vector<256x128xf32>
      %46 = vector.broadcast %34 : vector<1x128xf32> to vector<256x128xf32>
      %47 = arith.mulf %42, %46 : vector<256x128xf32>
      %48 = vector.broadcast %37 : vector<1x128xf32> to vector<256x128xf32>
      %49 = arith.addf %47, %48 : vector<256x128xf32>
      %50 = arith.addf %49, %45 : vector<256x128xf32>
      %cst_33 = arith.constant 0.000000e+00 : f32
      %51 = vector.broadcast %cst_33 : f32 to vector<256x128xf32>
      %52 = arith.maximumf %50, %51 : vector<256x128xf32>
      %53 = arith.index_cast %40 : i32 to index
      %c0_34 = arith.constant 0 : index
      %54 = vector.load %arg8[%53, %c0_34] : memref<768x128xf32, #tpu.memory_space<vmem>>, vector<256x128xf32>
      tpu.vector_store %arg8[%53, %c0_34], %52 {strides = array<i32>} : memref<768x128xf32, #tpu.memory_space<vmem>>, vector<256x128xf32>,
    }
    %c3_i32_30 = arith.constant 3 : i32
    return
  }
  func.func @transform_0(%arg0: i32) -> (i32, i32) {
    %c0_i32 = arith.constant 0 : i32
    %c0_i32_0 = arith.constant 0 : i32
    %c0_i32_1 = arith.constant 0 : i32
    return %c0_i32, %c0_i32_0 : i32, i32
  }
  func.func @transform_1(%arg0: i32) -> (i32, i32, i32) {
    %c0_i32 = arith.constant 0 : i32
    %c0_i32_0 = arith.constant 0 : i32
    %c0_i32_1 = arith.constant 0 : i32
    %c0_i32_2 = arith.constant 0 : i32
    return %c0_i32, %c0_i32_0, %c0_i32_1 : i32, i32, i32
  }
  func.func @transform_2(%arg0: i32) -> (i32, i32) {
    %c0_i32 = arith.constant 0 : i32
    %c0_i32_0 = arith.constant 0 : i32
    %c0_i32_1 = arith.constant 0 : i32
    return %c0_i32, %c0_i32_0 : i32, i32
  }
  func.func @transform_3(%arg0: i32) -> (i32, i32) {
    %c0_i32 = arith.constant 0 : i32
    %c0_i32_0 = arith.constant 0 : i32
    %c0_i32_1 = arith.constant 0 : i32
    return %c0_i32, %c0_i32_0 : i32, i32
  }
  func.func @transform_4(%arg0: i32) -> (i32, i32, i32) {
    %c0_i32 = arith.constant 0 : i32
    %c0_i32_0 = arith.constant 0 : i32
    %c0_i32_1 = arith.constant 0 : i32
    %c0_i32_2 = arith.constant 0 : i32
    return %c0_i32, %c0_i32_0, %c0_i32_1 : i32, i32, i32
  }
  func.func @transform_5(%arg0: i32) -> (i32, i32) {
    %c0_i32 = arith.constant 0 : i32
    %c0_i32_0 = arith.constant 0 : i32
    %c0_i32_1 = arith.constant 0 : i32
    return %c0_i32, %c0_i32_0 : i32, i32
  }
  func.func @transform_6(%arg0: i32) -> (i32, i32) {
    %c0_i32 = arith.constant 0 : i32
    %c0_i32_0 = arith.constant 0 : i32
    %c0_i32_1 = arith.constant 0 : i32
    return %c0_i32, %c0_i32_0 : i32, i32
  }
  func.func @transform_7(%arg0: i32) -> (i32, i32) {
    %c0_i32 = arith.constant 0 : i32
    %c0_i32_0 = arith.constant 0 : i32
    %c0_i32_1 = arith.constant 0 : i32
    return %c0_i32, %c0_i32_0 : i32, i32
  }
}

</mosaic_0001>

<llo_original>
// kernel: tpu_custom_call.1
$region0: #{tpu_custom_call.1}
  #allocation0 [shape = 'u32[]', space=smem, size = 0x4, offset = 0x4, fixed_abs, tag = 'smem constant byte address 0x4 - core index']
  #allocation1 [shape = 'u32[144,128]{1,0:T(1,128)}', space=vmem, size = 0x12000, scoped, tag = 'internal scratch']
  #allocation2 [shape = 'f32[816,128]{1,0:T(8,128)}', space=vmem, size = 0x66000, scoped, tag = 'scratch operand']
  %s0 = inlined_call_operand.hbm [shape: f32[816,128], index: 0, kind: input, shape index: {}]
  %s1 = inlined_call_operand.hbm [shape: f32[9,128,128], index: 1, kind: input, shape index: {}]
  %s2 = inlined_call_operand.vmem [shape: f32[1,128], index: 2, kind: input, shape index: {}]
  %s3 = inlined_call_operand.vmem [shape: f32[1,128], index: 3, kind: input, shape index: {}]
  %s4 = inlined_call_operand.hbm [shape: f32[9,128,128], index: 4, kind: input, shape index: {}]
  %s5 = inlined_call_operand.vmem [shape: f32[1,128], index: 5, kind: input, shape index: {}]
  %s6 = inlined_call_operand.vmem [shape: f32[1,128], index: 6, kind: input, shape index: {}]
  %s7 = inlined_call_operand.hbm [shape: f32[768,128], index: 7, kind: output, shape index: {}]
  %s8 = sld [smem:[#allocation0]]
  $region78: #{tpu_custom_call.1} parent=0
    _
  %s10 = ssub.s32 1, %s8
  %s11 = scalar_select 0, %s10, %s8
  $region1: #{tpu_custom_call.1} parent=0
    #allocation3 [shape = 'u8[417792]{0}', space=vmem, size = 0x66000, scoped, tag = 'input window, operand 0, single buffered']
    #allocation4 [shape = 's32[1]{0}', space=sflag, size = 0x4, scoped, tag = 'scoped memory for tpu_custom_call.1']
    #allocation5 [shape = 's32[1]{0}', space=sflag, size = 0x4, scoped, tag = 'scoped memory for tpu_custom_call.1']
    #allocation6 [shape = 'u8[589824]{0}', space=vmem, size = 0x90000, scoped, tag = 'input window, operand 1, single buffered']
    #allocation7 [shape = 's32[1]{0}', space=sflag, size = 0x4, scoped, tag = 'scoped memory for tpu_custom_call.1']
    #allocation8 [shape = 'u8[589824]{0}', space=vmem, size = 0x90000, scoped, tag = 'input window, operand 4, single buffered']
    #allocation9 [shape = 'u8[393216]{0}', space=vmem, size = 0x60000, scoped, tag = 'output window, operand 0, single buffered']
    %12 = vsyncpa [#allocation4], 0
    %13 = vsyncpa [#allocation7], 0
    %14 = vsyncpa [#allocation5], 0
    // Predicated region
    $region2: #{tpu_custom_call.1} parent=1 // pred_check
      _
    $region3: #{tpu_custom_call.1} parent=1 // pred_check_branch
      %16 = sbr.rel (0) target = $region5
    $region4: #{tpu_custom_call.1} parent=1 // pred_region
      %s18 = ssub.s32 13056, 13056
      %19 = vsyncadd [#allocation4], %s18
      %s20 = sshll.u32 [#allocation3], 4
      %s21 = int_to_ptr.vmem [resolvable:$true] %s20
      %26 = dma.hbm_to_vmem [thread:$0]  %s0, 13056, %s21, [#allocation4], 128, 128, 8
    $region5: #{tpu_custom_call.1} parent=1 // pred_fallthru
      _
    // Predicated region
    $region6: #{tpu_custom_call.1} parent=1 // pred_check
      _
    $region7: #{tpu_custom_call.1} parent=1 // pred_check_branch
      %28 = sbr.rel (0) target = $region9
    $region8: #{tpu_custom_call.1} parent=1 // pred_region
      %s30 = ssub.s32 18432, 18432
      %31 = vsyncadd [#allocation7], %s30
      %s32 = sshll.u32 [#allocation6], 4
      %s33 = int_to_ptr.vmem [resolvable:$true] %s32
      %38 = dma.hbm_to_vmem [thread:$0]  %s1, 18432, %s33, [#allocation7], 128, 128, 8
    $region9: #{tpu_custom_call.1} parent=1 // pred_fallthru
      _
    // Predicated region
    $region10: #{tpu_custom_call.1} parent=1 // pred_check
      _
    $region11: #{tpu_custom_call.1} parent=1 // pred_check_branch
      %40 = sbr.rel (0) target = $region13
    $region12: #{tpu_custom_call.1} parent=1 // pred_region
      _
    $region13: #{tpu_custom_call.1} parent=1 // pred_fallthru
      _
    // Predicated region
    $region14: #{tpu_custom_call.1} parent=1 // pred_check
      _
    $region15: #{tpu_custom_call.1} parent=1 // pred_check_branch
      %42 = sbr.rel (0) target = $region17
    $region16: #{tpu_custom_call.1} parent=1 // pred_region
      _
    $region17: #{tpu_custom_call.1} parent=1 // pred_fallthru
      _
    // Predicated region
    $region18: #{tpu_custom_call.1} parent=1 // pred_check
      _
    $region19: #{tpu_custom_call.1} parent=1 // pred_check_branch
      %44 = sbr.rel (0) target = $region21
    $region20: #{tpu_custom_call.1} parent=1 // pred_region
      %s46 = ssub.s32 18432, 18432
      %47 = vsyncadd [#allocation7], %s46
      %s48 = sshll.u32 [#allocation8], 4
      %s49 = int_to_ptr.vmem [resolvable:$true] %s48
      %54 = dma.hbm_to_vmem [thread:$0]  %s4, 18432, %s49, [#allocation7], 128, 128, 8
    $region21: #{tpu_custom_call.1} parent=1 // pred_fallthru
      _
    // Predicated region
    $region22: #{tpu_custom_call.1} parent=1 // pred_check
      _
    $region23: #{tpu_custom_call.1} parent=1 // pred_check_branch
      %56 = sbr.rel (0) target = $region25
    $region24: #{tpu_custom_call.1} parent=1 // pred_region
      _
    $region25: #{tpu_custom_call.1} parent=1 // pred_fallthru
      _
    // Predicated region
    $region26: #{tpu_custom_call.1} parent=1 // pred_check
      _
    $region27: #{tpu_custom_call.1} parent=1 // pred_check_branch
      %58 = sbr.rel (0) target = $region29
    $region28: #{tpu_custom_call.1} parent=1 // pred_region
      _
    $region29: #{tpu_custom_call.1} parent=1 // pred_fallthru
      _
    // Predicated region
    $region30: #{tpu_custom_call.1} parent=1 // pred_check
      _
    $region31: #{tpu_custom_call.1} parent=1 // pred_check_branch
      %60 = sbr.rel (0) target = $region33
    $region32: #{tpu_custom_call.1} parent=1 // pred_region
      %61 = dma.done [#allocation4], 13056
    $region33: #{tpu_custom_call.1} parent=1 // pred_fallthru
      _
    // Predicated region
    $region34: #{tpu_custom_call.1} parent=1 // pred_check
      _
    $region35: #{tpu_custom_call.1} parent=1 // pred_check_branch
      %63 = sbr.rel (0) target = $region37
    $region36: #{tpu_custom_call.1} parent=1 // pred_region
      %64 = dma.done [#allocation7], 18432
    $region37: #{tpu_custom_call.1} parent=1 // pred_fallthru
      _
    // Predicated region
    $region38: #{tpu_custom_call.1} parent=1 // pred_check
      _
    $region39: #{tpu_custom_call.1} parent=1 // pred_check_branch
      %66 = sbr.rel (0) target = $region41
    $region40: #{tpu_custom_call.1} parent=1 // pred_region
      %67 = dma.done [#allocation7], 18432
    $region41: #{tpu_custom_call.1} parent=1 // pred_fallthru
      _
    %68 = vst [vmem:[#allocation2] sm:$0xff] 0.0
    %69 = vst [vmem:[#allocation2 + $0x8] sm:$0xff] 0.0
    %70 = vst [vmem:[#allocation2 + $0x10] sm:$0xff] 0.0
    %71 = vst [vmem:[#allocation2 + $0x318] sm:$0xff] 0.0
    %72 = vst [vmem:[#allocation2 + $0x320] sm:$0xff] 0.0
    %73 = vst [vmem:[#allocation2 + $0x328] sm:$0xff] 0.0
    loop: start=0, step=1, limit=3
    $region42: #{tpu_custom_call.1} parent=1 // loop_pre_header
      _
    $region43: #{tpu_custom_call.1} parent=1 // loop_header
      %s75 = sphi 0, %s79
      %p76 = scmp.ge.s32.totalorder %s75, 3
      %v80 = vphi 0.0, %v3630
      %v81 = vphi 0.0, %v3700
    $region44: #{tpu_custom_call.1} parent=1 // loop_header_branch
      %78 = sbr.rel (%p76) target = $region48
    $region45: #{tpu_custom_call.1} parent=1 // loop_body
      %s82 = smul.u32 %s75, 256
      %s83 = sadd.s32 %s82, 5
      %s84 = scalar_lea.vmem [#allocation3], %s83
      %v85 = vld [vmem:[%s84] sm:$0xff]
      %v86 = vld [vmem:[%s84 + $0x8] sm:$0xff]
      %v87 = vld [vmem:[%s84 + $0x10] sm:$0xff]
      %v88 = vld [vmem:[%s84 + $0x18] sm:$0xff]
      %v89 = vld [vmem:[%s84 + $0x20] sm:$0xff]
      %v90 = vld [vmem:[%s84 + $0x28] sm:$0xff]
      %v91 = vld [vmem:[%s84 + $0x30] sm:$0xff]
      %v92 = vld [vmem:[%s84 + $0x38] sm:$0xff]
      %v93 = vld [vmem:[%s84 + $0x40] sm:$0xff]
      %v94 = vld [vmem:[%s84 + $0x48] sm:$0xff]
      %v95 = vld [vmem:[%s84 + $0x50] sm:$0xff]
      %v96 = vld [vmem:[%s84 + $0x58] sm:$0xff]
      %v97 = vld [vmem:[%s84 + $0x60] sm:$0xff]
      %v98 = vld [vmem:[%s84 + $0x68] sm:$0xff]
      %v99 = vld [vmem:[%s84 + $0x70] sm:$0xff]
      %v100 = vld [vmem:[%s84 + $0x78] sm:$0xff]
      %v101 = vld [vmem:[%s84 + $0x80] sm:$0xff]
      %v102 = vld [vmem:[%s84 + $0x88] sm:$0xff]
      %v103 = vld [vmem:[%s84 + $0x90] sm:$0xff]
      %v104 = vld [vmem:[%s84 + $0x98] sm:$0xff]
      %v105 = vld [vmem:[%s84 + $0xa0] sm:$0xff]
      %v106 = vld [vmem:[%s84 + $0xa8] sm:$0xff]
      %v107 = vld [vmem:[%s84 + $0xb0] sm:$0xff]
      %v108 = vld [vmem:[%s84 + $0xb8] sm:$0xff]
      %v109 = vld [vmem:[%s84 + $0xc0] sm:$0xff]
      %v110 = vld [vmem:[%s84 + $0xc8] sm:$0xff]
      %v111 = vld [vmem:[%s84 + $0xd0] sm:$0xff]
      %v112 = vld [vmem:[%s84 + $0xd8] sm:$0xff]
      %v113 = vld [vmem:[%s84 + $0xe0] sm:$0xff]
      %v114 = vld [vmem:[%s84 + $0xe8] sm:$0xff]
      %v115 = vld [vmem:[%s84 + $0xf0] sm:$0xff]
      %v116 = vld [vmem:[%s84 + $0xf8] sm:$0xff]
      %v117 = vld [vmem:[#allocation6] sm:$0xff]
      %v118 = vld [vmem:[#allocation6 + $0x8] sm:$0xff]
      %v119 = vld [vmem:[#allocation6 + $0x10] sm:$0xff]
      %v120 = vld [vmem:[#allocation6 + $0x18] sm:$0xff]
      %v121 = vld [vmem:[#allocation6 + $0x20] sm:$0xff]
      %v122 = vld [vmem:[#allocation6 + $0x28] sm:$0xff]
      %v123 = vld [vmem:[#allocation6 + $0x30] sm:$0xff]
      %v124 = vld [vmem:[#allocation6 + $0x38] sm:$0xff]
      %v125 = vld [vmem:[#allocation6 + $0x40] sm:$0xff]
      %v126 = vld [vmem:[#allocation6 + $0x48] sm:$0xff]
      %v127 = vld [vmem:[#allocation6 + $0x50] sm:$0xff]
      %v128 = vld [vmem:[#allocation6 + $0x58] sm:$0xff]
      %v129 = vld [vmem:[#allocation6 + $0x60] sm:$0xff]
      %v130 = vld [vmem:[#allocation6 + $0x68] sm:$0xff]
      %v131 = vld [vmem:[#allocation6 + $0x70] sm:$0xff]
      %v132 = vld [vmem:[#allocation6 + $0x78] sm:$0xff]
      %s133 = sadd.s32 %s82, 6
      %s134 = scalar_lea.vmem [#allocation3], %s133
      %v135 = vld [vmem:[%s134] sm:$0xff]
      %v136 = vld [vmem:[%s134 + $0x8] sm:$0xff]
      %v137 = vld [vmem:[%s134 + $0x10] sm:$0xff]
      %v138 = vld [vmem:[%s134 + $0x18] sm:$0xff]
      %v139 = vld [vmem:[%s134 + $0x20] sm:$0xff]
      %v140 = vld [vmem:[%s134 + $0x28] sm:$0xff]
      %v141 = vld [vmem:[%s134 + $0x30] sm:$0xff]
      %v142 = vld [vmem:[%s134 + $0x38] sm:$0xff]
      %v143 = vld [vmem:[%s134 + $0x40] sm:$0xff]
      %v144 = vld [vmem:[%s134 + $0x48] sm:$0xff]
      %v145 = vld [vmem:[%s134 + $0x50] sm:$0xff]
      %v146 = vld [vmem:[%s134 + $0x58] sm:$0xff]
      %v147 = vld [vmem:[%s134 + $0x60] sm:$0xff]
      %v148 = vld [vmem:[%s134 + $0x68] sm:$0xff]
      %v149 = vld [vmem:[%s134 + $0x70] sm:$0xff]
      %v150 = vld [vmem:[%s134 + $0x78] sm:$0xff]
      %v151 = vld [vmem:[%s134 + $0x80] sm:$0xff]
      %v152 = vld [vmem:[%s134 + $0x88] sm:$0xff]
      %v153 = vld [vmem:[%s134 + $0x90] sm:$0xff]
      %v154 = vld [vmem:[%s134 + $0x98] sm:$0xff]
      %v155 = vld [vmem:[%s134 + $0xa0] sm:$0xff]
      %v156 = vld [vmem:[%s134 + $0xa8] sm:$0xff]
      %v157 = vld [vmem:[%s134 + $0xb0] sm:$0xff]
      %v158 = vld [vmem:[%s134 + $0xb8] sm:$0xff]
      %v159 = vld [vmem:[%s134 + $0xc0] sm:$0xff]
      %v160 = vld [vmem:[%s134 + $0xc8] sm:$0xff]
      %v161 = vld [vmem:[%s134 + $0xd0] sm:$0xff]
      %v162 = vld [vmem:[%s134 + $0xd8] sm:$0xff]
      %v163 = vld [vmem:[%s134 + $0xe0] sm:$0xff]
      %v164 = vld [vmem:[%s134 + $0xe8] sm:$0xff]
      %v165 = vld [vmem:[%s134 + $0xf0] sm:$0xff]
      %v166 = vld [vmem:[%s134 + $0xf8] sm:$0xff]
      %s167 = scalar_lea.vmem [#allocation6], 128
      %v168 = vld [vmem:[%s167] sm:$0xff]
      %v169 = vld [vmem:[%s167 + $0x8] sm:$0xff]
      %v170 = vld [vmem:[%s167 + $0x10] sm:$0xff]
      %v171 = vld [vmem:[%s167 + $0x18] sm:$0xff]
      %v172 = vld [vmem:[%s167 + $0x20] sm:$0xff]
      %v173 = vld [vmem:[%s167 + $0x28] sm:$0xff]
      %v174 = vld [vmem:[%s167 + $0x30] sm:$0xff]
      %v175 = vld [vmem:[%s167 + $0x38] sm:$0xff]
      %v176 = vld [vmem:[%s167 + $0x40] sm:$0xff]
      %v177 = vld [vmem:[%s167 + $0x48] sm:$0xff]
      %v178 = vld [vmem:[%s167 + $0x50] sm:$0xff]
      %v179 = vld [vmem:[%s167 + $0x58] sm:$0xff]
      %v180 = vld [vmem:[%s167 + $0x60] sm:$0xff]
      %v181 = vld [vmem:[%s167 + $0x68] sm:$0xff]
      %v182 = vld [vmem:[%s167 + $0x70] sm:$0xff]
      %v183 = vld [vmem:[%s167 + $0x78] sm:$0xff]
      %184 = vmatprep.subr.mxu0 0.0
      %185 = vmatpush1.msra.mxu0 %v183
      %186 = vmatprep.subr.mxu0 0.0
      %187 = vmatpush1.msra.mxu0 %v182
      %188 = vmatprep.subr.mxu0 0.0
      %189 = vmatpush1.msra.mxu0 %v181
      %190 = vmatprep.subr.mxu0 0.0
      %191 = vmatpush1.msra.mxu0 %v180
      %192 = vmatprep.subr.mxu0 0.0
      %193 = vmatpush1.msra.mxu0 %v179
      %194 = vmatprep.subr.mxu0 0.0
      %195 = vmatpush1.msra.mxu0 %v178
      %196 = vmatprep.subr.mxu0 0.0
      %197 = vmatpush1.msra.mxu0 %v177
      %198 = vmatprep.subr.mxu0 0.0
      %199 = vmatpush1.msra.mxu0 %v176
      %200 = vmatprep.subr.mxu0 0.0
      %201 = vmatpush1.msra.mxu0 %v175
      %202 = vmatprep.subr.mxu0 0.0
      %203 = vmatpush1.msra.mxu0 %v174
      %204 = vmatprep.subr.mxu0 0.0
      %205 = vmatpush1.msra.mxu0 %v173
      %206 = vmatprep.subr.mxu0 0.0
      %207 = vmatpush1.msra.mxu0 %v172
      %208 = vmatprep.subr.mxu0 0.0
      %209 = vmatpush1.msra.mxu0 %v171
      %210 = vmatprep.subr.mxu0 0.0
      %211 = vmatpush1.msra.mxu0 %v170
      %212 = vmatprep.subr.mxu0 0.0
      %213 = vmatpush1.msra.mxu0 %v169
      %214 = vmatprep.subr.mxu0 0.0
      %215 = vmatpush1.msra.mxu0 %v168
      %216 = vmatprep.subr.mxu0 0.0
      %217 = vmatpush2.msra.mxu0 0.0
      %218 = vmatprep.subr.mxu0 0.0
      %219 = vmatpush2.msra.mxu0 0.0
      %220 = vmatprep.subr.mxu0 0.0
      %221 = vmatpush2.msra.mxu0 0.0
      %222 = vmatprep.subr.mxu0 0.0
      %223 = vmatpush2.msra.mxu0 0.0
      %224 = vmatprep.subr.mxu0 0.0
      %225 = vmatpush2.msra.mxu0 0.0
      %226 = vmatprep.subr.mxu0 0.0
      %227 = vmatpush2.msra.mxu0 0.0
      %228 = vmatprep.subr.mxu0 0.0
      %229 = vmatpush2.msra.mxu0 0.0
      %230 = vmatprep.subr.mxu0 0.0
      %231 = vmatpush2.msra.mxu0 0.0
      %232 = vmatprep.subr.mxu0 0.0
      %233 = vmatpush2.msra.mxu0 0.0
      %234 = vmatprep.subr.mxu0 0.0
      %235 = vmatpush2.msra.mxu0 0.0
      %236 = vmatprep.subr.mxu0 0.0
      %237 = vmatpush2.msra.mxu0 0.0
      %238 = vmatprep.subr.mxu0 0.0
      %239 = vmatpush2.msra.mxu0 0.0
      %240 = vmatprep.subr.mxu0 0.0
      %241 = vmatpush2.msra.mxu0 0.0
      %242 = vmatprep.subr.mxu0 0.0
      %243 = vmatpush2.msra.mxu0 0.0
      %244 = vmatprep.subr.mxu0 0.0
      %245 = vmatpush2.msra.mxu0 0.0
      %246 = vmatprep.subr.mxu0 0.0
      %247 = vmatpush2.msra.mxu0 0.0
      %248 = vmatprep.mubr.f32.mxu0 0.0
      %249 = vmatmul.mubr.f32.gmra.mxu0 %v135
      %v250 = vpop.f32.mrf.mxu0
      %v251 = vadd.f32 0.0, %v250
      %v252 = vpop.f32.mrf.mxu0
      %253 = vmatprep.mubr.f32.mxu0 0.0
      %254 = vmatmul.mubr.f32.gmra.mxu0 %v136
      %v255 = vpop.f32.mrf.mxu0
      %v256 = vadd.f32 0.0, %v255
      %v257 = vpop.f32.mrf.mxu0
      %258 = vmatprep.mubr.f32.mxu0 0.0
      %259 = vmatmul.mubr.f32.gmra.mxu0 %v137
      %v260 = vpop.f32.mrf.mxu0
      %v261 = vadd.f32 0.0, %v260
      %v262 = vpop.f32.mrf.mxu0
      %263 = vmatprep.mubr.f32.mxu0 0.0
      %264 = vmatmul.mubr.f32.gmra.mxu0 %v138
      %v265 = vpop.f32.mrf.mxu0
      %v266 = vadd.f32 0.0, %v265
      %v267 = vpop.f32.mrf.mxu0
      %268 = vmatprep.mubr.f32.mxu0 0.0
      %269 = vmatmul.mubr.f32.gmra.mxu0 %v139
      %v270 = vpop.f32.mrf.mxu0
      %v271 = vadd.f32 0.0, %v270
      %v272 = vpop.f32.mrf.mxu0
      %273 = vmatprep.mubr.f32.mxu0 0.0
      %274 = vmatmul.mubr.f32.gmra.mxu0 %v140
      %v275 = vpop.f32.mrf.mxu0
      %v276 = vadd.f32 0.0, %v275
      %v277 = vpop.f32.mrf.mxu0
      %278 = vmatprep.mubr.f32.mxu0 0.0
      %279 = vmatmul.mubr.f32.gmra.mxu0 %v141
      %v280 = vpop.f32.mrf.mxu0
      %v281 = vadd.f32 0.0, %v280
      %v282 = vpop.f32.mrf.mxu0
      %283 = vmatprep.mubr.f32.mxu0 0.0
      %284 = vmatmul.mubr.f32.gmra.mxu0 %v142
      %v285 = vpop.f32.mrf.mxu0
      %v286 = vadd.f32 0.0, %v285
      %v287 = vpop.f32.mrf.mxu0
      %288 = vmatprep.mubr.f32.mxu0 0.0
      %289 = vmatmul.mubr.f32.gmra.mxu0 %v143
      %v290 = vpop.f32.mrf.mxu0
      %v291 = vadd.f32 0.0, %v290
      %v292 = vpop.f32.mrf.mxu0
      %293 = vmatprep.mubr.f32.mxu0 0.0
      %294 = vmatmul.mubr.f32.gmra.mxu0 %v144
      %v295 = vpop.f32.mrf.mxu0
      %v296 = vadd.f32 0.0, %v295
      %v297 = vpop.f32.mrf.mxu0
      %298 = vmatprep.mubr.f32.mxu0 0.0
      %299 = vmatmul.mubr.f32.gmra.mxu0 %v145
      %v300 = vpop.f32.mrf.mxu0
      %v301 = vadd.f32 0.0, %v300
      %v302 = vpop.f32.mrf.mxu0
      %303 = vmatprep.mubr.f32.mxu0 0.0
      %304 = vmatmul.mubr.f32.gmra.mxu0 %v146
      %v305 = vpop.f32.mrf.mxu0
      %v306 = vadd.f32 0.0, %v305
      %v307 = vpop.f32.mrf.mxu0
      %308 = vmatprep.mubr.f32.mxu0 0.0
      %309 = vmatmul.mubr.f32.gmra.mxu0 %v147
      %v310 = vpop.f32.mrf.mxu0
      %v311 = vadd.f32 0.0, %v310
      %v312 = vpop.f32.mrf.mxu0
      %313 = vmatprep.mubr.f32.mxu0 0.0
      %314 = vmatmul.mubr.f32.gmra.mxu0 %v148
      %v315 = vpop.f32.mrf.mxu0
      %v316 = vadd.f32 0.0, %v315
      %v317 = vpop.f32.mrf.mxu0
      %318 = vmatprep.mubr.f32.mxu0 0.0
      %319 = vmatmul.mubr.f32.gmra.mxu0 %v149
      %v320 = vpop.f32.mrf.mxu0
      %v321 = vadd.f32 0.0, %v320
      %v322 = vpop.f32.mrf.mxu0
      %323 = vmatprep.mubr.f32.mxu0 0.0
      %324 = vmatmul.mubr.f32.gmra.mxu0 %v150
      %v325 = vpop.f32.mrf.mxu0
      %v326 = vadd.f32 0.0, %v325
      %v327 = vpop.f32.mrf.mxu0
      %328 = vmatprep.mubr.f32.mxu0 0.0
      %329 = vmatmul.mubr.f32.gmra.mxu0 %v151
      %v330 = vpop.f32.mrf.mxu0
      %v331 = vadd.f32 0.0, %v330
      %v332 = vpop.f32.mrf.mxu0
      %333 = vmatprep.mubr.f32.mxu0 0.0
      %334 = vmatmul.mubr.f32.gmra.mxu0 %v152
      %v335 = vpop.f32.mrf.mxu0
      %v336 = vadd.f32 0.0, %v335
      %v337 = vpop.f32.mrf.mxu0
      %338 = vmatprep.mubr.f32.mxu0 0.0
      %339 = vmatmul.mubr.f32.gmra.mxu0 %v153
      %v340 = vpop.f32.mrf.mxu0
      %v341 = vadd.f32 0.0, %v340
      %v342 = vpop.f32.mrf.mxu0
      %343 = vmatprep.mubr.f32.mxu0 0.0
      %344 = vmatmul.mubr.f32.gmra.mxu0 %v154
      %v345 = vpop.f32.mrf.mxu0
      %v346 = vadd.f32 0.0, %v345
      %v347 = vpop.f32.mrf.mxu0
      %348 = vmatprep.mubr.f32.mxu0 0.0
      %349 = vmatmul.mubr.f32.gmra.mxu0 %v155
      %v350 = vpop.f32.mrf.mxu0
      %v351 = vadd.f32 0.0, %v350
      %v352 = vpop.f32.mrf.mxu0
      %353 = vmatprep.mubr.f32.mxu0 0.0
      %354 = vmatmul.mubr.f32.gmra.mxu0 %v156
      %v355 = vpop.f32.mrf.mxu0
      %v356 = vadd.f32 0.0, %v355
      %v357 = vpop.f32.mrf.mxu0
      %358 = vmatprep.mubr.f32.mxu0 0.0
      %359 = vmatmul.mubr.f32.gmra.mxu0 %v157
      %v360 = vpop.f32.mrf.mxu0
      %v361 = vadd.f32 0.0, %v360
      %v362 = vpop.f32.mrf.mxu0
      %363 = vmatprep.mubr.f32.mxu0 0.0
      %364 = vmatmul.mubr.f32.gmra.mxu0 %v158
      %v365 = vpop.f32.mrf.mxu0
      %v366 = vadd.f32 0.0, %v365
      %v367 = vpop.f32.mrf.mxu0
      %368 = vmatprep.mubr.f32.mxu0 0.0
      %369 = vmatmul.mubr.f32.gmra.mxu0 %v159
      %v370 = vpop.f32.mrf.mxu0
      %v371 = vadd.f32 0.0, %v370
      %v372 = vpop.f32.mrf.mxu0
      %373 = vmatprep.mubr.f32.mxu0 0.0
      %374 = vmatmul.mubr.f32.gmra.mxu0 %v160
      %v375 = vpop.f32.mrf.mxu0
      %v376 = vadd.f32 0.0, %v375
      %v377 = vpop.f32.mrf.mxu0
      %378 = vmatprep.mubr.f32.mxu0 0.0
      %379 = vmatmul.mubr.f32.gmra.mxu0 %v161
      %v380 = vpop.f32.mrf.mxu0
      %v381 = vadd.f32 0.0, %v380
      %v382 = vpop.f32.mrf.mxu0
      %383 = vmatprep.mubr.f32.mxu0 0.0
      %384 = vmatmul.mubr.f32.gmra.mxu0 %v162
      %v385 = vpop.f32.mrf.mxu0
      %v386 = vadd.f32 0.0, %v385
      %v387 = vpop.f32.mrf.mxu0
      %388 = vmatprep.mubr.f32.mxu0 0.0
      %389 = vmatmul.mubr.f32.gmra.mxu0 %v163
      %v390 = vpop.f32.mrf.mxu0
      %v391 = vadd.f32 0.0, %v390
      %v392 = vpop.f32.mrf.mxu0
      %393 = vmatprep.mubr.f32.mxu0 0.0
      %394 = vmatmul.mubr.f32.gmra.mxu0 %v164
      %v395 = vpop.f32.mrf.mxu0
      %v396 = vadd.f32 0.0, %v395
      %v397 = vpop.f32.mrf.mxu0
      %398 = vmatprep.mubr.f32.mxu0 0.0
      %399 = vmatmul.mubr.f32.gmra.mxu0 %v165
      %v400 = vpop.f32.mrf.mxu0
      %v401 = vadd.f32 0.0, %v400
      %v402 = vpop.f32.mrf.mxu0
      %403 = vmatprep.mubr.f32.mxu0 0.0
      %404 = vmatmul.mubr.f32.gmra.mxu0 %v166
      %v405 = vpop.f32.mrf.mxu0
      %v406 = vadd.f32 0.0, %v405
      %v407 = vpop.f32.mrf.mxu0
      %408 = vdwg.mxu0
      %409 = vmatprep.subr.mxu0 0.0
      %410 = vmatpush1.msra.mxu0 %v132
      %411 = vmatprep.subr.mxu0 0.0
      %412 = vmatpush1.msra.mxu0 %v131
      %413 = vmatprep.subr.mxu0 0.0
      %414 = vmatpush1.msra.mxu0 %v130
      %415 = vmatprep.subr.mxu0 0.0
      %416 = vmatpush1.msra.mxu0 %v129
      %417 = vmatprep.subr.mxu0 0.0
      %418 = vmatpush1.msra.mxu0 %v128
      %419 = vmatprep.subr.mxu0 0.0
      %420 = vmatpush1.msra.mxu0 %v127
      %421 = vmatprep.subr.mxu0 0.0
      %422 = vmatpush1.msra.mxu0 %v126
      %423 = vmatprep.subr.mxu0 0.0
      %424 = vmatpush1.msra.mxu0 %v125
      %425 = vmatprep.subr.mxu0 0.0
      %426 = vmatpush1.msra.mxu0 %v124
      %427 = vmatprep.subr.mxu0 0.0
      %428 = vmatpush1.msra.mxu0 %v123
      %429 = vmatprep.subr.mxu0 0.0
      %430 = vmatpush1.msra.mxu0 %v122
      %431 = vmatprep.subr.mxu0 0.0
      %432 = vmatpush1.msra.mxu0 %v121
      %433 = vmatprep.subr.mxu0 0.0
      %434 = vmatpush1.msra.mxu0 %v120
      %435 = vmatprep.subr.mxu0 0.0
      %436 = vmatpush1.msra.mxu0 %v119
      %437 = vmatprep.subr.mxu0 0.0
      %438 = vmatpush1.msra.mxu0 %v118
      %439 = vmatprep.subr.mxu0 0.0
      %440 = vmatpush1.msra.mxu0 %v117
      %441 = vmatprep.subr.mxu0 0.0
      %442 = vmatpush2.msra.mxu0 0.0
      %443 = vmatprep.subr.mxu0 0.0
      %444 = vmatpush2.msra.mxu0 0.0
      %445 = vmatprep.subr.mxu0 0.0
      %446 = vmatpush2.msra.mxu0 0.0
      %447 = vmatprep.subr.mxu0 0.0
      %448 = vmatpush2.msra.mxu0 0.0
      %449 = vmatprep.subr.mxu0 0.0
      %450 = vmatpush2.msra.mxu0 0.0
      %451 = vmatprep.subr.mxu0 0.0
      %452 = vmatpush2.msra.mxu0 0.0
      %453 = vmatprep.subr.mxu0 0.0
      %454 = vmatpush2.msra.mxu0 0.0
      %455 = vmatprep.subr.mxu0 0.0
      %456 = vmatpush2.msra.mxu0 0.0
      %457 = vmatprep.subr.mxu0 0.0
      %458 = vmatpush2.msra.mxu0 0.0
      %459 = vmatprep.subr.mxu0 0.0
      %460 = vmatpush2.msra.mxu0 0.0
      %461 = vmatprep.subr.mxu0 0.0
      %462 = vmatpush2.msra.mxu0 0.0
      %463 = vmatprep.subr.mxu0 0.0
      %464 = vmatpush2.msra.mxu0 0.0
      %465 = vmatprep.subr.mxu0 0.0
      %466 = vmatpush2.msra.mxu0 0.0
      %467 = vmatprep.subr.mxu0 0.0
      %468 = vmatpush2.msra.mxu0 0.0
      %469 = vmatprep.subr.mxu0 0.0
      %470 = vmatpush2.msra.mxu0 0.0
      %471 = vmatprep.subr.mxu0 0.0
      %472 = vmatpush2.msra.mxu0 0.0
      %473 = vmatprep.mubr.f32.mxu0 0.0
      %474 = vmatmul.mubr.f32.gmra.mxu0 %v85
      %v475 = vpop.f32.mrf.mxu0
      %v476 = vadd.f32 %v251, %v475
      %v477 = vpop.f32.mrf.mxu0
      %478 = vmatprep.mubr.f32.mxu0 0.0
      %479 = vmatmul.mubr.f32.gmra.mxu0 %v86
      %v480 = vpop.f32.mrf.mxu0
      %v481 = vadd.f32 %v256, %v480
      %v482 = vpop.f32.mrf.mxu0
      %483 = vmatprep.mubr.f32.mxu0 0.0
      %484 = vmatmul.mubr.f32.gmra.mxu0 %v87
      %v485 = vpop.f32.mrf.mxu0
      %v486 = vadd.f32 %v261, %v485
      %v487 = vpop.f32.mrf.mxu0
      %488 = vmatprep.mubr.f32.mxu0 0.0
      %489 = vmatmul.mubr.f32.gmra.mxu0 %v88
      %v490 = vpop.f32.mrf.mxu0
      %v491 = vadd.f32 %v266, %v490
      %v492 = vpop.f32.mrf.mxu0
      %493 = vmatprep.mubr.f32.mxu0 0.0
      %494 = vmatmul.mubr.f32.gmra.mxu0 %v89
      %v495 = vpop.f32.mrf.mxu0
      %v496 = vadd.f32 %v271, %v495
      %v497 = vpop.f32.mrf.mxu0
      %498 = vmatprep.mubr.f32.mxu0 0.0
      %499 = vmatmul.mubr.f32.gmra.mxu0 %v90
      %v500 = vpop.f32.mrf.mxu0
      %v501 = vadd.f32 %v276, %v500
      %v502 = vpop.f32.mrf.mxu0
      %503 = vmatprep.mubr.f32.mxu0 0.0
      %504 = vmatmul.mubr.f32.gmra.mxu0 %v91
      %v505 = vpop.f32.mrf.mxu0
      %v506 = vadd.f32 %v281, %v505
      %v507 = vpop.f32.mrf.mxu0
      %508 = vmatprep.mubr.f32.mxu0 0.0
      %509 = vmatmul.mubr.f32.gmra.mxu0 %v92
      %v510 = vpop.f32.mrf.mxu0
      %v511 = vadd.f32 %v286, %v510
      %v512 = vpop.f32.mrf.mxu0
      %513 = vmatprep.mubr.f32.mxu0 0.0
      %514 = vmatmul.mubr.f32.gmra.mxu0 %v93
      %v515 = vpop.f32.mrf.mxu0
      %v516 = vadd.f32 %v291, %v515
      %v517 = vpop.f32.mrf.mxu0
      %518 = vmatprep.mubr.f32.mxu0 0.0
      %519 = vmatmul.mubr.f32.gmra.mxu0 %v94
      %v520 = vpop.f32.mrf.mxu0
      %v521 = vadd.f32 %v296, %v520
      %v522 = vpop.f32.mrf.mxu0
      %523 = vmatprep.mubr.f32.mxu0 0.0
      %524 = vmatmul.mubr.f32.gmra.mxu0 %v95
      %v525 = vpop.f32.mrf.mxu0
      %v526 = vadd.f32 %v301, %v525
      %v527 = vpop.f32.mrf.mxu0
      %528 = vmatprep.mubr.f32.mxu0 0.0
      %529 = vmatmul.mubr.f32.gmra.mxu0 %v96
      %v530 = vpop.f32.mrf.mxu0
      %v531 = vadd.f32 %v306, %v530
      %v532 = vpop.f32.mrf.mxu0
      %533 = vmatprep.mubr.f32.mxu0 0.0
      %534 = vmatmul.mubr.f32.gmra.mxu0 %v97
      %v535 = vpop.f32.mrf.mxu0
      %v536 = vadd.f32 %v311, %v535
      %v537 = vpop.f32.mrf.mxu0
      %538 = vmatprep.mubr.f32.mxu0 0.0
      %539 = vmatmul.mubr.f32.gmra.mxu0 %v98
      %v540 = vpop.f32.mrf.mxu0
      %v541 = vadd.f32 %v316, %v540
      %v542 = vpop.f32.mrf.mxu0
      %543 = vmatprep.mubr.f32.mxu0 0.0
      %544 = vmatmul.mubr.f32.gmra.mxu0 %v99
      %v545 = vpop.f32.mrf.mxu0
      %v546 = vadd.f32 %v321, %v545
      %v547 = vpop.f32.mrf.mxu0
      %548 = vmatprep.mubr.f32.mxu0 0.0
      %549 = vmatmul.mubr.f32.gmra.mxu0 %v100
      %v550 = vpop.f32.mrf.mxu0
      %v551 = vadd.f32 %v326, %v550
      %v552 = vpop.f32.mrf.mxu0
      %553 = vmatprep.mubr.f32.mxu0 0.0
      %554 = vmatmul.mubr.f32.gmra.mxu0 %v101
      %v555 = vpop.f32.mrf.mxu0
      %v556 = vadd.f32 %v331, %v555
      %v557 = vpop.f32.mrf.mxu0
      %558 = vmatprep.mubr.f32.mxu0 0.0
      %559 = vmatmul.mubr.f32.gmra.mxu0 %v102
      %v560 = vpop.f32.mrf.mxu0
      %v561 = vadd.f32 %v336, %v560
      %v562 = vpop.f32.mrf.mxu0
      %563 = vmatprep.mubr.f32.mxu0 0.0
      %564 = vmatmul.mubr.f32.gmra.mxu0 %v103
      %v565 = vpop.f32.mrf.mxu0
      %v566 = vadd.f32 %v341, %v565
      %v567 = vpop.f32.mrf.mxu0
      %568 = vmatprep.mubr.f32.mxu0 0.0
      %569 = vmatmul.mubr.f32.gmra.mxu0 %v104
      %v570 = vpop.f32.mrf.mxu0
      %v571 = vadd.f32 %v346, %v570
      %v572 = vpop.f32.mrf.mxu0
      %573 = vmatprep.mubr.f32.mxu0 0.0
      %574 = vmatmul.mubr.f32.gmra.mxu0 %v105
      %v575 = vpop.f32.mrf.mxu0
      %v576 = vadd.f32 %v351, %v575
      %v577 = vpop.f32.mrf.mxu0
      %578 = vmatprep.mubr.f32.mxu0 0.0
      %579 = vmatmul.mubr.f32.gmra.mxu0 %v106
      %v580 = vpop.f32.mrf.mxu0
      %v581 = vadd.f32 %v356, %v580
      %v582 = vpop.f32.mrf.mxu0
      %583 = vmatprep.mubr.f32.mxu0 0.0
      %584 = vmatmul.mubr.f32.gmra.mxu0 %v107
      %v585 = vpop.f32.mrf.mxu0
      %v586 = vadd.f32 %v361, %v585
      %v587 = vpop.f32.mrf.mxu0
      %588 = vmatprep.mubr.f32.mxu0 0.0
      %589 = vmatmul.mubr.f32.gmra.mxu0 %v108
      %v590 = vpop.f32.mrf.mxu0
      %v591 = vadd.f32 %v366, %v590
      %v592 = vpop.f32.mrf.mxu0
      %593 = vmatprep.mubr.f32.mxu0 0.0
      %594 = vmatmul.mubr.f32.gmra.mxu0 %v109
      %v595 = vpop.f32.mrf.mxu0
      %v596 = vadd.f32 %v371, %v595
      %v597 = vpop.f32.mrf.mxu0
      %598 = vmatprep.mubr.f32.mxu0 0.0
      %599 = vmatmul.mubr.f32.gmra.mxu0 %v110
      %v600 = vpop.f32.mrf.mxu0
      %v601 = vadd.f32 %v376, %v600
      %v602 = vpop.f32.mrf.mxu0
      %603 = vmatprep.mubr.f32.mxu0 0.0
      %604 = vmatmul.mubr.f32.gmra.mxu0 %v111
      %v605 = vpop.f32.mrf.mxu0
      %v606 = vadd.f32 %v381, %v605
      %v607 = vpop.f32.mrf.mxu0
      %608 = vmatprep.mubr.f32.mxu0 0.0
      %609 = vmatmul.mubr.f32.gmra.mxu0 %v112
      %v610 = vpop.f32.mrf.mxu0
      %v611 = vadd.f32 %v386, %v610
      %v612 = vpop.f32.mrf.mxu0
      %613 = vmatprep.mubr.f32.mxu0 0.0
      %614 = vmatmul.mubr.f32.gmra.mxu0 %v113
      %v615 = vpop.f32.mrf.mxu0
      %v616 = vadd.f32 %v391, %v615
      %v617 = vpop.f32.mrf.mxu0
      %618 = vmatprep.mubr.f32.mxu0 0.0
      %619 = vmatmul.mubr.f32.gmra.mxu0 %v114
      %v620 = vpop.f32.mrf.mxu0
      %v621 = vadd.f32 %v396, %v620
      %v622 = vpop.f32.mrf.mxu0
      %623 = vmatprep.mubr.f32.mxu0 0.0
      %624 = vmatmul.mubr.f32.gmra.mxu0 %v115
      %v625 = vpop.f32.mrf.mxu0
      %v626 = vadd.f32 %v401, %v625
      %v627 = vpop.f32.mrf.mxu0
      %628 = vmatprep.mubr.f32.mxu0 0.0
      %629 = vmatmul.mubr.f32.gmra.mxu0 %v116
      %v630 = vpop.f32.mrf.mxu0
      %v631 = vadd.f32 %v406, %v630
      %v632 = vpop.f32.mrf.mxu0
      %633 = vdwg.mxu0
      %s634 = sadd.s32 %s82, 7
      %s635 = scalar_lea.vmem [#allocation3], %s634
      %v636 = vld [vmem:[%s635] sm:$0xff]
      %v637 = vld [vmem:[%s635 + $0x8] sm:$0xff]
      %v638 = vld [vmem:[%s635 + $0x10] sm:$0xff]
      %v639 = vld [vmem:[%s635 + $0x18] sm:$0xff]
      %v640 = vld [vmem:[%s635 + $0x20] sm:$0xff]
      %v641 = vld [vmem:[%s635 + $0x28] sm:$0xff]
      %v642 = vld [vmem:[%s635 + $0x30] sm:$0xff]
      %v643 = vld [vmem:[%s635 + $0x38] sm:$0xff]
      %v644 = vld [vmem:[%s635 + $0x40] sm:$0xff]
      %v645 = vld [vmem:[%s635 + $0x48] sm:$0xff]
      %v646 = vld [vmem:[%s635 + $0x50] sm:$0xff]
      %v647 = vld [vmem:[%s635 + $0x58] sm:$0xff]
      %v648 = vld [vmem:[%s635 + $0x60] sm:$0xff]
      %v649 = vld [vmem:[%s635 + $0x68] sm:$0xff]
      %v650 = vld [vmem:[%s635 + $0x70] sm:$0xff]
      %v651 = vld [vmem:[%s635 + $0x78] sm:$0xff]
      %v652 = vld [vmem:[%s635 + $0x80] sm:$0xff]
      %v653 = vld [vmem:[%s635 + $0x88] sm:$0xff]
      %v654 = vld [vmem:[%s635 + $0x90] sm:$0xff]
      %v655 = vld [vmem:[%s635 + $0x98] sm:$0xff]
      %v656 = vld [vmem:[%s635 + $0xa0] sm:$0xff]
      %v657 = vld [vmem:[%s635 + $0xa8] sm:$0xff]
      %v658 = vld [vmem:[%s635 + $0xb0] sm:$0xff]
      %v659 = vld [vmem:[%s635 + $0xb8] sm:$0xff]
      %v660 = vld [vmem:[%s635 + $0xc0] sm:$0xff]
      %v661 = vld [vmem:[%s635 + $0xc8] sm:$0xff]
      %v662 = vld [vmem:[%s635 + $0xd0] sm:$0xff]
      %v663 = vld [vmem:[%s635 + $0xd8] sm:$0xff]
      %v664 = vld [vmem:[%s635 + $0xe0] sm:$0xff]
      %v665 = vld [vmem:[%s635 + $0xe8] sm:$0xff]
      %v666 = vld [vmem:[%s635 + $0xf0] sm:$0xff]
      %v667 = vld [vmem:[%s635 + $0xf8] sm:$0xff]
      %s668 = scalar_lea.vmem [#allocation6], 256
      %v669 = vld [vmem:[%s668] sm:$0xff]
      %v670 = vld [vmem:[%s668 + $0x8] sm:$0xff]
      %v671 = vld [vmem:[%s668 + $0x10] sm:$0xff]
      %v672 = vld [vmem:[%s668 + $0x18] sm:$0xff]
      %v673 = vld [vmem:[%s668 + $0x20] sm:$0xff]
      %v674 = vld [vmem:[%s668 + $0x28] sm:$0xff]
      %v675 = vld [vmem:[%s668 + $0x30] sm:$0xff]
      %v676 = vld [vmem:[%s668 + $0x38] sm:$0xff]
      %v677 = vld [vmem:[%s668 + $0x40] sm:$0xff]
      %v678 = vld [vmem:[%s668 + $0x48] sm:$0xff]
      %v679 = vld [vmem:[%s668 + $0x50] sm:$0xff]
      %v680 = vld [vmem:[%s668 + $0x58] sm:$0xff]
      %v681 = vld [vmem:[%s668 + $0x60] sm:$0xff]
      %v682 = vld [vmem:[%s668 + $0x68] sm:$0xff]
      %v683 = vld [vmem:[%s668 + $0x70] sm:$0xff]
      %v684 = vld [vmem:[%s668 + $0x78] sm:$0xff]
      %685 = vmatprep.subr.mxu0 0.0
      %686 = vmatpush1.msra.mxu0 %v684
      %687 = vmatprep.subr.mxu0 0.0
      %688 = vmatpush1.msra.mxu0 %v683
      %689 = vmatprep.subr.mxu0 0.0
      %690 = vmatpush1.msra.mxu0 %v682
      %691 = vmatprep.subr.mxu0 0.0
      %692 = vmatpush1.msra.mxu0 %v681
      %693 = vmatprep.subr.mxu0 0.0
      %694 = vmatpush1.msra.mxu0 %v680
      %695 = vmatprep.subr.mxu0 0.0
      %696 = vmatpush1.msra.mxu0 %v679
      %697 = vmatprep.subr.mxu0 0.0
      %698 = vmatpush1.msra.mxu0 %v678
      %699 = vmatprep.subr.mxu0 0.0
      %700 = vmatpush1.msra.mxu0 %v677
      %701 = vmatprep.subr.mxu0 0.0
      %702 = vmatpush1.msra.mxu0 %v676
      %703 = vmatprep.subr.mxu0 0.0
      %704 = vmatpush1.msra.mxu0 %v675
      %705 = vmatprep.subr.mxu0 0.0
      %706 = vmatpush1.msra.mxu0 %v674
      %707 = vmatprep.subr.mxu0 0.0
      %708 = vmatpush1.msra.mxu0 %v673
      %709 = vmatprep.subr.mxu0 0.0
      %710 = vmatpush1.msra.mxu0 %v672
      %711 = vmatprep.subr.mxu0 0.0
      %712 = vmatpush1.msra.mxu0 %v671
      %713 = vmatprep.subr.mxu0 0.0
      %714 = vmatpush1.msra.mxu0 %v670
      %715 = vmatprep.subr.mxu0 0.0
      %716 = vmatpush1.msra.mxu0 %v669
      %717 = vmatprep.subr.mxu0 0.0
      %718 = vmatpush2.msra.mxu0 0.0
      %719 = vmatprep.subr.mxu0 0.0
      %720 = vmatpush2.msra.mxu0 0.0
      %721 = vmatprep.subr.mxu0 0.0
      %722 = vmatpush2.msra.mxu0 0.0
      %723 = vmatprep.subr.mxu0 0.0
      %724 = vmatpush2.msra.mxu0 0.0
      %725 = vmatprep.subr.mxu0 0.0
      %726 = vmatpush2.msra.mxu0 0.0
      %727 = vmatprep.subr.mxu0 0.0
      %728 = vmatpush2.msra.mxu0 0.0
      %729 = vmatprep.subr.mxu0 0.0
      %730 = vmatpush2.msra.mxu0 0.0
      %731 = vmatprep.subr.mxu0 0.0
      %732 = vmatpush2.msra.mxu0 0.0
      %733 = vmatprep.subr.mxu0 0.0
      %734 = vmatpush2.msra.mxu0 0.0
      %735 = vmatprep.subr.mxu0 0.0
      %736 = vmatpush2.msra.mxu0 0.0
      %737 = vmatprep.subr.mxu0 0.0
      %738 = vmatpush2.msra.mxu0 0.0
      %739 = vmatprep.subr.mxu0 0.0
      %740 = vmatpush2.msra.mxu0 0.0
      %741 = vmatprep.subr.mxu0 0.0
      %742 = vmatpush2.msra.mxu0 0.0
      %743 = vmatprep.subr.mxu0 0.0
      %744 = vmatpush2.msra.mxu0 0.0
      %745 = vmatprep.subr.mxu0 0.0
      %746 = vmatpush2.msra.mxu0 0.0
      %747 = vmatprep.subr.mxu0 0.0
      %748 = vmatpush2.msra.mxu0 0.0
      %749 = vmatprep.mubr.f32.mxu0 0.0
      %750 = vmatmul.mubr.f32.gmra.mxu0 %v636
      %v751 = vpop.f32.mrf.mxu0
      %v752 = vadd.f32 0.0, %v751
      %v753 = vpop.f32.mrf.mxu0
      %754 = vmatprep.mubr.f32.mxu0 0.0
      %755 = vmatmul.mubr.f32.gmra.mxu0 %v637
      %v756 = vpop.f32.mrf.mxu0
      %v757 = vadd.f32 0.0, %v756
      %v758 = vpop.f32.mrf.mxu0
      %759 = vmatprep.mubr.f32.mxu0 0.0
      %760 = vmatmul.mubr.f32.gmra.mxu0 %v638
      %v761 = vpop.f32.mrf.mxu0
      %v762 = vadd.f32 0.0, %v761
      %v763 = vpop.f32.mrf.mxu0
      %764 = vmatprep.mubr.f32.mxu0 0.0
      %765 = vmatmul.mubr.f32.gmra.mxu0 %v639
      %v766 = vpop.f32.mrf.mxu0
      %v767 = vadd.f32 0.0, %v766
      %v768 = vpop.f32.mrf.mxu0
      %769 = vmatprep.mubr.f32.mxu0 0.0
      %770 = vmatmul.mubr.f32.gmra.mxu0 %v640
      %v771 = vpop.f32.mrf.mxu0
      %v772 = vadd.f32 0.0, %v771
      %v773 = vpop.f32.mrf.mxu0
      %774 = vmatprep.mubr.f32.mxu0 0.0
      %775 = vmatmul.mubr.f32.gmra.mxu0 %v641
      %v776 = vpop.f32.mrf.mxu0
      %v777 = vadd.f32 0.0, %v776
      %v778 = vpop.f32.mrf.mxu0
      %779 = vmatprep.mubr.f32.mxu0 0.0
      %780 = vmatmul.mubr.f32.gmra.mxu0 %v642
      %v781 = vpop.f32.mrf.mxu0
      %v782 = vadd.f32 0.0, %v781
      %v783 = vpop.f32.mrf.mxu0
      %784 = vmatprep.mubr.f32.mxu0 0.0
      %785 = vmatmul.mubr.f32.gmra.mxu0 %v643
      %v786 = vpop.f32.mrf.mxu0
      %v787 = vadd.f32 0.0, %v786
      %v788 = vpop.f32.mrf.mxu0
      %789 = vmatprep.mubr.f32.mxu0 0.0
      %790 = vmatmul.mubr.f32.gmra.mxu0 %v644
      %v791 = vpop.f32.mrf.mxu0
      %v792 = vadd.f32 0.0, %v791
      %v793 = vpop.f32.mrf.mxu0
      %794 = vmatprep.mubr.f32.mxu0 0.0
      %795 = vmatmul.mubr.f32.gmra.mxu0 %v645
      %v796 = vpop.f32.mrf.mxu0
      %v797 = vadd.f32 0.0, %v796
      %v798 = vpop.f32.mrf.mxu0
      %799 = vmatprep.mubr.f32.mxu0 0.0
      %800 = vmatmul.mubr.f32.gmra.mxu0 %v646
      %v801 = vpop.f32.mrf.mxu0
      %v802 = vadd.f32 0.0, %v801
      %v803 = vpop.f32.mrf.mxu0
      %804 = vmatprep.mubr.f32.mxu0 0.0
      %805 = vmatmul.mubr.f32.gmra.mxu0 %v647
      %v806 = vpop.f32.mrf.mxu0
      %v807 = vadd.f32 0.0, %v806
      %v808 = vpop.f32.mrf.mxu0
      %809 = vmatprep.mubr.f32.mxu0 0.0
      %810 = vmatmul.mubr.f32.gmra.mxu0 %v648
      %v811 = vpop.f32.mrf.mxu0
      %v812 = vadd.f32 0.0, %v811
      %v813 = vpop.f32.mrf.mxu0
      %814 = vmatprep.mubr.f32.mxu0 0.0
      %815 = vmatmul.mubr.f32.gmra.mxu0 %v649
      %v816 = vpop.f32.mrf.mxu0
      %v817 = vadd.f32 0.0, %v816
      %v818 = vpop.f32.mrf.mxu0
      %819 = vmatprep.mubr.f32.mxu0 0.0
      %820 = vmatmul.mubr.f32.gmra.mxu0 %v650
      %v821 = vpop.f32.mrf.mxu0
      %v822 = vadd.f32 0.0, %v821
      %v823 = vpop.f32.mrf.mxu0
      %824 = vmatprep.mubr.f32.mxu0 0.0
      %825 = vmatmul.mubr.f32.gmra.mxu0 %v651
      %v826 = vpop.f32.mrf.mxu0
      %v827 = vadd.f32 0.0, %v826
      %v828 = vpop.f32.mrf.mxu0
      %829 = vmatprep.mubr.f32.mxu0 0.0
      %830 = vmatmul.mubr.f32.gmra.mxu0 %v652
      %v831 = vpop.f32.mrf.mxu0
      %v832 = vadd.f32 0.0, %v831
      %v833 = vpop.f32.mrf.mxu0
      %834 = vmatprep.mubr.f32.mxu0 0.0
      %835 = vmatmul.mubr.f32.gmra.mxu0 %v653
      %v836 = vpop.f32.mrf.mxu0
      %v837 = vadd.f32 0.0, %v836
      %v838 = vpop.f32.mrf.mxu0
      %839 = vmatprep.mubr.f32.mxu0 0.0
      %840 = vmatmul.mubr.f32.gmra.mxu0 %v654
      %v841 = vpop.f32.mrf.mxu0
      %v842 = vadd.f32 0.0, %v841
      %v843 = vpop.f32.mrf.mxu0
      %844 = vmatprep.mubr.f32.mxu0 0.0
      %845 = vmatmul.mubr.f32.gmra.mxu0 %v655
      %v846 = vpop.f32.mrf.mxu0
      %v847 = vadd.f32 0.0, %v846
      %v848 = vpop.f32.mrf.mxu0
      %849 = vmatprep.mubr.f32.mxu0 0.0
      %850 = vmatmul.mubr.f32.gmra.mxu0 %v656
      %v851 = vpop.f32.mrf.mxu0
      %v852 = vadd.f32 0.0, %v851
      %v853 = vpop.f32.mrf.mxu0
      %854 = vmatprep.mubr.f32.mxu0 0.0
      %855 = vmatmul.mubr.f32.gmra.mxu0 %v657
      %v856 = vpop.f32.mrf.mxu0
      %v857 = vadd.f32 0.0, %v856
      %v858 = vpop.f32.mrf.mxu0
      %859 = vmatprep.mubr.f32.mxu0 0.0
      %860 = vmatmul.mubr.f32.gmra.mxu0 %v658
      %v861 = vpop.f32.mrf.mxu0
      %v862 = vadd.f32 0.0, %v861
      %v863 = vpop.f32.mrf.mxu0
      %864 = vmatprep.mubr.f32.mxu0 0.0
      %865 = vmatmul.mubr.f32.gmra.mxu0 %v659
      %v866 = vpop.f32.mrf.mxu0
      %v867 = vadd.f32 0.0, %v866
      %v868 = vpop.f32.mrf.mxu0
      %869 = vmatprep.mubr.f32.mxu0 0.0
      %870 = vmatmul.mubr.f32.gmra.mxu0 %v660
      %v871 = vpop.f32.mrf.mxu0
      %v872 = vadd.f32 0.0, %v871
      %v873 = vpop.f32.mrf.mxu0
      %874 = vmatprep.mubr.f32.mxu0 0.0
      %875 = vmatmul.mubr.f32.gmra.mxu0 %v661
      %v876 = vpop.f32.mrf.mxu0
      %v877 = vadd.f32 0.0, %v876
      %v878 = vpop.f32.mrf.mxu0
      %879 = vmatprep.mubr.f32.mxu0 0.0
      %880 = vmatmul.mubr.f32.gmra.mxu0 %v662
      %v881 = vpop.f32.mrf.mxu0
      %v882 = vadd.f32 0.0, %v881
      %v883 = vpop.f32.mrf.mxu0
      %884 = vmatprep.mubr.f32.mxu0 0.0
      %885 = vmatmul.mubr.f32.gmra.mxu0 %v663
      %v886 = vpop.f32.mrf.mxu0
      %v887 = vadd.f32 0.0, %v886
      %v888 = vpop.f32.mrf.mxu0
      %889 = vmatprep.mubr.f32.mxu0 0.0
      %890 = vmatmul.mubr.f32.gmra.mxu0 %v664
      %v891 = vpop.f32.mrf.mxu0
      %v892 = vadd.f32 0.0, %v891
      %v893 = vpop.f32.mrf.mxu0
      %894 = vmatprep.mubr.f32.mxu0 0.0
      %895 = vmatmul.mubr.f32.gmra.mxu0 %v665
      %v896 = vpop.f32.mrf.mxu0
      %v897 = vadd.f32 0.0, %v896
      %v898 = vpop.f32.mrf.mxu0
      %899 = vmatprep.mubr.f32.mxu0 0.0
      %900 = vmatmul.mubr.f32.gmra.mxu0 %v666
      %v901 = vpop.f32.mrf.mxu0
      %v902 = vadd.f32 0.0, %v901
      %v903 = vpop.f32.mrf.mxu0
      %904 = vmatprep.mubr.f32.mxu0 0.0
      %905 = vmatmul.mubr.f32.gmra.mxu0 %v667
      %v906 = vpop.f32.mrf.mxu0
      %v907 = vadd.f32 0.0, %v906
      %v908 = vpop.f32.mrf.mxu0
      %909 = vdwg.mxu0
      %v910 = vadd.f32 %v476, %v752
      %v911 = vadd.f32 %v481, %v757
      %v912 = vadd.f32 %v486, %v762
      %v913 = vadd.f32 %v491, %v767
      %v914 = vadd.f32 %v496, %v772
      %v915 = vadd.f32 %v501, %v777
      %v916 = vadd.f32 %v506, %v782
      %v917 = vadd.f32 %v511, %v787
      %v918 = vadd.f32 %v516, %v792
      %v919 = vadd.f32 %v521, %v797
      %v920 = vadd.f32 %v526, %v802
      %v921 = vadd.f32 %v531, %v807
      %v922 = vadd.f32 %v536, %v812
      %v923 = vadd.f32 %v541, %v817
      %v924 = vadd.f32 %v546, %v822
      %v925 = vadd.f32 %v551, %v827
      %v926 = vadd.f32 %v556, %v832
      %v927 = vadd.f32 %v561, %v837
      %v928 = vadd.f32 %v566, %v842
      %v929 = vadd.f32 %v571, %v847
      %v930 = vadd.f32 %v576, %v852
      %v931 = vadd.f32 %v581, %v857
      %v932 = vadd.f32 %v586, %v862
      %v933 = vadd.f32 %v591, %v867
      %v934 = vadd.f32 %v596, %v872
      %v935 = vadd.f32 %v601, %v877
      %v936 = vadd.f32 %v606, %v882
      %v937 = vadd.f32 %v611, %v887
      %v938 = vadd.f32 %v616, %v892
      %v939 = vadd.f32 %v621, %v897
      %v940 = vadd.f32 %v626, %v902
      %v941 = vadd.f32 %v631, %v907
      %s942 = sadd.s32 %s82, 23
      %s943 = scalar_lea.vmem [#allocation3], %s942
      %v944 = vld [vmem:[%s943] sm:$0xff]
      %v945 = vld [vmem:[%s943 + $0x8] sm:$0xff]
      %v946 = vld [vmem:[%s943 + $0x10] sm:$0xff]
      %v947 = vld [vmem:[%s943 + $0x18] sm:$0xff]
      %v948 = vld [vmem:[%s943 + $0x20] sm:$0xff]
      %v949 = vld [vmem:[%s943 + $0x28] sm:$0xff]
      %v950 = vld [vmem:[%s943 + $0x30] sm:$0xff]
      %v951 = vld [vmem:[%s943 + $0x38] sm:$0xff]
      %v952 = vld [vmem:[%s943 + $0x40] sm:$0xff]
      %v953 = vld [vmem:[%s943 + $0x48] sm:$0xff]
      %v954 = vld [vmem:[%s943 + $0x50] sm:$0xff]
      %v955 = vld [vmem:[%s943 + $0x58] sm:$0xff]
      %v956 = vld [vmem:[%s943 + $0x60] sm:$0xff]
      %v957 = vld [vmem:[%s943 + $0x68] sm:$0xff]
      %v958 = vld [vmem:[%s943 + $0x70] sm:$0xff]
      %v959 = vld [vmem:[%s943 + $0x78] sm:$0xff]
      %v960 = vld [vmem:[%s943 + $0x80] sm:$0xff]
      %v961 = vld [vmem:[%s943 + $0x88] sm:$0xff]
      %v962 = vld [vmem:[%s943 + $0x90] sm:$0xff]
      %v963 = vld [vmem:[%s943 + $0x98] sm:$0xff]
      %v964 = vld [vmem:[%s943 + $0xa0] sm:$0xff]
      %v965 = vld [vmem:[%s943 + $0xa8] sm:$0xff]
      %v966 = vld [vmem:[%s943 + $0xb0] sm:$0xff]
      %v967 = vld [vmem:[%s943 + $0xb8] sm:$0xff]
      %v968 = vld [vmem:[%s943 + $0xc0] sm:$0xff]
      %v969 = vld [vmem:[%s943 + $0xc8] sm:$0xff]
      %v970 = vld [vmem:[%s943 + $0xd0] sm:$0xff]
      %v971 = vld [vmem:[%s943 + $0xd8] sm:$0xff]
      %v972 = vld [vmem:[%s943 + $0xe0] sm:$0xff]
      %v973 = vld [vmem:[%s943 + $0xe8] sm:$0xff]
      %v974 = vld [vmem:[%s943 + $0xf0] sm:$0xff]
      %v975 = vld [vmem:[%s943 + $0xf8] sm:$0xff]
      %s976 = scalar_lea.vmem [#allocation6], 384
      %v977 = vld [vmem:[%s976] sm:$0xff]
      %v978 = vld [vmem:[%s976 + $0x8] sm:$0xff]
      %v979 = vld [vmem:[%s976 + $0x10] sm:$0xff]
      %v980 = vld [vmem:[%s976 + $0x18] sm:$0xff]
      %v981 = vld [vmem:[%s976 + $0x20] sm:$0xff]
      %v982 = vld [vmem:[%s976 + $0x28] sm:$0xff]
      %v983 = vld [vmem:[%s976 + $0x30] sm:$0xff]
      %v984 = vld [vmem:[%s976 + $0x38] sm:$0xff]
      %v985 = vld [vmem:[%s976 + $0x40] sm:$0xff]
      %v986 = vld [vmem:[%s976 + $0x48] sm:$0xff]
      %v987 = vld [vmem:[%s976 + $0x50] sm:$0xff]
      %v988 = vld [vmem:[%s976 + $0x58] sm:$0xff]
      %v989 = vld [vmem:[%s976 + $0x60] sm:$0xff]
      %v990 = vld [vmem:[%s976 + $0x68] sm:$0xff]
      %v991 = vld [vmem:[%s976 + $0x70] sm:$0xff]
      %v992 = vld [vmem:[%s976 + $0x78] sm:$0xff]
      %993 = vmatprep.subr.mxu0 0.0
      %994 = vmatpush1.msra.mxu0 %v992
      %995 = vmatprep.subr.mxu0 0.0
      %996 = vmatpush1.msra.mxu0 %v991
      %997 = vmatprep.subr.mxu0 0.0
      %998 = vmatpush1.msra.mxu0 %v990
      %999 = vmatprep.subr.mxu0 0.0
      %1000 = vmatpush1.msra.mxu0 %v989
      %1001 = vmatprep.subr.mxu0 0.0
      %1002 = vmatpush1.msra.mxu0 %v988
      %1003 = vmatprep.subr.mxu0 0.0
      %1004 = vmatpush1.msra.mxu0 %v987
      %1005 = vmatprep.subr.mxu0 0.0
      %1006 = vmatpush1.msra.mxu0 %v986
      %1007 = vmatprep.subr.mxu0 0.0
      %1008 = vmatpush1.msra.mxu0 %v985
      %1009 = vmatprep.subr.mxu0 0.0
      %1010 = vmatpush1.msra.mxu0 %v984
      %1011 = vmatprep.subr.mxu0 0.0
      %1012 = vmatpush1.msra.mxu0 %v983
      %1013 = vmatprep.subr.mxu0 0.0
      %1014 = vmatpush1.msra.mxu0 %v982
      %1015 = vmatprep.subr.mxu0 0.0
      %1016 = vmatpush1.msra.mxu0 %v981
      %1017 = vmatprep.subr.mxu0 0.0
      %1018 = vmatpush1.msra.mxu0 %v980
      %1019 = vmatprep.subr.mxu0 0.0
      %1020 = vmatpush1.msra.mxu0 %v979
      %1021 = vmatprep.subr.mxu0 0.0
      %1022 = vmatpush1.msra.mxu0 %v978
      %1023 = vmatprep.subr.mxu0 0.0
      %1024 = vmatpush1.msra.mxu0 %v977
      %1025 = vmatprep.subr.mxu0 0.0
      %1026 = vmatpush2.msra.mxu0 0.0
      %1027 = vmatprep.subr.mxu0 0.0
      %1028 = vmatpush2.msra.mxu0 0.0
      %1029 = vmatprep.subr.mxu0 0.0
      %1030 = vmatpush2.msra.mxu0 0.0
      %1031 = vmatprep.subr.mxu0 0.0
      %1032 = vmatpush2.msra.mxu0 0.0
      %1033 = vmatprep.subr.mxu0 0.0
      %1034 = vmatpush2.msra.mxu0 0.0
      %1035 = vmatprep.subr.mxu0 0.0
      %1036 = vmatpush2.msra.mxu0 0.0
      %1037 = vmatprep.subr.mxu0 0.0
      %1038 = vmatpush2.msra.mxu0 0.0
      %1039 = vmatprep.subr.mxu0 0.0
      %1040 = vmatpush2.msra.mxu0 0.0
      %1041 = vmatprep.subr.mxu0 0.0
      %1042 = vmatpush2.msra.mxu0 0.0
      %1043 = vmatprep.subr.mxu0 0.0
      %1044 = vmatpush2.msra.mxu0 0.0
      %1045 = vmatprep.subr.mxu0 0.0
      %1046 = vmatpush2.msra.mxu0 0.0
      %1047 = vmatprep.subr.mxu0 0.0
      %1048 = vmatpush2.msra.mxu0 0.0
      %1049 = vmatprep.subr.mxu0 0.0
      %1050 = vmatpush2.msra.mxu0 0.0
      %1051 = vmatprep.subr.mxu0 0.0
      %1052 = vmatpush2.msra.mxu0 0.0
      %1053 = vmatprep.subr.mxu0 0.0
      %1054 = vmatpush2.msra.mxu0 0.0
      %1055 = vmatprep.subr.mxu0 0.0
      %1056 = vmatpush2.msra.mxu0 0.0
      %1057 = vmatprep.mubr.f32.mxu0 0.0
      %1058 = vmatmul.mubr.f32.gmra.mxu0 %v944
      %v1059 = vpop.f32.mrf.mxu0
      %v1060 = vadd.f32 0.0, %v1059
      %v1061 = vpop.f32.mrf.mxu0
      %1062 = vmatprep.mubr.f32.mxu0 0.0
      %1063 = vmatmul.mubr.f32.gmra.mxu0 %v945
      %v1064 = vpop.f32.mrf.mxu0
      %v1065 = vadd.f32 0.0, %v1064
      %v1066 = vpop.f32.mrf.mxu0
      %1067 = vmatprep.mubr.f32.mxu0 0.0
      %1068 = vmatmul.mubr.f32.gmra.mxu0 %v946
      %v1069 = vpop.f32.mrf.mxu0
      %v1070 = vadd.f32 0.0, %v1069
      %v1071 = vpop.f32.mrf.mxu0
      %1072 = vmatprep.mubr.f32.mxu0 0.0
      %1073 = vmatmul.mubr.f32.gmra.mxu0 %v947
      %v1074 = vpop.f32.mrf.mxu0
      %v1075 = vadd.f32 0.0, %v1074
      %v1076 = vpop.f32.mrf.mxu0
      %1077 = vmatprep.mubr.f32.mxu0 0.0
      %1078 = vmatmul.mubr.f32.gmra.mxu0 %v948
      %v1079 = vpop.f32.mrf.mxu0
      %v1080 = vadd.f32 0.0, %v1079
      %v1081 = vpop.f32.mrf.mxu0
      %1082 = vmatprep.mubr.f32.mxu0 0.0
      %1083 = vmatmul.mubr.f32.gmra.mxu0 %v949
      %v1084 = vpop.f32.mrf.mxu0
      %v1085 = vadd.f32 0.0, %v1084
      %v1086 = vpop.f32.mrf.mxu0
      %1087 = vmatprep.mubr.f32.mxu0 0.0
      %1088 = vmatmul.mubr.f32.gmra.mxu0 %v950
      %v1089 = vpop.f32.mrf.mxu0
      %v1090 = vadd.f32 0.0, %v1089
      %v1091 = vpop.f32.mrf.mxu0
      %1092 = vmatprep.mubr.f32.mxu0 0.0
      %1093 = vmatmul.mubr.f32.gmra.mxu0 %v951
      %v1094 = vpop.f32.mrf.mxu0
      %v1095 = vadd.f32 0.0, %v1094
      %v1096 = vpop.f32.mrf.mxu0
      %1097 = vmatprep.mubr.f32.mxu0 0.0
      %1098 = vmatmul.mubr.f32.gmra.mxu0 %v952
      %v1099 = vpop.f32.mrf.mxu0
      %v1100 = vadd.f32 0.0, %v1099
      %v1101 = vpop.f32.mrf.mxu0
      %1102 = vmatprep.mubr.f32.mxu0 0.0
      %1103 = vmatmul.mubr.f32.gmra.mxu0 %v953
      %v1104 = vpop.f32.mrf.mxu0
      %v1105 = vadd.f32 0.0, %v1104
      %v1106 = vpop.f32.mrf.mxu0
      %1107 = vmatprep.mubr.f32.mxu0 0.0
      %1108 = vmatmul.mubr.f32.gmra.mxu0 %v954
      %v1109 = vpop.f32.mrf.mxu0
      %v1110 = vadd.f32 0.0, %v1109
      %v1111 = vpop.f32.mrf.mxu0
      %1112 = vmatprep.mubr.f32.mxu0 0.0
      %1113 = vmatmul.mubr.f32.gmra.mxu0 %v955
      %v1114 = vpop.f32.mrf.mxu0
      %v1115 = vadd.f32 0.0, %v1114
      %v1116 = vpop.f32.mrf.mxu0
      %1117 = vmatprep.mubr.f32.mxu0 0.0
      %1118 = vmatmul.mubr.f32.gmra.mxu0 %v956
      %v1119 = vpop.f32.mrf.mxu0
      %v1120 = vadd.f32 0.0, %v1119
      %v1121 = vpop.f32.mrf.mxu0
      %1122 = vmatprep.mubr.f32.mxu0 0.0
      %1123 = vmatmul.mubr.f32.gmra.mxu0 %v957
      %v1124 = vpop.f32.mrf.mxu0
      %v1125 = vadd.f32 0.0, %v1124
      %v1126 = vpop.f32.mrf.mxu0
      %1127 = vmatprep.mubr.f32.mxu0 0.0
      %1128 = vmatmul.mubr.f32.gmra.mxu0 %v958
      %v1129 = vpop.f32.mrf.mxu0
      %v1130 = vadd.f32 0.0, %v1129
      %v1131 = vpop.f32.mrf.mxu0
      %1132 = vmatprep.mubr.f32.mxu0 0.0
      %1133 = vmatmul.mubr.f32.gmra.mxu0 %v959
      %v1134 = vpop.f32.mrf.mxu0
      %v1135 = vadd.f32 0.0, %v1134
      %v1136 = vpop.f32.mrf.mxu0
      %1137 = vmatprep.mubr.f32.mxu0 0.0
      %1138 = vmatmul.mubr.f32.gmra.mxu0 %v960
      %v1139 = vpop.f32.mrf.mxu0
      %v1140 = vadd.f32 0.0, %v1139
      %v1141 = vpop.f32.mrf.mxu0
      %1142 = vmatprep.mubr.f32.mxu0 0.0
      %1143 = vmatmul.mubr.f32.gmra.mxu0 %v961
      %v1144 = vpop.f32.mrf.mxu0
      %v1145 = vadd.f32 0.0, %v1144
      %v1146 = vpop.f32.mrf.mxu0
      %1147 = vmatprep.mubr.f32.mxu0 0.0
      %1148 = vmatmul.mubr.f32.gmra.mxu0 %v962
      %v1149 = vpop.f32.mrf.mxu0
      %v1150 = vadd.f32 0.0, %v1149
      %v1151 = vpop.f32.mrf.mxu0
      %1152 = vmatprep.mubr.f32.mxu0 0.0
      %1153 = vmatmul.mubr.f32.gmra.mxu0 %v963
      %v1154 = vpop.f32.mrf.mxu0
      %v1155 = vadd.f32 0.0, %v1154
      %v1156 = vpop.f32.mrf.mxu0
      %1157 = vmatprep.mubr.f32.mxu0 0.0
      %1158 = vmatmul.mubr.f32.gmra.mxu0 %v964
      %v1159 = vpop.f32.mrf.mxu0
      %v1160 = vadd.f32 0.0, %v1159
      %v1161 = vpop.f32.mrf.mxu0
      %1162 = vmatprep.mubr.f32.mxu0 0.0
      %1163 = vmatmul.mubr.f32.gmra.mxu0 %v965
      %v1164 = vpop.f32.mrf.mxu0
      %v1165 = vadd.f32 0.0, %v1164
      %v1166 = vpop.f32.mrf.mxu0
      %1167 = vmatprep.mubr.f32.mxu0 0.0
      %1168 = vmatmul.mubr.f32.gmra.mxu0 %v966
      %v1169 = vpop.f32.mrf.mxu0
      %v1170 = vadd.f32 0.0, %v1169
      %v1171 = vpop.f32.mrf.mxu0
      %1172 = vmatprep.mubr.f32.mxu0 0.0
      %1173 = vmatmul.mubr.f32.gmra.mxu0 %v967
      %v1174 = vpop.f32.mrf.mxu0
      %v1175 = vadd.f32 0.0, %v1174
      %v1176 = vpop.f32.mrf.mxu0
      %1177 = vmatprep.mubr.f32.mxu0 0.0
      %1178 = vmatmul.mubr.f32.gmra.mxu0 %v968
      %v1179 = vpop.f32.mrf.mxu0
      %v1180 = vadd.f32 0.0, %v1179
      %v1181 = vpop.f32.mrf.mxu0
      %1182 = vmatprep.mubr.f32.mxu0 0.0
      %1183 = vmatmul.mubr.f32.gmra.mxu0 %v969
      %v1184 = vpop.f32.mrf.mxu0
      %v1185 = vadd.f32 0.0, %v1184
      %v1186 = vpop.f32.mrf.mxu0
      %1187 = vmatprep.mubr.f32.mxu0 0.0
      %1188 = vmatmul.mubr.f32.gmra.mxu0 %v970
      %v1189 = vpop.f32.mrf.mxu0
      %v1190 = vadd.f32 0.0, %v1189
      %v1191 = vpop.f32.mrf.mxu0
      %1192 = vmatprep.mubr.f32.mxu0 0.0
      %1193 = vmatmul.mubr.f32.gmra.mxu0 %v971
      %v1194 = vpop.f32.mrf.mxu0
      %v1195 = vadd.f32 0.0, %v1194
      %v1196 = vpop.f32.mrf.mxu0
      %1197 = vmatprep.mubr.f32.mxu0 0.0
      %1198 = vmatmul.mubr.f32.gmra.mxu0 %v972
      %v1199 = vpop.f32.mrf.mxu0
      %v1200 = vadd.f32 0.0, %v1199
      %v1201 = vpop.f32.mrf.mxu0
      %1202 = vmatprep.mubr.f32.mxu0 0.0
      %1203 = vmatmul.mubr.f32.gmra.mxu0 %v973
      %v1204 = vpop.f32.mrf.mxu0
      %v1205 = vadd.f32 0.0, %v1204
      %v1206 = vpop.f32.mrf.mxu0
      %1207 = vmatprep.mubr.f32.mxu0 0.0
      %1208 = vmatmul.mubr.f32.gmra.mxu0 %v974
      %v1209 = vpop.f32.mrf.mxu0
      %v1210 = vadd.f32 0.0, %v1209
      %v1211 = vpop.f32.mrf.mxu0
      %1212 = vmatprep.mubr.f32.mxu0 0.0
      %1213 = vmatmul.mubr.f32.gmra.mxu0 %v975
      %v1214 = vpop.f32.mrf.mxu0
      %v1215 = vadd.f32 0.0, %v1214
      %v1216 = vpop.f32.mrf.mxu0
      %1217 = vdwg.mxu0
      %v1218 = vadd.f32 %v910, %v1060
      %v1219 = vadd.f32 %v911, %v1065
      %v1220 = vadd.f32 %v912, %v1070
      %v1221 = vadd.f32 %v913, %v1075
      %v1222 = vadd.f32 %v914, %v1080
      %v1223 = vadd.f32 %v915, %v1085
      %v1224 = vadd.f32 %v916, %v1090
      %v1225 = vadd.f32 %v917, %v1095
      %v1226 = vadd.f32 %v918, %v1100
      %v1227 = vadd.f32 %v919, %v1105
      %v1228 = vadd.f32 %v920, %v1110
      %v1229 = vadd.f32 %v921, %v1115
      %v1230 = vadd.f32 %v922, %v1120
      %v1231 = vadd.f32 %v923, %v1125
      %v1232 = vadd.f32 %v924, %v1130
      %v1233 = vadd.f32 %v925, %v1135
      %v1234 = vadd.f32 %v926, %v1140
      %v1235 = vadd.f32 %v927, %v1145
      %v1236 = vadd.f32 %v928, %v1150
      %v1237 = vadd.f32 %v929, %v1155
      %v1238 = vadd.f32 %v930, %v1160
      %v1239 = vadd.f32 %v931, %v1165
      %v1240 = vadd.f32 %v932, %v1170
      %v1241 = vadd.f32 %v933, %v1175
      %v1242 = vadd.f32 %v934, %v1180
      %v1243 = vadd.f32 %v935, %v1185
      %v1244 = vadd.f32 %v936, %v1190
      %v1245 = vadd.f32 %v937, %v1195
      %v1246 = vadd.f32 %v938, %v1200
      %v1247 = vadd.f32 %v939, %v1205
      %v1248 = vadd.f32 %v940, %v1210
      %v1249 = vadd.f32 %v941, %v1215
      %s1250 = sadd.s32 %s82, 24
      %s1251 = scalar_lea.vmem [#allocation3], %s1250
      %v1252 = vld [vmem:[%s1251] sm:$0xff]
      %v1253 = vld [vmem:[%s1251 + $0x8] sm:$0xff]
      %v1254 = vld [vmem:[%s1251 + $0x10] sm:$0xff]
      %v1255 = vld [vmem:[%s1251 + $0x18] sm:$0xff]
      %v1256 = vld [vmem:[%s1251 + $0x20] sm:$0xff]
      %v1257 = vld [vmem:[%s1251 + $0x28] sm:$0xff]
      %v1258 = vld [vmem:[%s1251 + $0x30] sm:$0xff]
      %v1259 = vld [vmem:[%s1251 + $0x38] sm:$0xff]
      %v1260 = vld [vmem:[%s1251 + $0x40] sm:$0xff]
      %v1261 = vld [vmem:[%s1251 + $0x48] sm:$0xff]
      %v1262 = vld [vmem:[%s1251 + $0x50] sm:$0xff]
      %v1263 = vld [vmem:[%s1251 + $0x58] sm:$0xff]
      %v1264 = vld [vmem:[%s1251 + $0x60] sm:$0xff]
      %v1265 = vld [vmem:[%s1251 + $0x68] sm:$0xff]
      %v1266 = vld [vmem:[%s1251 + $0x70] sm:$0xff]
      %v1267 = vld [vmem:[%s1251 + $0x78] sm:$0xff]
      %v1268 = vld [vmem:[%s1251 + $0x80] sm:$0xff]
      %v1269 = vld [vmem:[%s1251 + $0x88] sm:$0xff]
      %v1270 = vld [vmem:[%s1251 + $0x90] sm:$0xff]
      %v1271 = vld [vmem:[%s1251 + $0x98] sm:$0xff]
      %v1272 = vld [vmem:[%s1251 + $0xa0] sm:$0xff]
      %v1273 = vld [vmem:[%s1251 + $0xa8] sm:$0xff]
      %v1274 = vld [vmem:[%s1251 + $0xb0] sm:$0xff]
      %v1275 = vld [vmem:[%s1251 + $0xb8] sm:$0xff]
      %v1276 = vld [vmem:[%s1251 + $0xc0] sm:$0xff]
      %v1277 = vld [vmem:[%s1251 + $0xc8] sm:$0xff]
      %v1278 = vld [vmem:[%s1251 + $0xd0] sm:$0xff]
      %v1279 = vld [vmem:[%s1251 + $0xd8] sm:$0xff]
      %v1280 = vld [vmem:[%s1251 + $0xe0] sm:$0xff]
      %v1281 = vld [vmem:[%s1251 + $0xe8] sm:$0xff]
      %v1282 = vld [vmem:[%s1251 + $0xf0] sm:$0xff]
      %v1283 = vld [vmem:[%s1251 + $0xf8] sm:$0xff]
      %s1284 = scalar_lea.vmem [#allocation6], 512
      %v1285 = vld [vmem:[%s1284] sm:$0xff]
      %v1286 = vld [vmem:[%s1284 + $0x8] sm:$0xff]
      %v1287 = vld [vmem:[%s1284 + $0x10] sm:$0xff]
      %v1288 = vld [vmem:[%s1284 + $0x18] sm:$0xff]
      %v1289 = vld [vmem:[%s1284 + $0x20] sm:$0xff]
      %v1290 = vld [vmem:[%s1284 + $0x28] sm:$0xff]
      %v1291 = vld [vmem:[%s1284 + $0x30] sm:$0xff]
      %v1292 = vld [vmem:[%s1284 + $0x38] sm:$0xff]
      %v1293 = vld [vmem:[%s1284 + $0x40] sm:$0xff]
      %v1294 = vld [vmem:[%s1284 + $0x48] sm:$0xff]
      %v1295 = vld [vmem:[%s1284 + $0x50] sm:$0xff]
      %v1296 = vld [vmem:[%s1284 + $0x58] sm:$0xff]
      %v1297 = vld [vmem:[%s1284 + $0x60] sm:$0xff]
      %v1298 = vld [vmem:[%s1284 + $0x68] sm:$0xff]
      %v1299 = vld [vmem:[%s1284 + $0x70] sm:$0xff]
      %v1300 = vld [vmem:[%s1284 + $0x78] sm:$0xff]
      %1301 = vmatprep.subr.mxu0 0.0
      %1302 = vmatpush1.msra.mxu0 %v1300
      %1303 = vmatprep.subr.mxu0 0.0
      %1304 = vmatpush1.msra.mxu0 %v1299
      %1305 = vmatprep.subr.mxu0 0.0
      %1306 = vmatpush1.msra.mxu0 %v1298
      %1307 = vmatprep.subr.mxu0 0.0
      %1308 = vmatpush1.msra.mxu0 %v1297
      %1309 = vmatprep.subr.mxu0 0.0
      %1310 = vmatpush1.msra.mxu0 %v1296
      %1311 = vmatprep.subr.mxu0 0.0
      %1312 = vmatpush1.msra.mxu0 %v1295
      %1313 = vmatprep.subr.mxu0 0.0
      %1314 = vmatpush1.msra.mxu0 %v1294
      %1315 = vmatprep.subr.mxu0 0.0
      %1316 = vmatpush1.msra.mxu0 %v1293
      %1317 = vmatprep.subr.mxu0 0.0
      %1318 = vmatpush1.msra.mxu0 %v1292
      %1319 = vmatprep.subr.mxu0 0.0
      %1320 = vmatpush1.msra.mxu0 %v1291
      %1321 = vmatprep.subr.mxu0 0.0
      %1322 = vmatpush1.msra.mxu0 %v1290
      %1323 = vmatprep.subr.mxu0 0.0
      %1324 = vmatpush1.msra.mxu0 %v1289
      %1325 = vmatprep.subr.mxu0 0.0
      %1326 = vmatpush1.msra.mxu0 %v1288
      %1327 = vmatprep.subr.mxu0 0.0
      %1328 = vmatpush1.msra.mxu0 %v1287
      %1329 = vmatprep.subr.mxu0 0.0
      %1330 = vmatpush1.msra.mxu0 %v1286
      %1331 = vmatprep.subr.mxu0 0.0
      %1332 = vmatpush1.msra.mxu0 %v1285
      %1333 = vmatprep.subr.mxu0 0.0
      %1334 = vmatpush2.msra.mxu0 0.0
      %1335 = vmatprep.subr.mxu0 0.0
      %1336 = vmatpush2.msra.mxu0 0.0
      %1337 = vmatprep.subr.mxu0 0.0
      %1338 = vmatpush2.msra.mxu0 0.0
      %1339 = vmatprep.subr.mxu0 0.0
      %1340 = vmatpush2.msra.mxu0 0.0
      %1341 = vmatprep.subr.mxu0 0.0
      %1342 = vmatpush2.msra.mxu0 0.0
      %1343 = vmatprep.subr.mxu0 0.0
      %1344 = vmatpush2.msra.mxu0 0.0
      %1345 = vmatprep.subr.mxu0 0.0
      %1346 = vmatpush2.msra.mxu0 0.0
      %1347 = vmatprep.subr.mxu0 0.0
      %1348 = vmatpush2.msra.mxu0 0.0
      %1349 = vmatprep.subr.mxu0 0.0
      %1350 = vmatpush2.msra.mxu0 0.0
      %1351 = vmatprep.subr.mxu0 0.0
      %1352 = vmatpush2.msra.mxu0 0.0
      %1353 = vmatprep.subr.mxu0 0.0
      %1354 = vmatpush2.msra.mxu0 0.0
      %1355 = vmatprep.subr.mxu0 0.0
      %1356 = vmatpush2.msra.mxu0 0.0
      %1357 = vmatprep.subr.mxu0 0.0
      %1358 = vmatpush2.msra.mxu0 0.0
      %1359 = vmatprep.subr.mxu0 0.0
      %1360 = vmatpush2.msra.mxu0 0.0
      %1361 = vmatprep.subr.mxu0 0.0
      %1362 = vmatpush2.msra.mxu0 0.0
      %1363 = vmatprep.subr.mxu0 0.0
      %1364 = vmatpush2.msra.mxu0 0.0
      %1365 = vmatprep.mubr.f32.mxu0 0.0
      %1366 = vmatmul.mubr.f32.gmra.mxu0 %v1252
      %v1367 = vpop.f32.mrf.mxu0
      %v1368 = vadd.f32 0.0, %v1367
      %v1369 = vpop.f32.mrf.mxu0
      %1370 = vmatprep.mubr.f32.mxu0 0.0
      %1371 = vmatmul.mubr.f32.gmra.mxu0 %v1253
      %v1372 = vpop.f32.mrf.mxu0
      %v1373 = vadd.f32 0.0, %v1372
      %v1374 = vpop.f32.mrf.mxu0
      %1375 = vmatprep.mubr.f32.mxu0 0.0
      %1376 = vmatmul.mubr.f32.gmra.mxu0 %v1254
      %v1377 = vpop.f32.mrf.mxu0
      %v1378 = vadd.f32 0.0, %v1377
      %v1379 = vpop.f32.mrf.mxu0
      %1380 = vmatprep.mubr.f32.mxu0 0.0
      %1381 = vmatmul.mubr.f32.gmra.mxu0 %v1255
      %v1382 = vpop.f32.mrf.mxu0
      %v1383 = vadd.f32 0.0, %v1382
      %v1384 = vpop.f32.mrf.mxu0
      %1385 = vmatprep.mubr.f32.mxu0 0.0
      %1386 = vmatmul.mubr.f32.gmra.mxu0 %v1256
      %v1387 = vpop.f32.mrf.mxu0
      %v1388 = vadd.f32 0.0, %v1387
      %v1389 = vpop.f32.mrf.mxu0
      %1390 = vmatprep.mubr.f32.mxu0 0.0
      %1391 = vmatmul.mubr.f32.gmra.mxu0 %v1257
      %v1392 = vpop.f32.mrf.mxu0
      %v1393 = vadd.f32 0.0, %v1392
      %v1394 = vpop.f32.mrf.mxu0
      %1395 = vmatprep.mubr.f32.mxu0 0.0
      %1396 = vmatmul.mubr.f32.gmra.mxu0 %v1258
      %v1397 = vpop.f32.mrf.mxu0
      %v1398 = vadd.f32 0.0, %v1397
      %v1399 = vpop.f32.mrf.mxu0
      %1400 = vmatprep.mubr.f32.mxu0 0.0
      %1401 = vmatmul.mubr.f32.gmra.mxu0 %v1259
      %v1402 = vpop.f32.mrf.mxu0
      %v1403 = vadd.f32 0.0, %v1402
      %v1404 = vpop.f32.mrf.mxu0
      %1405 = vmatprep.mubr.f32.mxu0 0.0
      %1406 = vmatmul.mubr.f32.gmra.mxu0 %v1260
      %v1407 = vpop.f32.mrf.mxu0
      %v1408 = vadd.f32 0.0, %v1407
      %v1409 = vpop.f32.mrf.mxu0
      %1410 = vmatprep.mubr.f32.mxu0 0.0
      %1411 = vmatmul.mubr.f32.gmra.mxu0 %v1261
      %v1412 = vpop.f32.mrf.mxu0
      %v1413 = vadd.f32 0.0, %v1412
      %v1414 = vpop.f32.mrf.mxu0
      %1415 = vmatprep.mubr.f32.mxu0 0.0
      %1416 = vmatmul.mubr.f32.gmra.mxu0 %v1262
      %v1417 = vpop.f32.mrf.mxu0
      %v1418 = vadd.f32 0.0, %v1417
      %v1419 = vpop.f32.mrf.mxu0
      %1420 = vmatprep.mubr.f32.mxu0 0.0
      %1421 = vmatmul.mubr.f32.gmra.mxu0 %v1263
      %v1422 = vpop.f32.mrf.mxu0
      %v1423 = vadd.f32 0.0, %v1422
      %v1424 = vpop.f32.mrf.mxu0
      %1425 = vmatprep.mubr.f32.mxu0 0.0
      %1426 = vmatmul.mubr.f32.gmra.mxu0 %v1264
      %v1427 = vpop.f32.mrf.mxu0
      %v1428 = vadd.f32 0.0, %v1427
      %v1429 = vpop.f32.mrf.mxu0
      %1430 = vmatprep.mubr.f32.mxu0 0.0
      %1431 = vmatmul.mubr.f32.gmra.mxu0 %v1265
      %v1432 = vpop.f32.mrf.mxu0
      %v1433 = vadd.f32 0.0, %v1432
      %v1434 = vpop.f32.mrf.mxu0
      %1435 = vmatprep.mubr.f32.mxu0 0.0
      %1436 = vmatmul.mubr.f32.gmra.mxu0 %v1266
      %v1437 = vpop.f32.mrf.mxu0
      %v1438 = vadd.f32 0.0, %v1437
      %v1439 = vpop.f32.mrf.mxu0
      %1440 = vmatprep.mubr.f32.mxu0 0.0
      %1441 = vmatmul.mubr.f32.gmra.mxu0 %v1267
      %v1442 = vpop.f32.mrf.mxu0
      %v1443 = vadd.f32 0.0, %v1442
      %v1444 = vpop.f32.mrf.mxu0
      %1445 = vmatprep.mubr.f32.mxu0 0.0
      %1446 = vmatmul.mubr.f32.gmra.mxu0 %v1268
      %v1447 = vpop.f32.mrf.mxu0
      %v1448 = vadd.f32 0.0, %v1447
      %v1449 = vpop.f32.mrf.mxu0
      %1450 = vmatprep.mubr.f32.mxu0 0.0
      %1451 = vmatmul.mubr.f32.gmra.mxu0 %v1269
      %v1452 = vpop.f32.mrf.mxu0
      %v1453 = vadd.f32 0.0, %v1452
      %v1454 = vpop.f32.mrf.mxu0
      %1455 = vmatprep.mubr.f32.mxu0 0.0
      %1456 = vmatmul.mubr.f32.gmra.mxu0 %v1270
      %v1457 = vpop.f32.mrf.mxu0
      %v1458 = vadd.f32 0.0, %v1457
      %v1459 = vpop.f32.mrf.mxu0
      %1460 = vmatprep.mubr.f32.mxu0 0.0
      %1461 = vmatmul.mubr.f32.gmra.mxu0 %v1271
      %v1462 = vpop.f32.mrf.mxu0
      %v1463 = vadd.f32 0.0, %v1462
      %v1464 = vpop.f32.mrf.mxu0
      %1465 = vmatprep.mubr.f32.mxu0 0.0
      %1466 = vmatmul.mubr.f32.gmra.mxu0 %v1272
      %v1467 = vpop.f32.mrf.mxu0
      %v1468 = vadd.f32 0.0, %v1467
      %v1469 = vpop.f32.mrf.mxu0
      %1470 = vmatprep.mubr.f32.mxu0 0.0
      %1471 = vmatmul.mubr.f32.gmra.mxu0 %v1273
      %v1472 = vpop.f32.mrf.mxu0
      %v1473 = vadd.f32 0.0, %v1472
      %v1474 = vpop.f32.mrf.mxu0
      %1475 = vmatprep.mubr.f32.mxu0 0.0
      %1476 = vmatmul.mubr.f32.gmra.mxu0 %v1274
      %v1477 = vpop.f32.mrf.mxu0
      %v1478 = vadd.f32 0.0, %v1477
      %v1479 = vpop.f32.mrf.mxu0
      %1480 = vmatprep.mubr.f32.mxu0 0.0
      %1481 = vmatmul.mubr.f32.gmra.mxu0 %v1275
      %v1482 = vpop.f32.mrf.mxu0
      %v1483 = vadd.f32 0.0, %v1482
      %v1484 = vpop.f32.mrf.mxu0
      %1485 = vmatprep.mubr.f32.mxu0 0.0
      %1486 = vmatmul.mubr.f32.gmra.mxu0 %v1276
      %v1487 = vpop.f32.mrf.mxu0
      %v1488 = vadd.f32 0.0, %v1487
      %v1489 = vpop.f32.mrf.mxu0
      %1490 = vmatprep.mubr.f32.mxu0 0.0
      %1491 = vmatmul.mubr.f32.gmra.mxu0 %v1277
      %v1492 = vpop.f32.mrf.mxu0
      %v1493 = vadd.f32 0.0, %v1492
      %v1494 = vpop.f32.mrf.mxu0
      %1495 = vmatprep.mubr.f32.mxu0 0.0
      %1496 = vmatmul.mubr.f32.gmra.mxu0 %v1278
      %v1497 = vpop.f32.mrf.mxu0
      %v1498 = vadd.f32 0.0, %v1497
      %v1499 = vpop.f32.mrf.mxu0
      %1500 = vmatprep.mubr.f32.mxu0 0.0
      %1501 = vmatmul.mubr.f32.gmra.mxu0 %v1279
      %v1502 = vpop.f32.mrf.mxu0
      %v1503 = vadd.f32 0.0, %v1502
      %v1504 = vpop.f32.mrf.mxu0
      %1505 = vmatprep.mubr.f32.mxu0 0.0
      %1506 = vmatmul.mubr.f32.gmra.mxu0 %v1280
      %v1507 = vpop.f32.mrf.mxu0
      %v1508 = vadd.f32 0.0, %v1507
      %v1509 = vpop.f32.mrf.mxu0
      %1510 = vmatprep.mubr.f32.mxu0 0.0
      %1511 = vmatmul.mubr.f32.gmra.mxu0 %v1281
      %v1512 = vpop.f32.mrf.mxu0
      %v1513 = vadd.f32 0.0, %v1512
      %v1514 = vpop.f32.mrf.mxu0
      %1515 = vmatprep.mubr.f32.mxu0 0.0
      %1516 = vmatmul.mubr.f32.gmra.mxu0 %v1282
      %v1517 = vpop.f32.mrf.mxu0
      %v1518 = vadd.f32 0.0, %v1517
      %v1519 = vpop.f32.mrf.mxu0
      %1520 = vmatprep.mubr.f32.mxu0 0.0
      %1521 = vmatmul.mubr.f32.gmra.mxu0 %v1283
      %v1522 = vpop.f32.mrf.mxu0
      %v1523 = vadd.f32 0.0, %v1522
      %v1524 = vpop.f32.mrf.mxu0
      %1525 = vdwg.mxu0
      %v1526 = vadd.f32 %v1218, %v1368
      %v1527 = vadd.f32 %v1219, %v1373
      %v1528 = vadd.f32 %v1220, %v1378
      %v1529 = vadd.f32 %v1221, %v1383
      %v1530 = vadd.f32 %v1222, %v1388
      %v1531 = vadd.f32 %v1223, %v1393
      %v1532 = vadd.f32 %v1224, %v1398
      %v1533 = vadd.f32 %v1225, %v1403
      %v1534 = vadd.f32 %v1226, %v1408
      %v1535 = vadd.f32 %v1227, %v1413
      %v1536 = vadd.f32 %v1228, %v1418
      %v1537 = vadd.f32 %v1229, %v1423
      %v1538 = vadd.f32 %v1230, %v1428
      %v1539 = vadd.f32 %v1231, %v1433
      %v1540 = vadd.f32 %v1232, %v1438
      %v1541 = vadd.f32 %v1233, %v1443
      %v1542 = vadd.f32 %v1234, %v1448
      %v1543 = vadd.f32 %v1235, %v1453
      %v1544 = vadd.f32 %v1236, %v1458
      %v1545 = vadd.f32 %v1237, %v1463
      %v1546 = vadd.f32 %v1238, %v1468
      %v1547 = vadd.f32 %v1239, %v1473
      %v1548 = vadd.f32 %v1240, %v1478
      %v1549 = vadd.f32 %v1241, %v1483
      %v1550 = vadd.f32 %v1242, %v1488
      %v1551 = vadd.f32 %v1243, %v1493
      %v1552 = vadd.f32 %v1244, %v1498
      %v1553 = vadd.f32 %v1245, %v1503
      %v1554 = vadd.f32 %v1246, %v1508
      %v1555 = vadd.f32 %v1247, %v1513
      %v1556 = vadd.f32 %v1248, %v1518
      %v1557 = vadd.f32 %v1249, %v1523
      %s1558 = sadd.s32 %s82, 25
      %s1559 = scalar_lea.vmem [#allocation3], %s1558
      %v1560 = vld [vmem:[%s1559] sm:$0xff]
      %v1561 = vld [vmem:[%s1559 + $0x8] sm:$0xff]
      %v1562 = vld [vmem:[%s1559 + $0x10] sm:$0xff]
      %v1563 = vld [vmem:[%s1559 + $0x18] sm:$0xff]
      %v1564 = vld [vmem:[%s1559 + $0x20] sm:$0xff]
      %v1565 = vld [vmem:[%s1559 + $0x28] sm:$0xff]
      %v1566 = vld [vmem:[%s1559 + $0x30] sm:$0xff]
      %v1567 = vld [vmem:[%s1559 + $0x38] sm:$0xff]
      %v1568 = vld [vmem:[%s1559 + $0x40] sm:$0xff]
      %v1569 = vld [vmem:[%s1559 + $0x48] sm:$0xff]
      %v1570 = vld [vmem:[%s1559 + $0x50] sm:$0xff]
      %v1571 = vld [vmem:[%s1559 + $0x58] sm:$0xff]
      %v1572 = vld [vmem:[%s1559 + $0x60] sm:$0xff]
      %v1573 = vld [vmem:[%s1559 + $0x68] sm:$0xff]
      %v1574 = vld [vmem:[%s1559 + $0x70] sm:$0xff]
      %v1575 = vld [vmem:[%s1559 + $0x78] sm:$0xff]
      %v1576 = vld [vmem:[%s1559 + $0x80] sm:$0xff]
      %v1577 = vld [vmem:[%s1559 + $0x88] sm:$0xff]
      %v1578 = vld [vmem:[%s1559 + $0x90] sm:$0xff]
      %v1579 = vld [vmem:[%s1559 + $0x98] sm:$0xff]
      %v1580 = vld [vmem:[%s1559 + $0xa0] sm:$0xff]
      %v1581 = vld [vmem:[%s1559 + $0xa8] sm:$0xff]
      %v1582 = vld [vmem:[%s1559 + $0xb0] sm:$0xff]
      %v1583 = vld [vmem:[%s1559 + $0xb8] sm:$0xff]
      %v1584 = vld [vmem:[%s1559 + $0xc0] sm:$0xff]
      %v1585 = vld [vmem:[%s1559 + $0xc8] sm:$0xff]
      %v1586 = vld [vmem:[%s1559 + $0xd0] sm:$0xff]
      %v1587 = vld [vmem:[%s1559 + $0xd8] sm:$0xff]
      %v1588 = vld [vmem:[%s1559 + $0xe0] sm:$0xff]
      %v1589 = vld [vmem:[%s1559 + $0xe8] sm:$0xff]
      %v1590 = vld [vmem:[%s1559 + $0xf0] sm:$0xff]
      %v1591 = vld [vmem:[%s1559 + $0xf8] sm:$0xff]
      %s1592 = scalar_lea.vmem [#allocation6], 640
      %v1593 = vld [vmem:[%s1592] sm:$0xff]
      %v1594 = vld [vmem:[%s1592 + $0x8] sm:$0xff]
      %v1595 = vld [vmem:[%s1592 + $0x10] sm:$0xff]
      %v1596 = vld [vmem:[%s1592 + $0x18] sm:$0xff]
      %v1597 = vld [vmem:[%s1592 + $0x20] sm:$0xff]
      %v1598 = vld [vmem:[%s1592 + $0x28] sm:$0xff]
      %v1599 = vld [vmem:[%s1592 + $0x30] sm:$0xff]
      %v1600 = vld [vmem:[%s1592 + $0x38] sm:$0xff]
      %v1601 = vld [vmem:[%s1592 + $0x40] sm:$0xff]
      %v1602 = vld [vmem:[%s1592 + $0x48] sm:$0xff]
      %v1603 = vld [vmem:[%s1592 + $0x50] sm:$0xff]
      %v1604 = vld [vmem:[%s1592 + $0x58] sm:$0xff]
      %v1605 = vld [vmem:[%s1592 + $0x60] sm:$0xff]
      %v1606 = vld [vmem:[%s1592 + $0x68] sm:$0xff]
      %v1607 = vld [vmem:[%s1592 + $0x70] sm:$0xff]
      %v1608 = vld [vmem:[%s1592 + $0x78] sm:$0xff]
      %1609 = vmatprep.subr.mxu0 0.0
      %1610 = vmatpush1.msra.mxu0 %v1608
      %1611 = vmatprep.subr.mxu0 0.0
      %1612 = vmatpush1.msra.mxu0 %v1607
      %1613 = vmatprep.subr.mxu0 0.0
      %1614 = vmatpush1.msra.mxu0 %v1606
      %1615 = vmatprep.subr.mxu0 0.0
      %1616 = vmatpush1.msra.mxu0 %v1605
      %1617 = vmatprep.subr.mxu0 0.0
      %1618 = vmatpush1.msra.mxu0 %v1604
      %1619 = vmatprep.subr.mxu0 0.0
      %1620 = vmatpush1.msra.mxu0 %v1603
      %1621 = vmatprep.subr.mxu0 0.0
      %1622 = vmatpush1.msra.mxu0 %v1602
      %1623 = vmatprep.subr.mxu0 0.0
      %1624 = vmatpush1.msra.mxu0 %v1601
      %1625 = vmatprep.subr.mxu0 0.0
      %1626 = vmatpush1.msra.mxu0 %v1600
      %1627 = vmatprep.subr.mxu0 0.0
      %1628 = vmatpush1.msra.mxu0 %v1599
      %1629 = vmatprep.subr.mxu0 0.0
      %1630 = vmatpush1.msra.mxu0 %v1598
      %1631 = vmatprep.subr.mxu0 0.0
      %1632 = vmatpush1.msra.mxu0 %v1597
      %1633 = vmatprep.subr.mxu0 0.0
      %1634 = vmatpush1.msra.mxu0 %v1596
      %1635 = vmatprep.subr.mxu0 0.0
      %1636 = vmatpush1.msra.mxu0 %v1595
      %1637 = vmatprep.subr.mxu0 0.0
      %1638 = vmatpush1.msra.mxu0 %v1594
      %1639 = vmatprep.subr.mxu0 0.0
      %1640 = vmatpush1.msra.mxu0 %v1593
      %1641 = vmatprep.subr.mxu0 0.0
      %1642 = vmatpush2.msra.mxu0 0.0
      %1643 = vmatprep.subr.mxu0 0.0
      %1644 = vmatpush2.msra.mxu0 0.0
      %1645 = vmatprep.subr.mxu0 0.0
      %1646 = vmatpush2.msra.mxu0 0.0
      %1647 = vmatprep.subr.mxu0 0.0
      %1648 = vmatpush2.msra.mxu0 0.0
      %1649 = vmatprep.subr.mxu0 0.0
      %1650 = vmatpush2.msra.mxu0 0.0
      %1651 = vmatprep.subr.mxu0 0.0
      %1652 = vmatpush2.msra.mxu0 0.0
      %1653 = vmatprep.subr.mxu0 0.0
      %1654 = vmatpush2.msra.mxu0 0.0
      %1655 = vmatprep.subr.mxu0 0.0
      %1656 = vmatpush2.msra.mxu0 0.0
      %1657 = vmatprep.subr.mxu0 0.0
      %1658 = vmatpush2.msra.mxu0 0.0
      %1659 = vmatprep.subr.mxu0 0.0
      %1660 = vmatpush2.msra.mxu0 0.0
      %1661 = vmatprep.subr.mxu0 0.0
      %1662 = vmatpush2.msra.mxu0 0.0
      %1663 = vmatprep.subr.mxu0 0.0
      %1664 = vmatpush2.msra.mxu0 0.0
      %1665 = vmatprep.subr.mxu0 0.0
      %1666 = vmatpush2.msra.mxu0 0.0
      %1667 = vmatprep.subr.mxu0 0.0
      %1668 = vmatpush2.msra.mxu0 0.0
      %1669 = vmatprep.subr.mxu0 0.0
      %1670 = vmatpush2.msra.mxu0 0.0
      %1671 = vmatprep.subr.mxu0 0.0
      %1672 = vmatpush2.msra.mxu0 0.0
      %1673 = vmatprep.mubr.f32.mxu0 0.0
      %1674 = vmatmul.mubr.f32.gmra.mxu0 %v1560
      %v1675 = vpop.f32.mrf.mxu0
      %v1676 = vadd.f32 0.0, %v1675
      %v1677 = vpop.f32.mrf.mxu0
      %1678 = vmatprep.mubr.f32.mxu0 0.0
      %1679 = vmatmul.mubr.f32.gmra.mxu0 %v1561
      %v1680 = vpop.f32.mrf.mxu0
      %v1681 = vadd.f32 0.0, %v1680
      %v1682 = vpop.f32.mrf.mxu0
      %1683 = vmatprep.mubr.f32.mxu0 0.0
      %1684 = vmatmul.mubr.f32.gmra.mxu0 %v1562
      %v1685 = vpop.f32.mrf.mxu0
      %v1686 = vadd.f32 0.0, %v1685
      %v1687 = vpop.f32.mrf.mxu0
      %1688 = vmatprep.mubr.f32.mxu0 0.0
      %1689 = vmatmul.mubr.f32.gmra.mxu0 %v1563
      %v1690 = vpop.f32.mrf.mxu0
      %v1691 = vadd.f32 0.0, %v1690
      %v1692 = vpop.f32.mrf.mxu0
      %1693 = vmatprep.mubr.f32.mxu0 0.0
      %1694 = vmatmul.mubr.f32.gmra.mxu0 %v1564
      %v1695 = vpop.f32.mrf.mxu0
      %v1696 = vadd.f32 0.0, %v1695
      %v1697 = vpop.f32.mrf.mxu0
      %1698 = vmatprep.mubr.f32.mxu0 0.0
      %1699 = vmatmul.mubr.f32.gmra.mxu0 %v1565
      %v1700 = vpop.f32.mrf.mxu0
      %v1701 = vadd.f32 0.0, %v1700
      %v1702 = vpop.f32.mrf.mxu0
      %1703 = vmatprep.mubr.f32.mxu0 0.0
      %1704 = vmatmul.mubr.f32.gmra.mxu0 %v1566
      %v1705 = vpop.f32.mrf.mxu0
      %v1706 = vadd.f32 0.0, %v1705
      %v1707 = vpop.f32.mrf.mxu0
      %1708 = vmatprep.mubr.f32.mxu0 0.0
      %1709 = vmatmul.mubr.f32.gmra.mxu0 %v1567
      %v1710 = vpop.f32.mrf.mxu0
      %v1711 = vadd.f32 0.0, %v1710
      %v1712 = vpop.f32.mrf.mxu0
      %1713 = vmatprep.mubr.f32.mxu0 0.0
      %1714 = vmatmul.mubr.f32.gmra.mxu0 %v1568
      %v1715 = vpop.f32.mrf.mxu0
      %v1716 = vadd.f32 0.0, %v1715
      %v1717 = vpop.f32.mrf.mxu0
      %1718 = vmatprep.mubr.f32.mxu0 0.0
      %1719 = vmatmul.mubr.f32.gmra.mxu0 %v1569
      %v1720 = vpop.f32.mrf.mxu0
      %v1721 = vadd.f32 0.0, %v1720
      %v1722 = vpop.f32.mrf.mxu0
      %1723 = vmatprep.mubr.f32.mxu0 0.0
      %1724 = vmatmul.mubr.f32.gmra.mxu0 %v1570
      %v1725 = vpop.f32.mrf.mxu0
      %v1726 = vadd.f32 0.0, %v1725
      %v1727 = vpop.f32.mrf.mxu0
      %1728 = vmatprep.mubr.f32.mxu0 0.0
      %1729 = vmatmul.mubr.f32.gmra.mxu0 %v1571
      %v1730 = vpop.f32.mrf.mxu0
      %v1731 = vadd.f32 0.0, %v1730
      %v1732 = vpop.f32.mrf.mxu0
      %1733 = vmatprep.mubr.f32.mxu0 0.0
      %1734 = vmatmul.mubr.f32.gmra.mxu0 %v1572
      %v1735 = vpop.f32.mrf.mxu0
      %v1736 = vadd.f32 0.0, %v1735
      %v1737 = vpop.f32.mrf.mxu0
      %1738 = vmatprep.mubr.f32.mxu0 0.0
      %1739 = vmatmul.mubr.f32.gmra.mxu0 %v1573
      %v1740 = vpop.f32.mrf.mxu0
      %v1741 = vadd.f32 0.0, %v1740
      %v1742 = vpop.f32.mrf.mxu0
      %1743 = vmatprep.mubr.f32.mxu0 0.0
      %1744 = vmatmul.mubr.f32.gmra.mxu0 %v1574
      %v1745 = vpop.f32.mrf.mxu0
      %v1746 = vadd.f32 0.0, %v1745
      %v1747 = vpop.f32.mrf.mxu0
      %1748 = vmatprep.mubr.f32.mxu0 0.0
      %1749 = vmatmul.mubr.f32.gmra.mxu0 %v1575
      %v1750 = vpop.f32.mrf.mxu0
      %v1751 = vadd.f32 0.0, %v1750
      %v1752 = vpop.f32.mrf.mxu0
      %1753 = vmatprep.mubr.f32.mxu0 0.0
      %1754 = vmatmul.mubr.f32.gmra.mxu0 %v1576
      %v1755 = vpop.f32.mrf.mxu0
      %v1756 = vadd.f32 0.0, %v1755
      %v1757 = vpop.f32.mrf.mxu0
      %1758 = vmatprep.mubr.f32.mxu0 0.0
      %1759 = vmatmul.mubr.f32.gmra.mxu0 %v1577
      %v1760 = vpop.f32.mrf.mxu0
      %v1761 = vadd.f32 0.0, %v1760
      %v1762 = vpop.f32.mrf.mxu0
      %1763 = vmatprep.mubr.f32.mxu0 0.0
      %1764 = vmatmul.mubr.f32.gmra.mxu0 %v1578
      %v1765 = vpop.f32.mrf.mxu0
      %v1766 = vadd.f32 0.0, %v1765
      %v1767 = vpop.f32.mrf.mxu0
      %1768 = vmatprep.mubr.f32.mxu0 0.0
      %1769 = vmatmul.mubr.f32.gmra.mxu0 %v1579
      %v1770 = vpop.f32.mrf.mxu0
      %v1771 = vadd.f32 0.0, %v1770
      %v1772 = vpop.f32.mrf.mxu0
      %1773 = vmatprep.mubr.f32.mxu0 0.0
      %1774 = vmatmul.mubr.f32.gmra.mxu0 %v1580
      %v1775 = vpop.f32.mrf.mxu0
      %v1776 = vadd.f32 0.0, %v1775
      %v1777 = vpop.f32.mrf.mxu0
      %1778 = vmatprep.mubr.f32.mxu0 0.0
      %1779 = vmatmul.mubr.f32.gmra.mxu0 %v1581
      %v1780 = vpop.f32.mrf.mxu0
      %v1781 = vadd.f32 0.0, %v1780
      %v1782 = vpop.f32.mrf.mxu0
      %1783 = vmatprep.mubr.f32.mxu0 0.0
      %1784 = vmatmul.mubr.f32.gmra.mxu0 %v1582
      %v1785 = vpop.f32.mrf.mxu0
      %v1786 = vadd.f32 0.0, %v1785
      %v1787 = vpop.f32.mrf.mxu0
      %1788 = vmatprep.mubr.f32.mxu0 0.0
      %1789 = vmatmul.mubr.f32.gmra.mxu0 %v1583
      %v1790 = vpop.f32.mrf.mxu0
      %v1791 = vadd.f32 0.0, %v1790
      %v1792 = vpop.f32.mrf.mxu0
      %1793 = vmatprep.mubr.f32.mxu0 0.0
      %1794 = vmatmul.mubr.f32.gmra.mxu0 %v1584
      %v1795 = vpop.f32.mrf.mxu0
      %v1796 = vadd.f32 0.0, %v1795
      %v1797 = vpop.f32.mrf.mxu0
      %1798 = vmatprep.mubr.f32.mxu0 0.0
      %1799 = vmatmul.mubr.f32.gmra.mxu0 %v1585
      %v1800 = vpop.f32.mrf.mxu0
      %v1801 = vadd.f32 0.0, %v1800
      %v1802 = vpop.f32.mrf.mxu0
      %1803 = vmatprep.mubr.f32.mxu0 0.0
      %1804 = vmatmul.mubr.f32.gmra.mxu0 %v1586
      %v1805 = vpop.f32.mrf.mxu0
      %v1806 = vadd.f32 0.0, %v1805
      %v1807 = vpop.f32.mrf.mxu0
      %1808 = vmatprep.mubr.f32.mxu0 0.0
      %1809 = vmatmul.mubr.f32.gmra.mxu0 %v1587
      %v1810 = vpop.f32.mrf.mxu0
      %v1811 = vadd.f32 0.0, %v1810
      %v1812 = vpop.f32.mrf.mxu0
      %1813 = vmatprep.mubr.f32.mxu0 0.0
      %1814 = vmatmul.mubr.f32.gmra.mxu0 %v1588
      %v1815 = vpop.f32.mrf.mxu0
      %v1816 = vadd.f32 0.0, %v1815
      %v1817 = vpop.f32.mrf.mxu0
      %1818 = vmatprep.mubr.f32.mxu0 0.0
      %1819 = vmatmul.mubr.f32.gmra.mxu0 %v1589
      %v1820 = vpop.f32.mrf.mxu0
      %v1821 = vadd.f32 0.0, %v1820
      %v1822 = vpop.f32.mrf.mxu0
      %1823 = vmatprep.mubr.f32.mxu0 0.0
      %1824 = vmatmul.mubr.f32.gmra.mxu0 %v1590
      %v1825 = vpop.f32.mrf.mxu0
      %v1826 = vadd.f32 0.0, %v1825
      %v1827 = vpop.f32.mrf.mxu0
      %1828 = vmatprep.mubr.f32.mxu0 0.0
      %1829 = vmatmul.mubr.f32.gmra.mxu0 %v1591
      %v1830 = vpop.f32.mrf.mxu0
      %v1831 = vadd.f32 0.0, %v1830
      %v1832 = vpop.f32.mrf.mxu0
      %1833 = vdwg.mxu0
      %v1834 = vadd.f32 %v1526, %v1676
      %v1835 = vadd.f32 %v1527, %v1681
      %v1836 = vadd.f32 %v1528, %v1686
      %v1837 = vadd.f32 %v1529, %v1691
      %v1838 = vadd.f32 %v1530, %v1696
      %v1839 = vadd.f32 %v1531, %v1701
      %v1840 = vadd.f32 %v1532, %v1706
      %v1841 = vadd.f32 %v1533, %v1711
      %v1842 = vadd.f32 %v1534, %v1716
      %v1843 = vadd.f32 %v1535, %v1721
      %v1844 = vadd.f32 %v1536, %v1726
      %v1845 = vadd.f32 %v1537, %v1731
      %v1846 = vadd.f32 %v1538, %v1736
      %v1847 = vadd.f32 %v1539, %v1741
      %v1848 = vadd.f32 %v1540, %v1746
      %v1849 = vadd.f32 %v1541, %v1751
      %v1850 = vadd.f32 %v1542, %v1756
      %v1851 = vadd.f32 %v1543, %v1761
      %v1852 = vadd.f32 %v1544, %v1766
      %v1853 = vadd.f32 %v1545, %v1771
      %v1854 = vadd.f32 %v1546, %v1776
      %v1855 = vadd.f32 %v1547, %v1781
      %v1856 = vadd.f32 %v1548, %v1786
      %v1857 = vadd.f32 %v1549, %v1791
      %v1858 = vadd.f32 %v1550, %v1796
      %v1859 = vadd.f32 %v1551, %v1801
      %v1860 = vadd.f32 %v1552, %v1806
      %v1861 = vadd.f32 %v1553, %v1811
      %v1862 = vadd.f32 %v1554, %v1816
      %v1863 = vadd.f32 %v1555, %v1821
      %v1864 = vadd.f32 %v1556, %v1826
      %v1865 = vadd.f32 %v1557, %v1831
      %s1866 = sadd.s32 %s82, 41
      %s1867 = scalar_lea.vmem [#allocation3], %s1866
      %v1868 = vld [vmem:[%s1867] sm:$0xff]
      %v1869 = vld [vmem:[%s1867 + $0x8] sm:$0xff]
      %v1870 = vld [vmem:[%s1867 + $0x10] sm:$0xff]
      %v1871 = vld [vmem:[%s1867 + $0x18] sm:$0xff]
      %v1872 = vld [vmem:[%s1867 + $0x20] sm:$0xff]
      %v1873 = vld [vmem:[%s1867 + $0x28] sm:$0xff]
      %v1874 = vld [vmem:[%s1867 + $0x30] sm:$0xff]
      %v1875 = vld [vmem:[%s1867 + $0x38] sm:$0xff]
      %v1876 = vld [vmem:[%s1867 + $0x40] sm:$0xff]
      %v1877 = vld [vmem:[%s1867 + $0x48] sm:$0xff]
      %v1878 = vld [vmem:[%s1867 + $0x50] sm:$0xff]
      %v1879 = vld [vmem:[%s1867 + $0x58] sm:$0xff]
      %v1880 = vld [vmem:[%s1867 + $0x60] sm:$0xff]
      %v1881 = vld [vmem:[%s1867 + $0x68] sm:$0xff]
      %v1882 = vld [vmem:[%s1867 + $0x70] sm:$0xff]
      %v1883 = vld [vmem:[%s1867 + $0x78] sm:$0xff]
      %v1884 = vld [vmem:[%s1867 + $0x80] sm:$0xff]
      %v1885 = vld [vmem:[%s1867 + $0x88] sm:$0xff]
      %v1886 = vld [vmem:[%s1867 + $0x90] sm:$0xff]
      %v1887 = vld [vmem:[%s1867 + $0x98] sm:$0xff]
      %v1888 = vld [vmem:[%s1867 + $0xa0] sm:$0xff]
      %v1889 = vld [vmem:[%s1867 + $0xa8] sm:$0xff]
      %v1890 = vld [vmem:[%s1867 + $0xb0] sm:$0xff]
      %v1891 = vld [vmem:[%s1867 + $0xb8] sm:$0xff]
      %v1892 = vld [vmem:[%s1867 + $0xc0] sm:$0xff]
      %v1893 = vld [vmem:[%s1867 + $0xc8] sm:$0xff]
      %v1894 = vld [vmem:[%s1867 + $0xd0] sm:$0xff]
      %v1895 = vld [vmem:[%s1867 + $0xd8] sm:$0xff]
      %v1896 = vld [vmem:[%s1867 + $0xe0] sm:$0xff]
      %v1897 = vld [vmem:[%s1867 + $0xe8] sm:$0xff]
      %v1898 = vld [vmem:[%s1867 + $0xf0] sm:$0xff]
      %v1899 = vld [vmem:[%s1867 + $0xf8] sm:$0xff]
      %s1900 = scalar_lea.vmem [#allocation6], 768
      %v1901 = vld [vmem:[%s1900] sm:$0xff]
      %v1902 = vld [vmem:[%s1900 + $0x8] sm:$0xff]
      %v1903 = vld [vmem:[%s1900 + $0x10] sm:$0xff]
      %v1904 = vld [vmem:[%s1900 + $0x18] sm:$0xff]
      %v1905 = vld [vmem:[%s1900 + $0x20] sm:$0xff]
      %v1906 = vld [vmem:[%s1900 + $0x28] sm:$0xff]
      %v1907 = vld [vmem:[%s1900 + $0x30] sm:$0xff]
      %v1908 = vld [vmem:[%s1900 + $0x38] sm:$0xff]
      %v1909 = vld [vmem:[%s1900 + $0x40] sm:$0xff]
      %v1910 = vld [vmem:[%s1900 + $0x48] sm:$0xff]
      %v1911 = vld [vmem:[%s1900 + $0x50] sm:$0xff]
      %v1912 = vld [vmem:[%s1900 + $0x58] sm:$0xff]
      %v1913 = vld [vmem:[%s1900 + $0x60] sm:$0xff]
      %v1914 = vld [vmem:[%s1900 + $0x68] sm:$0xff]
      %v1915 = vld [vmem:[%s1900 + $0x70] sm:$0xff]
      %v1916 = vld [vmem:[%s1900 + $0x78] sm:$0xff]
      %1917 = vmatprep.subr.mxu0 0.0
      %1918 = vmatpush1.msra.mxu0 %v1916
      %1919 = vmatprep.subr.mxu0 0.0
      %1920 = vmatpush1.msra.mxu0 %v1915
      %1921 = vmatprep.subr.mxu0 0.0
      %1922 = vmatpush1.msra.mxu0 %v1914
      %1923 = vmatprep.subr.mxu0 0.0
      %1924 = vmatpush1.msra.mxu0 %v1913
      %1925 = vmatprep.subr.mxu0 0.0
      %1926 = vmatpush1.msra.mxu0 %v1912
      %1927 = vmatprep.subr.mxu0 0.0
      %1928 = vmatpush1.msra.mxu0 %v1911
      %1929 = vmatprep.subr.mxu0 0.0
      %1930 = vmatpush1.msra.mxu0 %v1910
      %1931 = vmatprep.subr.mxu0 0.0
      %1932 = vmatpush1.msra.mxu0 %v1909
      %1933 = vmatprep.subr.mxu0 0.0
      %1934 = vmatpush1.msra.mxu0 %v1908
      %1935 = vmatprep.subr.mxu0 0.0
      %1936 = vmatpush1.msra.mxu0 %v1907
      %1937 = vmatprep.subr.mxu0 0.0
      %1938 = vmatpush1.msra.mxu0 %v1906
      %1939 = vmatprep.subr.mxu0 0.0
      %1940 = vmatpush1.msra.mxu0 %v1905
      %1941 = vmatprep.subr.mxu0 0.0
      %1942 = vmatpush1.msra.mxu0 %v1904
      %1943 = vmatprep.subr.mxu0 0.0
      %1944 = vmatpush1.msra.mxu0 %v1903
      %1945 = vmatprep.subr.mxu0 0.0
      %1946 = vmatpush1.msra.mxu0 %v1902
      %1947 = vmatprep.subr.mxu0 0.0
      %1948 = vmatpush1.msra.mxu0 %v1901
      %1949 = vmatprep.subr.mxu0 0.0
      %1950 = vmatpush2.msra.mxu0 0.0
      %1951 = vmatprep.subr.mxu0 0.0
      %1952 = vmatpush2.msra.mxu0 0.0
      %1953 = vmatprep.subr.mxu0 0.0
      %1954 = vmatpush2.msra.mxu0 0.0
      %1955 = vmatprep.subr.mxu0 0.0
      %1956 = vmatpush2.msra.mxu0 0.0
      %1957 = vmatprep.subr.mxu0 0.0
      %1958 = vmatpush2.msra.mxu0 0.0
      %1959 = vmatprep.subr.mxu0 0.0
      %1960 = vmatpush2.msra.mxu0 0.0
      %1961 = vmatprep.subr.mxu0 0.0
      %1962 = vmatpush2.msra.mxu0 0.0
      %1963 = vmatprep.subr.mxu0 0.0
      %1964 = vmatpush2.msra.mxu0 0.0
      %1965 = vmatprep.subr.mxu0 0.0
      %1966 = vmatpush2.msra.mxu0 0.0
      %1967 = vmatprep.subr.mxu0 0.0
      %1968 = vmatpush2.msra.mxu0 0.0
      %1969 = vmatprep.subr.mxu0 0.0
      %1970 = vmatpush2.msra.mxu0 0.0
      %1971 = vmatprep.subr.mxu0 0.0
      %1972 = vmatpush2.msra.mxu0 0.0
      %1973 = vmatprep.subr.mxu0 0.0
      %1974 = vmatpush2.msra.mxu0 0.0
      %1975 = vmatprep.subr.mxu0 0.0
      %1976 = vmatpush2.msra.mxu0 0.0
      %1977 = vmatprep.subr.mxu0 0.0
      %1978 = vmatpush2.msra.mxu0 0.0
      %1979 = vmatprep.subr.mxu0 0.0
      %1980 = vmatpush2.msra.mxu0 0.0
      %1981 = vmatprep.mubr.f32.mxu0 0.0
      %1982 = vmatmul.mubr.f32.gmra.mxu0 %v1868
      %v1983 = vpop.f32.mrf.mxu0
      %v1984 = vadd.f32 0.0, %v1983
      %v1985 = vpop.f32.mrf.mxu0
      %1986 = vmatprep.mubr.f32.mxu0 0.0
      %1987 = vmatmul.mubr.f32.gmra.mxu0 %v1869
      %v1988 = vpop.f32.mrf.mxu0
      %v1989 = vadd.f32 0.0, %v1988
      %v1990 = vpop.f32.mrf.mxu0
      %1991 = vmatprep.mubr.f32.mxu0 0.0
      %1992 = vmatmul.mubr.f32.gmra.mxu0 %v1870
      %v1993 = vpop.f32.mrf.mxu0
      %v1994 = vadd.f32 0.0, %v1993
      %v1995 = vpop.f32.mrf.mxu0
      %1996 = vmatprep.mubr.f32.mxu0 0.0
      %1997 = vmatmul.mubr.f32.gmra.mxu0 %v1871
      %v1998 = vpop.f32.mrf.mxu0
      %v1999 = vadd.f32 0.0, %v1998
      %v2000 = vpop.f32.mrf.mxu0
      %2001 = vmatprep.mubr.f32.mxu0 0.0
      %2002 = vmatmul.mubr.f32.gmra.mxu0 %v1872
      %v2003 = vpop.f32.mrf.mxu0
      %v2004 = vadd.f32 0.0, %v2003
      %v2005 = vpop.f32.mrf.mxu0
      %2006 = vmatprep.mubr.f32.mxu0 0.0
      %2007 = vmatmul.mubr.f32.gmra.mxu0 %v1873
      %v2008 = vpop.f32.mrf.mxu0
      %v2009 = vadd.f32 0.0, %v2008
      %v2010 = vpop.f32.mrf.mxu0
      %2011 = vmatprep.mubr.f32.mxu0 0.0
      %2012 = vmatmul.mubr.f32.gmra.mxu0 %v1874
      %v2013 = vpop.f32.mrf.mxu0
      %v2014 = vadd.f32 0.0, %v2013
      %v2015 = vpop.f32.mrf.mxu0
      %2016 = vmatprep.mubr.f32.mxu0 0.0
      %2017 = vmatmul.mubr.f32.gmra.mxu0 %v1875
      %v2018 = vpop.f32.mrf.mxu0
      %v2019 = vadd.f32 0.0, %v2018
      %v2020 = vpop.f32.mrf.mxu0
      %2021 = vmatprep.mubr.f32.mxu0 0.0
      %2022 = vmatmul.mubr.f32.gmra.mxu0 %v1876
      %v2023 = vpop.f32.mrf.mxu0
      %v2024 = vadd.f32 0.0, %v2023
      %v2025 = vpop.f32.mrf.mxu0
      %2026 = vmatprep.mubr.f32.mxu0 0.0
      %2027 = vmatmul.mubr.f32.gmra.mxu0 %v1877
      %v2028 = vpop.f32.mrf.mxu0
      %v2029 = vadd.f32 0.0, %v2028
      %v2030 = vpop.f32.mrf.mxu0
      %2031 = vmatprep.mubr.f32.mxu0 0.0
      %2032 = vmatmul.mubr.f32.gmra.mxu0 %v1878
      %v2033 = vpop.f32.mrf.mxu0
      %v2034 = vadd.f32 0.0, %v2033
      %v2035 = vpop.f32.mrf.mxu0
      %2036 = vmatprep.mubr.f32.mxu0 0.0
      %2037 = vmatmul.mubr.f32.gmra.mxu0 %v1879
      %v2038 = vpop.f32.mrf.mxu0
      %v2039 = vadd.f32 0.0, %v2038
      %v2040 = vpop.f32.mrf.mxu0
      %2041 = vmatprep.mubr.f32.mxu0 0.0
      %2042 = vmatmul.mubr.f32.gmra.mxu0 %v1880
      %v2043 = vpop.f32.mrf.mxu0
      %v2044 = vadd.f32 0.0, %v2043
      %v2045 = vpop.f32.mrf.mxu0
      %2046 = vmatprep.mubr.f32.mxu0 0.0
      %2047 = vmatmul.mubr.f32.gmra.mxu0 %v1881
      %v2048 = vpop.f32.mrf.mxu0
      %v2049 = vadd.f32 0.0, %v2048
      %v2050 = vpop.f32.mrf.mxu0
      %2051 = vmatprep.mubr.f32.mxu0 0.0
      %2052 = vmatmul.mubr.f32.gmra.mxu0 %v1882
      %v2053 = vpop.f32.mrf.mxu0
      %v2054 = vadd.f32 0.0, %v2053
      %v2055 = vpop.f32.mrf.mxu0
      %2056 = vmatprep.mubr.f32.mxu0 0.0
      %2057 = vmatmul.mubr.f32.gmra.mxu0 %v1883
      %v2058 = vpop.f32.mrf.mxu0
      %v2059 = vadd.f32 0.0, %v2058
      %v2060 = vpop.f32.mrf.mxu0
      %2061 = vmatprep.mubr.f32.mxu0 0.0
      %2062 = vmatmul.mubr.f32.gmra.mxu0 %v1884
      %v2063 = vpop.f32.mrf.mxu0
      %v2064 = vadd.f32 0.0, %v2063
      %v2065 = vpop.f32.mrf.mxu0
      %2066 = vmatprep.mubr.f32.mxu0 0.0
      %2067 = vmatmul.mubr.f32.gmra.mxu0 %v1885
      %v2068 = vpop.f32.mrf.mxu0
      %v2069 = vadd.f32 0.0, %v2068
      %v2070 = vpop.f32.mrf.mxu0
      %2071 = vmatprep.mubr.f32.mxu0 0.0
      %2072 = vmatmul.mubr.f32.gmra.mxu0 %v1886
      %v2073 = vpop.f32.mrf.mxu0
      %v2074 = vadd.f32 0.0, %v2073
      %v2075 = vpop.f32.mrf.mxu0
      %2076 = vmatprep.mubr.f32.mxu0 0.0
      %2077 = vmatmul.mubr.f32.gmra.mxu0 %v1887
      %v2078 = vpop.f32.mrf.mxu0
      %v2079 = vadd.f32 0.0, %v2078
      %v2080 = vpop.f32.mrf.mxu0
      %2081 = vmatprep.mubr.f32.mxu0 0.0
      %2082 = vmatmul.mubr.f32.gmra.mxu0 %v1888
      %v2083 = vpop.f32.mrf.mxu0
      %v2084 = vadd.f32 0.0, %v2083
      %v2085 = vpop.f32.mrf.mxu0
      %2086 = vmatprep.mubr.f32.mxu0 0.0
      %2087 = vmatmul.mubr.f32.gmra.mxu0 %v1889
      %v2088 = vpop.f32.mrf.mxu0
      %v2089 = vadd.f32 0.0, %v2088
      %v2090 = vpop.f32.mrf.mxu0
      %2091 = vmatprep.mubr.f32.mxu0 0.0
      %2092 = vmatmul.mubr.f32.gmra.mxu0 %v1890
      %v2093 = vpop.f32.mrf.mxu0
      %v2094 = vadd.f32 0.0, %v2093
      %v2095 = vpop.f32.mrf.mxu0
      %2096 = vmatprep.mubr.f32.mxu0 0.0
      %2097 = vmatmul.mubr.f32.gmra.mxu0 %v1891
      %v2098 = vpop.f32.mrf.mxu0
      %v2099 = vadd.f32 0.0, %v2098
      %v2100 = vpop.f32.mrf.mxu0
      %2101 = vmatprep.mubr.f32.mxu0 0.0
      %2102 = vmatmul.mubr.f32.gmra.mxu0 %v1892
      %v2103 = vpop.f32.mrf.mxu0
      %v2104 = vadd.f32 0.0, %v2103
      %v2105 = vpop.f32.mrf.mxu0
      %2106 = vmatprep.mubr.f32.mxu0 0.0
      %2107 = vmatmul.mubr.f32.gmra.mxu0 %v1893
      %v2108 = vpop.f32.mrf.mxu0
      %v2109 = vadd.f32 0.0, %v2108
      %v2110 = vpop.f32.mrf.mxu0
      %2111 = vmatprep.mubr.f32.mxu0 0.0
      %2112 = vmatmul.mubr.f32.gmra.mxu0 %v1894
      %v2113 = vpop.f32.mrf.mxu0
      %v2114 = vadd.f32 0.0, %v2113
      %v2115 = vpop.f32.mrf.mxu0
      %2116 = vmatprep.mubr.f32.mxu0 0.0
      %2117 = vmatmul.mubr.f32.gmra.mxu0 %v1895
      %v2118 = vpop.f32.mrf.mxu0
      %v2119 = vadd.f32 0.0, %v2118
      %v2120 = vpop.f32.mrf.mxu0
      %2121 = vmatprep.mubr.f32.mxu0 0.0
      %2122 = vmatmul.mubr.f32.gmra.mxu0 %v1896
      %v2123 = vpop.f32.mrf.mxu0
      %v2124 = vadd.f32 0.0, %v2123
      %v2125 = vpop.f32.mrf.mxu0
      %2126 = vmatprep.mubr.f32.mxu0 0.0
      %2127 = vmatmul.mubr.f32.gmra.mxu0 %v1897
      %v2128 = vpop.f32.mrf.mxu0
      %v2129 = vadd.f32 0.0, %v2128
      %v2130 = vpop.f32.mrf.mxu0
      %2131 = vmatprep.mubr.f32.mxu0 0.0
      %2132 = vmatmul.mubr.f32.gmra.mxu0 %v1898
      %v2133 = vpop.f32.mrf.mxu0
      %v2134 = vadd.f32 0.0, %v2133
      %v2135 = vpop.f32.mrf.mxu0
      %2136 = vmatprep.mubr.f32.mxu0 0.0
      %2137 = vmatmul.mubr.f32.gmra.mxu0 %v1899
      %v2138 = vpop.f32.mrf.mxu0
      %v2139 = vadd.f32 0.0, %v2138
      %v2140 = vpop.f32.mrf.mxu0
      %2141 = vdwg.mxu0
      %v2142 = vadd.f32 %v1834, %v1984
      %v2143 = vadd.f32 %v1835, %v1989
      %v2144 = vadd.f32 %v1836, %v1994
      %v2145 = vadd.f32 %v1837, %v1999
      %v2146 = vadd.f32 %v1838, %v2004
      %v2147 = vadd.f32 %v1839, %v2009
      %v2148 = vadd.f32 %v1840, %v2014
      %v2149 = vadd.f32 %v1841, %v2019
      %v2150 = vadd.f32 %v1842, %v2024
      %v2151 = vadd.f32 %v1843, %v2029
      %v2152 = vadd.f32 %v1844, %v2034
      %v2153 = vadd.f32 %v1845, %v2039
      %v2154 = vadd.f32 %v1846, %v2044
      %v2155 = vadd.f32 %v1847, %v2049
      %v2156 = vadd.f32 %v1848, %v2054
      %v2157 = vadd.f32 %v1849, %v2059
      %v2158 = vadd.f32 %v1850, %v2064
      %v2159 = vadd.f32 %v1851, %v2069
      %v2160 = vadd.f32 %v1852, %v2074
      %v2161 = vadd.f32 %v1853, %v2079
      %v2162 = vadd.f32 %v1854, %v2084
      %v2163 = vadd.f32 %v1855, %v2089
      %v2164 = vadd.f32 %v1856, %v2094
      %v2165 = vadd.f32 %v1857, %v2099
      %v2166 = vadd.f32 %v1858, %v2104
      %v2167 = vadd.f32 %v1859, %v2109
      %v2168 = vadd.f32 %v1860, %v2114
      %v2169 = vadd.f32 %v1861, %v2119
      %v2170 = vadd.f32 %v1862, %v2124
      %v2171 = vadd.f32 %v1863, %v2129
      %v2172 = vadd.f32 %v1864, %v2134
      %v2173 = vadd.f32 %v1865, %v2139
      %s2174 = sadd.s32 %s82, 42
      %s2175 = scalar_lea.vmem [#allocation3], %s2174
      %v2176 = vld [vmem:[%s2175] sm:$0xff]
      %v2177 = vld [vmem:[%s2175 + $0x8] sm:$0xff]
      %v2178 = vld [vmem:[%s2175 + $0x10] sm:$0xff]
      %v2179 = vld [vmem:[%s2175 + $0x18] sm:$0xff]
      %v2180 = vld [vmem:[%s2175 + $0x20] sm:$0xff]
      %v2181 = vld [vmem:[%s2175 + $0x28] sm:$0xff]
      %v2182 = vld [vmem:[%s2175 + $0x30] sm:$0xff]
      %v2183 = vld [vmem:[%s2175 + $0x38] sm:$0xff]
      %v2184 = vld [vmem:[%s2175 + $0x40] sm:$0xff]
      %v2185 = vld [vmem:[%s2175 + $0x48] sm:$0xff]
      %v2186 = vld [vmem:[%s2175 + $0x50] sm:$0xff]
      %v2187 = vld [vmem:[%s2175 + $0x58] sm:$0xff]
      %v2188 = vld [vmem:[%s2175 + $0x60] sm:$0xff]
      %v2189 = vld [vmem:[%s2175 + $0x68] sm:$0xff]
      %v2190 = vld [vmem:[%s2175 + $0x70] sm:$0xff]
      %v2191 = vld [vmem:[%s2175 + $0x78] sm:$0xff]
      %v2192 = vld [vmem:[%s2175 + $0x80] sm:$0xff]
      %v2193 = vld [vmem:[%s2175 + $0x88] sm:$0xff]
      %v2194 = vld [vmem:[%s2175 + $0x90] sm:$0xff]
      %v2195 = vld [vmem:[%s2175 + $0x98] sm:$0xff]
      %v2196 = vld [vmem:[%s2175 + $0xa0] sm:$0xff]
      %v2197 = vld [vmem:[%s2175 + $0xa8] sm:$0xff]
      %v2198 = vld [vmem:[%s2175 + $0xb0] sm:$0xff]
      %v2199 = vld [vmem:[%s2175 + $0xb8] sm:$0xff]
      %v2200 = vld [vmem:[%s2175 + $0xc0] sm:$0xff]
      %v2201 = vld [vmem:[%s2175 + $0xc8] sm:$0xff]
      %v2202 = vld [vmem:[%s2175 + $0xd0] sm:$0xff]
      %v2203 = vld [vmem:[%s2175 + $0xd8] sm:$0xff]
      %v2204 = vld [vmem:[%s2175 + $0xe0] sm:$0xff]
      %v2205 = vld [vmem:[%s2175 + $0xe8] sm:$0xff]
      %v2206 = vld [vmem:[%s2175 + $0xf0] sm:$0xff]
      %v2207 = vld [vmem:[%s2175 + $0xf8] sm:$0xff]
      %s2208 = scalar_lea.vmem [#allocation6], 896
      %v2209 = vld [vmem:[%s2208] sm:$0xff]
      %v2210 = vld [vmem:[%s2208 + $0x8] sm:$0xff]
      %v2211 = vld [vmem:[%s2208 + $0x10] sm:$0xff]
      %v2212 = vld [vmem:[%s2208 + $0x18] sm:$0xff]
      %v2213 = vld [vmem:[%s2208 + $0x20] sm:$0xff]
      %v2214 = vld [vmem:[%s2208 + $0x28] sm:$0xff]
      %v2215 = vld [vmem:[%s2208 + $0x30] sm:$0xff]
      %v2216 = vld [vmem:[%s2208 + $0x38] sm:$0xff]
      %v2217 = vld [vmem:[%s2208 + $0x40] sm:$0xff]
      %v2218 = vld [vmem:[%s2208 + $0x48] sm:$0xff]
      %v2219 = vld [vmem:[%s2208 + $0x50] sm:$0xff]
      %v2220 = vld [vmem:[%s2208 + $0x58] sm:$0xff]
      %v2221 = vld [vmem:[%s2208 + $0x60] sm:$0xff]
      %v2222 = vld [vmem:[%s2208 + $0x68] sm:$0xff]
      %v2223 = vld [vmem:[%s2208 + $0x70] sm:$0xff]
      %v2224 = vld [vmem:[%s2208 + $0x78] sm:$0xff]
      %2225 = vmatprep.subr.mxu0 0.0
      %2226 = vmatpush1.msra.mxu0 %v2224
      %2227 = vmatprep.subr.mxu0 0.0
      %2228 = vmatpush1.msra.mxu0 %v2223
      %2229 = vmatprep.subr.mxu0 0.0
      %2230 = vmatpush1.msra.mxu0 %v2222
      %2231 = vmatprep.subr.mxu0 0.0
      %2232 = vmatpush1.msra.mxu0 %v2221
      %2233 = vmatprep.subr.mxu0 0.0
      %2234 = vmatpush1.msra.mxu0 %v2220
      %2235 = vmatprep.subr.mxu0 0.0
      %2236 = vmatpush1.msra.mxu0 %v2219
      %2237 = vmatprep.subr.mxu0 0.0
      %2238 = vmatpush1.msra.mxu0 %v2218
      %2239 = vmatprep.subr.mxu0 0.0
      %2240 = vmatpush1.msra.mxu0 %v2217
      %2241 = vmatprep.subr.mxu0 0.0
      %2242 = vmatpush1.msra.mxu0 %v2216
      %2243 = vmatprep.subr.mxu0 0.0
      %2244 = vmatpush1.msra.mxu0 %v2215
      %2245 = vmatprep.subr.mxu0 0.0
      %2246 = vmatpush1.msra.mxu0 %v2214
      %2247 = vmatprep.subr.mxu0 0.0
      %2248 = vmatpush1.msra.mxu0 %v2213
      %2249 = vmatprep.subr.mxu0 0.0
      %2250 = vmatpush1.msra.mxu0 %v2212
      %2251 = vmatprep.subr.mxu0 0.0
      %2252 = vmatpush1.msra.mxu0 %v2211
      %2253 = vmatprep.subr.mxu0 0.0
      %2254 = vmatpush1.msra.mxu0 %v2210
      %2255 = vmatprep.subr.mxu0 0.0
      %2256 = vmatpush1.msra.mxu0 %v2209
      %2257 = vmatprep.subr.mxu0 0.0
      %2258 = vmatpush2.msra.mxu0 0.0
      %2259 = vmatprep.subr.mxu0 0.0
      %2260 = vmatpush2.msra.mxu0 0.0
      %2261 = vmatprep.subr.mxu0 0.0
      %2262 = vmatpush2.msra.mxu0 0.0
      %2263 = vmatprep.subr.mxu0 0.0
      %2264 = vmatpush2.msra.mxu0 0.0
      %2265 = vmatprep.subr.mxu0 0.0
      %2266 = vmatpush2.msra.mxu0 0.0
      %2267 = vmatprep.subr.mxu0 0.0
      %2268 = vmatpush2.msra.mxu0 0.0
      %2269 = vmatprep.subr.mxu0 0.0
      %2270 = vmatpush2.msra.mxu0 0.0
      %2271 = vmatprep.subr.mxu0 0.0
      %2272 = vmatpush2.msra.mxu0 0.0
      %2273 = vmatprep.subr.mxu0 0.0
      %2274 = vmatpush2.msra.mxu0 0.0
      %2275 = vmatprep.subr.mxu0 0.0
      %2276 = vmatpush2.msra.mxu0 0.0
      %2277 = vmatprep.subr.mxu0 0.0
      %2278 = vmatpush2.msra.mxu0 0.0
      %2279 = vmatprep.subr.mxu0 0.0
      %2280 = vmatpush2.msra.mxu0 0.0
      %2281 = vmatprep.subr.mxu0 0.0
      %2282 = vmatpush2.msra.mxu0 0.0
      %2283 = vmatprep.subr.mxu0 0.0
      %2284 = vmatpush2.msra.mxu0 0.0
      %2285 = vmatprep.subr.mxu0 0.0
      %2286 = vmatpush2.msra.mxu0 0.0
      %2287 = vmatprep.subr.mxu0 0.0
      %2288 = vmatpush2.msra.mxu0 0.0
      %2289 = vmatprep.mubr.f32.mxu0 0.0
      %2290 = vmatmul.mubr.f32.gmra.mxu0 %v2176
      %v2291 = vpop.f32.mrf.mxu0
      %v2292 = vadd.f32 0.0, %v2291
      %v2293 = vpop.f32.mrf.mxu0
      %2294 = vmatprep.mubr.f32.mxu0 0.0
      %2295 = vmatmul.mubr.f32.gmra.mxu0 %v2177
      %v2296 = vpop.f32.mrf.mxu0
      %v2297 = vadd.f32 0.0, %v2296
      %v2298 = vpop.f32.mrf.mxu0
      %2299 = vmatprep.mubr.f32.mxu0 0.0
      %2300 = vmatmul.mubr.f32.gmra.mxu0 %v2178
      %v2301 = vpop.f32.mrf.mxu0
      %v2302 = vadd.f32 0.0, %v2301
      %v2303 = vpop.f32.mrf.mxu0
      %2304 = vmatprep.mubr.f32.mxu0 0.0
      %2305 = vmatmul.mubr.f32.gmra.mxu0 %v2179
      %v2306 = vpop.f32.mrf.mxu0
      %v2307 = vadd.f32 0.0, %v2306
      %v2308 = vpop.f32.mrf.mxu0
      %2309 = vmatprep.mubr.f32.mxu0 0.0
      %2310 = vmatmul.mubr.f32.gmra.mxu0 %v2180
      %v2311 = vpop.f32.mrf.mxu0
      %v2312 = vadd.f32 0.0, %v2311
      %v2313 = vpop.f32.mrf.mxu0
      %2314 = vmatprep.mubr.f32.mxu0 0.0
      %2315 = vmatmul.mubr.f32.gmra.mxu0 %v2181
      %v2316 = vpop.f32.mrf.mxu0
      %v2317 = vadd.f32 0.0, %v2316
      %v2318 = vpop.f32.mrf.mxu0
      %2319 = vmatprep.mubr.f32.mxu0 0.0
      %2320 = vmatmul.mubr.f32.gmra.mxu0 %v2182
      %v2321 = vpop.f32.mrf.mxu0
      %v2322 = vadd.f32 0.0, %v2321
      %v2323 = vpop.f32.mrf.mxu0
      %2324 = vmatprep.mubr.f32.mxu0 0.0
      %2325 = vmatmul.mubr.f32.gmra.mxu0 %v2183
      %v2326 = vpop.f32.mrf.mxu0
      %v2327 = vadd.f32 0.0, %v2326
      %v2328 = vpop.f32.mrf.mxu0
      %2329 = vmatprep.mubr.f32.mxu0 0.0
      %2330 = vmatmul.mubr.f32.gmra.mxu0 %v2184
      %v2331 = vpop.f32.mrf.mxu0
      %v2332 = vadd.f32 0.0, %v2331
      %v2333 = vpop.f32.mrf.mxu0
      %2334 = vmatprep.mubr.f32.mxu0 0.0
      %2335 = vmatmul.mubr.f32.gmra.mxu0 %v2185
      %v2336 = vpop.f32.mrf.mxu0
      %v2337 = vadd.f32 0.0, %v2336
      %v2338 = vpop.f32.mrf.mxu0
      %2339 = vmatprep.mubr.f32.mxu0 0.0
      %2340 = vmatmul.mubr.f32.gmra.mxu0 %v2186
      %v2341 = vpop.f32.mrf.mxu0
      %v2342 = vadd.f32 0.0, %v2341
      %v2343 = vpop.f32.mrf.mxu0
      %2344 = vmatprep.mubr.f32.mxu0 0.0
      %2345 = vmatmul.mubr.f32.gmra.mxu0 %v2187
      %v2346 = vpop.f32.mrf.mxu0
      %v2347 = vadd.f32 0.0, %v2346
      %v2348 = vpop.f32.mrf.mxu0
      %2349 = vmatprep.mubr.f32.mxu0 0.0
      %2350 = vmatmul.mubr.f32.gmra.mxu0 %v2188
      %v2351 = vpop.f32.mrf.mxu0
      %v2352 = vadd.f32 0.0, %v2351
      %v2353 = vpop.f32.mrf.mxu0
      %2354 = vmatprep.mubr.f32.mxu0 0.0
      %2355 = vmatmul.mubr.f32.gmra.mxu0 %v2189
      %v2356 = vpop.f32.mrf.mxu0
      %v2357 = vadd.f32 0.0, %v2356
      %v2358 = vpop.f32.mrf.mxu0
      %2359 = vmatprep.mubr.f32.mxu0 0.0
      %2360 = vmatmul.mubr.f32.gmra.mxu0 %v2190
      %v2361 = vpop.f32.mrf.mxu0
      %v2362 = vadd.f32 0.0, %v2361
      %v2363 = vpop.f32.mrf.mxu0
      %2364 = vmatprep.mubr.f32.mxu0 0.0
      %2365 = vmatmul.mubr.f32.gmra.mxu0 %v2191
      %v2366 = vpop.f32.mrf.mxu0
      %v2367 = vadd.f32 0.0, %v2366
      %v2368 = vpop.f32.mrf.mxu0
      %2369 = vmatprep.mubr.f32.mxu0 0.0
      %2370 = vmatmul.mubr.f32.gmra.mxu0 %v2192
      %v2371 = vpop.f32.mrf.mxu0
      %v2372 = vadd.f32 0.0, %v2371
      %v2373 = vpop.f32.mrf.mxu0
      %2374 = vmatprep.mubr.f32.mxu0 0.0
      %2375 = vmatmul.mubr.f32.gmra.mxu0 %v2193
      %v2376 = vpop.f32.mrf.mxu0
      %v2377 = vadd.f32 0.0, %v2376
      %v2378 = vpop.f32.mrf.mxu0
      %2379 = vmatprep.mubr.f32.mxu0 0.0
      %2380 = vmatmul.mubr.f32.gmra.mxu0 %v2194
      %v2381 = vpop.f32.mrf.mxu0
      %v2382 = vadd.f32 0.0, %v2381
      %v2383 = vpop.f32.mrf.mxu0
      %2384 = vmatprep.mubr.f32.mxu0 0.0
      %2385 = vmatmul.mubr.f32.gmra.mxu0 %v2195
      %v2386 = vpop.f32.mrf.mxu0
      %v2387 = vadd.f32 0.0, %v2386
      %v2388 = vpop.f32.mrf.mxu0
      %2389 = vmatprep.mubr.f32.mxu0 0.0
      %2390 = vmatmul.mubr.f32.gmra.mxu0 %v2196
      %v2391 = vpop.f32.mrf.mxu0
      %v2392 = vadd.f32 0.0, %v2391
      %v2393 = vpop.f32.mrf.mxu0
      %2394 = vmatprep.mubr.f32.mxu0 0.0
      %2395 = vmatmul.mubr.f32.gmra.mxu0 %v2197
      %v2396 = vpop.f32.mrf.mxu0
      %v2397 = vadd.f32 0.0, %v2396
      %v2398 = vpop.f32.mrf.mxu0
      %2399 = vmatprep.mubr.f32.mxu0 0.0
      %2400 = vmatmul.mubr.f32.gmra.mxu0 %v2198
      %v2401 = vpop.f32.mrf.mxu0
      %v2402 = vadd.f32 0.0, %v2401
      %v2403 = vpop.f32.mrf.mxu0
      %2404 = vmatprep.mubr.f32.mxu0 0.0
      %2405 = vmatmul.mubr.f32.gmra.mxu0 %v2199
      %v2406 = vpop.f32.mrf.mxu0
      %v2407 = vadd.f32 0.0, %v2406
      %v2408 = vpop.f32.mrf.mxu0
      %2409 = vmatprep.mubr.f32.mxu0 0.0
      %2410 = vmatmul.mubr.f32.gmra.mxu0 %v2200
      %v2411 = vpop.f32.mrf.mxu0
      %v2412 = vadd.f32 0.0, %v2411
      %v2413 = vpop.f32.mrf.mxu0
      %2414 = vmatprep.mubr.f32.mxu0 0.0
      %2415 = vmatmul.mubr.f32.gmra.mxu0 %v2201
      %v2416 = vpop.f32.mrf.mxu0
      %v2417 = vadd.f32 0.0, %v2416
      %v2418 = vpop.f32.mrf.mxu0
      %2419 = vmatprep.mubr.f32.mxu0 0.0
      %2420 = vmatmul.mubr.f32.gmra.mxu0 %v2202
      %v2421 = vpop.f32.mrf.mxu0
      %v2422 = vadd.f32 0.0, %v2421
      %v2423 = vpop.f32.mrf.mxu0
      %2424 = vmatprep.mubr.f32.mxu0 0.0
      %2425 = vmatmul.mubr.f32.gmra.mxu0 %v2203
      %v2426 = vpop.f32.mrf.mxu0
      %v2427 = vadd.f32 0.0, %v2426
      %v2428 = vpop.f32.mrf.mxu0
      %2429 = vmatprep.mubr.f32.mxu0 0.0
      %2430 = vmatmul.mubr.f32.gmra.mxu0 %v2204
      %v2431 = vpop.f32.mrf.mxu0
      %v2432 = vadd.f32 0.0, %v2431
      %v2433 = vpop.f32.mrf.mxu0
      %2434 = vmatprep.mubr.f32.mxu0 0.0
      %2435 = vmatmul.mubr.f32.gmra.mxu0 %v2205
      %v2436 = vpop.f32.mrf.mxu0
      %v2437 = vadd.f32 0.0, %v2436
      %v2438 = vpop.f32.mrf.mxu0
      %2439 = vmatprep.mubr.f32.mxu0 0.0
      %2440 = vmatmul.mubr.f32.gmra.mxu0 %v2206
      %v2441 = vpop.f32.mrf.mxu0
      %v2442 = vadd.f32 0.0, %v2441
      %v2443 = vpop.f32.mrf.mxu0
      %2444 = vmatprep.mubr.f32.mxu0 0.0
      %2445 = vmatmul.mubr.f32.gmra.mxu0 %v2207
      %v2446 = vpop.f32.mrf.mxu0
      %v2447 = vadd.f32 0.0, %v2446
      %v2448 = vpop.f32.mrf.mxu0
      %2449 = vdwg.mxu0
      %v2450 = vadd.f32 %v2142, %v2292
      %v2451 = vadd.f32 %v2143, %v2297
      %v2452 = vadd.f32 %v2144, %v2302
      %v2453 = vadd.f32 %v2145, %v2307
      %v2454 = vadd.f32 %v2146, %v2312
      %v2455 = vadd.f32 %v2147, %v2317
      %v2456 = vadd.f32 %v2148, %v2322
      %v2457 = vadd.f32 %v2149, %v2327
      %v2458 = vadd.f32 %v2150, %v2332
      %v2459 = vadd.f32 %v2151, %v2337
      %v2460 = vadd.f32 %v2152, %v2342
      %v2461 = vadd.f32 %v2153, %v2347
      %v2462 = vadd.f32 %v2154, %v2352
      %v2463 = vadd.f32 %v2155, %v2357
      %v2464 = vadd.f32 %v2156, %v2362
      %v2465 = vadd.f32 %v2157, %v2367
      %v2466 = vadd.f32 %v2158, %v2372
      %v2467 = vadd.f32 %v2159, %v2377
      %v2468 = vadd.f32 %v2160, %v2382
      %v2469 = vadd.f32 %v2161, %v2387
      %v2470 = vadd.f32 %v2162, %v2392
      %v2471 = vadd.f32 %v2163, %v2397
      %v2472 = vadd.f32 %v2164, %v2402
      %v2473 = vadd.f32 %v2165, %v2407
      %v2474 = vadd.f32 %v2166, %v2412
      %v2475 = vadd.f32 %v2167, %v2417
      %v2476 = vadd.f32 %v2168, %v2422
      %v2477 = vadd.f32 %v2169, %v2427
      %v2478 = vadd.f32 %v2170, %v2432
      %v2479 = vadd.f32 %v2171, %v2437
      %v2480 = vadd.f32 %v2172, %v2442
      %v2481 = vadd.f32 %v2173, %v2447
      %s2482 = sadd.s32 %s82, 43
      %s2483 = scalar_lea.vmem [#allocation3], %s2482
      %v2484 = vld [vmem:[%s2483] sm:$0xff]
      %v2485 = vld [vmem:[%s2483 + $0x8] sm:$0xff]
      %v2486 = vld [vmem:[%s2483 + $0x10] sm:$0xff]
      %v2487 = vld [vmem:[%s2483 + $0x18] sm:$0xff]
      %v2488 = vld [vmem:[%s2483 + $0x20] sm:$0xff]
      %v2489 = vld [vmem:[%s2483 + $0x28] sm:$0xff]
      %v2490 = vld [vmem:[%s2483 + $0x30] sm:$0xff]
      %v2491 = vld [vmem:[%s2483 + $0x38] sm:$0xff]
      %v2492 = vld [vmem:[%s2483 + $0x40] sm:$0xff]
      %v2493 = vld [vmem:[%s2483 + $0x48] sm:$0xff]
      %v2494 = vld [vmem:[%s2483 + $0x50] sm:$0xff]
      %v2495 = vld [vmem:[%s2483 + $0x58] sm:$0xff]
      %v2496 = vld [vmem:[%s2483 + $0x60] sm:$0xff]
      %v2497 = vld [vmem:[%s2483 + $0x68] sm:$0xff]
      %v2498 = vld [vmem:[%s2483 + $0x70] sm:$0xff]
      %v2499 = vld [vmem:[%s2483 + $0x78] sm:$0xff]
      %v2500 = vld [vmem:[%s2483 + $0x80] sm:$0xff]
      %v2501 = vld [vmem:[%s2483 + $0x88] sm:$0xff]
      %v2502 = vld [vmem:[%s2483 + $0x90] sm:$0xff]
      %v2503 = vld [vmem:[%s2483 + $0x98] sm:$0xff]
      %v2504 = vld [vmem:[%s2483 + $0xa0] sm:$0xff]
      %v2505 = vld [vmem:[%s2483 + $0xa8] sm:$0xff]
      %v2506 = vld [vmem:[%s2483 + $0xb0] sm:$0xff]
      %v2507 = vld [vmem:[%s2483 + $0xb8] sm:$0xff]
      %v2508 = vld [vmem:[%s2483 + $0xc0] sm:$0xff]
      %v2509 = vld [vmem:[%s2483 + $0xc8] sm:$0xff]
      %v2510 = vld [vmem:[%s2483 + $0xd0] sm:$0xff]
      %v2511 = vld [vmem:[%s2483 + $0xd8] sm:$0xff]
      %v2512 = vld [vmem:[%s2483 + $0xe0] sm:$0xff]
      %v2513 = vld [vmem:[%s2483 + $0xe8] sm:$0xff]
      %v2514 = vld [vmem:[%s2483 + $0xf0] sm:$0xff]
      %v2515 = vld [vmem:[%s2483 + $0xf8] sm:$0xff]
      %s2516 = scalar_lea.vmem [#allocation6], 1024
      %v2517 = vld [vmem:[%s2516] sm:$0xff]
      %v2518 = vld [vmem:[%s2516 + $0x8] sm:$0xff]
      %v2519 = vld [vmem:[%s2516 + $0x10] sm:$0xff]
      %v2520 = vld [vmem:[%s2516 + $0x18] sm:$0xff]
      %v2521 = vld [vmem:[%s2516 + $0x20] sm:$0xff]
      %v2522 = vld [vmem:[%s2516 + $0x28] sm:$0xff]
      %v2523 = vld [vmem:[%s2516 + $0x30] sm:$0xff]
      %v2524 = vld [vmem:[%s2516 + $0x38] sm:$0xff]
      %v2525 = vld [vmem:[%s2516 + $0x40] sm:$0xff]
      %v2526 = vld [vmem:[%s2516 + $0x48] sm:$0xff]
      %v2527 = vld [vmem:[%s2516 + $0x50] sm:$0xff]
      %v2528 = vld [vmem:[%s2516 + $0x58] sm:$0xff]
      %v2529 = vld [vmem:[%s2516 + $0x60] sm:$0xff]
      %v2530 = vld [vmem:[%s2516 + $0x68] sm:$0xff]
      %v2531 = vld [vmem:[%s2516 + $0x70] sm:$0xff]
      %v2532 = vld [vmem:[%s2516 + $0x78] sm:$0xff]
      %2533 = vmatprep.subr.mxu0 0.0
      %2534 = vmatpush1.msra.mxu0 %v2532
      %2535 = vmatprep.subr.mxu0 0.0
      %2536 = vmatpush1.msra.mxu0 %v2531
      %2537 = vmatprep.subr.mxu0 0.0
      %2538 = vmatpush1.msra.mxu0 %v2530
      %2539 = vmatprep.subr.mxu0 0.0
      %2540 = vmatpush1.msra.mxu0 %v2529
      %2541 = vmatprep.subr.mxu0 0.0
      %2542 = vmatpush1.msra.mxu0 %v2528
      %2543 = vmatprep.subr.mxu0 0.0
      %2544 = vmatpush1.msra.mxu0 %v2527
      %2545 = vmatprep.subr.mxu0 0.0
      %2546 = vmatpush1.msra.mxu0 %v2526
      %2547 = vmatprep.subr.mxu0 0.0
      %2548 = vmatpush1.msra.mxu0 %v2525
      %2549 = vmatprep.subr.mxu0 0.0
      %2550 = vmatpush1.msra.mxu0 %v2524
      %2551 = vmatprep.subr.mxu0 0.0
      %2552 = vmatpush1.msra.mxu0 %v2523
      %2553 = vmatprep.subr.mxu0 0.0
      %2554 = vmatpush1.msra.mxu0 %v2522
      %2555 = vmatprep.subr.mxu0 0.0
      %2556 = vmatpush1.msra.mxu0 %v2521
      %2557 = vmatprep.subr.mxu0 0.0
      %2558 = vmatpush1.msra.mxu0 %v2520
      %2559 = vmatprep.subr.mxu0 0.0
      %2560 = vmatpush1.msra.mxu0 %v2519
      %2561 = vmatprep.subr.mxu0 0.0
      %2562 = vmatpush1.msra.mxu0 %v2518
      %2563 = vmatprep.subr.mxu0 0.0
      %2564 = vmatpush1.msra.mxu0 %v2517
      %2565 = vmatprep.subr.mxu0 0.0
      %2566 = vmatpush2.msra.mxu0 0.0
      %2567 = vmatprep.subr.mxu0 0.0
      %2568 = vmatpush2.msra.mxu0 0.0
      %2569 = vmatprep.subr.mxu0 0.0
      %2570 = vmatpush2.msra.mxu0 0.0
      %2571 = vmatprep.subr.mxu0 0.0
      %2572 = vmatpush2.msra.mxu0 0.0
      %2573 = vmatprep.subr.mxu0 0.0
      %2574 = vmatpush2.msra.mxu0 0.0
      %2575 = vmatprep.subr.mxu0 0.0
      %2576 = vmatpush2.msra.mxu0 0.0
      %2577 = vmatprep.subr.mxu0 0.0
      %2578 = vmatpush2.msra.mxu0 0.0
      %2579 = vmatprep.subr.mxu0 0.0
      %2580 = vmatpush2.msra.mxu0 0.0
      %2581 = vmatprep.subr.mxu0 0.0
      %2582 = vmatpush2.msra.mxu0 0.0
      %2583 = vmatprep.subr.mxu0 0.0
      %2584 = vmatpush2.msra.mxu0 0.0
      %2585 = vmatprep.subr.mxu0 0.0
      %2586 = vmatpush2.msra.mxu0 0.0
      %2587 = vmatprep.subr.mxu0 0.0
      %2588 = vmatpush2.msra.mxu0 0.0
      %2589 = vmatprep.subr.mxu0 0.0
      %2590 = vmatpush2.msra.mxu0 0.0
      %2591 = vmatprep.subr.mxu0 0.0
      %2592 = vmatpush2.msra.mxu0 0.0
      %2593 = vmatprep.subr.mxu0 0.0
      %2594 = vmatpush2.msra.mxu0 0.0
      %2595 = vmatprep.subr.mxu0 0.0
      %2596 = vmatpush2.msra.mxu0 0.0
      %2597 = vmatprep.mubr.f32.mxu0 0.0
      %2598 = vmatmul.mubr.f32.gmra.mxu0 %v2484
      %v2599 = vpop.f32.mrf.mxu0
      %v2600 = vadd.f32 0.0, %v2599
      %v2601 = vpop.f32.mrf.mxu0
      %2602 = vmatprep.mubr.f32.mxu0 0.0
      %2603 = vmatmul.mubr.f32.gmra.mxu0 %v2485
      %v2604 = vpop.f32.mrf.mxu0
      %v2605 = vadd.f32 0.0, %v2604
      %v2606 = vpop.f32.mrf.mxu0
      %2607 = vmatprep.mubr.f32.mxu0 0.0
      %2608 = vmatmul.mubr.f32.gmra.mxu0 %v2486
      %v2609 = vpop.f32.mrf.mxu0
      %v2610 = vadd.f32 0.0, %v2609
      %v2611 = vpop.f32.mrf.mxu0
      %2612 = vmatprep.mubr.f32.mxu0 0.0
      %2613 = vmatmul.mubr.f32.gmra.mxu0 %v2487
      %v2614 = vpop.f32.mrf.mxu0
      %v2615 = vadd.f32 0.0, %v2614
      %v2616 = vpop.f32.mrf.mxu0
      %2617 = vmatprep.mubr.f32.mxu0 0.0
      %2618 = vmatmul.mubr.f32.gmra.mxu0 %v2488
      %v2619 = vpop.f32.mrf.mxu0
      %v2620 = vadd.f32 0.0, %v2619
      %v2621 = vpop.f32.mrf.mxu0
      %2622 = vmatprep.mubr.f32.mxu0 0.0
      %2623 = vmatmul.mubr.f32.gmra.mxu0 %v2489
      %v2624 = vpop.f32.mrf.mxu0
      %v2625 = vadd.f32 0.0, %v2624
      %v2626 = vpop.f32.mrf.mxu0
      %2627 = vmatprep.mubr.f32.mxu0 0.0
      %2628 = vmatmul.mubr.f32.gmra.mxu0 %v2490
      %v2629 = vpop.f32.mrf.mxu0
      %v2630 = vadd.f32 0.0, %v2629
      %v2631 = vpop.f32.mrf.mxu0
      %2632 = vmatprep.mubr.f32.mxu0 0.0
      %2633 = vmatmul.mubr.f32.gmra.mxu0 %v2491
      %v2634 = vpop.f32.mrf.mxu0
      %v2635 = vadd.f32 0.0, %v2634
      %v2636 = vpop.f32.mrf.mxu0
      %2637 = vmatprep.mubr.f32.mxu0 0.0
      %2638 = vmatmul.mubr.f32.gmra.mxu0 %v2492
      %v2639 = vpop.f32.mrf.mxu0
      %v2640 = vadd.f32 0.0, %v2639
      %v2641 = vpop.f32.mrf.mxu0
      %2642 = vmatprep.mubr.f32.mxu0 0.0
      %2643 = vmatmul.mubr.f32.gmra.mxu0 %v2493
      %v2644 = vpop.f32.mrf.mxu0
      %v2645 = vadd.f32 0.0, %v2644
      %v2646 = vpop.f32.mrf.mxu0
      %2647 = vmatprep.mubr.f32.mxu0 0.0
      %2648 = vmatmul.mubr.f32.gmra.mxu0 %v2494
      %v2649 = vpop.f32.mrf.mxu0
      %v2650 = vadd.f32 0.0, %v2649
      %v2651 = vpop.f32.mrf.mxu0
      %2652 = vmatprep.mubr.f32.mxu0 0.0
      %2653 = vmatmul.mubr.f32.gmra.mxu0 %v2495
      %v2654 = vpop.f32.mrf.mxu0
      %v2655 = vadd.f32 0.0, %v2654
      %v2656 = vpop.f32.mrf.mxu0
      %2657 = vmatprep.mubr.f32.mxu0 0.0
      %2658 = vmatmul.mubr.f32.gmra.mxu0 %v2496
      %v2659 = vpop.f32.mrf.mxu0
      %v2660 = vadd.f32 0.0, %v2659
      %v2661 = vpop.f32.mrf.mxu0
      %2662 = vmatprep.mubr.f32.mxu0 0.0
      %2663 = vmatmul.mubr.f32.gmra.mxu0 %v2497
      %v2664 = vpop.f32.mrf.mxu0
      %v2665 = vadd.f32 0.0, %v2664
      %v2666 = vpop.f32.mrf.mxu0
      %2667 = vmatprep.mubr.f32.mxu0 0.0
      %2668 = vmatmul.mubr.f32.gmra.mxu0 %v2498
      %v2669 = vpop.f32.mrf.mxu0
      %v2670 = vadd.f32 0.0, %v2669
      %v2671 = vpop.f32.mrf.mxu0
      %2672 = vmatprep.mubr.f32.mxu0 0.0
      %2673 = vmatmul.mubr.f32.gmra.mxu0 %v2499
      %v2674 = vpop.f32.mrf.mxu0
      %v2675 = vadd.f32 0.0, %v2674
      %v2676 = vpop.f32.mrf.mxu0
      %2677 = vmatprep.mubr.f32.mxu0 0.0
      %2678 = vmatmul.mubr.f32.gmra.mxu0 %v2500
      %v2679 = vpop.f32.mrf.mxu0
      %v2680 = vadd.f32 0.0, %v2679
      %v2681 = vpop.f32.mrf.mxu0
      %2682 = vmatprep.mubr.f32.mxu0 0.0
      %2683 = vmatmul.mubr.f32.gmra.mxu0 %v2501
      %v2684 = vpop.f32.mrf.mxu0
      %v2685 = vadd.f32 0.0, %v2684
      %v2686 = vpop.f32.mrf.mxu0
      %2687 = vmatprep.mubr.f32.mxu0 0.0
      %2688 = vmatmul.mubr.f32.gmra.mxu0 %v2502
      %v2689 = vpop.f32.mrf.mxu0
      %v2690 = vadd.f32 0.0, %v2689
      %v2691 = vpop.f32.mrf.mxu0
      %2692 = vmatprep.mubr.f32.mxu0 0.0
      %2693 = vmatmul.mubr.f32.gmra.mxu0 %v2503
      %v2694 = vpop.f32.mrf.mxu0
      %v2695 = vadd.f32 0.0, %v2694
      %v2696 = vpop.f32.mrf.mxu0
      %2697 = vmatprep.mubr.f32.mxu0 0.0
      %2698 = vmatmul.mubr.f32.gmra.mxu0 %v2504
      %v2699 = vpop.f32.mrf.mxu0
      %v2700 = vadd.f32 0.0, %v2699
      %v2701 = vpop.f32.mrf.mxu0
      %2702 = vmatprep.mubr.f32.mxu0 0.0
      %2703 = vmatmul.mubr.f32.gmra.mxu0 %v2505
      %v2704 = vpop.f32.mrf.mxu0
      %v2705 = vadd.f32 0.0, %v2704
      %v2706 = vpop.f32.mrf.mxu0
      %2707 = vmatprep.mubr.f32.mxu0 0.0
      %2708 = vmatmul.mubr.f32.gmra.mxu0 %v2506
      %v2709 = vpop.f32.mrf.mxu0
      %v2710 = vadd.f32 0.0, %v2709
      %v2711 = vpop.f32.mrf.mxu0
      %2712 = vmatprep.mubr.f32.mxu0 0.0
      %2713 = vmatmul.mubr.f32.gmra.mxu0 %v2507
      %v2714 = vpop.f32.mrf.mxu0
      %v2715 = vadd.f32 0.0, %v2714
      %v2716 = vpop.f32.mrf.mxu0
      %2717 = vmatprep.mubr.f32.mxu0 0.0
      %2718 = vmatmul.mubr.f32.gmra.mxu0 %v2508
      %v2719 = vpop.f32.mrf.mxu0
      %v2720 = vadd.f32 0.0, %v2719
      %v2721 = vpop.f32.mrf.mxu0
      %2722 = vmatprep.mubr.f32.mxu0 0.0
      %2723 = vmatmul.mubr.f32.gmra.mxu0 %v2509
      %v2724 = vpop.f32.mrf.mxu0
      %v2725 = vadd.f32 0.0, %v2724
      %v2726 = vpop.f32.mrf.mxu0
      %2727 = vmatprep.mubr.f32.mxu0 0.0
      %2728 = vmatmul.mubr.f32.gmra.mxu0 %v2510
      %v2729 = vpop.f32.mrf.mxu0
      %v2730 = vadd.f32 0.0, %v2729
      %v2731 = vpop.f32.mrf.mxu0
      %2732 = vmatprep.mubr.f32.mxu0 0.0
      %2733 = vmatmul.mubr.f32.gmra.mxu0 %v2511
      %v2734 = vpop.f32.mrf.mxu0
      %v2735 = vadd.f32 0.0, %v2734
      %v2736 = vpop.f32.mrf.mxu0
      %2737 = vmatprep.mubr.f32.mxu0 0.0
      %2738 = vmatmul.mubr.f32.gmra.mxu0 %v2512
      %v2739 = vpop.f32.mrf.mxu0
      %v2740 = vadd.f32 0.0, %v2739
      %v2741 = vpop.f32.mrf.mxu0
      %2742 = vmatprep.mubr.f32.mxu0 0.0
      %2743 = vmatmul.mubr.f32.gmra.mxu0 %v2513
      %v2744 = vpop.f32.mrf.mxu0
      %v2745 = vadd.f32 0.0, %v2744
      %v2746 = vpop.f32.mrf.mxu0
      %2747 = vmatprep.mubr.f32.mxu0 0.0
      %2748 = vmatmul.mubr.f32.gmra.mxu0 %v2514
      %v2749 = vpop.f32.mrf.mxu0
      %v2750 = vadd.f32 0.0, %v2749
      %v2751 = vpop.f32.mrf.mxu0
      %2752 = vmatprep.mubr.f32.mxu0 0.0
      %2753 = vmatmul.mubr.f32.gmra.mxu0 %v2515
      %v2754 = vpop.f32.mrf.mxu0
      %v2755 = vadd.f32 0.0, %v2754
      %v2756 = vpop.f32.mrf.mxu0
      %2757 = vdwg.mxu0
      %v2758 = vadd.f32 %v2450, %v2600
      %v2759 = vadd.f32 %v2451, %v2605
      %v2760 = vadd.f32 %v2452, %v2610
      %v2761 = vadd.f32 %v2453, %v2615
      %v2762 = vadd.f32 %v2454, %v2620
      %v2763 = vadd.f32 %v2455, %v2625
      %v2764 = vadd.f32 %v2456, %v2630
      %v2765 = vadd.f32 %v2457, %v2635
      %v2766 = vadd.f32 %v2458, %v2640
      %v2767 = vadd.f32 %v2459, %v2645
      %v2768 = vadd.f32 %v2460, %v2650
      %v2769 = vadd.f32 %v2461, %v2655
      %v2770 = vadd.f32 %v2462, %v2660
      %v2771 = vadd.f32 %v2463, %v2665
      %v2772 = vadd.f32 %v2464, %v2670
      %v2773 = vadd.f32 %v2465, %v2675
      %v2774 = vadd.f32 %v2466, %v2680
      %v2775 = vadd.f32 %v2467, %v2685
      %v2776 = vadd.f32 %v2468, %v2690
      %v2777 = vadd.f32 %v2469, %v2695
      %v2778 = vadd.f32 %v2470, %v2700
      %v2779 = vadd.f32 %v2471, %v2705
      %v2780 = vadd.f32 %v2472, %v2710
      %v2781 = vadd.f32 %v2473, %v2715
      %v2782 = vadd.f32 %v2474, %v2720
      %v2783 = vadd.f32 %v2475, %v2725
      %v2784 = vadd.f32 %v2476, %v2730
      %v2785 = vadd.f32 %v2477, %v2735
      %v2786 = vadd.f32 %v2478, %v2740
      %v2787 = vadd.f32 %v2479, %v2745
      %v2788 = vadd.f32 %v2480, %v2750
      %v2789 = vadd.f32 %v2481, %v2755
      %s2790 = scalar_lea.vmem [#allocation2], %s1250
      %2791 = vst [vmem:[%s2790] sm:$0xff] %v2758
      %2792 = vst [vmem:[%s2790 + $0x8] sm:$0xff] %v2759
      %2793 = vst [vmem:[%s2790 + $0x10] sm:$0xff] %v2760
      %2794 = vst [vmem:[%s2790 + $0x18] sm:$0xff] %v2761
      %2795 = vst [vmem:[%s2790 + $0x20] sm:$0xff] %v2762
      %2796 = vst [vmem:[%s2790 + $0x28] sm:$0xff] %v2763
      %2797 = vst [vmem:[%s2790 + $0x30] sm:$0xff] %v2764
      %2798 = vst [vmem:[%s2790 + $0x38] sm:$0xff] %v2765
      %2799 = vst [vmem:[%s2790 + $0x40] sm:$0xff] %v2766
      %2800 = vst [vmem:[%s2790 + $0x48] sm:$0xff] %v2767
      %2801 = vst [vmem:[%s2790 + $0x50] sm:$0xff] %v2768
      %2802 = vst [vmem:[%s2790 + $0x58] sm:$0xff] %v2769
      %2803 = vst [vmem:[%s2790 + $0x60] sm:$0xff] %v2770
      %2804 = vst [vmem:[%s2790 + $0x68] sm:$0xff] %v2771
      %2805 = vst [vmem:[%s2790 + $0x70] sm:$0xff] %v2772
      %2806 = vst [vmem:[%s2790 + $0x78] sm:$0xff] %v2773
      %2807 = vst [vmem:[%s2790 + $0x80] sm:$0xff] %v2774
      %2808 = vst [vmem:[%s2790 + $0x88] sm:$0xff] %v2775
      %2809 = vst [vmem:[%s2790 + $0x90] sm:$0xff] %v2776
      %2810 = vst [vmem:[%s2790 + $0x98] sm:$0xff] %v2777
      %2811 = vst [vmem:[%s2790 + $0xa0] sm:$0xff] %v2778
      %2812 = vst [vmem:[%s2790 + $0xa8] sm:$0xff] %v2779
      %2813 = vst [vmem:[%s2790 + $0xb0] sm:$0xff] %v2780
      %2814 = vst [vmem:[%s2790 + $0xb8] sm:$0xff] %v2781
      %2815 = vst [vmem:[%s2790 + $0xc0] sm:$0xff] %v2782
      %2816 = vst [vmem:[%s2790 + $0xc8] sm:$0xff] %v2783
      %2817 = vst [vmem:[%s2790 + $0xd0] sm:$0xff] %v2784
      %2818 = vst [vmem:[%s2790 + $0xd8] sm:$0xff] %v2785
      %2819 = vst [vmem:[%s2790 + $0xe0] sm:$0xff] %v2786
      %2820 = vst [vmem:[%s2790 + $0xe8] sm:$0xff] %v2787
      %2821 = vst [vmem:[%s2790 + $0xf0] sm:$0xff] %v2788
      %2822 = vst [vmem:[%s2790 + $0xf8] sm:$0xff] %v2789
      %v2823 = vlaneseq
      %v2824 = vshrl.u32 %v2823, 7
      %v2825 = vadd.s32 %v2824, 8
      %v2826 = vadd.s32 %v2824, 16
      %v2827 = vadd.s32 %v2824, 24
      %v2828 = vadd.s32 %v2824, 32
      %v2829 = vadd.s32 %v2824, 40
      %v2830 = vadd.s32 %v2824, 48
      %v2831 = vadd.s32 %v2824, 56
      %v2832 = vadd.s32 %v2824, 64
      %v2833 = vadd.s32 %v2824, 72
      %v2834 = vadd.s32 %v2824, 80
      %v2835 = vadd.s32 %v2824, 88
      %v2836 = vadd.s32 %v2824, 96
      %v2837 = vadd.s32 %v2824, 104
      %v2838 = vadd.s32 %v2824, 112
      %v2839 = vadd.s32 %v2824, 120
      %v2840 = vadd.s32 %v2824, 128
      %v2841 = vadd.s32 %v2824, 136
      %v2842 = vadd.s32 %v2824, 144
      %v2843 = vadd.s32 %v2824, 152
      %v2844 = vadd.s32 %v2824, 160
      %v2845 = vadd.s32 %v2824, 168
      %v2846 = vadd.s32 %v2824, 176
      %v2847 = vadd.s32 %v2824, 184
      %v2848 = vadd.s32 %v2824, 192
      %v2849 = vadd.s32 %v2824, 200
      %v2850 = vadd.s32 %v2824, 208
      %v2851 = vadd.s32 %v2824, 216
      %v2852 = vadd.s32 %v2824, 224
      %v2853 = vadd.s32 %v2824, 232
      %v2854 = vadd.s32 %v2824, 240
      %v2855 = vadd.s32 %v2824, 248
      %v2856 = vstv %s82
      %v2857 = vadd.s32 %v2856, %v2824
      %v2858 = vadd.s32 %v2856, %v2825
      %v2859 = vadd.s32 %v2856, %v2826
      %v2860 = vadd.s32 %v2856, %v2827
      %v2861 = vadd.s32 %v2856, %v2828
      %v2862 = vadd.s32 %v2856, %v2829
      %v2863 = vadd.s32 %v2856, %v2830
      %v2864 = vadd.s32 %v2856, %v2831
      %v2865 = vadd.s32 %v2856, %v2832
      %v2866 = vadd.s32 %v2856, %v2833
      %v2867 = vadd.s32 %v2856, %v2834
      %v2868 = vadd.s32 %v2856, %v2835
      %v2869 = vadd.s32 %v2856, %v2836
      %v2870 = vadd.s32 %v2856, %v2837
      %v2871 = vadd.s32 %v2856, %v2838
      %v2872 = vadd.s32 %v2856, %v2839
      %v2873 = vadd.s32 %v2856, %v2840
      %v2874 = vadd.s32 %v2856, %v2841
      %v2875 = vadd.s32 %v2856, %v2842
      %v2876 = vadd.s32 %v2856, %v2843
      %v2877 = vadd.s32 %v2856, %v2844
      %v2878 = vadd.s32 %v2856, %v2845
      %v2879 = vadd.s32 %v2856, %v2846
      %v2880 = vadd.s32 %v2856, %v2847
      %v2881 = vadd.s32 %v2856, %v2848
      %v2882 = vadd.s32 %v2856, %v2849
      %v2883 = vadd.s32 %v2856, %v2850
      %v2884 = vadd.s32 %v2856, %v2851
      %v2885 = vadd.s32 %v2856, %v2852
      %v2886 = vadd.s32 %v2856, %v2853
      %v2887 = vadd.s32 %v2856, %v2854
      %v2888 = vadd.s32 %v2856, %v2855
      %v2889 = vcvt.s32.f32 %v2857
      %v2890 = vcvt.s32.f32 %v2858
      %v2891 = vcvt.s32.f32 %v2859
      %v2892 = vcvt.s32.f32 %v2860
      %v2893 = vcvt.s32.f32 %v2861
      %v2894 = vcvt.s32.f32 %v2862
      %v2895 = vcvt.s32.f32 %v2863
      %v2896 = vcvt.s32.f32 %v2864
      %v2897 = vcvt.s32.f32 %v2865
      %v2898 = vcvt.s32.f32 %v2866
      %v2899 = vcvt.s32.f32 %v2867
      %v2900 = vcvt.s32.f32 %v2868
      %v2901 = vcvt.s32.f32 %v2869
      %v2902 = vcvt.s32.f32 %v2870
      %v2903 = vcvt.s32.f32 %v2871
      %v2904 = vcvt.s32.f32 %v2872
      %v2905 = vcvt.s32.f32 %v2873
      %v2906 = vcvt.s32.f32 %v2874
      %v2907 = vcvt.s32.f32 %v2875
      %v2908 = vcvt.s32.f32 %v2876
      %v2909 = vcvt.s32.f32 %v2877
      %v2910 = vcvt.s32.f32 %v2878
      %v2911 = vcvt.s32.f32 %v2879
      %v2912 = vcvt.s32.f32 %v2880
      %v2913 = vcvt.s32.f32 %v2881
      %v2914 = vcvt.s32.f32 %v2882
      %v2915 = vcvt.s32.f32 %v2883
      %v2916 = vcvt.s32.f32 %v2884
      %v2917 = vcvt.s32.f32 %v2885
      %v2918 = vcvt.s32.f32 %v2886
      %v2919 = vcvt.s32.f32 %v2887
      %v2920 = vcvt.s32.f32 %v2888
      %v2921 = vadd.f32 %v2889, 0.5
      %v2922 = vadd.f32 %v2890, 0.5
      %v2923 = vadd.f32 %v2891, 0.5
      %v2924 = vadd.f32 %v2892, 0.5
      %v2925 = vadd.f32 %v2893, 0.5
      %v2926 = vadd.f32 %v2894, 0.5
      %v2927 = vadd.f32 %v2895, 0.5
      %v2928 = vadd.f32 %v2896, 0.5
      %v2929 = vadd.f32 %v2897, 0.5
      %v2930 = vadd.f32 %v2898, 0.5
      %v2931 = vadd.f32 %v2899, 0.5
      %v2932 = vadd.f32 %v2900, 0.5
      %v2933 = vadd.f32 %v2901, 0.5
      %v2934 = vadd.f32 %v2902, 0.5
      %v2935 = vadd.f32 %v2903, 0.5
      %v2936 = vadd.f32 %v2904, 0.5
      %v2937 = vadd.f32 %v2905, 0.5
      %v2938 = vadd.f32 %v2906, 0.5
      %v2939 = vadd.f32 %v2907, 0.5
      %v2940 = vadd.f32 %v2908, 0.5
      %v2941 = vadd.f32 %v2909, 0.5
      %v2942 = vadd.f32 %v2910, 0.5
      %v2943 = vadd.f32 %v2911, 0.5
      %v2944 = vadd.f32 %v2912, 0.5
      %v2945 = vadd.f32 %v2913, 0.5
      %v2946 = vadd.f32 %v2914, 0.5
      %v2947 = vadd.f32 %v2915, 0.5
      %v2948 = vadd.f32 %v2916, 0.5
      %v2949 = vadd.f32 %v2917, 0.5
      %v2950 = vadd.f32 %v2918, 0.5
      %v2951 = vadd.f32 %v2919, 0.5
      %v2952 = vadd.f32 %v2920, 0.5
      %v2953 = vmul.f32 %v2921, 0.0030864198
      %v2954 = vmul.f32 %v2922, 0.0030864198
      %v2955 = vmul.f32 %v2923, 0.0030864198
      %v2956 = vmul.f32 %v2924, 0.0030864198
      %v2957 = vmul.f32 %v2925, 0.0030864198
      %v2958 = vmul.f32 %v2926, 0.0030864198
      %v2959 = vmul.f32 %v2927, 0.0030864198
      %v2960 = vmul.f32 %v2928, 0.0030864198
      %v2961 = vmul.f32 %v2929, 0.0030864198
      %v2962 = vmul.f32 %v2930, 0.0030864198
      %v2963 = vmul.f32 %v2931, 0.0030864198
      %v2964 = vmul.f32 %v2932, 0.0030864198
      %v2965 = vmul.f32 %v2933, 0.0030864198
      %v2966 = vmul.f32 %v2934, 0.0030864198
      %v2967 = vmul.f32 %v2935, 0.0030864198
      %v2968 = vmul.f32 %v2936, 0.0030864198
      %v2969 = vmul.f32 %v2937, 0.0030864198
      %v2970 = vmul.f32 %v2938, 0.0030864198
      %v2971 = vmul.f32 %v2939, 0.0030864198
      %v2972 = vmul.f32 %v2940, 0.0030864198
      %v2973 = vmul.f32 %v2941, 0.0030864198
      %v2974 = vmul.f32 %v2942, 0.0030864198
      %v2975 = vmul.f32 %v2943, 0.0030864198
      %v2976 = vmul.f32 %v2944, 0.0030864198
      %v2977 = vmul.f32 %v2945, 0.0030864198
      %v2978 = vmul.f32 %v2946, 0.0030864198
      %v2979 = vmul.f32 %v2947, 0.0030864198
      %v2980 = vmul.f32 %v2948, 0.0030864198
      %v2981 = vmul.f32 %v2949, 0.0030864198
      %v2982 = vmul.f32 %v2950, 0.0030864198
      %v2983 = vmul.f32 %v2951, 0.0030864198
      %v2984 = vmul.f32 %v2952, 0.0030864198
      %v2985 = vfloor.f32 %v2953
      %v2986 = vfloor.f32 %v2954
      %v2987 = vfloor.f32 %v2955
      %v2988 = vfloor.f32 %v2956
      %v2989 = vfloor.f32 %v2957
      %v2990 = vfloor.f32 %v2958
      %v2991 = vfloor.f32 %v2959
      %v2992 = vfloor.f32 %v2960
      %v2993 = vfloor.f32 %v2961
      %v2994 = vfloor.f32 %v2962
      %v2995 = vfloor.f32 %v2963
      %v2996 = vfloor.f32 %v2964
      %v2997 = vfloor.f32 %v2965
      %v2998 = vfloor.f32 %v2966
      %v2999 = vfloor.f32 %v2967
      %v3000 = vfloor.f32 %v2968
      %v3001 = vfloor.f32 %v2969
      %v3002 = vfloor.f32 %v2970
      %v3003 = vfloor.f32 %v2971
      %v3004 = vfloor.f32 %v2972
      %v3005 = vfloor.f32 %v2973
      %v3006 = vfloor.f32 %v2974
      %v3007 = vfloor.f32 %v2975
      %v3008 = vfloor.f32 %v2976
      %v3009 = vfloor.f32 %v2977
      %v3010 = vfloor.f32 %v2978
      %v3011 = vfloor.f32 %v2979
      %v3012 = vfloor.f32 %v2980
      %v3013 = vfloor.f32 %v2981
      %v3014 = vfloor.f32 %v2982
      %v3015 = vfloor.f32 %v2983
      %v3016 = vfloor.f32 %v2984
      %v3017 = vmul.f32 %v2985, 324.0
      %v3018 = vmul.f32 %v2986, 324.0
      %v3019 = vmul.f32 %v2987, 324.0
      %v3020 = vmul.f32 %v2988, 324.0
      %v3021 = vmul.f32 %v2989, 324.0
      %v3022 = vmul.f32 %v2990, 324.0
      %v3023 = vmul.f32 %v2991, 324.0
      %v3024 = vmul.f32 %v2992, 324.0
      %v3025 = vmul.f32 %v2993, 324.0
      %v3026 = vmul.f32 %v2994, 324.0
      %v3027 = vmul.f32 %v2995, 324.0
      %v3028 = vmul.f32 %v2996, 324.0
      %v3029 = vmul.f32 %v2997, 324.0
      %v3030 = vmul.f32 %v2998, 324.0
      %v3031 = vmul.f32 %v2999, 324.0
      %v3032 = vmul.f32 %v3000, 324.0
      %v3033 = vmul.f32 %v3001, 324.0
      %v3034 = vmul.f32 %v3002, 324.0
      %v3035 = vmul.f32 %v3003, 324.0
      %v3036 = vmul.f32 %v3004, 324.0
      %v3037 = vmul.f32 %v3005, 324.0
      %v3038 = vmul.f32 %v3006, 324.0
      %v3039 = vmul.f32 %v3007, 324.0
      %v3040 = vmul.f32 %v3008, 324.0
      %v3041 = vmul.f32 %v3009, 324.0
      %v3042 = vmul.f32 %v3010, 324.0
      %v3043 = vmul.f32 %v3011, 324.0
      %v3044 = vmul.f32 %v3012, 324.0
      %v3045 = vmul.f32 %v3013, 324.0
      %v3046 = vmul.f32 %v3014, 324.0
      %v3047 = vmul.f32 %v3015, 324.0
      %v3048 = vmul.f32 %v3016, 324.0
      %v3049 = vsub.f32 %v2889, %v3017
      %v3050 = vsub.f32 %v2890, %v3018
      %v3051 = vsub.f32 %v2891, %v3019
      %v3052 = vsub.f32 %v2892, %v3020
      %v3053 = vsub.f32 %v2893, %v3021
      %v3054 = vsub.f32 %v2894, %v3022
      %v3055 = vsub.f32 %v2895, %v3023
      %v3056 = vsub.f32 %v2896, %v3024
      %v3057 = vsub.f32 %v2897, %v3025
      %v3058 = vsub.f32 %v2898, %v3026
      %v3059 = vsub.f32 %v2899, %v3027
      %v3060 = vsub.f32 %v2900, %v3028
      %v3061 = vsub.f32 %v2901, %v3029
      %v3062 = vsub.f32 %v2902, %v3030
      %v3063 = vsub.f32 %v2903, %v3031
      %v3064 = vsub.f32 %v2904, %v3032
      %v3065 = vsub.f32 %v2905, %v3033
      %v3066 = vsub.f32 %v2906, %v3034
      %v3067 = vsub.f32 %v2907, %v3035
      %v3068 = vsub.f32 %v2908, %v3036
      %v3069 = vsub.f32 %v2909, %v3037
      %v3070 = vsub.f32 %v2910, %v3038
      %v3071 = vsub.f32 %v2911, %v3039
      %v3072 = vsub.f32 %v2912, %v3040
      %v3073 = vsub.f32 %v2913, %v3041
      %v3074 = vsub.f32 %v2914, %v3042
      %v3075 = vsub.f32 %v2915, %v3043
      %v3076 = vsub.f32 %v2916, %v3044
      %v3077 = vsub.f32 %v2917, %v3045
      %v3078 = vsub.f32 %v2918, %v3046
      %v3079 = vsub.f32 %v2919, %v3047
      %v3080 = vsub.f32 %v2920, %v3048
      %v3081 = vadd.f32 %v3049, 0.5
      %v3082 = vadd.f32 %v3050, 0.5
      %v3083 = vadd.f32 %v3051, 0.5
      %v3084 = vadd.f32 %v3052, 0.5
      %v3085 = vadd.f32 %v3053, 0.5
      %v3086 = vadd.f32 %v3054, 0.5
      %v3087 = vadd.f32 %v3055, 0.5
      %v3088 = vadd.f32 %v3056, 0.5
      %v3089 = vadd.f32 %v3057, 0.5
      %v3090 = vadd.f32 %v3058, 0.5
      %v3091 = vadd.f32 %v3059, 0.5
      %v3092 = vadd.f32 %v3060, 0.5
      %v3093 = vadd.f32 %v3061, 0.5
      %v3094 = vadd.f32 %v3062, 0.5
      %v3095 = vadd.f32 %v3063, 0.5
      %v3096 = vadd.f32 %v3064, 0.5
      %v3097 = vadd.f32 %v3065, 0.5
      %v3098 = vadd.f32 %v3066, 0.5
      %v3099 = vadd.f32 %v3067, 0.5
      %v3100 = vadd.f32 %v3068, 0.5
      %v3101 = vadd.f32 %v3069, 0.5
      %v3102 = vadd.f32 %v3070, 0.5
      %v3103 = vadd.f32 %v3071, 0.5
      %v3104 = vadd.f32 %v3072, 0.5
      %v3105 = vadd.f32 %v3073, 0.5
      %v3106 = vadd.f32 %v3074, 0.5
      %v3107 = vadd.f32 %v3075, 0.5
      %v3108 = vadd.f32 %v3076, 0.5
      %v3109 = vadd.f32 %v3077, 0.5
      %v3110 = vadd.f32 %v3078, 0.5
      %v3111 = vadd.f32 %v3079, 0.5
      %v3112 = vadd.f32 %v3080, 0.5
      %v3113 = vmul.f32 %v3081, 0.055555556
      %v3114 = vmul.f32 %v3082, 0.055555556
      %v3115 = vmul.f32 %v3083, 0.055555556
      %v3116 = vmul.f32 %v3084, 0.055555556
      %v3117 = vmul.f32 %v3085, 0.055555556
      %v3118 = vmul.f32 %v3086, 0.055555556
      %v3119 = vmul.f32 %v3087, 0.055555556
      %v3120 = vmul.f32 %v3088, 0.055555556
      %v3121 = vmul.f32 %v3089, 0.055555556
      %v3122 = vmul.f32 %v3090, 0.055555556
      %v3123 = vmul.f32 %v3091, 0.055555556
      %v3124 = vmul.f32 %v3092, 0.055555556
      %v3125 = vmul.f32 %v3093, 0.055555556
      %v3126 = vmul.f32 %v3094, 0.055555556
      %v3127 = vmul.f32 %v3095, 0.055555556
      %v3128 = vmul.f32 %v3096, 0.055555556
      %v3129 = vmul.f32 %v3097, 0.055555556
      %v3130 = vmul.f32 %v3098, 0.055555556
      %v3131 = vmul.f32 %v3099, 0.055555556
      %v3132 = vmul.f32 %v3100, 0.055555556
      %v3133 = vmul.f32 %v3101, 0.055555556
      %v3134 = vmul.f32 %v3102, 0.055555556
      %v3135 = vmul.f32 %v3103, 0.055555556
      %v3136 = vmul.f32 %v3104, 0.055555556
      %v3137 = vmul.f32 %v3105, 0.055555556
      %v3138 = vmul.f32 %v3106, 0.055555556
      %v3139 = vmul.f32 %v3107, 0.055555556
      %v3140 = vmul.f32 %v3108, 0.055555556
      %v3141 = vmul.f32 %v3109, 0.055555556
      %v3142 = vmul.f32 %v3110, 0.055555556
      %v3143 = vmul.f32 %v3111, 0.055555556
      %v3144 = vmul.f32 %v3112, 0.055555556
      %v3145 = vfloor.f32 %v3113
      %v3146 = vfloor.f32 %v3114
      %v3147 = vfloor.f32 %v3115
      %v3148 = vfloor.f32 %v3116
      %v3149 = vfloor.f32 %v3117
      %v3150 = vfloor.f32 %v3118
      %v3151 = vfloor.f32 %v3119
      %v3152 = vfloor.f32 %v3120
      %v3153 = vfloor.f32 %v3121
      %v3154 = vfloor.f32 %v3122
      %v3155 = vfloor.f32 %v3123
      %v3156 = vfloor.f32 %v3124
      %v3157 = vfloor.f32 %v3125
      %v3158 = vfloor.f32 %v3126
      %v3159 = vfloor.f32 %v3127
      %v3160 = vfloor.f32 %v3128
      %v3161 = vfloor.f32 %v3129
      %v3162 = vfloor.f32 %v3130
      %v3163 = vfloor.f32 %v3131
      %v3164 = vfloor.f32 %v3132
      %v3165 = vfloor.f32 %v3133
      %v3166 = vfloor.f32 %v3134
      %v3167 = vfloor.f32 %v3135
      %v3168 = vfloor.f32 %v3136
      %v3169 = vfloor.f32 %v3137
      %v3170 = vfloor.f32 %v3138
      %v3171 = vfloor.f32 %v3139
      %v3172 = vfloor.f32 %v3140
      %v3173 = vfloor.f32 %v3141
      %v3174 = vfloor.f32 %v3142
      %v3175 = vfloor.f32 %v3143
      %v3176 = vfloor.f32 %v3144
      %v3177 = vmul.f32 %v3145, 18.0
      %v3178 = vmul.f32 %v3146, 18.0
      %v3179 = vmul.f32 %v3147, 18.0
      %v3180 = vmul.f32 %v3148, 18.0
      %v3181 = vmul.f32 %v3149, 18.0
      %v3182 = vmul.f32 %v3150, 18.0
      %v3183 = vmul.f32 %v3151, 18.0
      %v3184 = vmul.f32 %v3152, 18.0
      %v3185 = vmul.f32 %v3153, 18.0
      %v3186 = vmul.f32 %v3154, 18.0
      %v3187 = vmul.f32 %v3155, 18.0
      %v3188 = vmul.f32 %v3156, 18.0
      %v3189 = vmul.f32 %v3157, 18.0
      %v3190 = vmul.f32 %v3158, 18.0
      %v3191 = vmul.f32 %v3159, 18.0
      %v3192 = vmul.f32 %v3160, 18.0
      %v3193 = vmul.f32 %v3161, 18.0
      %v3194 = vmul.f32 %v3162, 18.0
      %v3195 = vmul.f32 %v3163, 18.0
      %v3196 = vmul.f32 %v3164, 18.0
      %v3197 = vmul.f32 %v3165, 18.0
      %v3198 = vmul.f32 %v3166, 18.0
      %v3199 = vmul.f32 %v3167, 18.0
      %v3200 = vmul.f32 %v3168, 18.0
      %v3201 = vmul.f32 %v3169, 18.0
      %v3202 = vmul.f32 %v3170, 18.0
      %v3203 = vmul.f32 %v3171, 18.0
      %v3204 = vmul.f32 %v3172, 18.0
      %v3205 = vmul.f32 %v3173, 18.0
      %v3206 = vmul.f32 %v3174, 18.0
      %v3207 = vmul.f32 %v3175, 18.0
      %v3208 = vmul.f32 %v3176, 18.0
      %v3209 = vsub.f32 %v3049, %v3177
      %v3210 = vsub.f32 %v3050, %v3178
      %v3211 = vsub.f32 %v3051, %v3179
      %v3212 = vsub.f32 %v3052, %v3180
      %v3213 = vsub.f32 %v3053, %v3181
      %v3214 = vsub.f32 %v3054, %v3182
      %v3215 = vsub.f32 %v3055, %v3183
      %v3216 = vsub.f32 %v3056, %v3184
      %v3217 = vsub.f32 %v3057, %v3185
      %v3218 = vsub.f32 %v3058, %v3186
      %v3219 = vsub.f32 %v3059, %v3187
      %v3220 = vsub.f32 %v3060, %v3188
      %v3221 = vsub.f32 %v3061, %v3189
      %v3222 = vsub.f32 %v3062, %v3190
      %v3223 = vsub.f32 %v3063, %v3191
      %v3224 = vsub.f32 %v3064, %v3192
      %v3225 = vsub.f32 %v3065, %v3193
      %v3226 = vsub.f32 %v3066, %v3194
      %v3227 = vsub.f32 %v3067, %v3195
      %v3228 = vsub.f32 %v3068, %v3196
      %v3229 = vsub.f32 %v3069, %v3197
      %v3230 = vsub.f32 %v3070, %v3198
      %v3231 = vsub.f32 %v3071, %v3199
      %v3232 = vsub.f32 %v3072, %v3200
      %v3233 = vsub.f32 %v3073, %v3201
      %v3234 = vsub.f32 %v3074, %v3202
      %v3235 = vsub.f32 %v3075, %v3203
      %v3236 = vsub.f32 %v3076, %v3204
      %v3237 = vsub.f32 %v3077, %v3205
      %v3238 = vsub.f32 %v3078, %v3206
      %v3239 = vsub.f32 %v3079, %v3207
      %v3240 = vsub.f32 %v3080, %v3208
      %vm3241 = vcmp.lt.f32.partialorder %v2889, 648.0
      %vm3242 = vcmp.lt.f32.partialorder %v2890, 648.0
      %vm3243 = vcmp.lt.f32.partialorder %v2891, 648.0
      %vm3244 = vcmp.lt.f32.partialorder %v2892, 648.0
      %vm3245 = vcmp.lt.f32.partialorder %v2893, 648.0
      %vm3246 = vcmp.lt.f32.partialorder %v2894, 648.0
      %vm3247 = vcmp.lt.f32.partialorder %v2895, 648.0
      %vm3248 = vcmp.lt.f32.partialorder %v2896, 648.0
      %vm3249 = vcmp.lt.f32.partialorder %v2897, 648.0
      %vm3250 = vcmp.lt.f32.partialorder %v2898, 648.0
      %vm3251 = vcmp.lt.f32.partialorder %v2899, 648.0
      %vm3252 = vcmp.lt.f32.partialorder %v2900, 648.0
      %vm3253 = vcmp.lt.f32.partialorder %v2901, 648.0
      %vm3254 = vcmp.lt.f32.partialorder %v2902, 648.0
      %vm3255 = vcmp.lt.f32.partialorder %v2903, 648.0
      %vm3256 = vcmp.lt.f32.partialorder %v2904, 648.0
      %vm3257 = vcmp.lt.f32.partialorder %v2905, 648.0
      %vm3258 = vcmp.lt.f32.partialorder %v2906, 648.0
      %vm3259 = vcmp.lt.f32.partialorder %v2907, 648.0
      %vm3260 = vcmp.lt.f32.partialorder %v2908, 648.0
      %vm3261 = vcmp.lt.f32.partialorder %v2909, 648.0
      %vm3262 = vcmp.lt.f32.partialorder %v2910, 648.0
      %vm3263 = vcmp.lt.f32.partialorder %v2911, 648.0
      %vm3264 = vcmp.lt.f32.partialorder %v2912, 648.0
      %vm3265 = vcmp.lt.f32.partialorder %v2913, 648.0
      %vm3266 = vcmp.lt.f32.partialorder %v2914, 648.0
      %vm3267 = vcmp.lt.f32.partialorder %v2915, 648.0
      %vm3268 = vcmp.lt.f32.partialorder %v2916, 648.0
      %vm3269 = vcmp.lt.f32.partialorder %v2917, 648.0
      %vm3270 = vcmp.lt.f32.partialorder %v2918, 648.0
      %vm3271 = vcmp.lt.f32.partialorder %v2919, 648.0
      %vm3272 = vcmp.lt.f32.partialorder %v2920, 648.0
      %vm3273 = vcmp.ge.f32.partialorder %v3145, 1.0
      %vm3274 = vcmp.ge.f32.partialorder %v3146, 1.0
      %vm3275 = vcmp.ge.f32.partialorder %v3147, 1.0
      %vm3276 = vcmp.ge.f32.partialorder %v3148, 1.0
      %vm3277 = vcmp.ge.f32.partialorder %v3149, 1.0
      %vm3278 = vcmp.ge.f32.partialorder %v3150, 1.0
      %vm3279 = vcmp.ge.f32.partialorder %v3151, 1.0
      %vm3280 = vcmp.ge.f32.partialorder %v3152, 1.0
      %vm3281 = vcmp.ge.f32.partialorder %v3153, 1.0
      %vm3282 = vcmp.ge.f32.partialorder %v3154, 1.0
      %vm3283 = vcmp.ge.f32.partialorder %v3155, 1.0
      %vm3284 = vcmp.ge.f32.partialorder %v3156, 1.0
      %vm3285 = vcmp.ge.f32.partialorder %v3157, 1.0
      %vm3286 = vcmp.ge.f32.partialorder %v3158, 1.0
      %vm3287 = vcmp.ge.f32.partialorder %v3159, 1.0
      %vm3288 = vcmp.ge.f32.partialorder %v3160, 1.0
      %vm3289 = vcmp.ge.f32.partialorder %v3161, 1.0
      %vm3290 = vcmp.ge.f32.partialorder %v3162, 1.0
      %vm3291 = vcmp.ge.f32.partialorder %v3163, 1.0
      %vm3292 = vcmp.ge.f32.partialorder %v3164, 1.0
      %vm3293 = vcmp.ge.f32.partialorder %v3165, 1.0
      %vm3294 = vcmp.ge.f32.partialorder %v3166, 1.0
      %vm3295 = vcmp.ge.f32.partialorder %v3167, 1.0
      %vm3296 = vcmp.ge.f32.partialorder %v3168, 1.0
      %vm3297 = vcmp.ge.f32.partialorder %v3169, 1.0
      %vm3298 = vcmp.ge.f32.partialorder %v3170, 1.0
      %vm3299 = vcmp.ge.f32.partialorder %v3171, 1.0
      %vm3300 = vcmp.ge.f32.partialorder %v3172, 1.0
      %vm3301 = vcmp.ge.f32.partialorder %v3173, 1.0
      %vm3302 = vcmp.ge.f32.partialorder %v3174, 1.0
      %vm3303 = vcmp.ge.f32.partialorder %v3175, 1.0
      %vm3304 = vcmp.ge.f32.partialorder %v3176, 1.0
      %vm3305 = vmand %vm3241, %vm3273
      %vm3306 = vmand %vm3242, %vm3274
      %vm3307 = vmand %vm3243, %vm3275
      %vm3308 = vmand %vm3244, %vm3276
      %vm3309 = vmand %vm3245, %vm3277
      %vm3310 = vmand %vm3246, %vm3278
      %vm3311 = vmand %vm3247, %vm3279
      %vm3312 = vmand %vm3248, %vm3280
      %vm3313 = vmand %vm3249, %vm3281
      %vm3314 = vmand %vm3250, %vm3282
      %vm3315 = vmand %vm3251, %vm3283
      %vm3316 = vmand %vm3252, %vm3284
      %vm3317 = vmand %vm3253, %vm3285
      %vm3318 = vmand %vm3254, %vm3286
      %vm3319 = vmand %vm3255, %vm3287
      %vm3320 = vmand %vm3256, %vm3288
      %vm3321 = vmand %vm3257, %vm3289
      %vm3322 = vmand %vm3258, %vm3290
      %vm3323 = vmand %vm3259, %vm3291
      %vm3324 = vmand %vm3260, %vm3292
      %vm3325 = vmand %vm3261, %vm3293
      %vm3326 = vmand %vm3262, %vm3294
      %vm3327 = vmand %vm3263, %vm3295
      %vm3328 = vmand %vm3264, %vm3296
      %vm3329 = vmand %vm3265, %vm3297
      %vm3330 = vmand %vm3266, %vm3298
      %vm3331 = vmand %vm3267, %vm3299
      %vm3332 = vmand %vm3268, %vm3300
      %vm3333 = vmand %vm3269, %vm3301
      %vm3334 = vmand %vm3270, %vm3302
      %vm3335 = vmand %vm3271, %vm3303
      %vm3336 = vmand %vm3272, %vm3304
      %vm3337 = vcmp.le.f32.partialorder %v3145, 16.0
      %vm3338 = vcmp.le.f32.partialorder %v3146, 16.0
      %vm3339 = vcmp.le.f32.partialorder %v3147, 16.0
      %vm3340 = vcmp.le.f32.partialorder %v3148, 16.0
      %vm3341 = vcmp.le.f32.partialorder %v3149, 16.0
      %vm3342 = vcmp.le.f32.partialorder %v3150, 16.0
      %vm3343 = vcmp.le.f32.partialorder %v3151, 16.0
      %vm3344 = vcmp.le.f32.partialorder %v3152, 16.0
      %vm3345 = vcmp.le.f32.partialorder %v3153, 16.0
      %vm3346 = vcmp.le.f32.partialorder %v3154, 16.0
      %vm3347 = vcmp.le.f32.partialorder %v3155, 16.0
      %vm3348 = vcmp.le.f32.partialorder %v3156, 16.0
      %vm3349 = vcmp.le.f32.partialorder %v3157, 16.0
      %vm3350 = vcmp.le.f32.partialorder %v3158, 16.0
      %vm3351 = vcmp.le.f32.partialorder %v3159, 16.0
      %vm3352 = vcmp.le.f32.partialorder %v3160, 16.0
      %vm3353 = vcmp.le.f32.partialorder %v3161, 16.0
      %vm3354 = vcmp.le.f32.partialorder %v3162, 16.0
      %vm3355 = vcmp.le.f32.partialorder %v3163, 16.0
      %vm3356 = vcmp.le.f32.partialorder %v3164, 16.0
      %vm3357 = vcmp.le.f32.partialorder %v3165, 16.0
      %vm3358 = vcmp.le.f32.partialorder %v3166, 16.0
      %vm3359 = vcmp.le.f32.partialorder %v3167, 16.0
      %vm3360 = vcmp.le.f32.partialorder %v3168, 16.0
      %vm3361 = vcmp.le.f32.partialorder %v3169, 16.0
      %vm3362 = vcmp.le.f32.partialorder %v3170, 16.0
      %vm3363 = vcmp.le.f32.partialorder %v3171, 16.0
      %vm3364 = vcmp.le.f32.partialorder %v3172, 16.0
      %vm3365 = vcmp.le.f32.partialorder %v3173, 16.0
      %vm3366 = vcmp.le.f32.partialorder %v3174, 16.0
      %vm3367 = vcmp.le.f32.partialorder %v3175, 16.0
      %vm3368 = vcmp.le.f32.partialorder %v3176, 16.0
      %vm3369 = vmand %vm3305, %vm3337
      %vm3370 = vmand %vm3306, %vm3338
      %vm3371 = vmand %vm3307, %vm3339
      %vm3372 = vmand %vm3308, %vm3340
      %vm3373 = vmand %vm3309, %vm3341
      %vm3374 = vmand %vm3310, %vm3342
      %vm3375 = vmand %vm3311, %vm3343
      %vm3376 = vmand %vm3312, %vm3344
      %vm3377 = vmand %vm3313, %vm3345
      %vm3378 = vmand %vm3314, %vm3346
      %vm3379 = vmand %vm3315, %vm3347
      %vm3380 = vmand %vm3316, %vm3348
      %vm3381 = vmand %vm3317, %vm3349
      %vm3382 = vmand %vm3318, %vm3350
      %vm3383 = vmand %vm3319, %vm3351
      %vm3384 = vmand %vm3320, %vm3352
      %vm3385 = vmand %vm3321, %vm3353
      %vm3386 = vmand %vm3322, %vm3354
      %vm3387 = vmand %vm3323, %vm3355
      %vm3388 = vmand %vm3324, %vm3356
      %vm3389 = vmand %vm3325, %vm3357
      %vm3390 = vmand %vm3326, %vm3358
      %vm3391 = vmand %vm3327, %vm3359
      %vm3392 = vmand %vm3328, %vm3360
      %vm3393 = vmand %vm3329, %vm3361
      %vm3394 = vmand %vm3330, %vm3362
      %vm3395 = vmand %vm3331, %vm3363
      %vm3396 = vmand %vm3332, %vm3364
      %vm3397 = vmand %vm3333, %vm3365
      %vm3398 = vmand %vm3334, %vm3366
      %vm3399 = vmand %vm3335, %vm3367
      %vm3400 = vmand %vm3336, %vm3368
      %vm3401 = vcmp.ge.f32.partialorder %v3209, 1.0
      %vm3402 = vcmp.ge.f32.partialorder %v3210, 1.0
      %vm3403 = vcmp.ge.f32.partialorder %v3211, 1.0
      %vm3404 = vcmp.ge.f32.partialorder %v3212, 1.0
      %vm3405 = vcmp.ge.f32.partialorder %v3213, 1.0
      %vm3406 = vcmp.ge.f32.partialorder %v3214, 1.0
      %vm3407 = vcmp.ge.f32.partialorder %v3215, 1.0
      %vm3408 = vcmp.ge.f32.partialorder %v3216, 1.0
      %vm3409 = vcmp.ge.f32.partialorder %v3217, 1.0
      %vm3410 = vcmp.ge.f32.partialorder %v3218, 1.0
      %vm3411 = vcmp.ge.f32.partialorder %v3219, 1.0
      %vm3412 = vcmp.ge.f32.partialorder %v3220, 1.0
      %vm3413 = vcmp.ge.f32.partialorder %v3221, 1.0
      %vm3414 = vcmp.ge.f32.partialorder %v3222, 1.0
      %vm3415 = vcmp.ge.f32.partialorder %v3223, 1.0
      %vm3416 = vcmp.ge.f32.partialorder %v3224, 1.0
      %vm3417 = vcmp.ge.f32.partialorder %v3225, 1.0
      %vm3418 = vcmp.ge.f32.partialorder %v3226, 1.0
      %vm3419 = vcmp.ge.f32.partialorder %v3227, 1.0
      %vm3420 = vcmp.ge.f32.partialorder %v3228, 1.0
      %vm3421 = vcmp.ge.f32.partialorder %v3229, 1.0
      %vm3422 = vcmp.ge.f32.partialorder %v3230, 1.0
      %vm3423 = vcmp.ge.f32.partialorder %v3231, 1.0
      %vm3424 = vcmp.ge.f32.partialorder %v3232, 1.0
      %vm3425 = vcmp.ge.f32.partialorder %v3233, 1.0
      %vm3426 = vcmp.ge.f32.partialorder %v3234, 1.0
      %vm3427 = vcmp.ge.f32.partialorder %v3235, 1.0
      %vm3428 = vcmp.ge.f32.partialorder %v3236, 1.0
      %vm3429 = vcmp.ge.f32.partialorder %v3237, 1.0
      %vm3430 = vcmp.ge.f32.partialorder %v3238, 1.0
      %vm3431 = vcmp.ge.f32.partialorder %v3239, 1.0
      %vm3432 = vcmp.ge.f32.partialorder %v3240, 1.0
      %vm3433 = vmand %vm3369, %vm3401
      %vm3434 = vmand %vm3370, %vm3402
      %vm3435 = vmand %vm3371, %vm3403
      %vm3436 = vmand %vm3372, %vm3404
      %vm3437 = vmand %vm3373, %vm3405
      %vm3438 = vmand %vm3374, %vm3406
      %vm3439 = vmand %vm3375, %vm3407
      %vm3440 = vmand %vm3376, %vm3408
      %vm3441 = vmand %vm3377, %vm3409
      %vm3442 = vmand %vm3378, %vm3410
      %vm3443 = vmand %vm3379, %vm3411
      %vm3444 = vmand %vm3380, %vm3412
      %vm3445 = vmand %vm3381, %vm3413
      %vm3446 = vmand %vm3382, %vm3414
      %vm3447 = vmand %vm3383, %vm3415
      %vm3448 = vmand %vm3384, %vm3416
      %vm3449 = vmand %vm3385, %vm3417
      %vm3450 = vmand %vm3386, %vm3418
      %vm3451 = vmand %vm3387, %vm3419
      %vm3452 = vmand %vm3388, %vm3420
      %vm3453 = vmand %vm3389, %vm3421
      %vm3454 = vmand %vm3390, %vm3422
      %vm3455 = vmand %vm3391, %vm3423
      %vm3456 = vmand %vm3392, %vm3424
      %vm3457 = vmand %vm3393, %vm3425
      %vm3458 = vmand %vm3394, %vm3426
      %vm3459 = vmand %vm3395, %vm3427
      %vm3460 = vmand %vm3396, %vm3428
      %vm3461 = vmand %vm3397, %vm3429
      %vm3462 = vmand %vm3398, %vm3430
      %vm3463 = vmand %vm3399, %vm3431
      %vm3464 = vmand %vm3400, %vm3432
      %vm3465 = vcmp.le.f32.partialorder %v3209, 16.0
      %vm3466 = vcmp.le.f32.partialorder %v3210, 16.0
      %vm3467 = vcmp.le.f32.partialorder %v3211, 16.0
      %vm3468 = vcmp.le.f32.partialorder %v3212, 16.0
      %vm3469 = vcmp.le.f32.partialorder %v3213, 16.0
      %vm3470 = vcmp.le.f32.partialorder %v3214, 16.0
      %vm3471 = vcmp.le.f32.partialorder %v3215, 16.0
      %vm3472 = vcmp.le.f32.partialorder %v3216, 16.0
      %vm3473 = vcmp.le.f32.partialorder %v3217, 16.0
      %vm3474 = vcmp.le.f32.partialorder %v3218, 16.0
      %vm3475 = vcmp.le.f32.partialorder %v3219, 16.0
      %vm3476 = vcmp.le.f32.partialorder %v3220, 16.0
      %vm3477 = vcmp.le.f32.partialorder %v3221, 16.0
      %vm3478 = vcmp.le.f32.partialorder %v3222, 16.0
      %vm3479 = vcmp.le.f32.partialorder %v3223, 16.0
      %vm3480 = vcmp.le.f32.partialorder %v3224, 16.0
      %vm3481 = vcmp.le.f32.partialorder %v3225, 16.0
      %vm3482 = vcmp.le.f32.partialorder %v3226, 16.0
      %vm3483 = vcmp.le.f32.partialorder %v3227, 16.0
      %vm3484 = vcmp.le.f32.partialorder %v3228, 16.0
      %vm3485 = vcmp.le.f32.partialorder %v3229, 16.0
      %vm3486 = vcmp.le.f32.partialorder %v3230, 16.0
      %vm3487 = vcmp.le.f32.partialorder %v3231, 16.0
      %vm3488 = vcmp.le.f32.partialorder %v3232, 16.0
      %vm3489 = vcmp.le.f32.partialorder %v3233, 16.0
      %vm3490 = vcmp.le.f32.partialorder %v3234, 16.0
      %vm3491 = vcmp.le.f32.partialorder %v3235, 16.0
      %vm3492 = vcmp.le.f32.partialorder %v3236, 16.0
      %vm3493 = vcmp.le.f32.partialorder %v3237, 16.0
      %vm3494 = vcmp.le.f32.partialorder %v3238, 16.0
      %vm3495 = vcmp.le.f32.partialorder %v3239, 16.0
      %vm3496 = vcmp.le.f32.partialorder %v3240, 16.0
      %vm3497 = vmand %vm3433, %vm3465
      %vm3498 = vmand %vm3434, %vm3466
      %vm3499 = vmand %vm3435, %vm3467
      %vm3500 = vmand %vm3436, %vm3468
      %vm3501 = vmand %vm3437, %vm3469
      %vm3502 = vmand %vm3438, %vm3470
      %vm3503 = vmand %vm3439, %vm3471
      %vm3504 = vmand %vm3440, %vm3472
      %vm3505 = vmand %vm3441, %vm3473
      %vm3506 = vmand %vm3442, %vm3474
      %vm3507 = vmand %vm3443, %vm3475
      %vm3508 = vmand %vm3444, %vm3476
      %vm3509 = vmand %vm3445, %vm3477
      %vm3510 = vmand %vm3446, %vm3478
      %vm3511 = vmand %vm3447, %vm3479
      %vm3512 = vmand %vm3448, %vm3480
      %vm3513 = vmand %vm3449, %vm3481
      %vm3514 = vmand %vm3450, %vm3482
      %vm3515 = vmand %vm3451, %vm3483
      %vm3516 = vmand %vm3452, %vm3484
      %vm3517 = vmand %vm3453, %vm3485
      %vm3518 = vmand %vm3454, %vm3486
      %vm3519 = vmand %vm3455, %vm3487
      %vm3520 = vmand %vm3456, %vm3488
      %vm3521 = vmand %vm3457, %vm3489
      %vm3522 = vmand %vm3458, %vm3490
      %vm3523 = vmand %vm3459, %vm3491
      %vm3524 = vmand %vm3460, %vm3492
      %vm3525 = vmand %vm3461, %vm3493
      %vm3526 = vmand %vm3462, %vm3494
      %vm3527 = vmand %vm3463, %vm3495
      %vm3528 = vmand %vm3464, %vm3496
      %v3529 = vsel %vm3497, 1.0, 0.0
      %v3530 = vsel %vm3498, 1.0, 0.0
      %v3531 = vsel %vm3499, 1.0, 0.0
      %v3532 = vsel %vm3500, 1.0, 0.0
      %v3533 = vsel %vm3501, 1.0, 0.0
      %v3534 = vsel %vm3502, 1.0, 0.0
      %v3535 = vsel %vm3503, 1.0, 0.0
      %v3536 = vsel %vm3504, 1.0, 0.0
      %v3537 = vsel %vm3505, 1.0, 0.0
      %v3538 = vsel %vm3506, 1.0, 0.0
      %v3539 = vsel %vm3507, 1.0, 0.0
      %v3540 = vsel %vm3508, 1.0, 0.0
      %v3541 = vsel %vm3509, 1.0, 0.0
      %v3542 = vsel %vm3510, 1.0, 0.0
      %v3543 = vsel %vm3511, 1.0, 0.0
      %v3544 = vsel %vm3512, 1.0, 0.0
      %v3545 = vsel %vm3513, 1.0, 0.0
      %v3546 = vsel %vm3514, 1.0, 0.0
      %v3547 = vsel %vm3515, 1.0, 0.0
      %v3548 = vsel %vm3516, 1.0, 0.0
      %v3549 = vsel %vm3517, 1.0, 0.0
      %v3550 = vsel %vm3518, 1.0, 0.0
      %v3551 = vsel %vm3519, 1.0, 0.0
      %v3552 = vsel %vm3520, 1.0, 0.0
      %v3553 = vsel %vm3521, 1.0, 0.0
      %v3554 = vsel %vm3522, 1.0, 0.0
      %v3555 = vsel %vm3523, 1.0, 0.0
      %v3556 = vsel %vm3524, 1.0, 0.0
      %v3557 = vsel %vm3525, 1.0, 0.0
      %v3558 = vsel %vm3526, 1.0, 0.0
      %v3559 = vsel %vm3527, 1.0, 0.0
      %v3560 = vsel %vm3528, 1.0, 0.0
      %v3561 = vmul.f32 %v2758, %v3529
      %v3562 = vmul.f32 %v2759, %v3530
      %v3563 = vmul.f32 %v2760, %v3531
      %v3564 = vmul.f32 %v2761, %v3532
      %v3565 = vmul.f32 %v2762, %v3533
      %v3566 = vmul.f32 %v2763, %v3534
      %v3567 = vmul.f32 %v2764, %v3535
      %v3568 = vmul.f32 %v2765, %v3536
      %v3569 = vmul.f32 %v2766, %v3537
      %v3570 = vmul.f32 %v2767, %v3538
      %v3571 = vmul.f32 %v2768, %v3539
      %v3572 = vmul.f32 %v2769, %v3540
      %v3573 = vmul.f32 %v2770, %v3541
      %v3574 = vmul.f32 %v2771, %v3542
      %v3575 = vmul.f32 %v2772, %v3543
      %v3576 = vmul.f32 %v2773, %v3544
      %v3577 = vmul.f32 %v2774, %v3545
      %v3578 = vmul.f32 %v2775, %v3546
      %v3579 = vmul.f32 %v2776, %v3547
      %v3580 = vmul.f32 %v2777, %v3548
      %v3581 = vmul.f32 %v2778, %v3549
      %v3582 = vmul.f32 %v2779, %v3550
      %v3583 = vmul.f32 %v2780, %v3551
      %v3584 = vmul.f32 %v2781, %v3552
      %v3585 = vmul.f32 %v2782, %v3553
      %v3586 = vmul.f32 %v2783, %v3554
      %v3587 = vmul.f32 %v2784, %v3555
      %v3588 = vmul.f32 %v2785, %v3556
      %v3589 = vmul.f32 %v2786, %v3557
      %v3590 = vmul.f32 %v2787, %v3558
      %v3591 = vmul.f32 %v2788, %v3559
      %v3592 = vmul.f32 %v2789, %v3560
      %v3593 = vadd.f32 %v3561, %v3562
      %v3594 = vadd.f32 %v3593, %v3563
      %v3595 = vadd.f32 %v3594, %v3564
      %v3596 = vadd.f32 %v3595, %v3565
      %v3597 = vadd.f32 %v3596, %v3566
      %v3598 = vadd.f32 %v3597, %v3567
      %v3599 = vadd.f32 %v3598, %v3568
      %v3600 = vadd.f32 %v3599, %v3569
      %v3601 = vadd.f32 %v3600, %v3570
      %v3602 = vadd.f32 %v3601, %v3571
      %v3603 = vadd.f32 %v3602, %v3572
      %v3604 = vadd.f32 %v3603, %v3573
      %v3605 = vadd.f32 %v3604, %v3574
      %v3606 = vadd.f32 %v3605, %v3575
      %v3607 = vadd.f32 %v3606, %v3576
      %v3608 = vadd.f32 %v3607, %v3577
      %v3609 = vadd.f32 %v3608, %v3578
      %v3610 = vadd.f32 %v3609, %v3579
      %v3611 = vadd.f32 %v3610, %v3580
      %v3612 = vadd.f32 %v3611, %v3581
      %v3613 = vadd.f32 %v3612, %v3582
      %v3614 = vadd.f32 %v3613, %v3583
      %v3615 = vadd.f32 %v3614, %v3584
      %v3616 = vadd.f32 %v3615, %v3585
      %v3617 = vadd.f32 %v3616, %v3586
      %v3618 = vadd.f32 %v3617, %v3587
      %v3619 = vadd.f32 %v3618, %v3588
      %v3620 = vadd.f32 %v3619, %v3589
      %v3621 = vadd.f32 %v3620, %v3590
      %v3622 = vadd.f32 %v3621, %v3591
      %v3623 = vadd.f32 %v3622, %v3592
      %v3624 = vrot.slane %v3623, 4
      %v3625 = vadd.f32 %v3623, %v3624
      %v3626 = vrot.slane %v3625, 2
      %v3627 = vadd.f32 %v3625, %v3626
      %v3628 = vrot.slane %v3627, 1
      %v3629 = vadd.f32 %v3627, %v3628
      %v3630 = vadd.f32 %v80, %v3629
      %v3631 = vmul.f32 %v3561, %v2758
      %v3632 = vmul.f32 %v3562, %v2759
      %v3633 = vmul.f32 %v3563, %v2760
      %v3634 = vmul.f32 %v3564, %v2761
      %v3635 = vmul.f32 %v3565, %v2762
      %v3636 = vmul.f32 %v3566, %v2763
      %v3637 = vmul.f32 %v3567, %v2764
      %v3638 = vmul.f32 %v3568, %v2765
      %v3639 = vmul.f32 %v3569, %v2766
      %v3640 = vmul.f32 %v3570, %v2767
      %v3641 = vmul.f32 %v3571, %v2768
      %v3642 = vmul.f32 %v3572, %v2769
      %v3643 = vmul.f32 %v3573, %v2770
      %v3644 = vmul.f32 %v3574, %v2771
      %v3645 = vmul.f32 %v3575, %v2772
      %v3646 = vmul.f32 %v3576, %v2773
      %v3647 = vmul.f32 %v3577, %v2774
      %v3648 = vmul.f32 %v3578, %v2775
      %v3649 = vmul.f32 %v3579, %v2776
      %v3650 = vmul.f32 %v3580, %v2777
      %v3651 = vmul.f32 %v3581, %v2778
      %v3652 = vmul.f32 %v3582, %v2779
      %v3653 = vmul.f32 %v3583, %v2780
      %v3654 = vmul.f32 %v3584, %v2781
      %v3655 = vmul.f32 %v3585, %v2782
      %v3656 = vmul.f32 %v3586, %v2783
      %v3657 = vmul.f32 %v3587, %v2784
      %v3658 = vmul.f32 %v3588, %v2785
      %v3659 = vmul.f32 %v3589, %v2786
      %v3660 = vmul.f32 %v3590, %v2787
      %v3661 = vmul.f32 %v3591, %v2788
      %v3662 = vmul.f32 %v3592, %v2789
      %v3663 = vadd.f32 %v3631, %v3632
      %v3664 = vadd.f32 %v3663, %v3633
      %v3665 = vadd.f32 %v3664, %v3634
      %v3666 = vadd.f32 %v3665, %v3635
      %v3667 = vadd.f32 %v3666, %v3636
      %v3668 = vadd.f32 %v3667, %v3637
      %v3669 = vadd.f32 %v3668, %v3638
      %v3670 = vadd.f32 %v3669, %v3639
      %v3671 = vadd.f32 %v3670, %v3640
      %v3672 = vadd.f32 %v3671, %v3641
      %v3673 = vadd.f32 %v3672, %v3642
      %v3674 = vadd.f32 %v3673, %v3643
      %v3675 = vadd.f32 %v3674, %v3644
      %v3676 = vadd.f32 %v3675, %v3645
      %v3677 = vadd.f32 %v3676, %v3646
      %v3678 = vadd.f32 %v3677, %v3647
      %v3679 = vadd.f32 %v3678, %v3648
      %v3680 = vadd.f32 %v3679, %v3649
      %v3681 = vadd.f32 %v3680, %v3650
      %v3682 = vadd.f32 %v3681, %v3651
      %v3683 = vadd.f32 %v3682, %v3652
      %v3684 = vadd.f32 %v3683, %v3653
      %v3685 = vadd.f32 %v3684, %v3654
      %v3686 = vadd.f32 %v3685, %v3655
      %v3687 = vadd.f32 %v3686, %v3656
      %v3688 = vadd.f32 %v3687, %v3657
      %v3689 = vadd.f32 %v3688, %v3658
      %v3690 = vadd.f32 %v3689, %v3659
      %v3691 = vadd.f32 %v3690, %v3660
      %v3692 = vadd.f32 %v3691, %v3661
      %v3693 = vadd.f32 %v3692, %v3662
      %v3694 = vrot.slane %v3693, 4
      %v3695 = vadd.f32 %v3693, %v3694
      %v3696 = vrot.slane %v3695, 2
      %v3697 = vadd.f32 %v3695, %v3696
      %v3698 = vrot.slane %v3697, 1
      %v3699 = vadd.f32 %v3697, %v3698
      %v3700 = vadd.f32 %v81, %v3699
    $region46: #{tpu_custom_call.1} parent=1 // loop_footer
      %s79 = sadd.s32 1, %s75
    $region47: #{tpu_custom_call.1} parent=1 // loop_footer_branch
      %74 = sbr.rel target = $region43
    $region48: #{tpu_custom_call.1} parent=1 // loop_exit
      _
    %v3701 = vmul.f32 %v80, 0.001953125
    %v3702 = vmul.f32 %v81, 0.001953125
    %v3703 = vmul.f32 %v3701, %v3701
    %v3704 = vsub.f32 %v3702, %v3703
    %v3705 = vld [vmem:[%s2] sm:$0x1]
    %v3706 = vadd.f32 %v3704, 1e-05
    %v3707 = vrsqrt.pop %v3706
    %v3708 = vmul.f32 %v3705, %v3707
    %v3709 = vld [vmem:[%s3] sm:$0x1]
    %v3710 = vmul.f32 %v3701, %v3708
    %v3711 = vsub.f32 %v3709, %v3710
    loop: start=0, step=1, limit=3
    $region49: #{tpu_custom_call.1} parent=1 // loop_pre_header
      _
    $region50: #{tpu_custom_call.1} parent=1 // loop_header
      %s3713 = sphi 0, %s3717
      %p3714 = scmp.ge.s32.totalorder %s3713, 3
    $region51: #{tpu_custom_call.1} parent=1 // loop_header_branch
      %3716 = sbr.rel (%p3714) target = $region55
    $region52: #{tpu_custom_call.1} parent=1 // loop_body
      %s3718 = smul.u32 %s3713, 256
      %s3719 = sadd.s32 %s3718, 24
      %s3720 = scalar_lea.vmem [#allocation2], %s3719
      %v3721 = vld [vmem:[%s3720] sm:$0xff]
      %v3722 = vld [vmem:[%s3720 + $0x8] sm:$0xff]
      %v3723 = vld [vmem:[%s3720 + $0x10] sm:$0xff]
      %v3724 = vld [vmem:[%s3720 + $0x18] sm:$0xff]
      %v3725 = vld [vmem:[%s3720 + $0x20] sm:$0xff]
      %v3726 = vld [vmem:[%s3720 + $0x28] sm:$0xff]
      %v3727 = vld [vmem:[%s3720 + $0x30] sm:$0xff]
      %v3728 = vld [vmem:[%s3720 + $0x38] sm:$0xff]
      %v3729 = vld [vmem:[%s3720 + $0x40] sm:$0xff]
      %v3730 = vld [vmem:[%s3720 + $0x48] sm:$0xff]
      %v3731 = vld [vmem:[%s3720 + $0x50] sm:$0xff]
      %v3732 = vld [vmem:[%s3720 + $0x58] sm:$0xff]
      %v3733 = vld [vmem:[%s3720 + $0x60] sm:$0xff]
      %v3734 = vld [vmem:[%s3720 + $0x68] sm:$0xff]
      %v3735 = vld [vmem:[%s3720 + $0x70] sm:$0xff]
      %v3736 = vld [vmem:[%s3720 + $0x78] sm:$0xff]
      %v3737 = vld [vmem:[%s3720 + $0x80] sm:$0xff]
      %v3738 = vld [vmem:[%s3720 + $0x88] sm:$0xff]
      %v3739 = vld [vmem:[%s3720 + $0x90] sm:$0xff]
      %v3740 = vld [vmem:[%s3720 + $0x98] sm:$0xff]
      %v3741 = vld [vmem:[%s3720 + $0xa0] sm:$0xff]
      %v3742 = vld [vmem:[%s3720 + $0xa8] sm:$0xff]
      %v3743 = vld [vmem:[%s3720 + $0xb0] sm:$0xff]
      %v3744 = vld [vmem:[%s3720 + $0xb8] sm:$0xff]
      %v3745 = vld [vmem:[%s3720 + $0xc0] sm:$0xff]
      %v3746 = vld [vmem:[%s3720 + $0xc8] sm:$0xff]
      %v3747 = vld [vmem:[%s3720 + $0xd0] sm:$0xff]
      %v3748 = vld [vmem:[%s3720 + $0xd8] sm:$0xff]
      %v3749 = vld [vmem:[%s3720 + $0xe0] sm:$0xff]
      %v3750 = vld [vmem:[%s3720 + $0xe8] sm:$0xff]
      %v3751 = vld [vmem:[%s3720 + $0xf0] sm:$0xff]
      %v3752 = vld [vmem:[%s3720 + $0xf8] sm:$0xff]
      %v3754 = vlaneseq
      %v3755 = vshrl.u32 %v3754, 7
      %v3756 = vsub.s32 0, %v3755
      %v3757 = vrot.slane %v3708, %v3756
      %v3759 = vmul.f32 %v3721, %v3757
      %v3760 = vmul.f32 %v3722, %v3757
      %v3761 = vmul.f32 %v3723, %v3757
      %v3762 = vmul.f32 %v3724, %v3757
      %v3763 = vmul.f32 %v3725, %v3757
      %v3764 = vmul.f32 %v3726, %v3757
      %v3765 = vmul.f32 %v3727, %v3757
      %v3766 = vmul.f32 %v3728, %v3757
      %v3767 = vmul.f32 %v3729, %v3757
      %v3768 = vmul.f32 %v3730, %v3757
      %v3769 = vmul.f32 %v3731, %v3757
      %v3770 = vmul.f32 %v3732, %v3757
      %v3771 = vmul.f32 %v3733, %v3757
      %v3772 = vmul.f32 %v3734, %v3757
      %v3773 = vmul.f32 %v3735, %v3757
      %v3774 = vmul.f32 %v3736, %v3757
      %v3775 = vmul.f32 %v3737, %v3757
      %v3776 = vmul.f32 %v3738, %v3757
      %v3777 = vmul.f32 %v3739, %v3757
      %v3778 = vmul.f32 %v3740, %v3757
      %v3779 = vmul.f32 %v3741, %v3757
      %v3780 = vmul.f32 %v3742, %v3757
      %v3781 = vmul.f32 %v3743, %v3757
      %v3782 = vmul.f32 %v3744, %v3757
      %v3783 = vmul.f32 %v3745, %v3757
      %v3784 = vmul.f32 %v3746, %v3757
      %v3785 = vmul.f32 %v3747, %v3757
      %v3786 = vmul.f32 %v3748, %v3757
      %v3787 = vmul.f32 %v3749, %v3757
      %v3788 = vmul.f32 %v3750, %v3757
      %v3789 = vmul.f32 %v3751, %v3757
      %v3790 = vmul.f32 %v3752, %v3757
      %v3792 = vlaneseq
      %v3793 = vshrl.u32 %v3792, 7
      %v3794 = vsub.s32 0, %v3793
      %v3795 = vrot.slane %v3711, %v3794
      %v3797 = vadd.f32 %v3759, %v3795
      %v3798 = vadd.f32 %v3760, %v3795
      %v3799 = vadd.f32 %v3761, %v3795
      %v3800 = vadd.f32 %v3762, %v3795
      %v3801 = vadd.f32 %v3763, %v3795
      %v3802 = vadd.f32 %v3764, %v3795
      %v3803 = vadd.f32 %v3765, %v3795
      %v3804 = vadd.f32 %v3766, %v3795
      %v3805 = vadd.f32 %v3767, %v3795
      %v3806 = vadd.f32 %v3768, %v3795
      %v3807 = vadd.f32 %v3769, %v3795
      %v3808 = vadd.f32 %v3770, %v3795
      %v3809 = vadd.f32 %v3771, %v3795
      %v3810 = vadd.f32 %v3772, %v3795
      %v3811 = vadd.f32 %v3773, %v3795
      %v3812 = vadd.f32 %v3774, %v3795
      %v3813 = vadd.f32 %v3775, %v3795
      %v3814 = vadd.f32 %v3776, %v3795
      %v3815 = vadd.f32 %v3777, %v3795
      %v3816 = vadd.f32 %v3778, %v3795
      %v3817 = vadd.f32 %v3779, %v3795
      %v3818 = vadd.f32 %v3780, %v3795
      %v3819 = vadd.f32 %v3781, %v3795
      %v3820 = vadd.f32 %v3782, %v3795
      %v3821 = vadd.f32 %v3783, %v3795
      %v3822 = vadd.f32 %v3784, %v3795
      %v3823 = vadd.f32 %v3785, %v3795
      %v3824 = vadd.f32 %v3786, %v3795
      %v3825 = vadd.f32 %v3787, %v3795
      %v3826 = vadd.f32 %v3788, %v3795
      %v3827 = vadd.f32 %v3789, %v3795
      %v3828 = vadd.f32 %v3790, %v3795
      %v3829 = vmax.f32 %v3797, 0.0
      %v3830 = vmax.f32 %v3798, 0.0
      %v3831 = vmax.f32 %v3799, 0.0
      %v3832 = vmax.f32 %v3800, 0.0
      %v3833 = vmax.f32 %v3801, 0.0
      %v3834 = vmax.f32 %v3802, 0.0
      %v3835 = vmax.f32 %v3803, 0.0
      %v3836 = vmax.f32 %v3804, 0.0
      %v3837 = vmax.f32 %v3805, 0.0
      %v3838 = vmax.f32 %v3806, 0.0
      %v3839 = vmax.f32 %v3807, 0.0
      %v3840 = vmax.f32 %v3808, 0.0
      %v3841 = vmax.f32 %v3809, 0.0
      %v3842 = vmax.f32 %v3810, 0.0
      %v3843 = vmax.f32 %v3811, 0.0
      %v3844 = vmax.f32 %v3812, 0.0
      %v3845 = vmax.f32 %v3813, 0.0
      %v3846 = vmax.f32 %v3814, 0.0
      %v3847 = vmax.f32 %v3815, 0.0
      %v3848 = vmax.f32 %v3816, 0.0
      %v3849 = vmax.f32 %v3817, 0.0
      %v3850 = vmax.f32 %v3818, 0.0
      %v3851 = vmax.f32 %v3819, 0.0
      %v3852 = vmax.f32 %v3820, 0.0
      %v3853 = vmax.f32 %v3821, 0.0
      %v3854 = vmax.f32 %v3822, 0.0
      %v3855 = vmax.f32 %v3823, 0.0
      %v3856 = vmax.f32 %v3824, 0.0
      %v3857 = vmax.f32 %v3825, 0.0
      %v3858 = vmax.f32 %v3826, 0.0
      %v3859 = vmax.f32 %v3827, 0.0
      %v3860 = vmax.f32 %v3828, 0.0
      %v3861 = vlaneseq
      %v3862 = vshrl.u32 %v3861, 7
      %v3863 = vadd.s32 %v3862, 8
      %v3864 = vadd.s32 %v3862, 16
      %v3865 = vadd.s32 %v3862, 24
      %v3866 = vadd.s32 %v3862, 32
      %v3867 = vadd.s32 %v3862, 40
      %v3868 = vadd.s32 %v3862, 48
      %v3869 = vadd.s32 %v3862, 56
      %v3870 = vadd.s32 %v3862, 64
      %v3871 = vadd.s32 %v3862, 72
      %v3872 = vadd.s32 %v3862, 80
      %v3873 = vadd.s32 %v3862, 88
      %v3874 = vadd.s32 %v3862, 96
      %v3875 = vadd.s32 %v3862, 104
      %v3876 = vadd.s32 %v3862, 112
      %v3877 = vadd.s32 %v3862, 120
      %v3878 = vadd.s32 %v3862, 128
      %v3879 = vadd.s32 %v3862, 136
      %v3880 = vadd.s32 %v3862, 144
      %v3881 = vadd.s32 %v3862, 152
      %v3882 = vadd.s32 %v3862, 160
      %v3883 = vadd.s32 %v3862, 168
      %v3884 = vadd.s32 %v3862, 176
      %v3885 = vadd.s32 %v3862, 184
      %v3886 = vadd.s32 %v3862, 192
      %v3887 = vadd.s32 %v3862, 200
      %v3888 = vadd.s32 %v3862, 208
      %v3889 = vadd.s32 %v3862, 216
      %v3890 = vadd.s32 %v3862, 224
      %v3891 = vadd.s32 %v3862, 232
      %v3892 = vadd.s32 %v3862, 240
      %v3893 = vadd.s32 %v3862, 248
      %v3894 = vstv %s3718
      %v3895 = vadd.s32 %v3894, %v3862
      %v3896 = vadd.s32 %v3894, %v3863
      %v3897 = vadd.s32 %v3894, %v3864
      %v3898 = vadd.s32 %v3894, %v3865
      %v3899 = vadd.s32 %v3894, %v3866
      %v3900 = vadd.s32 %v3894, %v3867
      %v3901 = vadd.s32 %v3894, %v3868
      %v3902 = vadd.s32 %v3894, %v3869
      %v3903 = vadd.s32 %v3894, %v3870
      %v3904 = vadd.s32 %v3894, %v3871
      %v3905 = vadd.s32 %v3894, %v3872
      %v3906 = vadd.s32 %v3894, %v3873
      %v3907 = vadd.s32 %v3894, %v3874
      %v3908 = vadd.s32 %v3894, %v3875
      %v3909 = vadd.s32 %v3894, %v3876
      %v3910 = vadd.s32 %v3894, %v3877
      %v3911 = vadd.s32 %v3894, %v3878
      %v3912 = vadd.s32 %v3894, %v3879
      %v3913 = vadd.s32 %v3894, %v3880
      %v3914 = vadd.s32 %v3894, %v3881
      %v3915 = vadd.s32 %v3894, %v3882
      %v3916 = vadd.s32 %v3894, %v3883
      %v3917 = vadd.s32 %v3894, %v3884
      %v3918 = vadd.s32 %v3894, %v3885
      %v3919 = vadd.s32 %v3894, %v3886
      %v3920 = vadd.s32 %v3894, %v3887
      %v3921 = vadd.s32 %v3894, %v3888
      %v3922 = vadd.s32 %v3894, %v3889
      %v3923 = vadd.s32 %v3894, %v3890
      %v3924 = vadd.s32 %v3894, %v3891
      %v3925 = vadd.s32 %v3894, %v3892
      %v3926 = vadd.s32 %v3894, %v3893
      %v3927 = vcvt.s32.f32 %v3895
      %v3928 = vcvt.s32.f32 %v3896
      %v3929 = vcvt.s32.f32 %v3897
      %v3930 = vcvt.s32.f32 %v3898
      %v3931 = vcvt.s32.f32 %v3899
      %v3932 = vcvt.s32.f32 %v3900
      %v3933 = vcvt.s32.f32 %v3901
      %v3934 = vcvt.s32.f32 %v3902
      %v3935 = vcvt.s32.f32 %v3903
      %v3936 = vcvt.s32.f32 %v3904
      %v3937 = vcvt.s32.f32 %v3905
      %v3938 = vcvt.s32.f32 %v3906
      %v3939 = vcvt.s32.f32 %v3907
      %v3940 = vcvt.s32.f32 %v3908
      %v3941 = vcvt.s32.f32 %v3909
      %v3942 = vcvt.s32.f32 %v3910
      %v3943 = vcvt.s32.f32 %v3911
      %v3944 = vcvt.s32.f32 %v3912
      %v3945 = vcvt.s32.f32 %v3913
      %v3946 = vcvt.s32.f32 %v3914
      %v3947 = vcvt.s32.f32 %v3915
      %v3948 = vcvt.s32.f32 %v3916
      %v3949 = vcvt.s32.f32 %v3917
      %v3950 = vcvt.s32.f32 %v3918
      %v3951 = vcvt.s32.f32 %v3919
      %v3952 = vcvt.s32.f32 %v3920
      %v3953 = vcvt.s32.f32 %v3921
      %v3954 = vcvt.s32.f32 %v3922
      %v3955 = vcvt.s32.f32 %v3923
      %v3956 = vcvt.s32.f32 %v3924
      %v3957 = vcvt.s32.f32 %v3925
      %v3958 = vcvt.s32.f32 %v3926
      %v3959 = vadd.f32 %v3927, 0.5
      %v3960 = vadd.f32 %v3928, 0.5
      %v3961 = vadd.f32 %v3929, 0.5
      %v3962 = vadd.f32 %v3930, 0.5
      %v3963 = vadd.f32 %v3931, 0.5
      %v3964 = vadd.f32 %v3932, 0.5
      %v3965 = vadd.f32 %v3933, 0.5
      %v3966 = vadd.f32 %v3934, 0.5
      %v3967 = vadd.f32 %v3935, 0.5
      %v3968 = vadd.f32 %v3936, 0.5
      %v3969 = vadd.f32 %v3937, 0.5
      %v3970 = vadd.f32 %v3938, 0.5
      %v3971 = vadd.f32 %v3939, 0.5
      %v3972 = vadd.f32 %v3940, 0.5
      %v3973 = vadd.f32 %v3941, 0.5
      %v3974 = vadd.f32 %v3942, 0.5
      %v3975 = vadd.f32 %v3943, 0.5
      %v3976 = vadd.f32 %v3944, 0.5
      %v3977 = vadd.f32 %v3945, 0.5
      %v3978 = vadd.f32 %v3946, 0.5
      %v3979 = vadd.f32 %v3947, 0.5
      %v3980 = vadd.f32 %v3948, 0.5
      %v3981 = vadd.f32 %v3949, 0.5
      %v3982 = vadd.f32 %v3950, 0.5
      %v3983 = vadd.f32 %v3951, 0.5
      %v3984 = vadd.f32 %v3952, 0.5
      %v3985 = vadd.f32 %v3953, 0.5
      %v3986 = vadd.f32 %v3954, 0.5
      %v3987 = vadd.f32 %v3955, 0.5
      %v3988 = vadd.f32 %v3956, 0.5
      %v3989 = vadd.f32 %v3957, 0.5
      %v3990 = vadd.f32 %v3958, 0.5
      %v3991 = vmul.f32 %v3959, 0.0030864198
      %v3992 = vmul.f32 %v3960, 0.0030864198
      %v3993 = vmul.f32 %v3961, 0.0030864198
      %v3994 = vmul.f32 %v3962, 0.0030864198
      %v3995 = vmul.f32 %v3963, 0.0030864198
      %v3996 = vmul.f32 %v3964, 0.0030864198
      %v3997 = vmul.f32 %v3965, 0.0030864198
      %v3998 = vmul.f32 %v3966, 0.0030864198
      %v3999 = vmul.f32 %v3967, 0.0030864198
      %v4000 = vmul.f32 %v3968, 0.0030864198
      %v4001 = vmul.f32 %v3969, 0.0030864198
      %v4002 = vmul.f32 %v3970, 0.0030864198
      %v4003 = vmul.f32 %v3971, 0.0030864198
      %v4004 = vmul.f32 %v3972, 0.0030864198
      %v4005 = vmul.f32 %v3973, 0.0030864198
      %v4006 = vmul.f32 %v3974, 0.0030864198
      %v4007 = vmul.f32 %v3975, 0.0030864198
      %v4008 = vmul.f32 %v3976, 0.0030864198
      %v4009 = vmul.f32 %v3977, 0.0030864198
      %v4010 = vmul.f32 %v3978, 0.0030864198
      %v4011 = vmul.f32 %v3979, 0.0030864198
      %v4012 = vmul.f32 %v3980, 0.0030864198
      %v4013 = vmul.f32 %v3981, 0.0030864198
      %v4014 = vmul.f32 %v3982, 0.0030864198
      %v4015 = vmul.f32 %v3983, 0.0030864198
      %v4016 = vmul.f32 %v3984, 0.0030864198
      %v4017 = vmul.f32 %v3985, 0.0030864198
      %v4018 = vmul.f32 %v3986, 0.0030864198
      %v4019 = vmul.f32 %v3987, 0.0030864198
      %v4020 = vmul.f32 %v3988, 0.0030864198
      %v4021 = vmul.f32 %v3989, 0.0030864198
      %v4022 = vmul.f32 %v3990, 0.0030864198
      %v4023 = vfloor.f32 %v3991
      %v4024 = vfloor.f32 %v3992
      %v4025 = vfloor.f32 %v3993
      %v4026 = vfloor.f32 %v3994
      %v4027 = vfloor.f32 %v3995
      %v4028 = vfloor.f32 %v3996
      %v4029 = vfloor.f32 %v3997
      %v4030 = vfloor.f32 %v3998
      %v4031 = vfloor.f32 %v3999
      %v4032 = vfloor.f32 %v4000
      %v4033 = vfloor.f32 %v4001
      %v4034 = vfloor.f32 %v4002
      %v4035 = vfloor.f32 %v4003
      %v4036 = vfloor.f32 %v4004
      %v4037 = vfloor.f32 %v4005
      %v4038 = vfloor.f32 %v4006
      %v4039 = vfloor.f32 %v4007
      %v4040 = vfloor.f32 %v4008
      %v4041 = vfloor.f32 %v4009
      %v4042 = vfloor.f32 %v4010
      %v4043 = vfloor.f32 %v4011
      %v4044 = vfloor.f32 %v4012
      %v4045 = vfloor.f32 %v4013
      %v4046 = vfloor.f32 %v4014
      %v4047 = vfloor.f32 %v4015
      %v4048 = vfloor.f32 %v4016
      %v4049 = vfloor.f32 %v4017
      %v4050 = vfloor.f32 %v4018
      %v4051 = vfloor.f32 %v4019
      %v4052 = vfloor.f32 %v4020
      %v4053 = vfloor.f32 %v4021
      %v4054 = vfloor.f32 %v4022
      %v4055 = vmul.f32 %v4023, 324.0
      %v4056 = vmul.f32 %v4024, 324.0
      %v4057 = vmul.f32 %v4025, 324.0
      %v4058 = vmul.f32 %v4026, 324.0
      %v4059 = vmul.f32 %v4027, 324.0
      %v4060 = vmul.f32 %v4028, 324.0
      %v4061 = vmul.f32 %v4029, 324.0
      %v4062 = vmul.f32 %v4030, 324.0
      %v4063 = vmul.f32 %v4031, 324.0
      %v4064 = vmul.f32 %v4032, 324.0
      %v4065 = vmul.f32 %v4033, 324.0
      %v4066 = vmul.f32 %v4034, 324.0
      %v4067 = vmul.f32 %v4035, 324.0
      %v4068 = vmul.f32 %v4036, 324.0
      %v4069 = vmul.f32 %v4037, 324.0
      %v4070 = vmul.f32 %v4038, 324.0
      %v4071 = vmul.f32 %v4039, 324.0
      %v4072 = vmul.f32 %v4040, 324.0
      %v4073 = vmul.f32 %v4041, 324.0
      %v4074 = vmul.f32 %v4042, 324.0
      %v4075 = vmul.f32 %v4043, 324.0
      %v4076 = vmul.f32 %v4044, 324.0
      %v4077 = vmul.f32 %v4045, 324.0
      %v4078 = vmul.f32 %v4046, 324.0
      %v4079 = vmul.f32 %v4047, 324.0
      %v4080 = vmul.f32 %v4048, 324.0
      %v4081 = vmul.f32 %v4049, 324.0
      %v4082 = vmul.f32 %v4050, 324.0
      %v4083 = vmul.f32 %v4051, 324.0
      %v4084 = vmul.f32 %v4052, 324.0
      %v4085 = vmul.f32 %v4053, 324.0
      %v4086 = vmul.f32 %v4054, 324.0
      %v4087 = vsub.f32 %v3927, %v4055
      %v4088 = vsub.f32 %v3928, %v4056
      %v4089 = vsub.f32 %v3929, %v4057
      %v4090 = vsub.f32 %v3930, %v4058
      %v4091 = vsub.f32 %v3931, %v4059
      %v4092 = vsub.f32 %v3932, %v4060
      %v4093 = vsub.f32 %v3933, %v4061
      %v4094 = vsub.f32 %v3934, %v4062
      %v4095 = vsub.f32 %v3935, %v4063
      %v4096 = vsub.f32 %v3936, %v4064
      %v4097 = vsub.f32 %v3937, %v4065
      %v4098 = vsub.f32 %v3938, %v4066
      %v4099 = vsub.f32 %v3939, %v4067
      %v4100 = vsub.f32 %v3940, %v4068
      %v4101 = vsub.f32 %v3941, %v4069
      %v4102 = vsub.f32 %v3942, %v4070
      %v4103 = vsub.f32 %v3943, %v4071
      %v4104 = vsub.f32 %v3944, %v4072
      %v4105 = vsub.f32 %v3945, %v4073
      %v4106 = vsub.f32 %v3946, %v4074
      %v4107 = vsub.f32 %v3947, %v4075
      %v4108 = vsub.f32 %v3948, %v4076
      %v4109 = vsub.f32 %v3949, %v4077
      %v4110 = vsub.f32 %v3950, %v4078
      %v4111 = vsub.f32 %v3951, %v4079
      %v4112 = vsub.f32 %v3952, %v4080
      %v4113 = vsub.f32 %v3953, %v4081
      %v4114 = vsub.f32 %v3954, %v4082
      %v4115 = vsub.f32 %v3955, %v4083
      %v4116 = vsub.f32 %v3956, %v4084
      %v4117 = vsub.f32 %v3957, %v4085
      %v4118 = vsub.f32 %v3958, %v4086
      %v4119 = vadd.f32 %v4087, 0.5
      %v4120 = vadd.f32 %v4088, 0.5
      %v4121 = vadd.f32 %v4089, 0.5
      %v4122 = vadd.f32 %v4090, 0.5
      %v4123 = vadd.f32 %v4091, 0.5
      %v4124 = vadd.f32 %v4092, 0.5
      %v4125 = vadd.f32 %v4093, 0.5
      %v4126 = vadd.f32 %v4094, 0.5
      %v4127 = vadd.f32 %v4095, 0.5
      %v4128 = vadd.f32 %v4096, 0.5
      %v4129 = vadd.f32 %v4097, 0.5
      %v4130 = vadd.f32 %v4098, 0.5
      %v4131 = vadd.f32 %v4099, 0.5
      %v4132 = vadd.f32 %v4100, 0.5
      %v4133 = vadd.f32 %v4101, 0.5
      %v4134 = vadd.f32 %v4102, 0.5
      %v4135 = vadd.f32 %v4103, 0.5
      %v4136 = vadd.f32 %v4104, 0.5
      %v4137 = vadd.f32 %v4105, 0.5
      %v4138 = vadd.f32 %v4106, 0.5
      %v4139 = vadd.f32 %v4107, 0.5
      %v4140 = vadd.f32 %v4108, 0.5
      %v4141 = vadd.f32 %v4109, 0.5
      %v4142 = vadd.f32 %v4110, 0.5
      %v4143 = vadd.f32 %v4111, 0.5
      %v4144 = vadd.f32 %v4112, 0.5
      %v4145 = vadd.f32 %v4113, 0.5
      %v4146 = vadd.f32 %v4114, 0.5
      %v4147 = vadd.f32 %v4115, 0.5
      %v4148 = vadd.f32 %v4116, 0.5
      %v4149 = vadd.f32 %v4117, 0.5
      %v4150 = vadd.f32 %v4118, 0.5
      %v4151 = vmul.f32 %v4119, 0.055555556
      %v4152 = vmul.f32 %v4120, 0.055555556
      %v4153 = vmul.f32 %v4121, 0.055555556
      %v4154 = vmul.f32 %v4122, 0.055555556
      %v4155 = vmul.f32 %v4123, 0.055555556
      %v4156 = vmul.f32 %v4124, 0.055555556
      %v4157 = vmul.f32 %v4125, 0.055555556
      %v4158 = vmul.f32 %v4126, 0.055555556
      %v4159 = vmul.f32 %v4127, 0.055555556
      %v4160 = vmul.f32 %v4128, 0.055555556
      %v4161 = vmul.f32 %v4129, 0.055555556
      %v4162 = vmul.f32 %v4130, 0.055555556
      %v4163 = vmul.f32 %v4131, 0.055555556
      %v4164 = vmul.f32 %v4132, 0.055555556
      %v4165 = vmul.f32 %v4133, 0.055555556
      %v4166 = vmul.f32 %v4134, 0.055555556
      %v4167 = vmul.f32 %v4135, 0.055555556
      %v4168 = vmul.f32 %v4136, 0.055555556
      %v4169 = vmul.f32 %v4137, 0.055555556
      %v4170 = vmul.f32 %v4138, 0.055555556
      %v4171 = vmul.f32 %v4139, 0.055555556
      %v4172 = vmul.f32 %v4140, 0.055555556
      %v4173 = vmul.f32 %v4141, 0.055555556
      %v4174 = vmul.f32 %v4142, 0.055555556
      %v4175 = vmul.f32 %v4143, 0.055555556
      %v4176 = vmul.f32 %v4144, 0.055555556
      %v4177 = vmul.f32 %v4145, 0.055555556
      %v4178 = vmul.f32 %v4146, 0.055555556
      %v4179 = vmul.f32 %v4147, 0.055555556
      %v4180 = vmul.f32 %v4148, 0.055555556
      %v4181 = vmul.f32 %v4149, 0.055555556
      %v4182 = vmul.f32 %v4150, 0.055555556
      %v4183 = vfloor.f32 %v4151
      %v4184 = vfloor.f32 %v4152
      %v4185 = vfloor.f32 %v4153
      %v4186 = vfloor.f32 %v4154
      %v4187 = vfloor.f32 %v4155
      %v4188 = vfloor.f32 %v4156
      %v4189 = vfloor.f32 %v4157
      %v4190 = vfloor.f32 %v4158
      %v4191 = vfloor.f32 %v4159
      %v4192 = vfloor.f32 %v4160
      %v4193 = vfloor.f32 %v4161
      %v4194 = vfloor.f32 %v4162
      %v4195 = vfloor.f32 %v4163
      %v4196 = vfloor.f32 %v4164
      %v4197 = vfloor.f32 %v4165
      %v4198 = vfloor.f32 %v4166
      %v4199 = vfloor.f32 %v4167
      %v4200 = vfloor.f32 %v4168
      %v4201 = vfloor.f32 %v4169
      %v4202 = vfloor.f32 %v4170
      %v4203 = vfloor.f32 %v4171
      %v4204 = vfloor.f32 %v4172
      %v4205 = vfloor.f32 %v4173
      %v4206 = vfloor.f32 %v4174
      %v4207 = vfloor.f32 %v4175
      %v4208 = vfloor.f32 %v4176
      %v4209 = vfloor.f32 %v4177
      %v4210 = vfloor.f32 %v4178
      %v4211 = vfloor.f32 %v4179
      %v4212 = vfloor.f32 %v4180
      %v4213 = vfloor.f32 %v4181
      %v4214 = vfloor.f32 %v4182
      %v4215 = vmul.f32 %v4183, 18.0
      %v4216 = vmul.f32 %v4184, 18.0
      %v4217 = vmul.f32 %v4185, 18.0
      %v4218 = vmul.f32 %v4186, 18.0
      %v4219 = vmul.f32 %v4187, 18.0
      %v4220 = vmul.f32 %v4188, 18.0
      %v4221 = vmul.f32 %v4189, 18.0
      %v4222 = vmul.f32 %v4190, 18.0
      %v4223 = vmul.f32 %v4191, 18.0
      %v4224 = vmul.f32 %v4192, 18.0
      %v4225 = vmul.f32 %v4193, 18.0
      %v4226 = vmul.f32 %v4194, 18.0
      %v4227 = vmul.f32 %v4195, 18.0
      %v4228 = vmul.f32 %v4196, 18.0
      %v4229 = vmul.f32 %v4197, 18.0
      %v4230 = vmul.f32 %v4198, 18.0
      %v4231 = vmul.f32 %v4199, 18.0
      %v4232 = vmul.f32 %v4200, 18.0
      %v4233 = vmul.f32 %v4201, 18.0
      %v4234 = vmul.f32 %v4202, 18.0
      %v4235 = vmul.f32 %v4203, 18.0
      %v4236 = vmul.f32 %v4204, 18.0
      %v4237 = vmul.f32 %v4205, 18.0
      %v4238 = vmul.f32 %v4206, 18.0
      %v4239 = vmul.f32 %v4207, 18.0
      %v4240 = vmul.f32 %v4208, 18.0
      %v4241 = vmul.f32 %v4209, 18.0
      %v4242 = vmul.f32 %v4210, 18.0
      %v4243 = vmul.f32 %v4211, 18.0
      %v4244 = vmul.f32 %v4212, 18.0
      %v4245 = vmul.f32 %v4213, 18.0
      %v4246 = vmul.f32 %v4214, 18.0
      %v4247 = vsub.f32 %v4087, %v4215
      %v4248 = vsub.f32 %v4088, %v4216
      %v4249 = vsub.f32 %v4089, %v4217
      %v4250 = vsub.f32 %v4090, %v4218
      %v4251 = vsub.f32 %v4091, %v4219
      %v4252 = vsub.f32 %v4092, %v4220
      %v4253 = vsub.f32 %v4093, %v4221
      %v4254 = vsub.f32 %v4094, %v4222
      %v4255 = vsub.f32 %v4095, %v4223
      %v4256 = vsub.f32 %v4096, %v4224
      %v4257 = vsub.f32 %v4097, %v4225
      %v4258 = vsub.f32 %v4098, %v4226
      %v4259 = vsub.f32 %v4099, %v4227
      %v4260 = vsub.f32 %v4100, %v4228
      %v4261 = vsub.f32 %v4101, %v4229
      %v4262 = vsub.f32 %v4102, %v4230
      %v4263 = vsub.f32 %v4103, %v4231
      %v4264 = vsub.f32 %v4104, %v4232
      %v4265 = vsub.f32 %v4105, %v4233
      %v4266 = vsub.f32 %v4106, %v4234
      %v4267 = vsub.f32 %v4107, %v4235
      %v4268 = vsub.f32 %v4108, %v4236
      %v4269 = vsub.f32 %v4109, %v4237
      %v4270 = vsub.f32 %v4110, %v4238
      %v4271 = vsub.f32 %v4111, %v4239
      %v4272 = vsub.f32 %v4112, %v4240
      %v4273 = vsub.f32 %v4113, %v4241
      %v4274 = vsub.f32 %v4114, %v4242
      %v4275 = vsub.f32 %v4115, %v4243
      %v4276 = vsub.f32 %v4116, %v4244
      %v4277 = vsub.f32 %v4117, %v4245
      %v4278 = vsub.f32 %v4118, %v4246
      %vm4279 = vcmp.lt.f32.partialorder %v3927, 648.0
      %vm4280 = vcmp.lt.f32.partialorder %v3928, 648.0
      %vm4281 = vcmp.lt.f32.partialorder %v3929, 648.0
      %vm4282 = vcmp.lt.f32.partialorder %v3930, 648.0
      %vm4283 = vcmp.lt.f32.partialorder %v3931, 648.0
      %vm4284 = vcmp.lt.f32.partialorder %v3932, 648.0
      %vm4285 = vcmp.lt.f32.partialorder %v3933, 648.0
      %vm4286 = vcmp.lt.f32.partialorder %v3934, 648.0
      %vm4287 = vcmp.lt.f32.partialorder %v3935, 648.0
      %vm4288 = vcmp.lt.f32.partialorder %v3936, 648.0
      %vm4289 = vcmp.lt.f32.partialorder %v3937, 648.0
      %vm4290 = vcmp.lt.f32.partialorder %v3938, 648.0
      %vm4291 = vcmp.lt.f32.partialorder %v3939, 648.0
      %vm4292 = vcmp.lt.f32.partialorder %v3940, 648.0
      %vm4293 = vcmp.lt.f32.partialorder %v3941, 648.0
      %vm4294 = vcmp.lt.f32.partialorder %v3942, 648.0
      %vm4295 = vcmp.lt.f32.partialorder %v3943, 648.0
      %vm4296 = vcmp.lt.f32.partialorder %v3944, 648.0
      %vm4297 = vcmp.lt.f32.partialorder %v3945, 648.0
      %vm4298 = vcmp.lt.f32.partialorder %v3946, 648.0
      %vm4299 = vcmp.lt.f32.partialorder %v3947, 648.0
      %vm4300 = vcmp.lt.f32.partialorder %v3948, 648.0
      %vm4301 = vcmp.lt.f32.partialorder %v3949, 648.0
      %vm4302 = vcmp.lt.f32.partialorder %v3950, 648.0
      %vm4303 = vcmp.lt.f32.partialorder %v3951, 648.0
      %vm4304 = vcmp.lt.f32.partialorder %v3952, 648.0
      %vm4305 = vcmp.lt.f32.partialorder %v3953, 648.0
      %vm4306 = vcmp.lt.f32.partialorder %v3954, 648.0
      %vm4307 = vcmp.lt.f32.partialorder %v3955, 648.0
      %vm4308 = vcmp.lt.f32.partialorder %v3956, 648.0
      %vm4309 = vcmp.lt.f32.partialorder %v3957, 648.0
      %vm4310 = vcmp.lt.f32.partialorder %v3958, 648.0
      %vm4311 = vcmp.ge.f32.partialorder %v4183, 1.0
      %vm4312 = vcmp.ge.f32.partialorder %v4184, 1.0
      %vm4313 = vcmp.ge.f32.partialorder %v4185, 1.0
      %vm4314 = vcmp.ge.f32.partialorder %v4186, 1.0
      %vm4315 = vcmp.ge.f32.partialorder %v4187, 1.0
      %vm4316 = vcmp.ge.f32.partialorder %v4188, 1.0
      %vm4317 = vcmp.ge.f32.partialorder %v4189, 1.0
      %vm4318 = vcmp.ge.f32.partialorder %v4190, 1.0
      %vm4319 = vcmp.ge.f32.partialorder %v4191, 1.0
      %vm4320 = vcmp.ge.f32.partialorder %v4192, 1.0
      %vm4321 = vcmp.ge.f32.partialorder %v4193, 1.0
      %vm4322 = vcmp.ge.f32.partialorder %v4194, 1.0
      %vm4323 = vcmp.ge.f32.partialorder %v4195, 1.0
      %vm4324 = vcmp.ge.f32.partialorder %v4196, 1.0
      %vm4325 = vcmp.ge.f32.partialorder %v4197, 1.0
      %vm4326 = vcmp.ge.f32.partialorder %v4198, 1.0
      %vm4327 = vcmp.ge.f32.partialorder %v4199, 1.0
      %vm4328 = vcmp.ge.f32.partialorder %v4200, 1.0
      %vm4329 = vcmp.ge.f32.partialorder %v4201, 1.0
      %vm4330 = vcmp.ge.f32.partialorder %v4202, 1.0
      %vm4331 = vcmp.ge.f32.partialorder %v4203, 1.0
      %vm4332 = vcmp.ge.f32.partialorder %v4204, 1.0
      %vm4333 = vcmp.ge.f32.partialorder %v4205, 1.0
      %vm4334 = vcmp.ge.f32.partialorder %v4206, 1.0
      %vm4335 = vcmp.ge.f32.partialorder %v4207, 1.0
      %vm4336 = vcmp.ge.f32.partialorder %v4208, 1.0
      %vm4337 = vcmp.ge.f32.partialorder %v4209, 1.0
      %vm4338 = vcmp.ge.f32.partialorder %v4210, 1.0
      %vm4339 = vcmp.ge.f32.partialorder %v4211, 1.0
      %vm4340 = vcmp.ge.f32.partialorder %v4212, 1.0
      %vm4341 = vcmp.ge.f32.partialorder %v4213, 1.0
      %vm4342 = vcmp.ge.f32.partialorder %v4214, 1.0
      %vm4343 = vmand %vm4279, %vm4311
      %vm4344 = vmand %vm4280, %vm4312
      %vm4345 = vmand %vm4281, %vm4313
      %vm4346 = vmand %vm4282, %vm4314
      %vm4347 = vmand %vm4283, %vm4315
      %vm4348 = vmand %vm4284, %vm4316
      %vm4349 = vmand %vm4285, %vm4317
      %vm4350 = vmand %vm4286, %vm4318
      %vm4351 = vmand %vm4287, %vm4319
      %vm4352 = vmand %vm4288, %vm4320
      %vm4353 = vmand %vm4289, %vm4321
      %vm4354 = vmand %vm4290, %vm4322
      %vm4355 = vmand %vm4291, %vm4323
      %vm4356 = vmand %vm4292, %vm4324
      %vm4357 = vmand %vm4293, %vm4325
      %vm4358 = vmand %vm4294, %vm4326
      %vm4359 = vmand %vm4295, %vm4327
      %vm4360 = vmand %vm4296, %vm4328
      %vm4361 = vmand %vm4297, %vm4329
      %vm4362 = vmand %vm4298, %vm4330
      %vm4363 = vmand %vm4299, %vm4331
      %vm4364 = vmand %vm4300, %vm4332
      %vm4365 = vmand %vm4301, %vm4333
      %vm4366 = vmand %vm4302, %vm4334
      %vm4367 = vmand %vm4303, %vm4335
      %vm4368 = vmand %vm4304, %vm4336
      %vm4369 = vmand %vm4305, %vm4337
      %vm4370 = vmand %vm4306, %vm4338
      %vm4371 = vmand %vm4307, %vm4339
      %vm4372 = vmand %vm4308, %vm4340
      %vm4373 = vmand %vm4309, %vm4341
      %vm4374 = vmand %vm4310, %vm4342
      %vm4375 = vcmp.le.f32.partialorder %v4183, 16.0
      %vm4376 = vcmp.le.f32.partialorder %v4184, 16.0
      %vm4377 = vcmp.le.f32.partialorder %v4185, 16.0
      %vm4378 = vcmp.le.f32.partialorder %v4186, 16.0
      %vm4379 = vcmp.le.f32.partialorder %v4187, 16.0
      %vm4380 = vcmp.le.f32.partialorder %v4188, 16.0
      %vm4381 = vcmp.le.f32.partialorder %v4189, 16.0
      %vm4382 = vcmp.le.f32.partialorder %v4190, 16.0
      %vm4383 = vcmp.le.f32.partialorder %v4191, 16.0
      %vm4384 = vcmp.le.f32.partialorder %v4192, 16.0
      %vm4385 = vcmp.le.f32.partialorder %v4193, 16.0
      %vm4386 = vcmp.le.f32.partialorder %v4194, 16.0
      %vm4387 = vcmp.le.f32.partialorder %v4195, 16.0
      %vm4388 = vcmp.le.f32.partialorder %v4196, 16.0
      %vm4389 = vcmp.le.f32.partialorder %v4197, 16.0
      %vm4390 = vcmp.le.f32.partialorder %v4198, 16.0
      %vm4391 = vcmp.le.f32.partialorder %v4199, 16.0
      %vm4392 = vcmp.le.f32.partialorder %v4200, 16.0
      %vm4393 = vcmp.le.f32.partialorder %v4201, 16.0
      %vm4394 = vcmp.le.f32.partialorder %v4202, 16.0
      %vm4395 = vcmp.le.f32.partialorder %v4203, 16.0
      %vm4396 = vcmp.le.f32.partialorder %v4204, 16.0
      %vm4397 = vcmp.le.f32.partialorder %v4205, 16.0
      %vm4398 = vcmp.le.f32.partialorder %v4206, 16.0
      %vm4399 = vcmp.le.f32.partialorder %v4207, 16.0
      %vm4400 = vcmp.le.f32.partialorder %v4208, 16.0
      %vm4401 = vcmp.le.f32.partialorder %v4209, 16.0
      %vm4402 = vcmp.le.f32.partialorder %v4210, 16.0
      %vm4403 = vcmp.le.f32.partialorder %v4211, 16.0
      %vm4404 = vcmp.le.f32.partialorder %v4212, 16.0
      %vm4405 = vcmp.le.f32.partialorder %v4213, 16.0
      %vm4406 = vcmp.le.f32.partialorder %v4214, 16.0
      %vm4407 = vmand %vm4343, %vm4375
      %vm4408 = vmand %vm4344, %vm4376
      %vm4409 = vmand %vm4345, %vm4377
      %vm4410 = vmand %vm4346, %vm4378
      %vm4411 = vmand %vm4347, %vm4379
      %vm4412 = vmand %vm4348, %vm4380
      %vm4413 = vmand %vm4349, %vm4381
      %vm4414 = vmand %vm4350, %vm4382
      %vm4415 = vmand %vm4351, %vm4383
      %vm4416 = vmand %vm4352, %vm4384
      %vm4417 = vmand %vm4353, %vm4385
      %vm4418 = vmand %vm4354, %vm4386
      %vm4419 = vmand %vm4355, %vm4387
      %vm4420 = vmand %vm4356, %vm4388
      %vm4421 = vmand %vm4357, %vm4389
      %vm4422 = vmand %vm4358, %vm4390
      %vm4423 = vmand %vm4359, %vm4391
      %vm4424 = vmand %vm4360, %vm4392
      %vm4425 = vmand %vm4361, %vm4393
      %vm4426 = vmand %vm4362, %vm4394
      %vm4427 = vmand %vm4363, %vm4395
      %vm4428 = vmand %vm4364, %vm4396
      %vm4429 = vmand %vm4365, %vm4397
      %vm4430 = vmand %vm4366, %vm4398
      %vm4431 = vmand %vm4367, %vm4399
      %vm4432 = vmand %vm4368, %vm4400
      %vm4433 = vmand %vm4369, %vm4401
      %vm4434 = vmand %vm4370, %vm4402
      %vm4435 = vmand %vm4371, %vm4403
      %vm4436 = vmand %vm4372, %vm4404
      %vm4437 = vmand %vm4373, %vm4405
      %vm4438 = vmand %vm4374, %vm4406
      %vm4439 = vcmp.ge.f32.partialorder %v4247, 1.0
      %vm4440 = vcmp.ge.f32.partialorder %v4248, 1.0
      %vm4441 = vcmp.ge.f32.partialorder %v4249, 1.0
      %vm4442 = vcmp.ge.f32.partialorder %v4250, 1.0
      %vm4443 = vcmp.ge.f32.partialorder %v4251, 1.0
      %vm4444 = vcmp.ge.f32.partialorder %v4252, 1.0
      %vm4445 = vcmp.ge.f32.partialorder %v4253, 1.0
      %vm4446 = vcmp.ge.f32.partialorder %v4254, 1.0
      %vm4447 = vcmp.ge.f32.partialorder %v4255, 1.0
      %vm4448 = vcmp.ge.f32.partialorder %v4256, 1.0
      %vm4449 = vcmp.ge.f32.partialorder %v4257, 1.0
      %vm4450 = vcmp.ge.f32.partialorder %v4258, 1.0
      %vm4451 = vcmp.ge.f32.partialorder %v4259, 1.0
      %vm4452 = vcmp.ge.f32.partialorder %v4260, 1.0
      %vm4453 = vcmp.ge.f32.partialorder %v4261, 1.0
      %vm4454 = vcmp.ge.f32.partialorder %v4262, 1.0
      %vm4455 = vcmp.ge.f32.partialorder %v4263, 1.0
      %vm4456 = vcmp.ge.f32.partialorder %v4264, 1.0
      %vm4457 = vcmp.ge.f32.partialorder %v4265, 1.0
      %vm4458 = vcmp.ge.f32.partialorder %v4266, 1.0
      %vm4459 = vcmp.ge.f32.partialorder %v4267, 1.0
      %vm4460 = vcmp.ge.f32.partialorder %v4268, 1.0
      %vm4461 = vcmp.ge.f32.partialorder %v4269, 1.0
      %vm4462 = vcmp.ge.f32.partialorder %v4270, 1.0
      %vm4463 = vcmp.ge.f32.partialorder %v4271, 1.0
      %vm4464 = vcmp.ge.f32.partialorder %v4272, 1.0
      %vm4465 = vcmp.ge.f32.partialorder %v4273, 1.0
      %vm4466 = vcmp.ge.f32.partialorder %v4274, 1.0
      %vm4467 = vcmp.ge.f32.partialorder %v4275, 1.0
      %vm4468 = vcmp.ge.f32.partialorder %v4276, 1.0
      %vm4469 = vcmp.ge.f32.partialorder %v4277, 1.0
      %vm4470 = vcmp.ge.f32.partialorder %v4278, 1.0
      %vm4471 = vmand %vm4407, %vm4439
      %vm4472 = vmand %vm4408, %vm4440
      %vm4473 = vmand %vm4409, %vm4441
      %vm4474 = vmand %vm4410, %vm4442
      %vm4475 = vmand %vm4411, %vm4443
      %vm4476 = vmand %vm4412, %vm4444
      %vm4477 = vmand %vm4413, %vm4445
      %vm4478 = vmand %vm4414, %vm4446
      %vm4479 = vmand %vm4415, %vm4447
      %vm4480 = vmand %vm4416, %vm4448
      %vm4481 = vmand %vm4417, %vm4449
      %vm4482 = vmand %vm4418, %vm4450
      %vm4483 = vmand %vm4419, %vm4451
      %vm4484 = vmand %vm4420, %vm4452
      %vm4485 = vmand %vm4421, %vm4453
      %vm4486 = vmand %vm4422, %vm4454
      %vm4487 = vmand %vm4423, %vm4455
      %vm4488 = vmand %vm4424, %vm4456
      %vm4489 = vmand %vm4425, %vm4457
      %vm4490 = vmand %vm4426, %vm4458
      %vm4491 = vmand %vm4427, %vm4459
      %vm4492 = vmand %vm4428, %vm4460
      %vm4493 = vmand %vm4429, %vm4461
      %vm4494 = vmand %vm4430, %vm4462
      %vm4495 = vmand %vm4431, %vm4463
      %vm4496 = vmand %vm4432, %vm4464
      %vm4497 = vmand %vm4433, %vm4465
      %vm4498 = vmand %vm4434, %vm4466
      %vm4499 = vmand %vm4435, %vm4467
      %vm4500 = vmand %vm4436, %vm4468
      %vm4501 = vmand %vm4437, %vm4469
      %vm4502 = vmand %vm4438, %vm4470
      %vm4503 = vcmp.le.f32.partialorder %v4247, 16.0
      %vm4504 = vcmp.le.f32.partialorder %v4248, 16.0
      %vm4505 = vcmp.le.f32.partialorder %v4249, 16.0
      %vm4506 = vcmp.le.f32.partialorder %v4250, 16.0
      %vm4507 = vcmp.le.f32.partialorder %v4251, 16.0
      %vm4508 = vcmp.le.f32.partialorder %v4252, 16.0
      %vm4509 = vcmp.le.f32.partialorder %v4253, 16.0
      %vm4510 = vcmp.le.f32.partialorder %v4254, 16.0
      %vm4511 = vcmp.le.f32.partialorder %v4255, 16.0
      %vm4512 = vcmp.le.f32.partialorder %v4256, 16.0
      %vm4513 = vcmp.le.f32.partialorder %v4257, 16.0
      %vm4514 = vcmp.le.f32.partialorder %v4258, 16.0
      %vm4515 = vcmp.le.f32.partialorder %v4259, 16.0
      %vm4516 = vcmp.le.f32.partialorder %v4260, 16.0
      %vm4517 = vcmp.le.f32.partialorder %v4261, 16.0
      %vm4518 = vcmp.le.f32.partialorder %v4262, 16.0
      %vm4519 = vcmp.le.f32.partialorder %v4263, 16.0
      %vm4520 = vcmp.le.f32.partialorder %v4264, 16.0
      %vm4521 = vcmp.le.f32.partialorder %v4265, 16.0
      %vm4522 = vcmp.le.f32.partialorder %v4266, 16.0
      %vm4523 = vcmp.le.f32.partialorder %v4267, 16.0
      %vm4524 = vcmp.le.f32.partialorder %v4268, 16.0
      %vm4525 = vcmp.le.f32.partialorder %v4269, 16.0
      %vm4526 = vcmp.le.f32.partialorder %v4270, 16.0
      %vm4527 = vcmp.le.f32.partialorder %v4271, 16.0
      %vm4528 = vcmp.le.f32.partialorder %v4272, 16.0
      %vm4529 = vcmp.le.f32.partialorder %v4273, 16.0
      %vm4530 = vcmp.le.f32.partialorder %v4274, 16.0
      %vm4531 = vcmp.le.f32.partialorder %v4275, 16.0
      %vm4532 = vcmp.le.f32.partialorder %v4276, 16.0
      %vm4533 = vcmp.le.f32.partialorder %v4277, 16.0
      %vm4534 = vcmp.le.f32.partialorder %v4278, 16.0
      %vm4535 = vmand %vm4471, %vm4503
      %vm4536 = vmand %vm4472, %vm4504
      %vm4537 = vmand %vm4473, %vm4505
      %vm4538 = vmand %vm4474, %vm4506
      %vm4539 = vmand %vm4475, %vm4507
      %vm4540 = vmand %vm4476, %vm4508
      %vm4541 = vmand %vm4477, %vm4509
      %vm4542 = vmand %vm4478, %vm4510
      %vm4543 = vmand %vm4479, %vm4511
      %vm4544 = vmand %vm4480, %vm4512
      %vm4545 = vmand %vm4481, %vm4513
      %vm4546 = vmand %vm4482, %vm4514
      %vm4547 = vmand %vm4483, %vm4515
      %vm4548 = vmand %vm4484, %vm4516
      %vm4549 = vmand %vm4485, %vm4517
      %vm4550 = vmand %vm4486, %vm4518
      %vm4551 = vmand %vm4487, %vm4519
      %vm4552 = vmand %vm4488, %vm4520
      %vm4553 = vmand %vm4489, %vm4521
      %vm4554 = vmand %vm4490, %vm4522
      %vm4555 = vmand %vm4491, %vm4523
      %vm4556 = vmand %vm4492, %vm4524
      %vm4557 = vmand %vm4493, %vm4525
      %vm4558 = vmand %vm4494, %vm4526
      %vm4559 = vmand %vm4495, %vm4527
      %vm4560 = vmand %vm4496, %vm4528
      %vm4561 = vmand %vm4497, %vm4529
      %vm4562 = vmand %vm4498, %vm4530
      %vm4563 = vmand %vm4499, %vm4531
      %vm4564 = vmand %vm4500, %vm4532
      %vm4565 = vmand %vm4501, %vm4533
      %vm4566 = vmand %vm4502, %vm4534
      %v4567 = vsel %vm4535, 1.0, 0.0
      %v4568 = vsel %vm4536, 1.0, 0.0
      %v4569 = vsel %vm4537, 1.0, 0.0
      %v4570 = vsel %vm4538, 1.0, 0.0
      %v4571 = vsel %vm4539, 1.0, 0.0
      %v4572 = vsel %vm4540, 1.0, 0.0
      %v4573 = vsel %vm4541, 1.0, 0.0
      %v4574 = vsel %vm4542, 1.0, 0.0
      %v4575 = vsel %vm4543, 1.0, 0.0
      %v4576 = vsel %vm4544, 1.0, 0.0
      %v4577 = vsel %vm4545, 1.0, 0.0
      %v4578 = vsel %vm4546, 1.0, 0.0
      %v4579 = vsel %vm4547, 1.0, 0.0
      %v4580 = vsel %vm4548, 1.0, 0.0
      %v4581 = vsel %vm4549, 1.0, 0.0
      %v4582 = vsel %vm4550, 1.0, 0.0
      %v4583 = vsel %vm4551, 1.0, 0.0
      %v4584 = vsel %vm4552, 1.0, 0.0
      %v4585 = vsel %vm4553, 1.0, 0.0
      %v4586 = vsel %vm4554, 1.0, 0.0
      %v4587 = vsel %vm4555, 1.0, 0.0
      %v4588 = vsel %vm4556, 1.0, 0.0
      %v4589 = vsel %vm4557, 1.0, 0.0
      %v4590 = vsel %vm4558, 1.0, 0.0
      %v4591 = vsel %vm4559, 1.0, 0.0
      %v4592 = vsel %vm4560, 1.0, 0.0
      %v4593 = vsel %vm4561, 1.0, 0.0
      %v4594 = vsel %vm4562, 1.0, 0.0
      %v4595 = vsel %vm4563, 1.0, 0.0
      %v4596 = vsel %vm4564, 1.0, 0.0
      %v4597 = vsel %vm4565, 1.0, 0.0
      %v4598 = vsel %vm4566, 1.0, 0.0
      %v4599 = vmul.f32 %v3829, %v4567
      %v4600 = vmul.f32 %v3830, %v4568
      %v4601 = vmul.f32 %v3831, %v4569
      %v4602 = vmul.f32 %v3832, %v4570
      %v4603 = vmul.f32 %v3833, %v4571
      %v4604 = vmul.f32 %v3834, %v4572
      %v4605 = vmul.f32 %v3835, %v4573
      %v4606 = vmul.f32 %v3836, %v4574
      %v4607 = vmul.f32 %v3837, %v4575
      %v4608 = vmul.f32 %v3838, %v4576
      %v4609 = vmul.f32 %v3839, %v4577
      %v4610 = vmul.f32 %v3840, %v4578
      %v4611 = vmul.f32 %v3841, %v4579
      %v4612 = vmul.f32 %v3842, %v4580
      %v4613 = vmul.f32 %v3843, %v4581
      %v4614 = vmul.f32 %v3844, %v4582
      %v4615 = vmul.f32 %v3845, %v4583
      %v4616 = vmul.f32 %v3846, %v4584
      %v4617 = vmul.f32 %v3847, %v4585
      %v4618 = vmul.f32 %v3848, %v4586
      %v4619 = vmul.f32 %v3849, %v4587
      %v4620 = vmul.f32 %v3850, %v4588
      %v4621 = vmul.f32 %v3851, %v4589
      %v4622 = vmul.f32 %v3852, %v4590
      %v4623 = vmul.f32 %v3853, %v4591
      %v4624 = vmul.f32 %v3854, %v4592
      %v4625 = vmul.f32 %v3855, %v4593
      %v4626 = vmul.f32 %v3856, %v4594
      %v4627 = vmul.f32 %v3857, %v4595
      %v4628 = vmul.f32 %v3858, %v4596
      %v4629 = vmul.f32 %v3859, %v4597
      %v4630 = vmul.f32 %v3860, %v4598
      %4631 = vst [vmem:[%s3720] sm:$0xff] %v4599
      %4632 = vst [vmem:[%s3720 + $0x8] sm:$0xff] %v4600
      %4633 = vst [vmem:[%s3720 + $0x10] sm:$0xff] %v4601
      %4634 = vst [vmem:[%s3720 + $0x18] sm:$0xff] %v4602
      %4635 = vst [vmem:[%s3720 + $0x20] sm:$0xff] %v4603
      %4636 = vst [vmem:[%s3720 + $0x28] sm:$0xff] %v4604
      %4637 = vst [vmem:[%s3720 + $0x30] sm:$0xff] %v4605
      %4638 = vst [vmem:[%s3720 + $0x38] sm:$0xff] %v4606
      %4639 = vst [vmem:[%s3720 + $0x40] sm:$0xff] %v4607
      %4640 = vst [vmem:[%s3720 + $0x48] sm:$0xff] %v4608
      %4641 = vst [vmem:[%s3720 + $0x50] sm:$0xff] %v4609
      %4642 = vst [vmem:[%s3720 + $0x58] sm:$0xff] %v4610
      %4643 = vst [vmem:[%s3720 + $0x60] sm:$0xff] %v4611
      %4644 = vst [vmem:[%s3720 + $0x68] sm:$0xff] %v4612
      %4645 = vst [vmem:[%s3720 + $0x70] sm:$0xff] %v4613
      %4646 = vst [vmem:[%s3720 + $0x78] sm:$0xff] %v4614
      %4647 = vst [vmem:[%s3720 + $0x80] sm:$0xff] %v4615
      %4648 = vst [vmem:[%s3720 + $0x88] sm:$0xff] %v4616
      %4649 = vst [vmem:[%s3720 + $0x90] sm:$0xff] %v4617
      %4650 = vst [vmem:[%s3720 + $0x98] sm:$0xff] %v4618
      %4651 = vst [vmem:[%s3720 + $0xa0] sm:$0xff] %v4619
      %4652 = vst [vmem:[%s3720 + $0xa8] sm:$0xff] %v4620
      %4653 = vst [vmem:[%s3720 + $0xb0] sm:$0xff] %v4621
      %4654 = vst [vmem:[%s3720 + $0xb8] sm:$0xff] %v4622
      %4655 = vst [vmem:[%s3720 + $0xc0] sm:$0xff] %v4623
      %4656 = vst [vmem:[%s3720 + $0xc8] sm:$0xff] %v4624
      %4657 = vst [vmem:[%s3720 + $0xd0] sm:$0xff] %v4625
      %4658 = vst [vmem:[%s3720 + $0xd8] sm:$0xff] %v4626
      %4659 = vst [vmem:[%s3720 + $0xe0] sm:$0xff] %v4627
      %4660 = vst [vmem:[%s3720 + $0xe8] sm:$0xff] %v4628
      %4661 = vst [vmem:[%s3720 + $0xf0] sm:$0xff] %v4629
      %4662 = vst [vmem:[%s3720 + $0xf8] sm:$0xff] %v4630
    $region53: #{tpu_custom_call.1} parent=1 // loop_footer
      %s3717 = sadd.s32 1, %s3713
    $region54: #{tpu_custom_call.1} parent=1 // loop_footer_branch
      %3712 = sbr.rel target = $region50
    $region55: #{tpu_custom_call.1} parent=1 // loop_exit
      _
    loop: start=0, step=1, limit=3
    $region56: #{tpu_custom_call.1} parent=1 // loop_pre_header
      _
    $region57: #{tpu_custom_call.1} parent=1 // loop_header
      %s4664 = sphi 0, %s4668
      %p4665 = scmp.ge.s32.totalorder %s4664, 3
      %v4669 = vphi 0.0, %v8219
      %v4670 = vphi 0.0, %v8289
    $region58: #{tpu_custom_call.1} parent=1 // loop_header_branch
      %4667 = sbr.rel (%p4665) target = $region62
    $region59: #{tpu_custom_call.1} parent=1 // loop_body
      %s4671 = smul.u32 %s4664, 256
      %s4672 = sadd.s32 %s4671, 5
      %s4673 = scalar_lea.vmem [#allocation2], %s4672
      %v4674 = vld [vmem:[%s4673] sm:$0xff]
      %v4675 = vld [vmem:[%s4673 + $0x8] sm:$0xff]
      %v4676 = vld [vmem:[%s4673 + $0x10] sm:$0xff]
      %v4677 = vld [vmem:[%s4673 + $0x18] sm:$0xff]
      %v4678 = vld [vmem:[%s4673 + $0x20] sm:$0xff]
      %v4679 = vld [vmem:[%s4673 + $0x28] sm:$0xff]
      %v4680 = vld [vmem:[%s4673 + $0x30] sm:$0xff]
      %v4681 = vld [vmem:[%s4673 + $0x38] sm:$0xff]
      %v4682 = vld [vmem:[%s4673 + $0x40] sm:$0xff]
      %v4683 = vld [vmem:[%s4673 + $0x48] sm:$0xff]
      %v4684 = vld [vmem:[%s4673 + $0x50] sm:$0xff]
      %v4685 = vld [vmem:[%s4673 + $0x58] sm:$0xff]
      %v4686 = vld [vmem:[%s4673 + $0x60] sm:$0xff]
      %v4687 = vld [vmem:[%s4673 + $0x68] sm:$0xff]
      %v4688 = vld [vmem:[%s4673 + $0x70] sm:$0xff]
      %v4689 = vld [vmem:[%s4673 + $0x78] sm:$0xff]
      %v4690 = vld [vmem:[%s4673 + $0x80] sm:$0xff]
      %v4691 = vld [vmem:[%s4673 + $0x88] sm:$0xff]
      %v4692 = vld [vmem:[%s4673 + $0x90] sm:$0xff]
      %v4693 = vld [vmem:[%s4673 + $0x98] sm:$0xff]
      %v4694 = vld [vmem:[%s4673 + $0xa0] sm:$0xff]
      %v4695 = vld [vmem:[%s4673 + $0xa8] sm:$0xff]
      %v4696 = vld [vmem:[%s4673 + $0xb0] sm:$0xff]
      %v4697 = vld [vmem:[%s4673 + $0xb8] sm:$0xff]
      %v4698 = vld [vmem:[%s4673 + $0xc0] sm:$0xff]
      %v4699 = vld [vmem:[%s4673 + $0xc8] sm:$0xff]
      %v4700 = vld [vmem:[%s4673 + $0xd0] sm:$0xff]
      %v4701 = vld [vmem:[%s4673 + $0xd8] sm:$0xff]
      %v4702 = vld [vmem:[%s4673 + $0xe0] sm:$0xff]
      %v4703 = vld [vmem:[%s4673 + $0xe8] sm:$0xff]
      %v4704 = vld [vmem:[%s4673 + $0xf0] sm:$0xff]
      %v4705 = vld [vmem:[%s4673 + $0xf8] sm:$0xff]
      %v4706 = vld [vmem:[#allocation8] sm:$0xff]
      %v4707 = vld [vmem:[#allocation8 + $0x8] sm:$0xff]
      %v4708 = vld [vmem:[#allocation8 + $0x10] sm:$0xff]
      %v4709 = vld [vmem:[#allocation8 + $0x18] sm:$0xff]
      %v4710 = vld [vmem:[#allocation8 + $0x20] sm:$0xff]
      %v4711 = vld [vmem:[#allocation8 + $0x28] sm:$0xff]
      %v4712 = vld [vmem:[#allocation8 + $0x30] sm:$0xff]
      %v4713 = vld [vmem:[#allocation8 + $0x38] sm:$0xff]
      %v4714 = vld [vmem:[#allocation8 + $0x40] sm:$0xff]
      %v4715 = vld [vmem:[#allocation8 + $0x48] sm:$0xff]
      %v4716 = vld [vmem:[#allocation8 + $0x50] sm:$0xff]
      %v4717 = vld [vmem:[#allocation8 + $0x58] sm:$0xff]
      %v4718 = vld [vmem:[#allocation8 + $0x60] sm:$0xff]
      %v4719 = vld [vmem:[#allocation8 + $0x68] sm:$0xff]
      %v4720 = vld [vmem:[#allocation8 + $0x70] sm:$0xff]
      %v4721 = vld [vmem:[#allocation8 + $0x78] sm:$0xff]
      %s4722 = sadd.s32 %s4671, 6
      %s4723 = scalar_lea.vmem [#allocation2], %s4722
      %v4724 = vld [vmem:[%s4723] sm:$0xff]
      %v4725 = vld [vmem:[%s4723 + $0x8] sm:$0xff]
      %v4726 = vld [vmem:[%s4723 + $0x10] sm:$0xff]
      %v4727 = vld [vmem:[%s4723 + $0x18] sm:$0xff]
      %v4728 = vld [vmem:[%s4723 + $0x20] sm:$0xff]
      %v4729 = vld [vmem:[%s4723 + $0x28] sm:$0xff]
      %v4730 = vld [vmem:[%s4723 + $0x30] sm:$0xff]
      %v4731 = vld [vmem:[%s4723 + $0x38] sm:$0xff]
      %v4732 = vld [vmem:[%s4723 + $0x40] sm:$0xff]
      %v4733 = vld [vmem:[%s4723 + $0x48] sm:$0xff]
      %v4734 = vld [vmem:[%s4723 + $0x50] sm:$0xff]
      %v4735 = vld [vmem:[%s4723 + $0x58] sm:$0xff]
      %v4736 = vld [vmem:[%s4723 + $0x60] sm:$0xff]
      %v4737 = vld [vmem:[%s4723 + $0x68] sm:$0xff]
      %v4738 = vld [vmem:[%s4723 + $0x70] sm:$0xff]
      %v4739 = vld [vmem:[%s4723 + $0x78] sm:$0xff]
      %v4740 = vld [vmem:[%s4723 + $0x80] sm:$0xff]
      %v4741 = vld [vmem:[%s4723 + $0x88] sm:$0xff]
      %v4742 = vld [vmem:[%s4723 + $0x90] sm:$0xff]
      %v4743 = vld [vmem:[%s4723 + $0x98] sm:$0xff]
      %v4744 = vld [vmem:[%s4723 + $0xa0] sm:$0xff]
      %v4745 = vld [vmem:[%s4723 + $0xa8] sm:$0xff]
      %v4746 = vld [vmem:[%s4723 + $0xb0] sm:$0xff]
      %v4747 = vld [vmem:[%s4723 + $0xb8] sm:$0xff]
      %v4748 = vld [vmem:[%s4723 + $0xc0] sm:$0xff]
      %v4749 = vld [vmem:[%s4723 + $0xc8] sm:$0xff]
      %v4750 = vld [vmem:[%s4723 + $0xd0] sm:$0xff]
      %v4751 = vld [vmem:[%s4723 + $0xd8] sm:$0xff]
      %v4752 = vld [vmem:[%s4723 + $0xe0] sm:$0xff]
      %v4753 = vld [vmem:[%s4723 + $0xe8] sm:$0xff]
      %v4754 = vld [vmem:[%s4723 + $0xf0] sm:$0xff]
      %v4755 = vld [vmem:[%s4723 + $0xf8] sm:$0xff]
      %s4756 = scalar_lea.vmem [#allocation8], 128
      %v4757 = vld [vmem:[%s4756] sm:$0xff]
      %v4758 = vld [vmem:[%s4756 + $0x8] sm:$0xff]
      %v4759 = vld [vmem:[%s4756 + $0x10] sm:$0xff]
      %v4760 = vld [vmem:[%s4756 + $0x18] sm:$0xff]
      %v4761 = vld [vmem:[%s4756 + $0x20] sm:$0xff]
      %v4762 = vld [vmem:[%s4756 + $0x28] sm:$0xff]
      %v4763 = vld [vmem:[%s4756 + $0x30] sm:$0xff]
      %v4764 = vld [vmem:[%s4756 + $0x38] sm:$0xff]
      %v4765 = vld [vmem:[%s4756 + $0x40] sm:$0xff]
      %v4766 = vld [vmem:[%s4756 + $0x48] sm:$0xff]
      %v4767 = vld [vmem:[%s4756 + $0x50] sm:$0xff]
      %v4768 = vld [vmem:[%s4756 + $0x58] sm:$0xff]
      %v4769 = vld [vmem:[%s4756 + $0x60] sm:$0xff]
      %v4770 = vld [vmem:[%s4756 + $0x68] sm:$0xff]
      %v4771 = vld [vmem:[%s4756 + $0x70] sm:$0xff]
      %v4772 = vld [vmem:[%s4756 + $0x78] sm:$0xff]
      %4773 = vmatprep.subr.mxu0 0.0
      %4774 = vmatpush1.msra.mxu0 %v4772
      %4775 = vmatprep.subr.mxu0 0.0
      %4776 = vmatpush1.msra.mxu0 %v4771
      %4777 = vmatprep.subr.mxu0 0.0
      %4778 = vmatpush1.msra.mxu0 %v4770
      %4779 = vmatprep.subr.mxu0 0.0
      %4780 = vmatpush1.msra.mxu0 %v4769
      %4781 = vmatprep.subr.mxu0 0.0
      %4782 = vmatpush1.msra.mxu0 %v4768
      %4783 = vmatprep.subr.mxu0 0.0
      %4784 = vmatpush1.msra.mxu0 %v4767
      %4785 = vmatprep.subr.mxu0 0.0
      %4786 = vmatpush1.msra.mxu0 %v4766
      %4787 = vmatprep.subr.mxu0 0.0
      %4788 = vmatpush1.msra.mxu0 %v4765
      %4789 = vmatprep.subr.mxu0 0.0
      %4790 = vmatpush1.msra.mxu0 %v4764
      %4791 = vmatprep.subr.mxu0 0.0
      %4792 = vmatpush1.msra.mxu0 %v4763
      %4793 = vmatprep.subr.mxu0 0.0
      %4794 = vmatpush1.msra.mxu0 %v4762
      %4795 = vmatprep.subr.mxu0 0.0
      %4796 = vmatpush1.msra.mxu0 %v4761
      %4797 = vmatprep.subr.mxu0 0.0
      %4798 = vmatpush1.msra.mxu0 %v4760
      %4799 = vmatprep.subr.mxu0 0.0
      %4800 = vmatpush1.msra.mxu0 %v4759
      %4801 = vmatprep.subr.mxu0 0.0
      %4802 = vmatpush1.msra.mxu0 %v4758
      %4803 = vmatprep.subr.mxu0 0.0
      %4804 = vmatpush1.msra.mxu0 %v4757
      %4805 = vmatprep.subr.mxu0 0.0
      %4806 = vmatpush2.msra.mxu0 0.0
      %4807 = vmatprep.subr.mxu0 0.0
      %4808 = vmatpush2.msra.mxu0 0.0
      %4809 = vmatprep.subr.mxu0 0.0
      %4810 = vmatpush2.msra.mxu0 0.0
      %4811 = vmatprep.subr.mxu0 0.0
      %4812 = vmatpush2.msra.mxu0 0.0
      %4813 = vmatprep.subr.mxu0 0.0
      %4814 = vmatpush2.msra.mxu0 0.0
      %4815 = vmatprep.subr.mxu0 0.0
      %4816 = vmatpush2.msra.mxu0 0.0
      %4817 = vmatprep.subr.mxu0 0.0
      %4818 = vmatpush2.msra.mxu0 0.0
      %4819 = vmatprep.subr.mxu0 0.0
      %4820 = vmatpush2.msra.mxu0 0.0
      %4821 = vmatprep.subr.mxu0 0.0
      %4822 = vmatpush2.msra.mxu0 0.0
      %4823 = vmatprep.subr.mxu0 0.0
      %4824 = vmatpush2.msra.mxu0 0.0
      %4825 = vmatprep.subr.mxu0 0.0
      %4826 = vmatpush2.msra.mxu0 0.0
      %4827 = vmatprep.subr.mxu0 0.0
      %4828 = vmatpush2.msra.mxu0 0.0
      %4829 = vmatprep.subr.mxu0 0.0
      %4830 = vmatpush2.msra.mxu0 0.0
      %4831 = vmatprep.subr.mxu0 0.0
      %4832 = vmatpush2.msra.mxu0 0.0
      %4833 = vmatprep.subr.mxu0 0.0
      %4834 = vmatpush2.msra.mxu0 0.0
      %4835 = vmatprep.subr.mxu0 0.0
      %4836 = vmatpush2.msra.mxu0 0.0
      %4837 = vmatprep.mubr.f32.mxu0 0.0
      %4838 = vmatmul.mubr.f32.gmra.mxu0 %v4724
      %v4839 = vpop.f32.mrf.mxu0
      %v4840 = vadd.f32 0.0, %v4839
      %v4841 = vpop.f32.mrf.mxu0
      %4842 = vmatprep.mubr.f32.mxu0 0.0
      %4843 = vmatmul.mubr.f32.gmra.mxu0 %v4725
      %v4844 = vpop.f32.mrf.mxu0
      %v4845 = vadd.f32 0.0, %v4844
      %v4846 = vpop.f32.mrf.mxu0
      %4847 = vmatprep.mubr.f32.mxu0 0.0
      %4848 = vmatmul.mubr.f32.gmra.mxu0 %v4726
      %v4849 = vpop.f32.mrf.mxu0
      %v4850 = vadd.f32 0.0, %v4849
      %v4851 = vpop.f32.mrf.mxu0
      %4852 = vmatprep.mubr.f32.mxu0 0.0
      %4853 = vmatmul.mubr.f32.gmra.mxu0 %v4727
      %v4854 = vpop.f32.mrf.mxu0
      %v4855 = vadd.f32 0.0, %v4854
      %v4856 = vpop.f32.mrf.mxu0
      %4857 = vmatprep.mubr.f32.mxu0 0.0
      %4858 = vmatmul.mubr.f32.gmra.mxu0 %v4728
      %v4859 = vpop.f32.mrf.mxu0
      %v4860 = vadd.f32 0.0, %v4859
      %v4861 = vpop.f32.mrf.mxu0
      %4862 = vmatprep.mubr.f32.mxu0 0.0
      %4863 = vmatmul.mubr.f32.gmra.mxu0 %v4729
      %v4864 = vpop.f32.mrf.mxu0
      %v4865 = vadd.f32 0.0, %v4864
      %v4866 = vpop.f32.mrf.mxu0
      %4867 = vmatprep.mubr.f32.mxu0 0.0
      %4868 = vmatmul.mubr.f32.gmra.mxu0 %v4730
      %v4869 = vpop.f32.mrf.mxu0
      %v4870 = vadd.f32 0.0, %v4869
      %v4871 = vpop.f32.mrf.mxu0
      %4872 = vmatprep.mubr.f32.mxu0 0.0
      %4873 = vmatmul.mubr.f32.gmra.mxu0 %v4731
      %v4874 = vpop.f32.mrf.mxu0
      %v4875 = vadd.f32 0.0, %v4874
      %v4876 = vpop.f32.mrf.mxu0
      %4877 = vmatprep.mubr.f32.mxu0 0.0
      %4878 = vmatmul.mubr.f32.gmra.mxu0 %v4732
      %v4879 = vpop.f32.mrf.mxu0
      %v4880 = vadd.f32 0.0, %v4879
      %v4881 = vpop.f32.mrf.mxu0
      %4882 = vmatprep.mubr.f32.mxu0 0.0
      %4883 = vmatmul.mubr.f32.gmra.mxu0 %v4733
      %v4884 = vpop.f32.mrf.mxu0
      %v4885 = vadd.f32 0.0, %v4884
      %v4886 = vpop.f32.mrf.mxu0
      %4887 = vmatprep.mubr.f32.mxu0 0.0
      %4888 = vmatmul.mubr.f32.gmra.mxu0 %v4734
      %v4889 = vpop.f32.mrf.mxu0
      %v4890 = vadd.f32 0.0, %v4889
      %v4891 = vpop.f32.mrf.mxu0
      %4892 = vmatprep.mubr.f32.mxu0 0.0
      %4893 = vmatmul.mubr.f32.gmra.mxu0 %v4735
      %v4894 = vpop.f32.mrf.mxu0
      %v4895 = vadd.f32 0.0, %v4894
      %v4896 = vpop.f32.mrf.mxu0
      %4897 = vmatprep.mubr.f32.mxu0 0.0
      %4898 = vmatmul.mubr.f32.gmra.mxu0 %v4736
      %v4899 = vpop.f32.mrf.mxu0
      %v4900 = vadd.f32 0.0, %v4899
      %v4901 = vpop.f32.mrf.mxu0
      %4902 = vmatprep.mubr.f32.mxu0 0.0
      %4903 = vmatmul.mubr.f32.gmra.mxu0 %v4737
      %v4904 = vpop.f32.mrf.mxu0
      %v4905 = vadd.f32 0.0, %v4904
      %v4906 = vpop.f32.mrf.mxu0
      %4907 = vmatprep.mubr.f32.mxu0 0.0
      %4908 = vmatmul.mubr.f32.gmra.mxu0 %v4738
      %v4909 = vpop.f32.mrf.mxu0
      %v4910 = vadd.f32 0.0, %v4909
      %v4911 = vpop.f32.mrf.mxu0
      %4912 = vmatprep.mubr.f32.mxu0 0.0
      %4913 = vmatmul.mubr.f32.gmra.mxu0 %v4739
      %v4914 = vpop.f32.mrf.mxu0
      %v4915 = vadd.f32 0.0, %v4914
      %v4916 = vpop.f32.mrf.mxu0
      %4917 = vmatprep.mubr.f32.mxu0 0.0
      %4918 = vmatmul.mubr.f32.gmra.mxu0 %v4740
      %v4919 = vpop.f32.mrf.mxu0
      %v4920 = vadd.f32 0.0, %v4919
      %v4921 = vpop.f32.mrf.mxu0
      %4922 = vmatprep.mubr.f32.mxu0 0.0
      %4923 = vmatmul.mubr.f32.gmra.mxu0 %v4741
      %v4924 = vpop.f32.mrf.mxu0
      %v4925 = vadd.f32 0.0, %v4924
      %v4926 = vpop.f32.mrf.mxu0
      %4927 = vmatprep.mubr.f32.mxu0 0.0
      %4928 = vmatmul.mubr.f32.gmra.mxu0 %v4742
      %v4929 = vpop.f32.mrf.mxu0
      %v4930 = vadd.f32 0.0, %v4929
      %v4931 = vpop.f32.mrf.mxu0
      %4932 = vmatprep.mubr.f32.mxu0 0.0
      %4933 = vmatmul.mubr.f32.gmra.mxu0 %v4743
      %v4934 = vpop.f32.mrf.mxu0
      %v4935 = vadd.f32 0.0, %v4934
      %v4936 = vpop.f32.mrf.mxu0
      %4937 = vmatprep.mubr.f32.mxu0 0.0
      %4938 = vmatmul.mubr.f32.gmra.mxu0 %v4744
      %v4939 = vpop.f32.mrf.mxu0
      %v4940 = vadd.f32 0.0, %v4939
      %v4941 = vpop.f32.mrf.mxu0
      %4942 = vmatprep.mubr.f32.mxu0 0.0
      %4943 = vmatmul.mubr.f32.gmra.mxu0 %v4745
      %v4944 = vpop.f32.mrf.mxu0
      %v4945 = vadd.f32 0.0, %v4944
      %v4946 = vpop.f32.mrf.mxu0
      %4947 = vmatprep.mubr.f32.mxu0 0.0
      %4948 = vmatmul.mubr.f32.gmra.mxu0 %v4746
      %v4949 = vpop.f32.mrf.mxu0
      %v4950 = vadd.f32 0.0, %v4949
      %v4951 = vpop.f32.mrf.mxu0
      %4952 = vmatprep.mubr.f32.mxu0 0.0
      %4953 = vmatmul.mubr.f32.gmra.mxu0 %v4747
      %v4954 = vpop.f32.mrf.mxu0
      %v4955 = vadd.f32 0.0, %v4954
      %v4956 = vpop.f32.mrf.mxu0
      %4957 = vmatprep.mubr.f32.mxu0 0.0
      %4958 = vmatmul.mubr.f32.gmra.mxu0 %v4748
      %v4959 = vpop.f32.mrf.mxu0
      %v4960 = vadd.f32 0.0, %v4959
      %v4961 = vpop.f32.mrf.mxu0
      %4962 = vmatprep.mubr.f32.mxu0 0.0
      %4963 = vmatmul.mubr.f32.gmra.mxu0 %v4749
      %v4964 = vpop.f32.mrf.mxu0
      %v4965 = vadd.f32 0.0, %v4964
      %v4966 = vpop.f32.mrf.mxu0
      %4967 = vmatprep.mubr.f32.mxu0 0.0
      %4968 = vmatmul.mubr.f32.gmra.mxu0 %v4750
      %v4969 = vpop.f32.mrf.mxu0
      %v4970 = vadd.f32 0.0, %v4969
      %v4971 = vpop.f32.mrf.mxu0
      %4972 = vmatprep.mubr.f32.mxu0 0.0
      %4973 = vmatmul.mubr.f32.gmra.mxu0 %v4751
      %v4974 = vpop.f32.mrf.mxu0
      %v4975 = vadd.f32 0.0, %v4974
      %v4976 = vpop.f32.mrf.mxu0
      %4977 = vmatprep.mubr.f32.mxu0 0.0
      %4978 = vmatmul.mubr.f32.gmra.mxu0 %v4752
      %v4979 = vpop.f32.mrf.mxu0
      %v4980 = vadd.f32 0.0, %v4979
      %v4981 = vpop.f32.mrf.mxu0
      %4982 = vmatprep.mubr.f32.mxu0 0.0
      %4983 = vmatmul.mubr.f32.gmra.mxu0 %v4753
      %v4984 = vpop.f32.mrf.mxu0
      %v4985 = vadd.f32 0.0, %v4984
      %v4986 = vpop.f32.mrf.mxu0
      %4987 = vmatprep.mubr.f32.mxu0 0.0
      %4988 = vmatmul.mubr.f32.gmra.mxu0 %v4754
      %v4989 = vpop.f32.mrf.mxu0
      %v4990 = vadd.f32 0.0, %v4989
      %v4991 = vpop.f32.mrf.mxu0
      %4992 = vmatprep.mubr.f32.mxu0 0.0
      %4993 = vmatmul.mubr.f32.gmra.mxu0 %v4755
      %v4994 = vpop.f32.mrf.mxu0
      %v4995 = vadd.f32 0.0, %v4994
      %v4996 = vpop.f32.mrf.mxu0
      %4997 = vdwg.mxu0
      %4998 = vmatprep.subr.mxu0 0.0
      %4999 = vmatpush1.msra.mxu0 %v4721
      %5000 = vmatprep.subr.mxu0 0.0
      %5001 = vmatpush1.msra.mxu0 %v4720
      %5002 = vmatprep.subr.mxu0 0.0
      %5003 = vmatpush1.msra.mxu0 %v4719
      %5004 = vmatprep.subr.mxu0 0.0
      %5005 = vmatpush1.msra.mxu0 %v4718
      %5006 = vmatprep.subr.mxu0 0.0
      %5007 = vmatpush1.msra.mxu0 %v4717
      %5008 = vmatprep.subr.mxu0 0.0
      %5009 = vmatpush1.msra.mxu0 %v4716
      %5010 = vmatprep.subr.mxu0 0.0
      %5011 = vmatpush1.msra.mxu0 %v4715
      %5012 = vmatprep.subr.mxu0 0.0
      %5013 = vmatpush1.msra.mxu0 %v4714
      %5014 = vmatprep.subr.mxu0 0.0
      %5015 = vmatpush1.msra.mxu0 %v4713
      %5016 = vmatprep.subr.mxu0 0.0
      %5017 = vmatpush1.msra.mxu0 %v4712
      %5018 = vmatprep.subr.mxu0 0.0
      %5019 = vmatpush1.msra.mxu0 %v4711
      %5020 = vmatprep.subr.mxu0 0.0
      %5021 = vmatpush1.msra.mxu0 %v4710
      %5022 = vmatprep.subr.mxu0 0.0
      %5023 = vmatpush1.msra.mxu0 %v4709
      %5024 = vmatprep.subr.mxu0 0.0
      %5025 = vmatpush1.msra.mxu0 %v4708
      %5026 = vmatprep.subr.mxu0 0.0
      %5027 = vmatpush1.msra.mxu0 %v4707
      %5028 = vmatprep.subr.mxu0 0.0
      %5029 = vmatpush1.msra.mxu0 %v4706
      %5030 = vmatprep.subr.mxu0 0.0
      %5031 = vmatpush2.msra.mxu0 0.0
      %5032 = vmatprep.subr.mxu0 0.0
      %5033 = vmatpush2.msra.mxu0 0.0
      %5034 = vmatprep.subr.mxu0 0.0
      %5035 = vmatpush2.msra.mxu0 0.0
      %5036 = vmatprep.subr.mxu0 0.0
      %5037 = vmatpush2.msra.mxu0 0.0
      %5038 = vmatprep.subr.mxu0 0.0
      %5039 = vmatpush2.msra.mxu0 0.0
      %5040 = vmatprep.subr.mxu0 0.0
      %5041 = vmatpush2.msra.mxu0 0.0
      %5042 = vmatprep.subr.mxu0 0.0
      %5043 = vmatpush2.msra.mxu0 0.0
      %5044 = vmatprep.subr.mxu0 0.0
      %5045 = vmatpush2.msra.mxu0 0.0
      %5046 = vmatprep.subr.mxu0 0.0
      %5047 = vmatpush2.msra.mxu0 0.0
      %5048 = vmatprep.subr.mxu0 0.0
      %5049 = vmatpush2.msra.mxu0 0.0
      %5050 = vmatprep.subr.mxu0 0.0
      %5051 = vmatpush2.msra.mxu0 0.0
      %5052 = vmatprep.subr.mxu0 0.0
      %5053 = vmatpush2.msra.mxu0 0.0
      %5054 = vmatprep.subr.mxu0 0.0
      %5055 = vmatpush2.msra.mxu0 0.0
      %5056 = vmatprep.subr.mxu0 0.0
      %5057 = vmatpush2.msra.mxu0 0.0
      %5058 = vmatprep.subr.mxu0 0.0
      %5059 = vmatpush2.msra.mxu0 0.0
      %5060 = vmatprep.subr.mxu0 0.0
      %5061 = vmatpush2.msra.mxu0 0.0
      %5062 = vmatprep.mubr.f32.mxu0 0.0
      %5063 = vmatmul.mubr.f32.gmra.mxu0 %v4674
      %v5064 = vpop.f32.mrf.mxu0
      %v5065 = vadd.f32 %v4840, %v5064
      %v5066 = vpop.f32.mrf.mxu0
      %5067 = vmatprep.mubr.f32.mxu0 0.0
      %5068 = vmatmul.mubr.f32.gmra.mxu0 %v4675
      %v5069 = vpop.f32.mrf.mxu0
      %v5070 = vadd.f32 %v4845, %v5069
      %v5071 = vpop.f32.mrf.mxu0
      %5072 = vmatprep.mubr.f32.mxu0 0.0
      %5073 = vmatmul.mubr.f32.gmra.mxu0 %v4676
      %v5074 = vpop.f32.mrf.mxu0
      %v5075 = vadd.f32 %v4850, %v5074
      %v5076 = vpop.f32.mrf.mxu0
      %5077 = vmatprep.mubr.f32.mxu0 0.0
      %5078 = vmatmul.mubr.f32.gmra.mxu0 %v4677
      %v5079 = vpop.f32.mrf.mxu0
      %v5080 = vadd.f32 %v4855, %v5079
      %v5081 = vpop.f32.mrf.mxu0
      %5082 = vmatprep.mubr.f32.mxu0 0.0
      %5083 = vmatmul.mubr.f32.gmra.mxu0 %v4678
      %v5084 = vpop.f32.mrf.mxu0
      %v5085 = vadd.f32 %v4860, %v5084
      %v5086 = vpop.f32.mrf.mxu0
      %5087 = vmatprep.mubr.f32.mxu0 0.0
      %5088 = vmatmul.mubr.f32.gmra.mxu0 %v4679
      %v5089 = vpop.f32.mrf.mxu0
      %v5090 = vadd.f32 %v4865, %v5089
      %v5091 = vpop.f32.mrf.mxu0
      %5092 = vmatprep.mubr.f32.mxu0 0.0
      %5093 = vmatmul.mubr.f32.gmra.mxu0 %v4680
      %v5094 = vpop.f32.mrf.mxu0
      %v5095 = vadd.f32 %v4870, %v5094
      %v5096 = vpop.f32.mrf.mxu0
      %5097 = vmatprep.mubr.f32.mxu0 0.0
      %5098 = vmatmul.mubr.f32.gmra.mxu0 %v4681
      %v5099 = vpop.f32.mrf.mxu0
      %v5100 = vadd.f32 %v4875, %v5099
      %v5101 = vpop.f32.mrf.mxu0
      %5102 = vmatprep.mubr.f32.mxu0 0.0
      %5103 = vmatmul.mubr.f32.gmra.mxu0 %v4682
      %v5104 = vpop.f32.mrf.mxu0
      %v5105 = vadd.f32 %v4880, %v5104
      %v5106 = vpop.f32.mrf.mxu0
      %5107 = vmatprep.mubr.f32.mxu0 0.0
      %5108 = vmatmul.mubr.f32.gmra.mxu0 %v4683
      %v5109 = vpop.f32.mrf.mxu0
      %v5110 = vadd.f32 %v4885, %v5109
      %v5111 = vpop.f32.mrf.mxu0
      %5112 = vmatprep.mubr.f32.mxu0 0.0
      %5113 = vmatmul.mubr.f32.gmra.mxu0 %v4684
      %v5114 = vpop.f32.mrf.mxu0
      %v5115 = vadd.f32 %v4890, %v5114
      %v5116 = vpop.f32.mrf.mxu0
      %5117 = vmatprep.mubr.f32.mxu0 0.0
      %5118 = vmatmul.mubr.f32.gmra.mxu0 %v4685
      %v5119 = vpop.f32.mrf.mxu0
      %v5120 = vadd.f32 %v4895, %v5119
      %v5121 = vpop.f32.mrf.mxu0
      %5122 = vmatprep.mubr.f32.mxu0 0.0
      %5123 = vmatmul.mubr.f32.gmra.mxu0 %v4686
      %v5124 = vpop.f32.mrf.mxu0
      %v5125 = vadd.f32 %v4900, %v5124
      %v5126 = vpop.f32.mrf.mxu0
      %5127 = vmatprep.mubr.f32.mxu0 0.0
      %5128 = vmatmul.mubr.f32.gmra.mxu0 %v4687
      %v5129 = vpop.f32.mrf.mxu0
      %v5130 = vadd.f32 %v4905, %v5129
      %v5131 = vpop.f32.mrf.mxu0
      %5132 = vmatprep.mubr.f32.mxu0 0.0
      %5133 = vmatmul.mubr.f32.gmra.mxu0 %v4688
      %v5134 = vpop.f32.mrf.mxu0
      %v5135 = vadd.f32 %v4910, %v5134
      %v5136 = vpop.f32.mrf.mxu0
      %5137 = vmatprep.mubr.f32.mxu0 0.0
      %5138 = vmatmul.mubr.f32.gmra.mxu0 %v4689
      %v5139 = vpop.f32.mrf.mxu0
      %v5140 = vadd.f32 %v4915, %v5139
      %v5141 = vpop.f32.mrf.mxu0
      %5142 = vmatprep.mubr.f32.mxu0 0.0
      %5143 = vmatmul.mubr.f32.gmra.mxu0 %v4690
      %v5144 = vpop.f32.mrf.mxu0
      %v5145 = vadd.f32 %v4920, %v5144
      %v5146 = vpop.f32.mrf.mxu0
      %5147 = vmatprep.mubr.f32.mxu0 0.0
      %5148 = vmatmul.mubr.f32.gmra.mxu0 %v4691
      %v5149 = vpop.f32.mrf.mxu0
      %v5150 = vadd.f32 %v4925, %v5149
      %v5151 = vpop.f32.mrf.mxu0
      %5152 = vmatprep.mubr.f32.mxu0 0.0
      %5153 = vmatmul.mubr.f32.gmra.mxu0 %v4692
      %v5154 = vpop.f32.mrf.mxu0
      %v5155 = vadd.f32 %v4930, %v5154
      %v5156 = vpop.f32.mrf.mxu0
      %5157 = vmatprep.mubr.f32.mxu0 0.0
      %5158 = vmatmul.mubr.f32.gmra.mxu0 %v4693
      %v5159 = vpop.f32.mrf.mxu0
      %v5160 = vadd.f32 %v4935, %v5159
      %v5161 = vpop.f32.mrf.mxu0
      %5162 = vmatprep.mubr.f32.mxu0 0.0
      %5163 = vmatmul.mubr.f32.gmra.mxu0 %v4694
      %v5164 = vpop.f32.mrf.mxu0
      %v5165 = vadd.f32 %v4940, %v5164
      %v5166 = vpop.f32.mrf.mxu0
      %5167 = vmatprep.mubr.f32.mxu0 0.0
      %5168 = vmatmul.mubr.f32.gmra.mxu0 %v4695
      %v5169 = vpop.f32.mrf.mxu0
      %v5170 = vadd.f32 %v4945, %v5169
      %v5171 = vpop.f32.mrf.mxu0
      %5172 = vmatprep.mubr.f32.mxu0 0.0
      %5173 = vmatmul.mubr.f32.gmra.mxu0 %v4696
      %v5174 = vpop.f32.mrf.mxu0
      %v5175 = vadd.f32 %v4950, %v5174
      %v5176 = vpop.f32.mrf.mxu0
      %5177 = vmatprep.mubr.f32.mxu0 0.0
      %5178 = vmatmul.mubr.f32.gmra.mxu0 %v4697
      %v5179 = vpop.f32.mrf.mxu0
      %v5180 = vadd.f32 %v4955, %v5179
      %v5181 = vpop.f32.mrf.mxu0
      %5182 = vmatprep.mubr.f32.mxu0 0.0
      %5183 = vmatmul.mubr.f32.gmra.mxu0 %v4698
      %v5184 = vpop.f32.mrf.mxu0
      %v5185 = vadd.f32 %v4960, %v5184
      %v5186 = vpop.f32.mrf.mxu0
      %5187 = vmatprep.mubr.f32.mxu0 0.0
      %5188 = vmatmul.mubr.f32.gmra.mxu0 %v4699
      %v5189 = vpop.f32.mrf.mxu0
      %v5190 = vadd.f32 %v4965, %v5189
      %v5191 = vpop.f32.mrf.mxu0
      %5192 = vmatprep.mubr.f32.mxu0 0.0
      %5193 = vmatmul.mubr.f32.gmra.mxu0 %v4700
      %v5194 = vpop.f32.mrf.mxu0
      %v5195 = vadd.f32 %v4970, %v5194
      %v5196 = vpop.f32.mrf.mxu0
      %5197 = vmatprep.mubr.f32.mxu0 0.0
      %5198 = vmatmul.mubr.f32.gmra.mxu0 %v4701
      %v5199 = vpop.f32.mrf.mxu0
      %v5200 = vadd.f32 %v4975, %v5199
      %v5201 = vpop.f32.mrf.mxu0
      %5202 = vmatprep.mubr.f32.mxu0 0.0
      %5203 = vmatmul.mubr.f32.gmra.mxu0 %v4702
      %v5204 = vpop.f32.mrf.mxu0
      %v5205 = vadd.f32 %v4980, %v5204
      %v5206 = vpop.f32.mrf.mxu0
      %5207 = vmatprep.mubr.f32.mxu0 0.0
      %5208 = vmatmul.mubr.f32.gmra.mxu0 %v4703
      %v5209 = vpop.f32.mrf.mxu0
      %v5210 = vadd.f32 %v4985, %v5209
      %v5211 = vpop.f32.mrf.mxu0
      %5212 = vmatprep.mubr.f32.mxu0 0.0
      %5213 = vmatmul.mubr.f32.gmra.mxu0 %v4704
      %v5214 = vpop.f32.mrf.mxu0
      %v5215 = vadd.f32 %v4990, %v5214
      %v5216 = vpop.f32.mrf.mxu0
      %5217 = vmatprep.mubr.f32.mxu0 0.0
      %5218 = vmatmul.mubr.f32.gmra.mxu0 %v4705
      %v5219 = vpop.f32.mrf.mxu0
      %v5220 = vadd.f32 %v4995, %v5219
      %v5221 = vpop.f32.mrf.mxu0
      %5222 = vdwg.mxu0
      %s5223 = sadd.s32 %s4671, 7
      %s5224 = scalar_lea.vmem [#allocation2], %s5223
      %v5225 = vld [vmem:[%s5224] sm:$0xff]
      %v5226 = vld [vmem:[%s5224 + $0x8] sm:$0xff]
      %v5227 = vld [vmem:[%s5224 + $0x10] sm:$0xff]
      %v5228 = vld [vmem:[%s5224 + $0x18] sm:$0xff]
      %v5229 = vld [vmem:[%s5224 + $0x20] sm:$0xff]
      %v5230 = vld [vmem:[%s5224 + $0x28] sm:$0xff]
      %v5231 = vld [vmem:[%s5224 + $0x30] sm:$0xff]
      %v5232 = vld [vmem:[%s5224 + $0x38] sm:$0xff]
      %v5233 = vld [vmem:[%s5224 + $0x40] sm:$0xff]
      %v5234 = vld [vmem:[%s5224 + $0x48] sm:$0xff]
      %v5235 = vld [vmem:[%s5224 + $0x50] sm:$0xff]
      %v5236 = vld [vmem:[%s5224 + $0x58] sm:$0xff]
      %v5237 = vld [vmem:[%s5224 + $0x60] sm:$0xff]
      %v5238 = vld [vmem:[%s5224 + $0x68] sm:$0xff]
      %v5239 = vld [vmem:[%s5224 + $0x70] sm:$0xff]
      %v5240 = vld [vmem:[%s5224 + $0x78] sm:$0xff]
      %v5241 = vld [vmem:[%s5224 + $0x80] sm:$0xff]
      %v5242 = vld [vmem:[%s5224 + $0x88] sm:$0xff]
      %v5243 = vld [vmem:[%s5224 + $0x90] sm:$0xff]
      %v5244 = vld [vmem:[%s5224 + $0x98] sm:$0xff]
      %v5245 = vld [vmem:[%s5224 + $0xa0] sm:$0xff]
      %v5246 = vld [vmem:[%s5224 + $0xa8] sm:$0xff]
      %v5247 = vld [vmem:[%s5224 + $0xb0] sm:$0xff]
      %v5248 = vld [vmem:[%s5224 + $0xb8] sm:$0xff]
      %v5249 = vld [vmem:[%s5224 + $0xc0] sm:$0xff]
      %v5250 = vld [vmem:[%s5224 + $0xc8] sm:$0xff]
      %v5251 = vld [vmem:[%s5224 + $0xd0] sm:$0xff]
      %v5252 = vld [vmem:[%s5224 + $0xd8] sm:$0xff]
      %v5253 = vld [vmem:[%s5224 + $0xe0] sm:$0xff]
      %v5254 = vld [vmem:[%s5224 + $0xe8] sm:$0xff]
      %v5255 = vld [vmem:[%s5224 + $0xf0] sm:$0xff]
      %v5256 = vld [vmem:[%s5224 + $0xf8] sm:$0xff]
      %s5257 = scalar_lea.vmem [#allocation8], 256
      %v5258 = vld [vmem:[%s5257] sm:$0xff]
      %v5259 = vld [vmem:[%s5257 + $0x8] sm:$0xff]
      %v5260 = vld [vmem:[%s5257 + $0x10] sm:$0xff]
      %v5261 = vld [vmem:[%s5257 + $0x18] sm:$0xff]
      %v5262 = vld [vmem:[%s5257 + $0x20] sm:$0xff]
      %v5263 = vld [vmem:[%s5257 + $0x28] sm:$0xff]
      %v5264 = vld [vmem:[%s5257 + $0x30] sm:$0xff]
      %v5265 = vld [vmem:[%s5257 + $0x38] sm:$0xff]
      %v5266 = vld [vmem:[%s5257 + $0x40] sm:$0xff]
      %v5267 = vld [vmem:[%s5257 + $0x48] sm:$0xff]
      %v5268 = vld [vmem:[%s5257 + $0x50] sm:$0xff]
      %v5269 = vld [vmem:[%s5257 + $0x58] sm:$0xff]
      %v5270 = vld [vmem:[%s5257 + $0x60] sm:$0xff]
      %v5271 = vld [vmem:[%s5257 + $0x68] sm:$0xff]
      %v5272 = vld [vmem:[%s5257 + $0x70] sm:$0xff]
      %v5273 = vld [vmem:[%s5257 + $0x78] sm:$0xff]
      %5274 = vmatprep.subr.mxu0 0.0
      %5275 = vmatpush1.msra.mxu0 %v5273
      %5276 = vmatprep.subr.mxu0 0.0
      %5277 = vmatpush1.msra.mxu0 %v5272
      %5278 = vmatprep.subr.mxu0 0.0
      %5279 = vmatpush1.msra.mxu0 %v5271
      %5280 = vmatprep.subr.mxu0 0.0
      %5281 = vmatpush1.msra.mxu0 %v5270
      %5282 = vmatprep.subr.mxu0 0.0
      %5283 = vmatpush1.msra.mxu0 %v5269
      %5284 = vmatprep.subr.mxu0 0.0
      %5285 = vmatpush1.msra.mxu0 %v5268
      %5286 = vmatprep.subr.mxu0 0.0
      %5287 = vmatpush1.msra.mxu0 %v5267
      %5288 = vmatprep.subr.mxu0 0.0
      %5289 = vmatpush1.msra.mxu0 %v5266
      %5290 = vmatprep.subr.mxu0 0.0
      %5291 = vmatpush1.msra.mxu0 %v5265
      %5292 = vmatprep.subr.mxu0 0.0
      %5293 = vmatpush1.msra.mxu0 %v5264
      %5294 = vmatprep.subr.mxu0 0.0
      %5295 = vmatpush1.msra.mxu0 %v5263
      %5296 = vmatprep.subr.mxu0 0.0
      %5297 = vmatpush1.msra.mxu0 %v5262
      %5298 = vmatprep.subr.mxu0 0.0
      %5299 = vmatpush1.msra.mxu0 %v5261
      %5300 = vmatprep.subr.mxu0 0.0
      %5301 = vmatpush1.msra.mxu0 %v5260
      %5302 = vmatprep.subr.mxu0 0.0
      %5303 = vmatpush1.msra.mxu0 %v5259
      %5304 = vmatprep.subr.mxu0 0.0
      %5305 = vmatpush1.msra.mxu0 %v5258
      %5306 = vmatprep.subr.mxu0 0.0
      %5307 = vmatpush2.msra.mxu0 0.0
      %5308 = vmatprep.subr.mxu0 0.0
      %5309 = vmatpush2.msra.mxu0 0.0
      %5310 = vmatprep.subr.mxu0 0.0
      %5311 = vmatpush2.msra.mxu0 0.0
      %5312 = vmatprep.subr.mxu0 0.0
      %5313 = vmatpush2.msra.mxu0 0.0
      %5314 = vmatprep.subr.mxu0 0.0
      %5315 = vmatpush2.msra.mxu0 0.0
      %5316 = vmatprep.subr.mxu0 0.0
      %5317 = vmatpush2.msra.mxu0 0.0
      %5318 = vmatprep.subr.mxu0 0.0
      %5319 = vmatpush2.msra.mxu0 0.0
      %5320 = vmatprep.subr.mxu0 0.0
      %5321 = vmatpush2.msra.mxu0 0.0
      %5322 = vmatprep.subr.mxu0 0.0
      %5323 = vmatpush2.msra.mxu0 0.0
      %5324 = vmatprep.subr.mxu0 0.0
      %5325 = vmatpush2.msra.mxu0 0.0
      %5326 = vmatprep.subr.mxu0 0.0
      %5327 = vmatpush2.msra.mxu0 0.0
      %5328 = vmatprep.subr.mxu0 0.0
      %5329 = vmatpush2.msra.mxu0 0.0
      %5330 = vmatprep.subr.mxu0 0.0
      %5331 = vmatpush2.msra.mxu0 0.0
      %5332 = vmatprep.subr.mxu0 0.0
      %5333 = vmatpush2.msra.mxu0 0.0
      %5334 = vmatprep.subr.mxu0 0.0
      %5335 = vmatpush2.msra.mxu0 0.0
      %5336 = vmatprep.subr.mxu0 0.0
      %5337 = vmatpush2.msra.mxu0 0.0
      %5338 = vmatprep.mubr.f32.mxu0 0.0
      %5339 = vmatmul.mubr.f32.gmra.mxu0 %v5225
      %v5340 = vpop.f32.mrf.mxu0
      %v5341 = vadd.f32 0.0, %v5340
      %v5342 = vpop.f32.mrf.mxu0
      %5343 = vmatprep.mubr.f32.mxu0 0.0
      %5344 = vmatmul.mubr.f32.gmra.mxu0 %v5226
      %v5345 = vpop.f32.mrf.mxu0
      %v5346 = vadd.f32 0.0, %v5345
      %v5347 = vpop.f32.mrf.mxu0
      %5348 = vmatprep.mubr.f32.mxu0 0.0
      %5349 = vmatmul.mubr.f32.gmra.mxu0 %v5227
      %v5350 = vpop.f32.mrf.mxu0
      %v5351 = vadd.f32 0.0, %v5350
      %v5352 = vpop.f32.mrf.mxu0
      %5353 = vmatprep.mubr.f32.mxu0 0.0
      %5354 = vmatmul.mubr.f32.gmra.mxu0 %v5228
      %v5355 = vpop.f32.mrf.mxu0
      %v5356 = vadd.f32 0.0, %v5355
      %v5357 = vpop.f32.mrf.mxu0
      %5358 = vmatprep.mubr.f32.mxu0 0.0
      %5359 = vmatmul.mubr.f32.gmra.mxu0 %v5229
      %v5360 = vpop.f32.mrf.mxu0
      %v5361 = vadd.f32 0.0, %v5360
      %v5362 = vpop.f32.mrf.mxu0
      %5363 = vmatprep.mubr.f32.mxu0 0.0
      %5364 = vmatmul.mubr.f32.gmra.mxu0 %v5230
      %v5365 = vpop.f32.mrf.mxu0
      %v5366 = vadd.f32 0.0, %v5365
      %v5367 = vpop.f32.mrf.mxu0
      %5368 = vmatprep.mubr.f32.mxu0 0.0
      %5369 = vmatmul.mubr.f32.gmra.mxu0 %v5231
      %v5370 = vpop.f32.mrf.mxu0
      %v5371 = vadd.f32 0.0, %v5370
      %v5372 = vpop.f32.mrf.mxu0
      %5373 = vmatprep.mubr.f32.mxu0 0.0
      %5374 = vmatmul.mubr.f32.gmra.mxu0 %v5232
      %v5375 = vpop.f32.mrf.mxu0
      %v5376 = vadd.f32 0.0, %v5375
      %v5377 = vpop.f32.mrf.mxu0
      %5378 = vmatprep.mubr.f32.mxu0 0.0
      %5379 = vmatmul.mubr.f32.gmra.mxu0 %v5233
      %v5380 = vpop.f32.mrf.mxu0
      %v5381 = vadd.f32 0.0, %v5380
      %v5382 = vpop.f32.mrf.mxu0
      %5383 = vmatprep.mubr.f32.mxu0 0.0
      %5384 = vmatmul.mubr.f32.gmra.mxu0 %v5234
      %v5385 = vpop.f32.mrf.mxu0
      %v5386 = vadd.f32 0.0, %v5385
      %v5387 = vpop.f32.mrf.mxu0
      %5388 = vmatprep.mubr.f32.mxu0 0.0
      %5389 = vmatmul.mubr.f32.gmra.mxu0 %v5235
      %v5390 = vpop.f32.mrf.mxu0
      %v5391 = vadd.f32 0.0, %v5390
      %v5392 = vpop.f32.mrf.mxu0
      %5393 = vmatprep.mubr.f32.mxu0 0.0
      %5394 = vmatmul.mubr.f32.gmra.mxu0 %v5236
      %v5395 = vpop.f32.mrf.mxu0
      %v5396 = vadd.f32 0.0, %v5395
      %v5397 = vpop.f32.mrf.mxu0
      %5398 = vmatprep.mubr.f32.mxu0 0.0
      %5399 = vmatmul.mubr.f32.gmra.mxu0 %v5237
      %v5400 = vpop.f32.mrf.mxu0
      %v5401 = vadd.f32 0.0, %v5400
      %v5402 = vpop.f32.mrf.mxu0
      %5403 = vmatprep.mubr.f32.mxu0 0.0
      %5404 = vmatmul.mubr.f32.gmra.mxu0 %v5238
      %v5405 = vpop.f32.mrf.mxu0
      %v5406 = vadd.f32 0.0, %v5405
      %v5407 = vpop.f32.mrf.mxu0
      %5408 = vmatprep.mubr.f32.mxu0 0.0
      %5409 = vmatmul.mubr.f32.gmra.mxu0 %v5239
      %v5410 = vpop.f32.mrf.mxu0
      %v5411 = vadd.f32 0.0, %v5410
      %v5412 = vpop.f32.mrf.mxu0
      %5413 = vmatprep.mubr.f32.mxu0 0.0
      %5414 = vmatmul.mubr.f32.gmra.mxu0 %v5240
      %v5415 = vpop.f32.mrf.mxu0
      %v5416 = vadd.f32 0.0, %v5415
      %v5417 = vpop.f32.mrf.mxu0
      %5418 = vmatprep.mubr.f32.mxu0 0.0
      %5419 = vmatmul.mubr.f32.gmra.mxu0 %v5241
      %v5420 = vpop.f32.mrf.mxu0
      %v5421 = vadd.f32 0.0, %v5420
      %v5422 = vpop.f32.mrf.mxu0
      %5423 = vmatprep.mubr.f32.mxu0 0.0
      %5424 = vmatmul.mubr.f32.gmra.mxu0 %v5242
      %v5425 = vpop.f32.mrf.mxu0
      %v5426 = vadd.f32 0.0, %v5425
      %v5427 = vpop.f32.mrf.mxu0
      %5428 = vmatprep.mubr.f32.mxu0 0.0
      %5429 = vmatmul.mubr.f32.gmra.mxu0 %v5243
      %v5430 = vpop.f32.mrf.mxu0
      %v5431 = vadd.f32 0.0, %v5430
      %v5432 = vpop.f32.mrf.mxu0
      %5433 = vmatprep.mubr.f32.mxu0 0.0
      %5434 = vmatmul.mubr.f32.gmra.mxu0 %v5244
      %v5435 = vpop.f32.mrf.mxu0
      %v5436 = vadd.f32 0.0, %v5435
      %v5437 = vpop.f32.mrf.mxu0
      %5438 = vmatprep.mubr.f32.mxu0 0.0
      %5439 = vmatmul.mubr.f32.gmra.mxu0 %v5245
      %v5440 = vpop.f32.mrf.mxu0
      %v5441 = vadd.f32 0.0, %v5440
      %v5442 = vpop.f32.mrf.mxu0
      %5443 = vmatprep.mubr.f32.mxu0 0.0
      %5444 = vmatmul.mubr.f32.gmra.mxu0 %v5246
      %v5445 = vpop.f32.mrf.mxu0
      %v5446 = vadd.f32 0.0, %v5445
      %v5447 = vpop.f32.mrf.mxu0
      %5448 = vmatprep.mubr.f32.mxu0 0.0
      %5449 = vmatmul.mubr.f32.gmra.mxu0 %v5247
      %v5450 = vpop.f32.mrf.mxu0
      %v5451 = vadd.f32 0.0, %v5450
      %v5452 = vpop.f32.mrf.mxu0
      %5453 = vmatprep.mubr.f32.mxu0 0.0
      %5454 = vmatmul.mubr.f32.gmra.mxu0 %v5248
      %v5455 = vpop.f32.mrf.mxu0
      %v5456 = vadd.f32 0.0, %v5455
      %v5457 = vpop.f32.mrf.mxu0
      %5458 = vmatprep.mubr.f32.mxu0 0.0
      %5459 = vmatmul.mubr.f32.gmra.mxu0 %v5249
      %v5460 = vpop.f32.mrf.mxu0
      %v5461 = vadd.f32 0.0, %v5460
      %v5462 = vpop.f32.mrf.mxu0
      %5463 = vmatprep.mubr.f32.mxu0 0.0
      %5464 = vmatmul.mubr.f32.gmra.mxu0 %v5250
      %v5465 = vpop.f32.mrf.mxu0
      %v5466 = vadd.f32 0.0, %v5465
      %v5467 = vpop.f32.mrf.mxu0
      %5468 = vmatprep.mubr.f32.mxu0 0.0
      %5469 = vmatmul.mubr.f32.gmra.mxu0 %v5251
      %v5470 = vpop.f32.mrf.mxu0
      %v5471 = vadd.f32 0.0, %v5470
      %v5472 = vpop.f32.mrf.mxu0
      %5473 = vmatprep.mubr.f32.mxu0 0.0
      %5474 = vmatmul.mubr.f32.gmra.mxu0 %v5252
      %v5475 = vpop.f32.mrf.mxu0
      %v5476 = vadd.f32 0.0, %v5475
      %v5477 = vpop.f32.mrf.mxu0
      %5478 = vmatprep.mubr.f32.mxu0 0.0
      %5479 = vmatmul.mubr.f32.gmra.mxu0 %v5253
      %v5480 = vpop.f32.mrf.mxu0
      %v5481 = vadd.f32 0.0, %v5480
      %v5482 = vpop.f32.mrf.mxu0
      %5483 = vmatprep.mubr.f32.mxu0 0.0
      %5484 = vmatmul.mubr.f32.gmra.mxu0 %v5254
      %v5485 = vpop.f32.mrf.mxu0
      %v5486 = vadd.f32 0.0, %v5485
      %v5487 = vpop.f32.mrf.mxu0
      %5488 = vmatprep.mubr.f32.mxu0 0.0
      %5489 = vmatmul.mubr.f32.gmra.mxu0 %v5255
      %v5490 = vpop.f32.mrf.mxu0
      %v5491 = vadd.f32 0.0, %v5490
      %v5492 = vpop.f32.mrf.mxu0
      %5493 = vmatprep.mubr.f32.mxu0 0.0
      %5494 = vmatmul.mubr.f32.gmra.mxu0 %v5256
      %v5495 = vpop.f32.mrf.mxu0
      %v5496 = vadd.f32 0.0, %v5495
      %v5497 = vpop.f32.mrf.mxu0
      %5498 = vdwg.mxu0
      %v5499 = vadd.f32 %v5065, %v5341
      %v5500 = vadd.f32 %v5070, %v5346
      %v5501 = vadd.f32 %v5075, %v5351
      %v5502 = vadd.f32 %v5080, %v5356
      %v5503 = vadd.f32 %v5085, %v5361
      %v5504 = vadd.f32 %v5090, %v5366
      %v5505 = vadd.f32 %v5095, %v5371
      %v5506 = vadd.f32 %v5100, %v5376
      %v5507 = vadd.f32 %v5105, %v5381
      %v5508 = vadd.f32 %v5110, %v5386
      %v5509 = vadd.f32 %v5115, %v5391
      %v5510 = vadd.f32 %v5120, %v5396
      %v5511 = vadd.f32 %v5125, %v5401
      %v5512 = vadd.f32 %v5130, %v5406
      %v5513 = vadd.f32 %v5135, %v5411
      %v5514 = vadd.f32 %v5140, %v5416
      %v5515 = vadd.f32 %v5145, %v5421
      %v5516 = vadd.f32 %v5150, %v5426
      %v5517 = vadd.f32 %v5155, %v5431
      %v5518 = vadd.f32 %v5160, %v5436
      %v5519 = vadd.f32 %v5165, %v5441
      %v5520 = vadd.f32 %v5170, %v5446
      %v5521 = vadd.f32 %v5175, %v5451
      %v5522 = vadd.f32 %v5180, %v5456
      %v5523 = vadd.f32 %v5185, %v5461
      %v5524 = vadd.f32 %v5190, %v5466
      %v5525 = vadd.f32 %v5195, %v5471
      %v5526 = vadd.f32 %v5200, %v5476
      %v5527 = vadd.f32 %v5205, %v5481
      %v5528 = vadd.f32 %v5210, %v5486
      %v5529 = vadd.f32 %v5215, %v5491
      %v5530 = vadd.f32 %v5220, %v5496
      %s5531 = sadd.s32 %s4671, 23
      %s5532 = scalar_lea.vmem [#allocation2], %s5531
      %v5533 = vld [vmem:[%s5532] sm:$0xff]
      %v5534 = vld [vmem:[%s5532 + $0x8] sm:$0xff]
      %v5535 = vld [vmem:[%s5532 + $0x10] sm:$0xff]
      %v5536 = vld [vmem:[%s5532 + $0x18] sm:$0xff]
      %v5537 = vld [vmem:[%s5532 + $0x20] sm:$0xff]
      %v5538 = vld [vmem:[%s5532 + $0x28] sm:$0xff]
      %v5539 = vld [vmem:[%s5532 + $0x30] sm:$0xff]
      %v5540 = vld [vmem:[%s5532 + $0x38] sm:$0xff]
      %v5541 = vld [vmem:[%s5532 + $0x40] sm:$0xff]
      %v5542 = vld [vmem:[%s5532 + $0x48] sm:$0xff]
      %v5543 = vld [vmem:[%s5532 + $0x50] sm:$0xff]
      %v5544 = vld [vmem:[%s5532 + $0x58] sm:$0xff]
      %v5545 = vld [vmem:[%s5532 + $0x60] sm:$0xff]
      %v5546 = vld [vmem:[%s5532 + $0x68] sm:$0xff]
      %v5547 = vld [vmem:[%s5532 + $0x70] sm:$0xff]
      %v5548 = vld [vmem:[%s5532 + $0x78] sm:$0xff]
      %v5549 = vld [vmem:[%s5532 + $0x80] sm:$0xff]
      %v5550 = vld [vmem:[%s5532 + $0x88] sm:$0xff]
      %v5551 = vld [vmem:[%s5532 + $0x90] sm:$0xff]
      %v5552 = vld [vmem:[%s5532 + $0x98] sm:$0xff]
      %v5553 = vld [vmem:[%s5532 + $0xa0] sm:$0xff]
      %v5554 = vld [vmem:[%s5532 + $0xa8] sm:$0xff]
      %v5555 = vld [vmem:[%s5532 + $0xb0] sm:$0xff]
      %v5556 = vld [vmem:[%s5532 + $0xb8] sm:$0xff]
      %v5557 = vld [vmem:[%s5532 + $0xc0] sm:$0xff]
      %v5558 = vld [vmem:[%s5532 + $0xc8] sm:$0xff]
      %v5559 = vld [vmem:[%s5532 + $0xd0] sm:$0xff]
      %v5560 = vld [vmem:[%s5532 + $0xd8] sm:$0xff]
      %v5561 = vld [vmem:[%s5532 + $0xe0] sm:$0xff]
      %v5562 = vld [vmem:[%s5532 + $0xe8] sm:$0xff]
      %v5563 = vld [vmem:[%s5532 + $0xf0] sm:$0xff]
      %v5564 = vld [vmem:[%s5532 + $0xf8] sm:$0xff]
      %s5565 = scalar_lea.vmem [#allocation8], 384
      %v5566 = vld [vmem:[%s5565] sm:$0xff]
      %v5567 = vld [vmem:[%s5565 + $0x8] sm:$0xff]
      %v5568 = vld [vmem:[%s5565 + $0x10] sm:$0xff]
      %v5569 = vld [vmem:[%s5565 + $0x18] sm:$0xff]
      %v5570 = vld [vmem:[%s5565 + $0x20] sm:$0xff]
      %v5571 = vld [vmem:[%s5565 + $0x28] sm:$0xff]
      %v5572 = vld [vmem:[%s5565 + $0x30] sm:$0xff]
      %v5573 = vld [vmem:[%s5565 + $0x38] sm:$0xff]
      %v5574 = vld [vmem:[%s5565 + $0x40] sm:$0xff]
      %v5575 = vld [vmem:[%s5565 + $0x48] sm:$0xff]
      %v5576 = vld [vmem:[%s5565 + $0x50] sm:$0xff]
      %v5577 = vld [vmem:[%s5565 + $0x58] sm:$0xff]
      %v5578 = vld [vmem:[%s5565 + $0x60] sm:$0xff]
      %v5579 = vld [vmem:[%s5565 + $0x68] sm:$0xff]
      %v5580 = vld [vmem:[%s5565 + $0x70] sm:$0xff]
      %v5581 = vld [vmem:[%s5565 + $0x78] sm:$0xff]
      %5582 = vmatprep.subr.mxu0 0.0
      %5583 = vmatpush1.msra.mxu0 %v5581
      %5584 = vmatprep.subr.mxu0 0.0
      %5585 = vmatpush1.msra.mxu0 %v5580
      %5586 = vmatprep.subr.mxu0 0.0
      %5587 = vmatpush1.msra.mxu0 %v5579
      %5588 = vmatprep.subr.mxu0 0.0
      %5589 = vmatpush1.msra.mxu0 %v5578
      %5590 = vmatprep.subr.mxu0 0.0
      %5591 = vmatpush1.msra.mxu0 %v5577
      %5592 = vmatprep.subr.mxu0 0.0
      %5593 = vmatpush1.msra.mxu0 %v5576
      %5594 = vmatprep.subr.mxu0 0.0
      %5595 = vmatpush1.msra.mxu0 %v5575
      %5596 = vmatprep.subr.mxu0 0.0
      %5597 = vmatpush1.msra.mxu0 %v5574
      %5598 = vmatprep.subr.mxu0 0.0
      %5599 = vmatpush1.msra.mxu0 %v5573
      %5600 = vmatprep.subr.mxu0 0.0
      %5601 = vmatpush1.msra.mxu0 %v5572
      %5602 = vmatprep.subr.mxu0 0.0
      %5603 = vmatpush1.msra.mxu0 %v5571
      %5604 = vmatprep.subr.mxu0 0.0
      %5605 = vmatpush1.msra.mxu0 %v5570
      %5606 = vmatprep.subr.mxu0 0.0
      %5607 = vmatpush1.msra.mxu0 %v5569
      %5608 = vmatprep.subr.mxu0 0.0
      %5609 = vmatpush1.msra.mxu0 %v5568
      %5610 = vmatprep.subr.mxu0 0.0
      %5611 = vmatpush1.msra.mxu0 %v5567
      %5612 = vmatprep.subr.mxu0 0.0
      %5613 = vmatpush1.msra.mxu0 %v5566
      %5614 = vmatprep.subr.mxu0 0.0
      %5615 = vmatpush2.msra.mxu0 0.0
      %5616 = vmatprep.subr.mxu0 0.0
      %5617 = vmatpush2.msra.mxu0 0.0
      %5618 = vmatprep.subr.mxu0 0.0
      %5619 = vmatpush2.msra.mxu0 0.0
      %5620 = vmatprep.subr.mxu0 0.0
      %5621 = vmatpush2.msra.mxu0 0.0
      %5622 = vmatprep.subr.mxu0 0.0
      %5623 = vmatpush2.msra.mxu0 0.0
      %5624 = vmatprep.subr.mxu0 0.0
      %5625 = vmatpush2.msra.mxu0 0.0
      %5626 = vmatprep.subr.mxu0 0.0
      %5627 = vmatpush2.msra.mxu0 0.0
      %5628 = vmatprep.subr.mxu0 0.0
      %5629 = vmatpush2.msra.mxu0 0.0
      %5630 = vmatprep.subr.mxu0 0.0
      %5631 = vmatpush2.msra.mxu0 0.0
      %5632 = vmatprep.subr.mxu0 0.0
      %5633 = vmatpush2.msra.mxu0 0.0
      %5634 = vmatprep.subr.mxu0 0.0
      %5635 = vmatpush2.msra.mxu0 0.0
      %5636 = vmatprep.subr.mxu0 0.0
      %5637 = vmatpush2.msra.mxu0 0.0
      %5638 = vmatprep.subr.mxu0 0.0
      %5639 = vmatpush2.msra.mxu0 0.0
      %5640 = vmatprep.subr.mxu0 0.0
      %5641 = vmatpush2.msra.mxu0 0.0
      %5642 = vmatprep.subr.mxu0 0.0
      %5643 = vmatpush2.msra.mxu0 0.0
      %5644 = vmatprep.subr.mxu0 0.0
      %5645 = vmatpush2.msra.mxu0 0.0
      %5646 = vmatprep.mubr.f32.mxu0 0.0
      %5647 = vmatmul.mubr.f32.gmra.mxu0 %v5533
      %v5648 = vpop.f32.mrf.mxu0
      %v5649 = vadd.f32 0.0, %v5648
      %v5650 = vpop.f32.mrf.mxu0
      %5651 = vmatprep.mubr.f32.mxu0 0.0
      %5652 = vmatmul.mubr.f32.gmra.mxu0 %v5534
      %v5653 = vpop.f32.mrf.mxu0
      %v5654 = vadd.f32 0.0, %v5653
      %v5655 = vpop.f32.mrf.mxu0
      %5656 = vmatprep.mubr.f32.mxu0 0.0
      %5657 = vmatmul.mubr.f32.gmra.mxu0 %v5535
      %v5658 = vpop.f32.mrf.mxu0
      %v5659 = vadd.f32 0.0, %v5658
      %v5660 = vpop.f32.mrf.mxu0
      %5661 = vmatprep.mubr.f32.mxu0 0.0
      %5662 = vmatmul.mubr.f32.gmra.mxu0 %v5536
      %v5663 = vpop.f32.mrf.mxu0
      %v5664 = vadd.f32 0.0, %v5663
      %v5665 = vpop.f32.mrf.mxu0
      %5666 = vmatprep.mubr.f32.mxu0 0.0
      %5667 = vmatmul.mubr.f32.gmra.mxu0 %v5537
      %v5668 = vpop.f32.mrf.mxu0
      %v5669 = vadd.f32 0.0, %v5668
      %v5670 = vpop.f32.mrf.mxu0
      %5671 = vmatprep.mubr.f32.mxu0 0.0
      %5672 = vmatmul.mubr.f32.gmra.mxu0 %v5538
      %v5673 = vpop.f32.mrf.mxu0
      %v5674 = vadd.f32 0.0, %v5673
      %v5675 = vpop.f32.mrf.mxu0
      %5676 = vmatprep.mubr.f32.mxu0 0.0
      %5677 = vmatmul.mubr.f32.gmra.mxu0 %v5539
      %v5678 = vpop.f32.mrf.mxu0
      %v5679 = vadd.f32 0.0, %v5678
      %v5680 = vpop.f32.mrf.mxu0
      %5681 = vmatprep.mubr.f32.mxu0 0.0
      %5682 = vmatmul.mubr.f32.gmra.mxu0 %v5540
      %v5683 = vpop.f32.mrf.mxu0
      %v5684 = vadd.f32 0.0, %v5683
      %v5685 = vpop.f32.mrf.mxu0
      %5686 = vmatprep.mubr.f32.mxu0 0.0
      %5687 = vmatmul.mubr.f32.gmra.mxu0 %v5541
      %v5688 = vpop.f32.mrf.mxu0
      %v5689 = vadd.f32 0.0, %v5688
      %v5690 = vpop.f32.mrf.mxu0
      %5691 = vmatprep.mubr.f32.mxu0 0.0
      %5692 = vmatmul.mubr.f32.gmra.mxu0 %v5542
      %v5693 = vpop.f32.mrf.mxu0
      %v5694 = vadd.f32 0.0, %v5693
      %v5695 = vpop.f32.mrf.mxu0
      %5696 = vmatprep.mubr.f32.mxu0 0.0
      %5697 = vmatmul.mubr.f32.gmra.mxu0 %v5543
      %v5698 = vpop.f32.mrf.mxu0
      %v5699 = vadd.f32 0.0, %v5698
      %v5700 = vpop.f32.mrf.mxu0
      %5701 = vmatprep.mubr.f32.mxu0 0.0
      %5702 = vmatmul.mubr.f32.gmra.mxu0 %v5544
      %v5703 = vpop.f32.mrf.mxu0
      %v5704 = vadd.f32 0.0, %v5703
      %v5705 = vpop.f32.mrf.mxu0
      %5706 = vmatprep.mubr.f32.mxu0 0.0
      %5707 = vmatmul.mubr.f32.gmra.mxu0 %v5545
      %v5708 = vpop.f32.mrf.mxu0
      %v5709 = vadd.f32 0.0, %v5708
      %v5710 = vpop.f32.mrf.mxu0
      %5711 = vmatprep.mubr.f32.mxu0 0.0
      %5712 = vmatmul.mubr.f32.gmra.mxu0 %v5546
      %v5713 = vpop.f32.mrf.mxu0
      %v5714 = vadd.f32 0.0, %v5713
      %v5715 = vpop.f32.mrf.mxu0
      %5716 = vmatprep.mubr.f32.mxu0 0.0
      %5717 = vmatmul.mubr.f32.gmra.mxu0 %v5547
      %v5718 = vpop.f32.mrf.mxu0
      %v5719 = vadd.f32 0.0, %v5718
      %v5720 = vpop.f32.mrf.mxu0
      %5721 = vmatprep.mubr.f32.mxu0 0.0
      %5722 = vmatmul.mubr.f32.gmra.mxu0 %v5548
      %v5723 = vpop.f32.mrf.mxu0
      %v5724 = vadd.f32 0.0, %v5723
      %v5725 = vpop.f32.mrf.mxu0
      %5726 = vmatprep.mubr.f32.mxu0 0.0
      %5727 = vmatmul.mubr.f32.gmra.mxu0 %v5549
      %v5728 = vpop.f32.mrf.mxu0
      %v5729 = vadd.f32 0.0, %v5728
      %v5730 = vpop.f32.mrf.mxu0
      %5731 = vmatprep.mubr.f32.mxu0 0.0
      %5732 = vmatmul.mubr.f32.gmra.mxu0 %v5550
      %v5733 = vpop.f32.mrf.mxu0
      %v5734 = vadd.f32 0.0, %v5733
      %v5735 = vpop.f32.mrf.mxu0
      %5736 = vmatprep.mubr.f32.mxu0 0.0
      %5737 = vmatmul.mubr.f32.gmra.mxu0 %v5551
      %v5738 = vpop.f32.mrf.mxu0
      %v5739 = vadd.f32 0.0, %v5738
      %v5740 = vpop.f32.mrf.mxu0
      %5741 = vmatprep.mubr.f32.mxu0 0.0
      %5742 = vmatmul.mubr.f32.gmra.mxu0 %v5552
      %v5743 = vpop.f32.mrf.mxu0
      %v5744 = vadd.f32 0.0, %v5743
      %v5745 = vpop.f32.mrf.mxu0
      %5746 = vmatprep.mubr.f32.mxu0 0.0
      %5747 = vmatmul.mubr.f32.gmra.mxu0 %v5553
      %v5748 = vpop.f32.mrf.mxu0
      %v5749 = vadd.f32 0.0, %v5748
      %v5750 = vpop.f32.mrf.mxu0
      %5751 = vmatprep.mubr.f32.mxu0 0.0
      %5752 = vmatmul.mubr.f32.gmra.mxu0 %v5554
      %v5753 = vpop.f32.mrf.mxu0
      %v5754 = vadd.f32 0.0, %v5753
      %v5755 = vpop.f32.mrf.mxu0
      %5756 = vmatprep.mubr.f32.mxu0 0.0
      %5757 = vmatmul.mubr.f32.gmra.mxu0 %v5555
      %v5758 = vpop.f32.mrf.mxu0
      %v5759 = vadd.f32 0.0, %v5758
      %v5760 = vpop.f32.mrf.mxu0
      %5761 = vmatprep.mubr.f32.mxu0 0.0
      %5762 = vmatmul.mubr.f32.gmra.mxu0 %v5556
      %v5763 = vpop.f32.mrf.mxu0
      %v5764 = vadd.f32 0.0, %v5763
      %v5765 = vpop.f32.mrf.mxu0
      %5766 = vmatprep.mubr.f32.mxu0 0.0
      %5767 = vmatmul.mubr.f32.gmra.mxu0 %v5557
      %v5768 = vpop.f32.mrf.mxu0
      %v5769 = vadd.f32 0.0, %v5768
      %v5770 = vpop.f32.mrf.mxu0
      %5771 = vmatprep.mubr.f32.mxu0 0.0
      %5772 = vmatmul.mubr.f32.gmra.mxu0 %v5558
      %v5773 = vpop.f32.mrf.mxu0
      %v5774 = vadd.f32 0.0, %v5773
      %v5775 = vpop.f32.mrf.mxu0
      %5776 = vmatprep.mubr.f32.mxu0 0.0
      %5777 = vmatmul.mubr.f32.gmra.mxu0 %v5559
      %v5778 = vpop.f32.mrf.mxu0
      %v5779 = vadd.f32 0.0, %v5778
      %v5780 = vpop.f32.mrf.mxu0
      %5781 = vmatprep.mubr.f32.mxu0 0.0
      %5782 = vmatmul.mubr.f32.gmra.mxu0 %v5560
      %v5783 = vpop.f32.mrf.mxu0
      %v5784 = vadd.f32 0.0, %v5783
      %v5785 = vpop.f32.mrf.mxu0
      %5786 = vmatprep.mubr.f32.mxu0 0.0
      %5787 = vmatmul.mubr.f32.gmra.mxu0 %v5561
      %v5788 = vpop.f32.mrf.mxu0
      %v5789 = vadd.f32 0.0, %v5788
      %v5790 = vpop.f32.mrf.mxu0
      %5791 = vmatprep.mubr.f32.mxu0 0.0
      %5792 = vmatmul.mubr.f32.gmra.mxu0 %v5562
      %v5793 = vpop.f32.mrf.mxu0
      %v5794 = vadd.f32 0.0, %v5793
      %v5795 = vpop.f32.mrf.mxu0
      %5796 = vmatprep.mubr.f32.mxu0 0.0
      %5797 = vmatmul.mubr.f32.gmra.mxu0 %v5563
      %v5798 = vpop.f32.mrf.mxu0
      %v5799 = vadd.f32 0.0, %v5798
      %v5800 = vpop.f32.mrf.mxu0
      %5801 = vmatprep.mubr.f32.mxu0 0.0
      %5802 = vmatmul.mubr.f32.gmra.mxu0 %v5564
      %v5803 = vpop.f32.mrf.mxu0
      %v5804 = vadd.f32 0.0, %v5803
      %v5805 = vpop.f32.mrf.mxu0
      %5806 = vdwg.mxu0
      %v5807 = vadd.f32 %v5499, %v5649
      %v5808 = vadd.f32 %v5500, %v5654
      %v5809 = vadd.f32 %v5501, %v5659
      %v5810 = vadd.f32 %v5502, %v5664
      %v5811 = vadd.f32 %v5503, %v5669
      %v5812 = vadd.f32 %v5504, %v5674
      %v5813 = vadd.f32 %v5505, %v5679
      %v5814 = vadd.f32 %v5506, %v5684
      %v5815 = vadd.f32 %v5507, %v5689
      %v5816 = vadd.f32 %v5508, %v5694
      %v5817 = vadd.f32 %v5509, %v5699
      %v5818 = vadd.f32 %v5510, %v5704
      %v5819 = vadd.f32 %v5511, %v5709
      %v5820 = vadd.f32 %v5512, %v5714
      %v5821 = vadd.f32 %v5513, %v5719
      %v5822 = vadd.f32 %v5514, %v5724
      %v5823 = vadd.f32 %v5515, %v5729
      %v5824 = vadd.f32 %v5516, %v5734
      %v5825 = vadd.f32 %v5517, %v5739
      %v5826 = vadd.f32 %v5518, %v5744
      %v5827 = vadd.f32 %v5519, %v5749
      %v5828 = vadd.f32 %v5520, %v5754
      %v5829 = vadd.f32 %v5521, %v5759
      %v5830 = vadd.f32 %v5522, %v5764
      %v5831 = vadd.f32 %v5523, %v5769
      %v5832 = vadd.f32 %v5524, %v5774
      %v5833 = vadd.f32 %v5525, %v5779
      %v5834 = vadd.f32 %v5526, %v5784
      %v5835 = vadd.f32 %v5527, %v5789
      %v5836 = vadd.f32 %v5528, %v5794
      %v5837 = vadd.f32 %v5529, %v5799
      %v5838 = vadd.f32 %v5530, %v5804
      %s5839 = sadd.s32 %s4671, 24
      %s5840 = scalar_lea.vmem [#allocation2], %s5839
      %v5841 = vld [vmem:[%s5840] sm:$0xff]
      %v5842 = vld [vmem:[%s5840 + $0x8] sm:$0xff]
      %v5843 = vld [vmem:[%s5840 + $0x10] sm:$0xff]
      %v5844 = vld [vmem:[%s5840 + $0x18] sm:$0xff]
      %v5845 = vld [vmem:[%s5840 + $0x20] sm:$0xff]
      %v5846 = vld [vmem:[%s5840 + $0x28] sm:$0xff]
      %v5847 = vld [vmem:[%s5840 + $0x30] sm:$0xff]
      %v5848 = vld [vmem:[%s5840 + $0x38] sm:$0xff]
      %v5849 = vld [vmem:[%s5840 + $0x40] sm:$0xff]
      %v5850 = vld [vmem:[%s5840 + $0x48] sm:$0xff]
      %v5851 = vld [vmem:[%s5840 + $0x50] sm:$0xff]
      %v5852 = vld [vmem:[%s5840 + $0x58] sm:$0xff]
      %v5853 = vld [vmem:[%s5840 + $0x60] sm:$0xff]
      %v5854 = vld [vmem:[%s5840 + $0x68] sm:$0xff]
      %v5855 = vld [vmem:[%s5840 + $0x70] sm:$0xff]
      %v5856 = vld [vmem:[%s5840 + $0x78] sm:$0xff]
      %v5857 = vld [vmem:[%s5840 + $0x80] sm:$0xff]
      %v5858 = vld [vmem:[%s5840 + $0x88] sm:$0xff]
      %v5859 = vld [vmem:[%s5840 + $0x90] sm:$0xff]
      %v5860 = vld [vmem:[%s5840 + $0x98] sm:$0xff]
      %v5861 = vld [vmem:[%s5840 + $0xa0] sm:$0xff]
      %v5862 = vld [vmem:[%s5840 + $0xa8] sm:$0xff]
      %v5863 = vld [vmem:[%s5840 + $0xb0] sm:$0xff]
      %v5864 = vld [vmem:[%s5840 + $0xb8] sm:$0xff]
      %v5865 = vld [vmem:[%s5840 + $0xc0] sm:$0xff]
      %v5866 = vld [vmem:[%s5840 + $0xc8] sm:$0xff]
      %v5867 = vld [vmem:[%s5840 + $0xd0] sm:$0xff]
      %v5868 = vld [vmem:[%s5840 + $0xd8] sm:$0xff]
      %v5869 = vld [vmem:[%s5840 + $0xe0] sm:$0xff]
      %v5870 = vld [vmem:[%s5840 + $0xe8] sm:$0xff]
      %v5871 = vld [vmem:[%s5840 + $0xf0] sm:$0xff]
      %v5872 = vld [vmem:[%s5840 + $0xf8] sm:$0xff]
      %s5873 = scalar_lea.vmem [#allocation8], 512
      %v5874 = vld [vmem:[%s5873] sm:$0xff]
      %v5875 = vld [vmem:[%s5873 + $0x8] sm:$0xff]
      %v5876 = vld [vmem:[%s5873 + $0x10] sm:$0xff]
      %v5877 = vld [vmem:[%s5873 + $0x18] sm:$0xff]
      %v5878 = vld [vmem:[%s5873 + $0x20] sm:$0xff]
      %v5879 = vld [vmem:[%s5873 + $0x28] sm:$0xff]
      %v5880 = vld [vmem:[%s5873 + $0x30] sm:$0xff]
      %v5881 = vld [vmem:[%s5873 + $0x38] sm:$0xff]
      %v5882 = vld [vmem:[%s5873 + $0x40] sm:$0xff]
      %v5883 = vld [vmem:[%s5873 + $0x48] sm:$0xff]
      %v5884 = vld [vmem:[%s5873 + $0x50] sm:$0xff]
      %v5885 = vld [vmem:[%s5873 + $0x58] sm:$0xff]
      %v5886 = vld [vmem:[%s5873 + $0x60] sm:$0xff]
      %v5887 = vld [vmem:[%s5873 + $0x68] sm:$0xff]
      %v5888 = vld [vmem:[%s5873 + $0x70] sm:$0xff]
      %v5889 = vld [vmem:[%s5873 + $0x78] sm:$0xff]
      %5890 = vmatprep.subr.mxu0 0.0
      %5891 = vmatpush1.msra.mxu0 %v5889
      %5892 = vmatprep.subr.mxu0 0.0
      %5893 = vmatpush1.msra.mxu0 %v5888
      %5894 = vmatprep.subr.mxu0 0.0
      %5895 = vmatpush1.msra.mxu0 %v5887
      %5896 = vmatprep.subr.mxu0 0.0
      %5897 = vmatpush1.msra.mxu0 %v5886
      %5898 = vmatprep.subr.mxu0 0.0
      %5899 = vmatpush1.msra.mxu0 %v5885
      %5900 = vmatprep.subr.mxu0 0.0
      %5901 = vmatpush1.msra.mxu0 %v5884
      %5902 = vmatprep.subr.mxu0 0.0
      %5903 = vmatpush1.msra.mxu0 %v5883
      %5904 = vmatprep.subr.mxu0 0.0
      %5905 = vmatpush1.msra.mxu0 %v5882
      %5906 = vmatprep.subr.mxu0 0.0
      %5907 = vmatpush1.msra.mxu0 %v5881
      %5908 = vmatprep.subr.mxu0 0.0
      %5909 = vmatpush1.msra.mxu0 %v5880
      %5910 = vmatprep.subr.mxu0 0.0
      %5911 = vmatpush1.msra.mxu0 %v5879
      %5912 = vmatprep.subr.mxu0 0.0
      %5913 = vmatpush1.msra.mxu0 %v5878
      %5914 = vmatprep.subr.mxu0 0.0
      %5915 = vmatpush1.msra.mxu0 %v5877
      %5916 = vmatprep.subr.mxu0 0.0
      %5917 = vmatpush1.msra.mxu0 %v5876
      %5918 = vmatprep.subr.mxu0 0.0
      %5919 = vmatpush1.msra.mxu0 %v5875
      %5920 = vmatprep.subr.mxu0 0.0
      %5921 = vmatpush1.msra.mxu0 %v5874
      %5922 = vmatprep.subr.mxu0 0.0
      %5923 = vmatpush2.msra.mxu0 0.0
      %5924 = vmatprep.subr.mxu0 0.0
      %5925 = vmatpush2.msra.mxu0 0.0
      %5926 = vmatprep.subr.mxu0 0.0
      %5927 = vmatpush2.msra.mxu0 0.0
      %5928 = vmatprep.subr.mxu0 0.0
      %5929 = vmatpush2.msra.mxu0 0.0
      %5930 = vmatprep.subr.mxu0 0.0
      %5931 = vmatpush2.msra.mxu0 0.0
      %5932 = vmatprep.subr.mxu0 0.0
      %5933 = vmatpush2.msra.mxu0 0.0
      %5934 = vmatprep.subr.mxu0 0.0
      %5935 = vmatpush2.msra.mxu0 0.0
      %5936 = vmatprep.subr.mxu0 0.0
      %5937 = vmatpush2.msra.mxu0 0.0
      %5938 = vmatprep.subr.mxu0 0.0
      %5939 = vmatpush2.msra.mxu0 0.0
      %5940 = vmatprep.subr.mxu0 0.0
      %5941 = vmatpush2.msra.mxu0 0.0
      %5942 = vmatprep.subr.mxu0 0.0
      %5943 = vmatpush2.msra.mxu0 0.0
      %5944 = vmatprep.subr.mxu0 0.0
      %5945 = vmatpush2.msra.mxu0 0.0
      %5946 = vmatprep.subr.mxu0 0.0
      %5947 = vmatpush2.msra.mxu0 0.0
      %5948 = vmatprep.subr.mxu0 0.0
      %5949 = vmatpush2.msra.mxu0 0.0
      %5950 = vmatprep.subr.mxu0 0.0
      %5951 = vmatpush2.msra.mxu0 0.0
      %5952 = vmatprep.subr.mxu0 0.0
      %5953 = vmatpush2.msra.mxu0 0.0
      %5954 = vmatprep.mubr.f32.mxu0 0.0
      %5955 = vmatmul.mubr.f32.gmra.mxu0 %v5841
      %v5956 = vpop.f32.mrf.mxu0
      %v5957 = vadd.f32 0.0, %v5956
      %v5958 = vpop.f32.mrf.mxu0
      %5959 = vmatprep.mubr.f32.mxu0 0.0
      %5960 = vmatmul.mubr.f32.gmra.mxu0 %v5842
      %v5961 = vpop.f32.mrf.mxu0
      %v5962 = vadd.f32 0.0, %v5961
      %v5963 = vpop.f32.mrf.mxu0
      %5964 = vmatprep.mubr.f32.mxu0 0.0
      %5965 = vmatmul.mubr.f32.gmra.mxu0 %v5843
      %v5966 = vpop.f32.mrf.mxu0
      %v5967 = vadd.f32 0.0, %v5966
      %v5968 = vpop.f32.mrf.mxu0
      %5969 = vmatprep.mubr.f32.mxu0 0.0
      %5970 = vmatmul.mubr.f32.gmra.mxu0 %v5844
      %v5971 = vpop.f32.mrf.mxu0
      %v5972 = vadd.f32 0.0, %v5971
      %v5973 = vpop.f32.mrf.mxu0
      %5974 = vmatprep.mubr.f32.mxu0 0.0
      %5975 = vmatmul.mubr.f32.gmra.mxu0 %v5845
      %v5976 = vpop.f32.mrf.mxu0
      %v5977 = vadd.f32 0.0, %v5976
      %v5978 = vpop.f32.mrf.mxu0
      %5979 = vmatprep.mubr.f32.mxu0 0.0
      %5980 = vmatmul.mubr.f32.gmra.mxu0 %v5846
      %v5981 = vpop.f32.mrf.mxu0
      %v5982 = vadd.f32 0.0, %v5981
      %v5983 = vpop.f32.mrf.mxu0
      %5984 = vmatprep.mubr.f32.mxu0 0.0
      %5985 = vmatmul.mubr.f32.gmra.mxu0 %v5847
      %v5986 = vpop.f32.mrf.mxu0
      %v5987 = vadd.f32 0.0, %v5986
      %v5988 = vpop.f32.mrf.mxu0
      %5989 = vmatprep.mubr.f32.mxu0 0.0
      %5990 = vmatmul.mubr.f32.gmra.mxu0 %v5848
      %v5991 = vpop.f32.mrf.mxu0
      %v5992 = vadd.f32 0.0, %v5991
      %v5993 = vpop.f32.mrf.mxu0
      %5994 = vmatprep.mubr.f32.mxu0 0.0
      %5995 = vmatmul.mubr.f32.gmra.mxu0 %v5849
      %v5996 = vpop.f32.mrf.mxu0
      %v5997 = vadd.f32 0.0, %v5996
      %v5998 = vpop.f32.mrf.mxu0
      %5999 = vmatprep.mubr.f32.mxu0 0.0
      %6000 = vmatmul.mubr.f32.gmra.mxu0 %v5850
      %v6001 = vpop.f32.mrf.mxu0
      %v6002 = vadd.f32 0.0, %v6001
      %v6003 = vpop.f32.mrf.mxu0
      %6004 = vmatprep.mubr.f32.mxu0 0.0
      %6005 = vmatmul.mubr.f32.gmra.mxu0 %v5851
      %v6006 = vpop.f32.mrf.mxu0
      %v6007 = vadd.f32 0.0, %v6006
      %v6008 = vpop.f32.mrf.mxu0
      %6009 = vmatprep.mubr.f32.mxu0 0.0
      %6010 = vmatmul.mubr.f32.gmra.mxu0 %v5852
      %v6011 = vpop.f32.mrf.mxu0
      %v6012 = vadd.f32 0.0, %v6011
      %v6013 = vpop.f32.mrf.mxu0
      %6014 = vmatprep.mubr.f32.mxu0 0.0
      %6015 = vmatmul.mubr.f32.gmra.mxu0 %v5853
      %v6016 = vpop.f32.mrf.mxu0
      %v6017 = vadd.f32 0.0, %v6016
      %v6018 = vpop.f32.mrf.mxu0
      %6019 = vmatprep.mubr.f32.mxu0 0.0
      %6020 = vmatmul.mubr.f32.gmra.mxu0 %v5854
      %v6021 = vpop.f32.mrf.mxu0
      %v6022 = vadd.f32 0.0, %v6021
      %v6023 = vpop.f32.mrf.mxu0
      %6024 = vmatprep.mubr.f32.mxu0 0.0
      %6025 = vmatmul.mubr.f32.gmra.mxu0 %v5855
      %v6026 = vpop.f32.mrf.mxu0
      %v6027 = vadd.f32 0.0, %v6026
      %v6028 = vpop.f32.mrf.mxu0
      %6029 = vmatprep.mubr.f32.mxu0 0.0
      %6030 = vmatmul.mubr.f32.gmra.mxu0 %v5856
      %v6031 = vpop.f32.mrf.mxu0
      %v6032 = vadd.f32 0.0, %v6031
      %v6033 = vpop.f32.mrf.mxu0
      %6034 = vmatprep.mubr.f32.mxu0 0.0
      %6035 = vmatmul.mubr.f32.gmra.mxu0 %v5857
      %v6036 = vpop.f32.mrf.mxu0
      %v6037 = vadd.f32 0.0, %v6036
      %v6038 = vpop.f32.mrf.mxu0
      %6039 = vmatprep.mubr.f32.mxu0 0.0
      %6040 = vmatmul.mubr.f32.gmra.mxu0 %v5858
      %v6041 = vpop.f32.mrf.mxu0
      %v6042 = vadd.f32 0.0, %v6041
      %v6043 = vpop.f32.mrf.mxu0
      %6044 = vmatprep.mubr.f32.mxu0 0.0
      %6045 = vmatmul.mubr.f32.gmra.mxu0 %v5859
      %v6046 = vpop.f32.mrf.mxu0
      %v6047 = vadd.f32 0.0, %v6046
      %v6048 = vpop.f32.mrf.mxu0
      %6049 = vmatprep.mubr.f32.mxu0 0.0
      %6050 = vmatmul.mubr.f32.gmra.mxu0 %v5860
      %v6051 = vpop.f32.mrf.mxu0
      %v6052 = vadd.f32 0.0, %v6051
      %v6053 = vpop.f32.mrf.mxu0
      %6054 = vmatprep.mubr.f32.mxu0 0.0
      %6055 = vmatmul.mubr.f32.gmra.mxu0 %v5861
      %v6056 = vpop.f32.mrf.mxu0
      %v6057 = vadd.f32 0.0, %v6056
      %v6058 = vpop.f32.mrf.mxu0
      %6059 = vmatprep.mubr.f32.mxu0 0.0
      %6060 = vmatmul.mubr.f32.gmra.mxu0 %v5862
      %v6061 = vpop.f32.mrf.mxu0
      %v6062 = vadd.f32 0.0, %v6061
      %v6063 = vpop.f32.mrf.mxu0
      %6064 = vmatprep.mubr.f32.mxu0 0.0
      %6065 = vmatmul.mubr.f32.gmra.mxu0 %v5863
      %v6066 = vpop.f32.mrf.mxu0
      %v6067 = vadd.f32 0.0, %v6066
      %v6068 = vpop.f32.mrf.mxu0
      %6069 = vmatprep.mubr.f32.mxu0 0.0
      %6070 = vmatmul.mubr.f32.gmra.mxu0 %v5864
      %v6071 = vpop.f32.mrf.mxu0
      %v6072 = vadd.f32 0.0, %v6071
      %v6073 = vpop.f32.mrf.mxu0
      %6074 = vmatprep.mubr.f32.mxu0 0.0
      %6075 = vmatmul.mubr.f32.gmra.mxu0 %v5865
      %v6076 = vpop.f32.mrf.mxu0
      %v6077 = vadd.f32 0.0, %v6076
      %v6078 = vpop.f32.mrf.mxu0
      %6079 = vmatprep.mubr.f32.mxu0 0.0
      %6080 = vmatmul.mubr.f32.gmra.mxu0 %v5866
      %v6081 = vpop.f32.mrf.mxu0
      %v6082 = vadd.f32 0.0, %v6081
      %v6083 = vpop.f32.mrf.mxu0
      %6084 = vmatprep.mubr.f32.mxu0 0.0
      %6085 = vmatmul.mubr.f32.gmra.mxu0 %v5867
      %v6086 = vpop.f32.mrf.mxu0
      %v6087 = vadd.f32 0.0, %v6086
      %v6088 = vpop.f32.mrf.mxu0
      %6089 = vmatprep.mubr.f32.mxu0 0.0
      %6090 = vmatmul.mubr.f32.gmra.mxu0 %v5868
      %v6091 = vpop.f32.mrf.mxu0
      %v6092 = vadd.f32 0.0, %v6091
      %v6093 = vpop.f32.mrf.mxu0
      %6094 = vmatprep.mubr.f32.mxu0 0.0
      %6095 = vmatmul.mubr.f32.gmra.mxu0 %v5869
      %v6096 = vpop.f32.mrf.mxu0
      %v6097 = vadd.f32 0.0, %v6096
      %v6098 = vpop.f32.mrf.mxu0
      %6099 = vmatprep.mubr.f32.mxu0 0.0
      %6100 = vmatmul.mubr.f32.gmra.mxu0 %v5870
      %v6101 = vpop.f32.mrf.mxu0
      %v6102 = vadd.f32 0.0, %v6101
      %v6103 = vpop.f32.mrf.mxu0
      %6104 = vmatprep.mubr.f32.mxu0 0.0
      %6105 = vmatmul.mubr.f32.gmra.mxu0 %v5871
      %v6106 = vpop.f32.mrf.mxu0
      %v6107 = vadd.f32 0.0, %v6106
      %v6108 = vpop.f32.mrf.mxu0
      %6109 = vmatprep.mubr.f32.mxu0 0.0
      %6110 = vmatmul.mubr.f32.gmra.mxu0 %v5872
      %v6111 = vpop.f32.mrf.mxu0
      %v6112 = vadd.f32 0.0, %v6111
      %v6113 = vpop.f32.mrf.mxu0
      %6114 = vdwg.mxu0
      %v6115 = vadd.f32 %v5807, %v5957
      %v6116 = vadd.f32 %v5808, %v5962
      %v6117 = vadd.f32 %v5809, %v5967
      %v6118 = vadd.f32 %v5810, %v5972
      %v6119 = vadd.f32 %v5811, %v5977
      %v6120 = vadd.f32 %v5812, %v5982
      %v6121 = vadd.f32 %v5813, %v5987
      %v6122 = vadd.f32 %v5814, %v5992
      %v6123 = vadd.f32 %v5815, %v5997
      %v6124 = vadd.f32 %v5816, %v6002
      %v6125 = vadd.f32 %v5817, %v6007
      %v6126 = vadd.f32 %v5818, %v6012
      %v6127 = vadd.f32 %v5819, %v6017
      %v6128 = vadd.f32 %v5820, %v6022
      %v6129 = vadd.f32 %v5821, %v6027
      %v6130 = vadd.f32 %v5822, %v6032
      %v6131 = vadd.f32 %v5823, %v6037
      %v6132 = vadd.f32 %v5824, %v6042
      %v6133 = vadd.f32 %v5825, %v6047
      %v6134 = vadd.f32 %v5826, %v6052
      %v6135 = vadd.f32 %v5827, %v6057
      %v6136 = vadd.f32 %v5828, %v6062
      %v6137 = vadd.f32 %v5829, %v6067
      %v6138 = vadd.f32 %v5830, %v6072
      %v6139 = vadd.f32 %v5831, %v6077
      %v6140 = vadd.f32 %v5832, %v6082
      %v6141 = vadd.f32 %v5833, %v6087
      %v6142 = vadd.f32 %v5834, %v6092
      %v6143 = vadd.f32 %v5835, %v6097
      %v6144 = vadd.f32 %v5836, %v6102
      %v6145 = vadd.f32 %v5837, %v6107
      %v6146 = vadd.f32 %v5838, %v6112
      %s6147 = sadd.s32 %s4671, 25
      %s6148 = scalar_lea.vmem [#allocation2], %s6147
      %v6149 = vld [vmem:[%s6148] sm:$0xff]
      %v6150 = vld [vmem:[%s6148 + $0x8] sm:$0xff]
      %v6151 = vld [vmem:[%s6148 + $0x10] sm:$0xff]
      %v6152 = vld [vmem:[%s6148 + $0x18] sm:$0xff]
      %v6153 = vld [vmem:[%s6148 + $0x20] sm:$0xff]
      %v6154 = vld [vmem:[%s6148 + $0x28] sm:$0xff]
      %v6155 = vld [vmem:[%s6148 + $0x30] sm:$0xff]
      %v6156 = vld [vmem:[%s6148 + $0x38] sm:$0xff]
      %v6157 = vld [vmem:[%s6148 + $0x40] sm:$0xff]
      %v6158 = vld [vmem:[%s6148 + $0x48] sm:$0xff]
      %v6159 = vld [vmem:[%s6148 + $0x50] sm:$0xff]
      %v6160 = vld [vmem:[%s6148 + $0x58] sm:$0xff]
      %v6161 = vld [vmem:[%s6148 + $0x60] sm:$0xff]
      %v6162 = vld [vmem:[%s6148 + $0x68] sm:$0xff]
      %v6163 = vld [vmem:[%s6148 + $0x70] sm:$0xff]
      %v6164 = vld [vmem:[%s6148 + $0x78] sm:$0xff]
      %v6165 = vld [vmem:[%s6148 + $0x80] sm:$0xff]
      %v6166 = vld [vmem:[%s6148 + $0x88] sm:$0xff]
      %v6167 = vld [vmem:[%s6148 + $0x90] sm:$0xff]
      %v6168 = vld [vmem:[%s6148 + $0x98] sm:$0xff]
      %v6169 = vld [vmem:[%s6148 + $0xa0] sm:$0xff]
      %v6170 = vld [vmem:[%s6148 + $0xa8] sm:$0xff]
      %v6171 = vld [vmem:[%s6148 + $0xb0] sm:$0xff]
      %v6172 = vld [vmem:[%s6148 + $0xb8] sm:$0xff]
      %v6173 = vld [vmem:[%s6148 + $0xc0] sm:$0xff]
      %v6174 = vld [vmem:[%s6148 + $0xc8] sm:$0xff]
      %v6175 = vld [vmem:[%s6148 + $0xd0] sm:$0xff]
      %v6176 = vld [vmem:[%s6148 + $0xd8] sm:$0xff]
      %v6177 = vld [vmem:[%s6148 + $0xe0] sm:$0xff]
      %v6178 = vld [vmem:[%s6148 + $0xe8] sm:$0xff]
      %v6179 = vld [vmem:[%s6148 + $0xf0] sm:$0xff]
      %v6180 = vld [vmem:[%s6148 + $0xf8] sm:$0xff]
      %s6181 = scalar_lea.vmem [#allocation8], 640
      %v6182 = vld [vmem:[%s6181] sm:$0xff]
      %v6183 = vld [vmem:[%s6181 + $0x8] sm:$0xff]
      %v6184 = vld [vmem:[%s6181 + $0x10] sm:$0xff]
      %v6185 = vld [vmem:[%s6181 + $0x18] sm:$0xff]
      %v6186 = vld [vmem:[%s6181 + $0x20] sm:$0xff]
      %v6187 = vld [vmem:[%s6181 + $0x28] sm:$0xff]
      %v6188 = vld [vmem:[%s6181 + $0x30] sm:$0xff]
      %v6189 = vld [vmem:[%s6181 + $0x38] sm:$0xff]
      %v6190 = vld [vmem:[%s6181 + $0x40] sm:$0xff]
      %v6191 = vld [vmem:[%s6181 + $0x48] sm:$0xff]
      %v6192 = vld [vmem:[%s6181 + $0x50] sm:$0xff]
      %v6193 = vld [vmem:[%s6181 + $0x58] sm:$0xff]
      %v6194 = vld [vmem:[%s6181 + $0x60] sm:$0xff]
      %v6195 = vld [vmem:[%s6181 + $0x68] sm:$0xff]
      %v6196 = vld [vmem:[%s6181 + $0x70] sm:$0xff]
      %v6197 = vld [vmem:[%s6181 + $0x78] sm:$0xff]
      %6198 = vmatprep.subr.mxu0 0.0
      %6199 = vmatpush1.msra.mxu0 %v6197
      %6200 = vmatprep.subr.mxu0 0.0
      %6201 = vmatpush1.msra.mxu0 %v6196
      %6202 = vmatprep.subr.mxu0 0.0
      %6203 = vmatpush1.msra.mxu0 %v6195
      %6204 = vmatprep.subr.mxu0 0.0
      %6205 = vmatpush1.msra.mxu0 %v6194
      %6206 = vmatprep.subr.mxu0 0.0
      %6207 = vmatpush1.msra.mxu0 %v6193
      %6208 = vmatprep.subr.mxu0 0.0
      %6209 = vmatpush1.msra.mxu0 %v6192
      %6210 = vmatprep.subr.mxu0 0.0
      %6211 = vmatpush1.msra.mxu0 %v6191
      %6212 = vmatprep.subr.mxu0 0.0
      %6213 = vmatpush1.msra.mxu0 %v6190
      %6214 = vmatprep.subr.mxu0 0.0
      %6215 = vmatpush1.msra.mxu0 %v6189
      %6216 = vmatprep.subr.mxu0 0.0
      %6217 = vmatpush1.msra.mxu0 %v6188
      %6218 = vmatprep.subr.mxu0 0.0
      %6219 = vmatpush1.msra.mxu0 %v6187
      %6220 = vmatprep.subr.mxu0 0.0
      %6221 = vmatpush1.msra.mxu0 %v6186
      %6222 = vmatprep.subr.mxu0 0.0
      %6223 = vmatpush1.msra.mxu0 %v6185
      %6224 = vmatprep.subr.mxu0 0.0
      %6225 = vmatpush1.msra.mxu0 %v6184
      %6226 = vmatprep.subr.mxu0 0.0
      %6227 = vmatpush1.msra.mxu0 %v6183
      %6228 = vmatprep.subr.mxu0 0.0
      %6229 = vmatpush1.msra.mxu0 %v6182
      %6230 = vmatprep.subr.mxu0 0.0
      %6231 = vmatpush2.msra.mxu0 0.0
      %6232 = vmatprep.subr.mxu0 0.0
      %6233 = vmatpush2.msra.mxu0 0.0
      %6234 = vmatprep.subr.mxu0 0.0
      %6235 = vmatpush2.msra.mxu0 0.0
      %6236 = vmatprep.subr.mxu0 0.0
      %6237 = vmatpush2.msra.mxu0 0.0
      %6238 = vmatprep.subr.mxu0 0.0
      %6239 = vmatpush2.msra.mxu0 0.0
      %6240 = vmatprep.subr.mxu0 0.0
      %6241 = vmatpush2.msra.mxu0 0.0
      %6242 = vmatprep.subr.mxu0 0.0
      %6243 = vmatpush2.msra.mxu0 0.0
      %6244 = vmatprep.subr.mxu0 0.0
      %6245 = vmatpush2.msra.mxu0 0.0
      %6246 = vmatprep.subr.mxu0 0.0
      %6247 = vmatpush2.msra.mxu0 0.0
      %6248 = vmatprep.subr.mxu0 0.0
      %6249 = vmatpush2.msra.mxu0 0.0
      %6250 = vmatprep.subr.mxu0 0.0
      %6251 = vmatpush2.msra.mxu0 0.0
      %6252 = vmatprep.subr.mxu0 0.0
      %6253 = vmatpush2.msra.mxu0 0.0
      %6254 = vmatprep.subr.mxu0 0.0
      %6255 = vmatpush2.msra.mxu0 0.0
      %6256 = vmatprep.subr.mxu0 0.0
      %6257 = vmatpush2.msra.mxu0 0.0
      %6258 = vmatprep.subr.mxu0 0.0
      %6259 = vmatpush2.msra.mxu0 0.0
      %6260 = vmatprep.subr.mxu0 0.0
      %6261 = vmatpush2.msra.mxu0 0.0
      %6262 = vmatprep.mubr.f32.mxu0 0.0
      %6263 = vmatmul.mubr.f32.gmra.mxu0 %v6149
      %v6264 = vpop.f32.mrf.mxu0
      %v6265 = vadd.f32 0.0, %v6264
      %v6266 = vpop.f32.mrf.mxu0
      %6267 = vmatprep.mubr.f32.mxu0 0.0
      %6268 = vmatmul.mubr.f32.gmra.mxu0 %v6150
      %v6269 = vpop.f32.mrf.mxu0
      %v6270 = vadd.f32 0.0, %v6269
      %v6271 = vpop.f32.mrf.mxu0
      %6272 = vmatprep.mubr.f32.mxu0 0.0
      %6273 = vmatmul.mubr.f32.gmra.mxu0 %v6151
      %v6274 = vpop.f32.mrf.mxu0
      %v6275 = vadd.f32 0.0, %v6274
      %v6276 = vpop.f32.mrf.mxu0
      %6277 = vmatprep.mubr.f32.mxu0 0.0
      %6278 = vmatmul.mubr.f32.gmra.mxu0 %v6152
      %v6279 = vpop.f32.mrf.mxu0
      %v6280 = vadd.f32 0.0, %v6279
      %v6281 = vpop.f32.mrf.mxu0
      %6282 = vmatprep.mubr.f32.mxu0 0.0
      %6283 = vmatmul.mubr.f32.gmra.mxu0 %v6153
      %v6284 = vpop.f32.mrf.mxu0
      %v6285 = vadd.f32 0.0, %v6284
      %v6286 = vpop.f32.mrf.mxu0
      %6287 = vmatprep.mubr.f32.mxu0 0.0
      %6288 = vmatmul.mubr.f32.gmra.mxu0 %v6154
      %v6289 = vpop.f32.mrf.mxu0
      %v6290 = vadd.f32 0.0, %v6289
      %v6291 = vpop.f32.mrf.mxu0
      %6292 = vmatprep.mubr.f32.mxu0 0.0
      %6293 = vmatmul.mubr.f32.gmra.mxu0 %v6155
      %v6294 = vpop.f32.mrf.mxu0
      %v6295 = vadd.f32 0.0, %v6294
      %v6296 = vpop.f32.mrf.mxu0
      %6297 = vmatprep.mubr.f32.mxu0 0.0
      %6298 = vmatmul.mubr.f32.gmra.mxu0 %v6156
      %v6299 = vpop.f32.mrf.mxu0
      %v6300 = vadd.f32 0.0, %v6299
      %v6301 = vpop.f32.mrf.mxu0
      %6302 = vmatprep.mubr.f32.mxu0 0.0
      %6303 = vmatmul.mubr.f32.gmra.mxu0 %v6157
      %v6304 = vpop.f32.mrf.mxu0
      %v6305 = vadd.f32 0.0, %v6304
      %v6306 = vpop.f32.mrf.mxu0
      %6307 = vmatprep.mubr.f32.mxu0 0.0
      %6308 = vmatmul.mubr.f32.gmra.mxu0 %v6158
      %v6309 = vpop.f32.mrf.mxu0
      %v6310 = vadd.f32 0.0, %v6309
      %v6311 = vpop.f32.mrf.mxu0
      %6312 = vmatprep.mubr.f32.mxu0 0.0
      %6313 = vmatmul.mubr.f32.gmra.mxu0 %v6159
      %v6314 = vpop.f32.mrf.mxu0
      %v6315 = vadd.f32 0.0, %v6314
      %v6316 = vpop.f32.mrf.mxu0
      %6317 = vmatprep.mubr.f32.mxu0 0.0
      %6318 = vmatmul.mubr.f32.gmra.mxu0 %v6160
      %v6319 = vpop.f32.mrf.mxu0
      %v6320 = vadd.f32 0.0, %v6319
      %v6321 = vpop.f32.mrf.mxu0
      %6322 = vmatprep.mubr.f32.mxu0 0.0
      %6323 = vmatmul.mubr.f32.gmra.mxu0 %v6161
      %v6324 = vpop.f32.mrf.mxu0
      %v6325 = vadd.f32 0.0, %v6324
      %v6326 = vpop.f32.mrf.mxu0
      %6327 = vmatprep.mubr.f32.mxu0 0.0
      %6328 = vmatmul.mubr.f32.gmra.mxu0 %v6162
      %v6329 = vpop.f32.mrf.mxu0
      %v6330 = vadd.f32 0.0, %v6329
      %v6331 = vpop.f32.mrf.mxu0
      %6332 = vmatprep.mubr.f32.mxu0 0.0
      %6333 = vmatmul.mubr.f32.gmra.mxu0 %v6163
      %v6334 = vpop.f32.mrf.mxu0
      %v6335 = vadd.f32 0.0, %v6334
      %v6336 = vpop.f32.mrf.mxu0
      %6337 = vmatprep.mubr.f32.mxu0 0.0
      %6338 = vmatmul.mubr.f32.gmra.mxu0 %v6164
      %v6339 = vpop.f32.mrf.mxu0
      %v6340 = vadd.f32 0.0, %v6339
      %v6341 = vpop.f32.mrf.mxu0
      %6342 = vmatprep.mubr.f32.mxu0 0.0
      %6343 = vmatmul.mubr.f32.gmra.mxu0 %v6165
      %v6344 = vpop.f32.mrf.mxu0
      %v6345 = vadd.f32 0.0, %v6344
      %v6346 = vpop.f32.mrf.mxu0
      %6347 = vmatprep.mubr.f32.mxu0 0.0
      %6348 = vmatmul.mubr.f32.gmra.mxu0 %v6166
      %v6349 = vpop.f32.mrf.mxu0
      %v6350 = vadd.f32 0.0, %v6349
      %v6351 = vpop.f32.mrf.mxu0
      %6352 = vmatprep.mubr.f32.mxu0 0.0
      %6353 = vmatmul.mubr.f32.gmra.mxu0 %v6167
      %v6354 = vpop.f32.mrf.mxu0
      %v6355 = vadd.f32 0.0, %v6354
      %v6356 = vpop.f32.mrf.mxu0
      %6357 = vmatprep.mubr.f32.mxu0 0.0
      %6358 = vmatmul.mubr.f32.gmra.mxu0 %v6168
      %v6359 = vpop.f32.mrf.mxu0
      %v6360 = vadd.f32 0.0, %v6359
      %v6361 = vpop.f32.mrf.mxu0
      %6362 = vmatprep.mubr.f32.mxu0 0.0
      %6363 = vmatmul.mubr.f32.gmra.mxu0 %v6169
      %v6364 = vpop.f32.mrf.mxu0
      %v6365 = vadd.f32 0.0, %v6364
      %v6366 = vpop.f32.mrf.mxu0
      %6367 = vmatprep.mubr.f32.mxu0 0.0
      %6368 = vmatmul.mubr.f32.gmra.mxu0 %v6170
      %v6369 = vpop.f32.mrf.mxu0
      %v6370 = vadd.f32 0.0, %v6369
      %v6371 = vpop.f32.mrf.mxu0
      %6372 = vmatprep.mubr.f32.mxu0 0.0
      %6373 = vmatmul.mubr.f32.gmra.mxu0 %v6171
      %v6374 = vpop.f32.mrf.mxu0
      %v6375 = vadd.f32 0.0, %v6374
      %v6376 = vpop.f32.mrf.mxu0
      %6377 = vmatprep.mubr.f32.mxu0 0.0
      %6378 = vmatmul.mubr.f32.gmra.mxu0 %v6172
      %v6379 = vpop.f32.mrf.mxu0
      %v6380 = vadd.f32 0.0, %v6379
      %v6381 = vpop.f32.mrf.mxu0
      %6382 = vmatprep.mubr.f32.mxu0 0.0
      %6383 = vmatmul.mubr.f32.gmra.mxu0 %v6173
      %v6384 = vpop.f32.mrf.mxu0
      %v6385 = vadd.f32 0.0, %v6384
      %v6386 = vpop.f32.mrf.mxu0
      %6387 = vmatprep.mubr.f32.mxu0 0.0
      %6388 = vmatmul.mubr.f32.gmra.mxu0 %v6174
      %v6389 = vpop.f32.mrf.mxu0
      %v6390 = vadd.f32 0.0, %v6389
      %v6391 = vpop.f32.mrf.mxu0
      %6392 = vmatprep.mubr.f32.mxu0 0.0
      %6393 = vmatmul.mubr.f32.gmra.mxu0 %v6175
      %v6394 = vpop.f32.mrf.mxu0
      %v6395 = vadd.f32 0.0, %v6394
      %v6396 = vpop.f32.mrf.mxu0
      %6397 = vmatprep.mubr.f32.mxu0 0.0
      %6398 = vmatmul.mubr.f32.gmra.mxu0 %v6176
      %v6399 = vpop.f32.mrf.mxu0
      %v6400 = vadd.f32 0.0, %v6399
      %v6401 = vpop.f32.mrf.mxu0
      %6402 = vmatprep.mubr.f32.mxu0 0.0
      %6403 = vmatmul.mubr.f32.gmra.mxu0 %v6177
      %v6404 = vpop.f32.mrf.mxu0
      %v6405 = vadd.f32 0.0, %v6404
      %v6406 = vpop.f32.mrf.mxu0
      %6407 = vmatprep.mubr.f32.mxu0 0.0
      %6408 = vmatmul.mubr.f32.gmra.mxu0 %v6178
      %v6409 = vpop.f32.mrf.mxu0
      %v6410 = vadd.f32 0.0, %v6409
      %v6411 = vpop.f32.mrf.mxu0
      %6412 = vmatprep.mubr.f32.mxu0 0.0
      %6413 = vmatmul.mubr.f32.gmra.mxu0 %v6179
      %v6414 = vpop.f32.mrf.mxu0
      %v6415 = vadd.f32 0.0, %v6414
      %v6416 = vpop.f32.mrf.mxu0
      %6417 = vmatprep.mubr.f32.mxu0 0.0
      %6418 = vmatmul.mubr.f32.gmra.mxu0 %v6180
      %v6419 = vpop.f32.mrf.mxu0
      %v6420 = vadd.f32 0.0, %v6419
      %v6421 = vpop.f32.mrf.mxu0
      %6422 = vdwg.mxu0
      %v6423 = vadd.f32 %v6115, %v6265
      %v6424 = vadd.f32 %v6116, %v6270
      %v6425 = vadd.f32 %v6117, %v6275
      %v6426 = vadd.f32 %v6118, %v6280
      %v6427 = vadd.f32 %v6119, %v6285
      %v6428 = vadd.f32 %v6120, %v6290
      %v6429 = vadd.f32 %v6121, %v6295
      %v6430 = vadd.f32 %v6122, %v6300
      %v6431 = vadd.f32 %v6123, %v6305
      %v6432 = vadd.f32 %v6124, %v6310
      %v6433 = vadd.f32 %v6125, %v6315
      %v6434 = vadd.f32 %v6126, %v6320
      %v6435 = vadd.f32 %v6127, %v6325
      %v6436 = vadd.f32 %v6128, %v6330
      %v6437 = vadd.f32 %v6129, %v6335
      %v6438 = vadd.f32 %v6130, %v6340
      %v6439 = vadd.f32 %v6131, %v6345
      %v6440 = vadd.f32 %v6132, %v6350
      %v6441 = vadd.f32 %v6133, %v6355
      %v6442 = vadd.f32 %v6134, %v6360
      %v6443 = vadd.f32 %v6135, %v6365
      %v6444 = vadd.f32 %v6136, %v6370
      %v6445 = vadd.f32 %v6137, %v6375
      %v6446 = vadd.f32 %v6138, %v6380
      %v6447 = vadd.f32 %v6139, %v6385
      %v6448 = vadd.f32 %v6140, %v6390
      %v6449 = vadd.f32 %v6141, %v6395
      %v6450 = vadd.f32 %v6142, %v6400
      %v6451 = vadd.f32 %v6143, %v6405
      %v6452 = vadd.f32 %v6144, %v6410
      %v6453 = vadd.f32 %v6145, %v6415
      %v6454 = vadd.f32 %v6146, %v6420
      %s6455 = sadd.s32 %s4671, 41
      %s6456 = scalar_lea.vmem [#allocation2], %s6455
      %v6457 = vld [vmem:[%s6456] sm:$0xff]
      %v6458 = vld [vmem:[%s6456 + $0x8] sm:$0xff]
      %v6459 = vld [vmem:[%s6456 + $0x10] sm:$0xff]
      %v6460 = vld [vmem:[%s6456 + $0x18] sm:$0xff]
      %v6461 = vld [vmem:[%s6456 + $0x20] sm:$0xff]
      %v6462 = vld [vmem:[%s6456 + $0x28] sm:$0xff]
      %v6463 = vld [vmem:[%s6456 + $0x30] sm:$0xff]
      %v6464 = vld [vmem:[%s6456 + $0x38] sm:$0xff]
      %v6465 = vld [vmem:[%s6456 + $0x40] sm:$0xff]
      %v6466 = vld [vmem:[%s6456 + $0x48] sm:$0xff]
      %v6467 = vld [vmem:[%s6456 + $0x50] sm:$0xff]
      %v6468 = vld [vmem:[%s6456 + $0x58] sm:$0xff]
      %v6469 = vld [vmem:[%s6456 + $0x60] sm:$0xff]
      %v6470 = vld [vmem:[%s6456 + $0x68] sm:$0xff]
      %v6471 = vld [vmem:[%s6456 + $0x70] sm:$0xff]
      %v6472 = vld [vmem:[%s6456 + $0x78] sm:$0xff]
      %v6473 = vld [vmem:[%s6456 + $0x80] sm:$0xff]
      %v6474 = vld [vmem:[%s6456 + $0x88] sm:$0xff]
      %v6475 = vld [vmem:[%s6456 + $0x90] sm:$0xff]
      %v6476 = vld [vmem:[%s6456 + $0x98] sm:$0xff]
      %v6477 = vld [vmem:[%s6456 + $0xa0] sm:$0xff]
      %v6478 = vld [vmem:[%s6456 + $0xa8] sm:$0xff]
      %v6479 = vld [vmem:[%s6456 + $0xb0] sm:$0xff]
      %v6480 = vld [vmem:[%s6456 + $0xb8] sm:$0xff]
      %v6481 = vld [vmem:[%s6456 + $0xc0] sm:$0xff]
      %v6482 = vld [vmem:[%s6456 + $0xc8] sm:$0xff]
      %v6483 = vld [vmem:[%s6456 + $0xd0] sm:$0xff]
      %v6484 = vld [vmem:[%s6456 + $0xd8] sm:$0xff]
      %v6485 = vld [vmem:[%s6456 + $0xe0] sm:$0xff]
      %v6486 = vld [vmem:[%s6456 + $0xe8] sm:$0xff]
      %v6487 = vld [vmem:[%s6456 + $0xf0] sm:$0xff]
      %v6488 = vld [vmem:[%s6456 + $0xf8] sm:$0xff]
      %s6489 = scalar_lea.vmem [#allocation8], 768
      %v6490 = vld [vmem:[%s6489] sm:$0xff]
      %v6491 = vld [vmem:[%s6489 + $0x8] sm:$0xff]
      %v6492 = vld [vmem:[%s6489 + $0x10] sm:$0xff]
      %v6493 = vld [vmem:[%s6489 + $0x18] sm:$0xff]
      %v6494 = vld [vmem:[%s6489 + $0x20] sm:$0xff]
      %v6495 = vld [vmem:[%s6489 + $0x28] sm:$0xff]
      %v6496 = vld [vmem:[%s6489 + $0x30] sm:$0xff]
      %v6497 = vld [vmem:[%s6489 + $0x38] sm:$0xff]
      %v6498 = vld [vmem:[%s6489 + $0x40] sm:$0xff]
      %v6499 = vld [vmem:[%s6489 + $0x48] sm:$0xff]
      %v6500 = vld [vmem:[%s6489 + $0x50] sm:$0xff]
      %v6501 = vld [vmem:[%s6489 + $0x58] sm:$0xff]
      %v6502 = vld [vmem:[%s6489 + $0x60] sm:$0xff]
      %v6503 = vld [vmem:[%s6489 + $0x68] sm:$0xff]
      %v6504 = vld [vmem:[%s6489 + $0x70] sm:$0xff]
      %v6505 = vld [vmem:[%s6489 + $0x78] sm:$0xff]
      %6506 = vmatprep.subr.mxu0 0.0
      %6507 = vmatpush1.msra.mxu0 %v6505
      %6508 = vmatprep.subr.mxu0 0.0
      %6509 = vmatpush1.msra.mxu0 %v6504
      %6510 = vmatprep.subr.mxu0 0.0
      %6511 = vmatpush1.msra.mxu0 %v6503
      %6512 = vmatprep.subr.mxu0 0.0
      %6513 = vmatpush1.msra.mxu0 %v6502
      %6514 = vmatprep.subr.mxu0 0.0
      %6515 = vmatpush1.msra.mxu0 %v6501
      %6516 = vmatprep.subr.mxu0 0.0
      %6517 = vmatpush1.msra.mxu0 %v6500
      %6518 = vmatprep.subr.mxu0 0.0
      %6519 = vmatpush1.msra.mxu0 %v6499
      %6520 = vmatprep.subr.mxu0 0.0
      %6521 = vmatpush1.msra.mxu0 %v6498
      %6522 = vmatprep.subr.mxu0 0.0
      %6523 = vmatpush1.msra.mxu0 %v6497
      %6524 = vmatprep.subr.mxu0 0.0
      %6525 = vmatpush1.msra.mxu0 %v6496
      %6526 = vmatprep.subr.mxu0 0.0
      %6527 = vmatpush1.msra.mxu0 %v6495
      %6528 = vmatprep.subr.mxu0 0.0
      %6529 = vmatpush1.msra.mxu0 %v6494
      %6530 = vmatprep.subr.mxu0 0.0
      %6531 = vmatpush1.msra.mxu0 %v6493
      %6532 = vmatprep.subr.mxu0 0.0
      %6533 = vmatpush1.msra.mxu0 %v6492
      %6534 = vmatprep.subr.mxu0 0.0
      %6535 = vmatpush1.msra.mxu0 %v6491
      %6536 = vmatprep.subr.mxu0 0.0
      %6537 = vmatpush1.msra.mxu0 %v6490
      %6538 = vmatprep.subr.mxu0 0.0
      %6539 = vmatpush2.msra.mxu0 0.0
      %6540 = vmatprep.subr.mxu0 0.0
      %6541 = vmatpush2.msra.mxu0 0.0
      %6542 = vmatprep.subr.mxu0 0.0
      %6543 = vmatpush2.msra.mxu0 0.0
      %6544 = vmatprep.subr.mxu0 0.0
      %6545 = vmatpush2.msra.mxu0 0.0
      %6546 = vmatprep.subr.mxu0 0.0
      %6547 = vmatpush2.msra.mxu0 0.0
      %6548 = vmatprep.subr.mxu0 0.0
      %6549 = vmatpush2.msra.mxu0 0.0
      %6550 = vmatprep.subr.mxu0 0.0
      %6551 = vmatpush2.msra.mxu0 0.0
      %6552 = vmatprep.subr.mxu0 0.0
      %6553 = vmatpush2.msra.mxu0 0.0
      %6554 = vmatprep.subr.mxu0 0.0
      %6555 = vmatpush2.msra.mxu0 0.0
      %6556 = vmatprep.subr.mxu0 0.0
      %6557 = vmatpush2.msra.mxu0 0.0
      %6558 = vmatprep.subr.mxu0 0.0
      %6559 = vmatpush2.msra.mxu0 0.0
      %6560 = vmatprep.subr.mxu0 0.0
      %6561 = vmatpush2.msra.mxu0 0.0
      %6562 = vmatprep.subr.mxu0 0.0
      %6563 = vmatpush2.msra.mxu0 0.0
      %6564 = vmatprep.subr.mxu0 0.0
      %6565 = vmatpush2.msra.mxu0 0.0
      %6566 = vmatprep.subr.mxu0 0.0
      %6567 = vmatpush2.msra.mxu0 0.0
      %6568 = vmatprep.subr.mxu0 0.0
      %6569 = vmatpush2.msra.mxu0 0.0
      %6570 = vmatprep.mubr.f32.mxu0 0.0
      %6571 = vmatmul.mubr.f32.gmra.mxu0 %v6457
      %v6572 = vpop.f32.mrf.mxu0
      %v6573 = vadd.f32 0.0, %v6572
      %v6574 = vpop.f32.mrf.mxu0
      %6575 = vmatprep.mubr.f32.mxu0 0.0
      %6576 = vmatmul.mubr.f32.gmra.mxu0 %v6458
      %v6577 = vpop.f32.mrf.mxu0
      %v6578 = vadd.f32 0.0, %v6577
      %v6579 = vpop.f32.mrf.mxu0
      %6580 = vmatprep.mubr.f32.mxu0 0.0
      %6581 = vmatmul.mubr.f32.gmra.mxu0 %v6459
      %v6582 = vpop.f32.mrf.mxu0
      %v6583 = vadd.f32 0.0, %v6582
      %v6584 = vpop.f32.mrf.mxu0
      %6585 = vmatprep.mubr.f32.mxu0 0.0
      %6586 = vmatmul.mubr.f32.gmra.mxu0 %v6460
      %v6587 = vpop.f32.mrf.mxu0
      %v6588 = vadd.f32 0.0, %v6587
      %v6589 = vpop.f32.mrf.mxu0
      %6590 = vmatprep.mubr.f32.mxu0 0.0
      %6591 = vmatmul.mubr.f32.gmra.mxu0 %v6461
      %v6592 = vpop.f32.mrf.mxu0
      %v6593 = vadd.f32 0.0, %v6592
      %v6594 = vpop.f32.mrf.mxu0
      %6595 = vmatprep.mubr.f32.mxu0 0.0
      %6596 = vmatmul.mubr.f32.gmra.mxu0 %v6462
      %v6597 = vpop.f32.mrf.mxu0
      %v6598 = vadd.f32 0.0, %v6597
      %v6599 = vpop.f32.mrf.mxu0
      %6600 = vmatprep.mubr.f32.mxu0 0.0
      %6601 = vmatmul.mubr.f32.gmra.mxu0 %v6463
      %v6602 = vpop.f32.mrf.mxu0
      %v6603 = vadd.f32 0.0, %v6602
      %v6604 = vpop.f32.mrf.mxu0
      %6605 = vmatprep.mubr.f32.mxu0 0.0
      %6606 = vmatmul.mubr.f32.gmra.mxu0 %v6464
      %v6607 = vpop.f32.mrf.mxu0
      %v6608 = vadd.f32 0.0, %v6607
      %v6609 = vpop.f32.mrf.mxu0
      %6610 = vmatprep.mubr.f32.mxu0 0.0
      %6611 = vmatmul.mubr.f32.gmra.mxu0 %v6465
      %v6612 = vpop.f32.mrf.mxu0
      %v6613 = vadd.f32 0.0, %v6612
      %v6614 = vpop.f32.mrf.mxu0
      %6615 = vmatprep.mubr.f32.mxu0 0.0
      %6616 = vmatmul.mubr.f32.gmra.mxu0 %v6466
      %v6617 = vpop.f32.mrf.mxu0
      %v6618 = vadd.f32 0.0, %v6617
      %v6619 = vpop.f32.mrf.mxu0
      %6620 = vmatprep.mubr.f32.mxu0 0.0
      %6621 = vmatmul.mubr.f32.gmra.mxu0 %v6467
      %v6622 = vpop.f32.mrf.mxu0
      %v6623 = vadd.f32 0.0, %v6622
      %v6624 = vpop.f32.mrf.mxu0
      %6625 = vmatprep.mubr.f32.mxu0 0.0
      %6626 = vmatmul.mubr.f32.gmra.mxu0 %v6468
      %v6627 = vpop.f32.mrf.mxu0
      %v6628 = vadd.f32 0.0, %v6627
      %v6629 = vpop.f32.mrf.mxu0
      %6630 = vmatprep.mubr.f32.mxu0 0.0
      %6631 = vmatmul.mubr.f32.gmra.mxu0 %v6469
      %v6632 = vpop.f32.mrf.mxu0
      %v6633 = vadd.f32 0.0, %v6632
      %v6634 = vpop.f32.mrf.mxu0
      %6635 = vmatprep.mubr.f32.mxu0 0.0
      %6636 = vmatmul.mubr.f32.gmra.mxu0 %v6470
      %v6637 = vpop.f32.mrf.mxu0
      %v6638 = vadd.f32 0.0, %v6637
      %v6639 = vpop.f32.mrf.mxu0
      %6640 = vmatprep.mubr.f32.mxu0 0.0
      %6641 = vmatmul.mubr.f32.gmra.mxu0 %v6471
      %v6642 = vpop.f32.mrf.mxu0
      %v6643 = vadd.f32 0.0, %v6642
      %v6644 = vpop.f32.mrf.mxu0
      %6645 = vmatprep.mubr.f32.mxu0 0.0
      %6646 = vmatmul.mubr.f32.gmra.mxu0 %v6472
      %v6647 = vpop.f32.mrf.mxu0
      %v6648 = vadd.f32 0.0, %v6647
      %v6649 = vpop.f32.mrf.mxu0
      %6650 = vmatprep.mubr.f32.mxu0 0.0
      %6651 = vmatmul.mubr.f32.gmra.mxu0 %v6473
      %v6652 = vpop.f32.mrf.mxu0
      %v6653 = vadd.f32 0.0, %v6652
      %v6654 = vpop.f32.mrf.mxu0
      %6655 = vmatprep.mubr.f32.mxu0 0.0
      %6656 = vmatmul.mubr.f32.gmra.mxu0 %v6474
      %v6657 = vpop.f32.mrf.mxu0
      %v6658 = vadd.f32 0.0, %v6657
      %v6659 = vpop.f32.mrf.mxu0
      %6660 = vmatprep.mubr.f32.mxu0 0.0
      %6661 = vmatmul.mubr.f32.gmra.mxu0 %v6475
      %v6662 = vpop.f32.mrf.mxu0
      %v6663 = vadd.f32 0.0, %v6662
      %v6664 = vpop.f32.mrf.mxu0
      %6665 = vmatprep.mubr.f32.mxu0 0.0
      %6666 = vmatmul.mubr.f32.gmra.mxu0 %v6476
      %v6667 = vpop.f32.mrf.mxu0
      %v6668 = vadd.f32 0.0, %v6667
      %v6669 = vpop.f32.mrf.mxu0
      %6670 = vmatprep.mubr.f32.mxu0 0.0
      %6671 = vmatmul.mubr.f32.gmra.mxu0 %v6477
      %v6672 = vpop.f32.mrf.mxu0
      %v6673 = vadd.f32 0.0, %v6672
      %v6674 = vpop.f32.mrf.mxu0
      %6675 = vmatprep.mubr.f32.mxu0 0.0
      %6676 = vmatmul.mubr.f32.gmra.mxu0 %v6478
      %v6677 = vpop.f32.mrf.mxu0
      %v6678 = vadd.f32 0.0, %v6677
      %v6679 = vpop.f32.mrf.mxu0
      %6680 = vmatprep.mubr.f32.mxu0 0.0
      %6681 = vmatmul.mubr.f32.gmra.mxu0 %v6479
      %v6682 = vpop.f32.mrf.mxu0
      %v6683 = vadd.f32 0.0, %v6682
      %v6684 = vpop.f32.mrf.mxu0
      %6685 = vmatprep.mubr.f32.mxu0 0.0
      %6686 = vmatmul.mubr.f32.gmra.mxu0 %v6480
      %v6687 = vpop.f32.mrf.mxu0
      %v6688 = vadd.f32 0.0, %v6687
      %v6689 = vpop.f32.mrf.mxu0
      %6690 = vmatprep.mubr.f32.mxu0 0.0
      %6691 = vmatmul.mubr.f32.gmra.mxu0 %v6481
      %v6692 = vpop.f32.mrf.mxu0
      %v6693 = vadd.f32 0.0, %v6692
      %v6694 = vpop.f32.mrf.mxu0
      %6695 = vmatprep.mubr.f32.mxu0 0.0
      %6696 = vmatmul.mubr.f32.gmra.mxu0 %v6482
      %v6697 = vpop.f32.mrf.mxu0
      %v6698 = vadd.f32 0.0, %v6697
      %v6699 = vpop.f32.mrf.mxu0
      %6700 = vmatprep.mubr.f32.mxu0 0.0
      %6701 = vmatmul.mubr.f32.gmra.mxu0 %v6483
      %v6702 = vpop.f32.mrf.mxu0
      %v6703 = vadd.f32 0.0, %v6702
      %v6704 = vpop.f32.mrf.mxu0
      %6705 = vmatprep.mubr.f32.mxu0 0.0
      %6706 = vmatmul.mubr.f32.gmra.mxu0 %v6484
      %v6707 = vpop.f32.mrf.mxu0
      %v6708 = vadd.f32 0.0, %v6707
      %v6709 = vpop.f32.mrf.mxu0
      %6710 = vmatprep.mubr.f32.mxu0 0.0
      %6711 = vmatmul.mubr.f32.gmra.mxu0 %v6485
      %v6712 = vpop.f32.mrf.mxu0
      %v6713 = vadd.f32 0.0, %v6712
      %v6714 = vpop.f32.mrf.mxu0
      %6715 = vmatprep.mubr.f32.mxu0 0.0
      %6716 = vmatmul.mubr.f32.gmra.mxu0 %v6486
      %v6717 = vpop.f32.mrf.mxu0
      %v6718 = vadd.f32 0.0, %v6717
      %v6719 = vpop.f32.mrf.mxu0
      %6720 = vmatprep.mubr.f32.mxu0 0.0
      %6721 = vmatmul.mubr.f32.gmra.mxu0 %v6487
      %v6722 = vpop.f32.mrf.mxu0
      %v6723 = vadd.f32 0.0, %v6722
      %v6724 = vpop.f32.mrf.mxu0
      %6725 = vmatprep.mubr.f32.mxu0 0.0
      %6726 = vmatmul.mubr.f32.gmra.mxu0 %v6488
      %v6727 = vpop.f32.mrf.mxu0
      %v6728 = vadd.f32 0.0, %v6727
      %v6729 = vpop.f32.mrf.mxu0
      %6730 = vdwg.mxu0
      %v6731 = vadd.f32 %v6423, %v6573
      %v6732 = vadd.f32 %v6424, %v6578
      %v6733 = vadd.f32 %v6425, %v6583
      %v6734 = vadd.f32 %v6426, %v6588
      %v6735 = vadd.f32 %v6427, %v6593
      %v6736 = vadd.f32 %v6428, %v6598
      %v6737 = vadd.f32 %v6429, %v6603
      %v6738 = vadd.f32 %v6430, %v6608
      %v6739 = vadd.f32 %v6431, %v6613
      %v6740 = vadd.f32 %v6432, %v6618
      %v6741 = vadd.f32 %v6433, %v6623
      %v6742 = vadd.f32 %v6434, %v6628
      %v6743 = vadd.f32 %v6435, %v6633
      %v6744 = vadd.f32 %v6436, %v6638
      %v6745 = vadd.f32 %v6437, %v6643
      %v6746 = vadd.f32 %v6438, %v6648
      %v6747 = vadd.f32 %v6439, %v6653
      %v6748 = vadd.f32 %v6440, %v6658
      %v6749 = vadd.f32 %v6441, %v6663
      %v6750 = vadd.f32 %v6442, %v6668
      %v6751 = vadd.f32 %v6443, %v6673
      %v6752 = vadd.f32 %v6444, %v6678
      %v6753 = vadd.f32 %v6445, %v6683
      %v6754 = vadd.f32 %v6446, %v6688
      %v6755 = vadd.f32 %v6447, %v6693
      %v6756 = vadd.f32 %v6448, %v6698
      %v6757 = vadd.f32 %v6449, %v6703
      %v6758 = vadd.f32 %v6450, %v6708
      %v6759 = vadd.f32 %v6451, %v6713
      %v6760 = vadd.f32 %v6452, %v6718
      %v6761 = vadd.f32 %v6453, %v6723
      %v6762 = vadd.f32 %v6454, %v6728
      %s6763 = sadd.s32 %s4671, 42
      %s6764 = scalar_lea.vmem [#allocation2], %s6763
      %v6765 = vld [vmem:[%s6764] sm:$0xff]
      %v6766 = vld [vmem:[%s6764 + $0x8] sm:$0xff]
      %v6767 = vld [vmem:[%s6764 + $0x10] sm:$0xff]
      %v6768 = vld [vmem:[%s6764 + $0x18] sm:$0xff]
      %v6769 = vld [vmem:[%s6764 + $0x20] sm:$0xff]
      %v6770 = vld [vmem:[%s6764 + $0x28] sm:$0xff]
      %v6771 = vld [vmem:[%s6764 + $0x30] sm:$0xff]
      %v6772 = vld [vmem:[%s6764 + $0x38] sm:$0xff]
      %v6773 = vld [vmem:[%s6764 + $0x40] sm:$0xff]
      %v6774 = vld [vmem:[%s6764 + $0x48] sm:$0xff]
      %v6775 = vld [vmem:[%s6764 + $0x50] sm:$0xff]
      %v6776 = vld [vmem:[%s6764 + $0x58] sm:$0xff]
      %v6777 = vld [vmem:[%s6764 + $0x60] sm:$0xff]
      %v6778 = vld [vmem:[%s6764 + $0x68] sm:$0xff]
      %v6779 = vld [vmem:[%s6764 + $0x70] sm:$0xff]
      %v6780 = vld [vmem:[%s6764 + $0x78] sm:$0xff]
      %v6781 = vld [vmem:[%s6764 + $0x80] sm:$0xff]
      %v6782 = vld [vmem:[%s6764 + $0x88] sm:$0xff]
      %v6783 = vld [vmem:[%s6764 + $0x90] sm:$0xff]
      %v6784 = vld [vmem:[%s6764 + $0x98] sm:$0xff]
      %v6785 = vld [vmem:[%s6764 + $0xa0] sm:$0xff]
      %v6786 = vld [vmem:[%s6764 + $0xa8] sm:$0xff]
      %v6787 = vld [vmem:[%s6764 + $0xb0] sm:$0xff]
      %v6788 = vld [vmem:[%s6764 + $0xb8] sm:$0xff]
      %v6789 = vld [vmem:[%s6764 + $0xc0] sm:$0xff]
      %v6790 = vld [vmem:[%s6764 + $0xc8] sm:$0xff]
      %v6791 = vld [vmem:[%s6764 + $0xd0] sm:$0xff]
      %v6792 = vld [vmem:[%s6764 + $0xd8] sm:$0xff]
      %v6793 = vld [vmem:[%s6764 + $0xe0] sm:$0xff]
      %v6794 = vld [vmem:[%s6764 + $0xe8] sm:$0xff]
      %v6795 = vld [vmem:[%s6764 + $0xf0] sm:$0xff]
      %v6796 = vld [vmem:[%s6764 + $0xf8] sm:$0xff]
      %s6797 = scalar_lea.vmem [#allocation8], 896
      %v6798 = vld [vmem:[%s6797] sm:$0xff]
      %v6799 = vld [vmem:[%s6797 + $0x8] sm:$0xff]
      %v6800 = vld [vmem:[%s6797 + $0x10] sm:$0xff]
      %v6801 = vld [vmem:[%s6797 + $0x18] sm:$0xff]
      %v6802 = vld [vmem:[%s6797 + $0x20] sm:$0xff]
      %v6803 = vld [vmem:[%s6797 + $0x28] sm:$0xff]
      %v6804 = vld [vmem:[%s6797 + $0x30] sm:$0xff]
      %v6805 = vld [vmem:[%s6797 + $0x38] sm:$0xff]
      %v6806 = vld [vmem:[%s6797 + $0x40] sm:$0xff]
      %v6807 = vld [vmem:[%s6797 + $0x48] sm:$0xff]
      %v6808 = vld [vmem:[%s6797 + $0x50] sm:$0xff]
      %v6809 = vld [vmem:[%s6797 + $0x58] sm:$0xff]
      %v6810 = vld [vmem:[%s6797 + $0x60] sm:$0xff]
      %v6811 = vld [vmem:[%s6797 + $0x68] sm:$0xff]
      %v6812 = vld [vmem:[%s6797 + $0x70] sm:$0xff]
      %v6813 = vld [vmem:[%s6797 + $0x78] sm:$0xff]
      %6814 = vmatprep.subr.mxu0 0.0
      %6815 = vmatpush1.msra.mxu0 %v6813
      %6816 = vmatprep.subr.mxu0 0.0
      %6817 = vmatpush1.msra.mxu0 %v6812
      %6818 = vmatprep.subr.mxu0 0.0
      %6819 = vmatpush1.msra.mxu0 %v6811
      %6820 = vmatprep.subr.mxu0 0.0
      %6821 = vmatpush1.msra.mxu0 %v6810
      %6822 = vmatprep.subr.mxu0 0.0
      %6823 = vmatpush1.msra.mxu0 %v6809
      %6824 = vmatprep.subr.mxu0 0.0
      %6825 = vmatpush1.msra.mxu0 %v6808
      %6826 = vmatprep.subr.mxu0 0.0
      %6827 = vmatpush1.msra.mxu0 %v6807
      %6828 = vmatprep.subr.mxu0 0.0
      %6829 = vmatpush1.msra.mxu0 %v6806
      %6830 = vmatprep.subr.mxu0 0.0
      %6831 = vmatpush1.msra.mxu0 %v6805
      %6832 = vmatprep.subr.mxu0 0.0
      %6833 = vmatpush1.msra.mxu0 %v6804
      %6834 = vmatprep.subr.mxu0 0.0
      %6835 = vmatpush1.msra.mxu0 %v6803
      %6836 = vmatprep.subr.mxu0 0.0
      %6837 = vmatpush1.msra.mxu0 %v6802
      %6838 = vmatprep.subr.mxu0 0.0
      %6839 = vmatpush1.msra.mxu0 %v6801
      %6840 = vmatprep.subr.mxu0 0.0
      %6841 = vmatpush1.msra.mxu0 %v6800
      %6842 = vmatprep.subr.mxu0 0.0
      %6843 = vmatpush1.msra.mxu0 %v6799
      %6844 = vmatprep.subr.mxu0 0.0
      %6845 = vmatpush1.msra.mxu0 %v6798
      %6846 = vmatprep.subr.mxu0 0.0
      %6847 = vmatpush2.msra.mxu0 0.0
      %6848 = vmatprep.subr.mxu0 0.0
      %6849 = vmatpush2.msra.mxu0 0.0
      %6850 = vmatprep.subr.mxu0 0.0
      %6851 = vmatpush2.msra.mxu0 0.0
      %6852 = vmatprep.subr.mxu0 0.0
      %6853 = vmatpush2.msra.mxu0 0.0
      %6854 = vmatprep.subr.mxu0 0.0
      %6855 = vmatpush2.msra.mxu0 0.0
      %6856 = vmatprep.subr.mxu0 0.0
      %6857 = vmatpush2.msra.mxu0 0.0
      %6858 = vmatprep.subr.mxu0 0.0
      %6859 = vmatpush2.msra.mxu0 0.0
      %6860 = vmatprep.subr.mxu0 0.0
      %6861 = vmatpush2.msra.mxu0 0.0
      %6862 = vmatprep.subr.mxu0 0.0
      %6863 = vmatpush2.msra.mxu0 0.0
      %6864 = vmatprep.subr.mxu0 0.0
      %6865 = vmatpush2.msra.mxu0 0.0
      %6866 = vmatprep.subr.mxu0 0.0
      %6867 = vmatpush2.msra.mxu0 0.0
      %6868 = vmatprep.subr.mxu0 0.0
      %6869 = vmatpush2.msra.mxu0 0.0
      %6870 = vmatprep.subr.mxu0 0.0
      %6871 = vmatpush2.msra.mxu0 0.0
      %6872 = vmatprep.subr.mxu0 0.0
      %6873 = vmatpush2.msra.mxu0 0.0
      %6874 = vmatprep.subr.mxu0 0.0
      %6875 = vmatpush2.msra.mxu0 0.0
      %6876 = vmatprep.subr.mxu0 0.0
      %6877 = vmatpush2.msra.mxu0 0.0
      %6878 = vmatprep.mubr.f32.mxu0 0.0
      %6879 = vmatmul.mubr.f32.gmra.mxu0 %v6765
      %v6880 = vpop.f32.mrf.mxu0
      %v6881 = vadd.f32 0.0, %v6880
      %v6882 = vpop.f32.mrf.mxu0
      %6883 = vmatprep.mubr.f32.mxu0 0.0
      %6884 = vmatmul.mubr.f32.gmra.mxu0 %v6766
      %v6885 = vpop.f32.mrf.mxu0
      %v6886 = vadd.f32 0.0, %v6885
      %v6887 = vpop.f32.mrf.mxu0
      %6888 = vmatprep.mubr.f32.mxu0 0.0
      %6889 = vmatmul.mubr.f32.gmra.mxu0 %v6767
      %v6890 = vpop.f32.mrf.mxu0
      %v6891 = vadd.f32 0.0, %v6890
      %v6892 = vpop.f32.mrf.mxu0
      %6893 = vmatprep.mubr.f32.mxu0 0.0
      %6894 = vmatmul.mubr.f32.gmra.mxu0 %v6768
      %v6895 = vpop.f32.mrf.mxu0
      %v6896 = vadd.f32 0.0, %v6895
      %v6897 = vpop.f32.mrf.mxu0
      %6898 = vmatprep.mubr.f32.mxu0 0.0
      %6899 = vmatmul.mubr.f32.gmra.mxu0 %v6769
      %v6900 = vpop.f32.mrf.mxu0
      %v6901 = vadd.f32 0.0, %v6900
      %v6902 = vpop.f32.mrf.mxu0
      %6903 = vmatprep.mubr.f32.mxu0 0.0
      %6904 = vmatmul.mubr.f32.gmra.mxu0 %v6770
      %v6905 = vpop.f32.mrf.mxu0
      %v6906 = vadd.f32 0.0, %v6905
      %v6907 = vpop.f32.mrf.mxu0
      %6908 = vmatprep.mubr.f32.mxu0 0.0
      %6909 = vmatmul.mubr.f32.gmra.mxu0 %v6771
      %v6910 = vpop.f32.mrf.mxu0
      %v6911 = vadd.f32 0.0, %v6910
      %v6912 = vpop.f32.mrf.mxu0
      %6913 = vmatprep.mubr.f32.mxu0 0.0
      %6914 = vmatmul.mubr.f32.gmra.mxu0 %v6772
      %v6915 = vpop.f32.mrf.mxu0
      %v6916 = vadd.f32 0.0, %v6915
      %v6917 = vpop.f32.mrf.mxu0
      %6918 = vmatprep.mubr.f32.mxu0 0.0
      %6919 = vmatmul.mubr.f32.gmra.mxu0 %v6773
      %v6920 = vpop.f32.mrf.mxu0
      %v6921 = vadd.f32 0.0, %v6920
      %v6922 = vpop.f32.mrf.mxu0
      %6923 = vmatprep.mubr.f32.mxu0 0.0
      %6924 = vmatmul.mubr.f32.gmra.mxu0 %v6774
      %v6925 = vpop.f32.mrf.mxu0
      %v6926 = vadd.f32 0.0, %v6925
      %v6927 = vpop.f32.mrf.mxu0
      %6928 = vmatprep.mubr.f32.mxu0 0.0
      %6929 = vmatmul.mubr.f32.gmra.mxu0 %v6775
      %v6930 = vpop.f32.mrf.mxu0
      %v6931 = vadd.f32 0.0, %v6930
      %v6932 = vpop.f32.mrf.mxu0
      %6933 = vmatprep.mubr.f32.mxu0 0.0
      %6934 = vmatmul.mubr.f32.gmra.mxu0 %v6776
      %v6935 = vpop.f32.mrf.mxu0
      %v6936 = vadd.f32 0.0, %v6935
      %v6937 = vpop.f32.mrf.mxu0
      %6938 = vmatprep.mubr.f32.mxu0 0.0
      %6939 = vmatmul.mubr.f32.gmra.mxu0 %v6777
      %v6940 = vpop.f32.mrf.mxu0
      %v6941 = vadd.f32 0.0, %v6940
      %v6942 = vpop.f32.mrf.mxu0
      %6943 = vmatprep.mubr.f32.mxu0 0.0
      %6944 = vmatmul.mubr.f32.gmra.mxu0 %v6778
      %v6945 = vpop.f32.mrf.mxu0
      %v6946 = vadd.f32 0.0, %v6945
      %v6947 = vpop.f32.mrf.mxu0
      %6948 = vmatprep.mubr.f32.mxu0 0.0
      %6949 = vmatmul.mubr.f32.gmra.mxu0 %v6779
      %v6950 = vpop.f32.mrf.mxu0
      %v6951 = vadd.f32 0.0, %v6950
      %v6952 = vpop.f32.mrf.mxu0
      %6953 = vmatprep.mubr.f32.mxu0 0.0
      %6954 = vmatmul.mubr.f32.gmra.mxu0 %v6780
      %v6955 = vpop.f32.mrf.mxu0
      %v6956 = vadd.f32 0.0, %v6955
      %v6957 = vpop.f32.mrf.mxu0
      %6958 = vmatprep.mubr.f32.mxu0 0.0
      %6959 = vmatmul.mubr.f32.gmra.mxu0 %v6781
      %v6960 = vpop.f32.mrf.mxu0
      %v6961 = vadd.f32 0.0, %v6960
      %v6962 = vpop.f32.mrf.mxu0
      %6963 = vmatprep.mubr.f32.mxu0 0.0
      %6964 = vmatmul.mubr.f32.gmra.mxu0 %v6782
      %v6965 = vpop.f32.mrf.mxu0
      %v6966 = vadd.f32 0.0, %v6965
      %v6967 = vpop.f32.mrf.mxu0
      %6968 = vmatprep.mubr.f32.mxu0 0.0
      %6969 = vmatmul.mubr.f32.gmra.mxu0 %v6783
      %v6970 = vpop.f32.mrf.mxu0
      %v6971 = vadd.f32 0.0, %v6970
      %v6972 = vpop.f32.mrf.mxu0
      %6973 = vmatprep.mubr.f32.mxu0 0.0
      %6974 = vmatmul.mubr.f32.gmra.mxu0 %v6784
      %v6975 = vpop.f32.mrf.mxu0
      %v6976 = vadd.f32 0.0, %v6975
      %v6977 = vpop.f32.mrf.mxu0
      %6978 = vmatprep.mubr.f32.mxu0 0.0
      %6979 = vmatmul.mubr.f32.gmra.mxu0 %v6785
      %v6980 = vpop.f32.mrf.mxu0
      %v6981 = vadd.f32 0.0, %v6980
      %v6982 = vpop.f32.mrf.mxu0
      %6983 = vmatprep.mubr.f32.mxu0 0.0
      %6984 = vmatmul.mubr.f32.gmra.mxu0 %v6786
      %v6985 = vpop.f32.mrf.mxu0
      %v6986 = vadd.f32 0.0, %v6985
      %v6987 = vpop.f32.mrf.mxu0
      %6988 = vmatprep.mubr.f32.mxu0 0.0
      %6989 = vmatmul.mubr.f32.gmra.mxu0 %v6787
      %v6990 = vpop.f32.mrf.mxu0
      %v6991 = vadd.f32 0.0, %v6990
      %v6992 = vpop.f32.mrf.mxu0
      %6993 = vmatprep.mubr.f32.mxu0 0.0
      %6994 = vmatmul.mubr.f32.gmra.mxu0 %v6788
      %v6995 = vpop.f32.mrf.mxu0
      %v6996 = vadd.f32 0.0, %v6995
      %v6997 = vpop.f32.mrf.mxu0
      %6998 = vmatprep.mubr.f32.mxu0 0.0
      %6999 = vmatmul.mubr.f32.gmra.mxu0 %v6789
      %v7000 = vpop.f32.mrf.mxu0
      %v7001 = vadd.f32 0.0, %v7000
      %v7002 = vpop.f32.mrf.mxu0
      %7003 = vmatprep.mubr.f32.mxu0 0.0
      %7004 = vmatmul.mubr.f32.gmra.mxu0 %v6790
      %v7005 = vpop.f32.mrf.mxu0
      %v7006 = vadd.f32 0.0, %v7005
      %v7007 = vpop.f32.mrf.mxu0
      %7008 = vmatprep.mubr.f32.mxu0 0.0
      %7009 = vmatmul.mubr.f32.gmra.mxu0 %v6791
      %v7010 = vpop.f32.mrf.mxu0
      %v7011 = vadd.f32 0.0, %v7010
      %v7012 = vpop.f32.mrf.mxu0
      %7013 = vmatprep.mubr.f32.mxu0 0.0
      %7014 = vmatmul.mubr.f32.gmra.mxu0 %v6792
      %v7015 = vpop.f32.mrf.mxu0
      %v7016 = vadd.f32 0.0, %v7015
      %v7017 = vpop.f32.mrf.mxu0
      %7018 = vmatprep.mubr.f32.mxu0 0.0
      %7019 = vmatmul.mubr.f32.gmra.mxu0 %v6793
      %v7020 = vpop.f32.mrf.mxu0
      %v7021 = vadd.f32 0.0, %v7020
      %v7022 = vpop.f32.mrf.mxu0
      %7023 = vmatprep.mubr.f32.mxu0 0.0
      %7024 = vmatmul.mubr.f32.gmra.mxu0 %v6794
      %v7025 = vpop.f32.mrf.mxu0
      %v7026 = vadd.f32 0.0, %v7025
      %v7027 = vpop.f32.mrf.mxu0
      %7028 = vmatprep.mubr.f32.mxu0 0.0
      %7029 = vmatmul.mubr.f32.gmra.mxu0 %v6795
      %v7030 = vpop.f32.mrf.mxu0
      %v7031 = vadd.f32 0.0, %v7030
      %v7032 = vpop.f32.mrf.mxu0
      %7033 = vmatprep.mubr.f32.mxu0 0.0
      %7034 = vmatmul.mubr.f32.gmra.mxu0 %v6796
      %v7035 = vpop.f32.mrf.mxu0
      %v7036 = vadd.f32 0.0, %v7035
      %v7037 = vpop.f32.mrf.mxu0
      %7038 = vdwg.mxu0
      %v7039 = vadd.f32 %v6731, %v6881
      %v7040 = vadd.f32 %v6732, %v6886
      %v7041 = vadd.f32 %v6733, %v6891
      %v7042 = vadd.f32 %v6734, %v6896
      %v7043 = vadd.f32 %v6735, %v6901
      %v7044 = vadd.f32 %v6736, %v6906
      %v7045 = vadd.f32 %v6737, %v6911
      %v7046 = vadd.f32 %v6738, %v6916
      %v7047 = vadd.f32 %v6739, %v6921
      %v7048 = vadd.f32 %v6740, %v6926
      %v7049 = vadd.f32 %v6741, %v6931
      %v7050 = vadd.f32 %v6742, %v6936
      %v7051 = vadd.f32 %v6743, %v6941
      %v7052 = vadd.f32 %v6744, %v6946
      %v7053 = vadd.f32 %v6745, %v6951
      %v7054 = vadd.f32 %v6746, %v6956
      %v7055 = vadd.f32 %v6747, %v6961
      %v7056 = vadd.f32 %v6748, %v6966
      %v7057 = vadd.f32 %v6749, %v6971
      %v7058 = vadd.f32 %v6750, %v6976
      %v7059 = vadd.f32 %v6751, %v6981
      %v7060 = vadd.f32 %v6752, %v6986
      %v7061 = vadd.f32 %v6753, %v6991
      %v7062 = vadd.f32 %v6754, %v6996
      %v7063 = vadd.f32 %v6755, %v7001
      %v7064 = vadd.f32 %v6756, %v7006
      %v7065 = vadd.f32 %v6757, %v7011
      %v7066 = vadd.f32 %v6758, %v7016
      %v7067 = vadd.f32 %v6759, %v7021
      %v7068 = vadd.f32 %v6760, %v7026
      %v7069 = vadd.f32 %v6761, %v7031
      %v7070 = vadd.f32 %v6762, %v7036
      %s7071 = sadd.s32 %s4671, 43
      %s7072 = scalar_lea.vmem [#allocation2], %s7071
      %v7073 = vld [vmem:[%s7072] sm:$0xff]
      %v7074 = vld [vmem:[%s7072 + $0x8] sm:$0xff]
      %v7075 = vld [vmem:[%s7072 + $0x10] sm:$0xff]
      %v7076 = vld [vmem:[%s7072 + $0x18] sm:$0xff]
      %v7077 = vld [vmem:[%s7072 + $0x20] sm:$0xff]
      %v7078 = vld [vmem:[%s7072 + $0x28] sm:$0xff]
      %v7079 = vld [vmem:[%s7072 + $0x30] sm:$0xff]
      %v7080 = vld [vmem:[%s7072 + $0x38] sm:$0xff]
      %v7081 = vld [vmem:[%s7072 + $0x40] sm:$0xff]
      %v7082 = vld [vmem:[%s7072 + $0x48] sm:$0xff]
      %v7083 = vld [vmem:[%s7072 + $0x50] sm:$0xff]
      %v7084 = vld [vmem:[%s7072 + $0x58] sm:$0xff]
      %v7085 = vld [vmem:[%s7072 + $0x60] sm:$0xff]
      %v7086 = vld [vmem:[%s7072 + $0x68] sm:$0xff]
      %v7087 = vld [vmem:[%s7072 + $0x70] sm:$0xff]
      %v7088 = vld [vmem:[%s7072 + $0x78] sm:$0xff]
      %v7089 = vld [vmem:[%s7072 + $0x80] sm:$0xff]
      %v7090 = vld [vmem:[%s7072 + $0x88] sm:$0xff]
      %v7091 = vld [vmem:[%s7072 + $0x90] sm:$0xff]
      %v7092 = vld [vmem:[%s7072 + $0x98] sm:$0xff]
      %v7093 = vld [vmem:[%s7072 + $0xa0] sm:$0xff]
      %v7094 = vld [vmem:[%s7072 + $0xa8] sm:$0xff]
      %v7095 = vld [vmem:[%s7072 + $0xb0] sm:$0xff]
      %v7096 = vld [vmem:[%s7072 + $0xb8] sm:$0xff]
      %v7097 = vld [vmem:[%s7072 + $0xc0] sm:$0xff]
      %v7098 = vld [vmem:[%s7072 + $0xc8] sm:$0xff]
      %v7099 = vld [vmem:[%s7072 + $0xd0] sm:$0xff]
      %v7100 = vld [vmem:[%s7072 + $0xd8] sm:$0xff]
      %v7101 = vld [vmem:[%s7072 + $0xe0] sm:$0xff]
      %v7102 = vld [vmem:[%s7072 + $0xe8] sm:$0xff]
      %v7103 = vld [vmem:[%s7072 + $0xf0] sm:$0xff]
      %v7104 = vld [vmem:[%s7072 + $0xf8] sm:$0xff]
      %s7105 = scalar_lea.vmem [#allocation8], 1024
      %v7106 = vld [vmem:[%s7105] sm:$0xff]
      %v7107 = vld [vmem:[%s7105 + $0x8] sm:$0xff]
      %v7108 = vld [vmem:[%s7105 + $0x10] sm:$0xff]
      %v7109 = vld [vmem:[%s7105 + $0x18] sm:$0xff]
      %v7110 = vld [vmem:[%s7105 + $0x20] sm:$0xff]
      %v7111 = vld [vmem:[%s7105 + $0x28] sm:$0xff]
      %v7112 = vld [vmem:[%s7105 + $0x30] sm:$0xff]
      %v7113 = vld [vmem:[%s7105 + $0x38] sm:$0xff]
      %v7114 = vld [vmem:[%s7105 + $0x40] sm:$0xff]
      %v7115 = vld [vmem:[%s7105 + $0x48] sm:$0xff]
      %v7116 = vld [vmem:[%s7105 + $0x50] sm:$0xff]
      %v7117 = vld [vmem:[%s7105 + $0x58] sm:$0xff]
      %v7118 = vld [vmem:[%s7105 + $0x60] sm:$0xff]
      %v7119 = vld [vmem:[%s7105 + $0x68] sm:$0xff]
      %v7120 = vld [vmem:[%s7105 + $0x70] sm:$0xff]
      %v7121 = vld [vmem:[%s7105 + $0x78] sm:$0xff]
      %7122 = vmatprep.subr.mxu0 0.0
      %7123 = vmatpush1.msra.mxu0 %v7121
      %7124 = vmatprep.subr.mxu0 0.0
      %7125 = vmatpush1.msra.mxu0 %v7120
      %7126 = vmatprep.subr.mxu0 0.0
      %7127 = vmatpush1.msra.mxu0 %v7119
      %7128 = vmatprep.subr.mxu0 0.0
      %7129 = vmatpush1.msra.mxu0 %v7118
      %7130 = vmatprep.subr.mxu0 0.0
      %7131 = vmatpush1.msra.mxu0 %v7117
      %7132 = vmatprep.subr.mxu0 0.0
      %7133 = vmatpush1.msra.mxu0 %v7116
      %7134 = vmatprep.subr.mxu0 0.0
      %7135 = vmatpush1.msra.mxu0 %v7115
      %7136 = vmatprep.subr.mxu0 0.0
      %7137 = vmatpush1.msra.mxu0 %v7114
      %7138 = vmatprep.subr.mxu0 0.0
      %7139 = vmatpush1.msra.mxu0 %v7113
      %7140 = vmatprep.subr.mxu0 0.0
      %7141 = vmatpush1.msra.mxu0 %v7112
      %7142 = vmatprep.subr.mxu0 0.0
      %7143 = vmatpush1.msra.mxu0 %v7111
      %7144 = vmatprep.subr.mxu0 0.0
      %7145 = vmatpush1.msra.mxu0 %v7110
      %7146 = vmatprep.subr.mxu0 0.0
      %7147 = vmatpush1.msra.mxu0 %v7109
      %7148 = vmatprep.subr.mxu0 0.0
      %7149 = vmatpush1.msra.mxu0 %v7108
      %7150 = vmatprep.subr.mxu0 0.0
      %7151 = vmatpush1.msra.mxu0 %v7107
      %7152 = vmatprep.subr.mxu0 0.0
      %7153 = vmatpush1.msra.mxu0 %v7106
      %7154 = vmatprep.subr.mxu0 0.0
      %7155 = vmatpush2.msra.mxu0 0.0
      %7156 = vmatprep.subr.mxu0 0.0
      %7157 = vmatpush2.msra.mxu0 0.0
      %7158 = vmatprep.subr.mxu0 0.0
      %7159 = vmatpush2.msra.mxu0 0.0
      %7160 = vmatprep.subr.mxu0 0.0
      %7161 = vmatpush2.msra.mxu0 0.0
      %7162 = vmatprep.subr.mxu0 0.0
      %7163 = vmatpush2.msra.mxu0 0.0
      %7164 = vmatprep.subr.mxu0 0.0
      %7165 = vmatpush2.msra.mxu0 0.0
      %7166 = vmatprep.subr.mxu0 0.0
      %7167 = vmatpush2.msra.mxu0 0.0
      %7168 = vmatprep.subr.mxu0 0.0
      %7169 = vmatpush2.msra.mxu0 0.0
      %7170 = vmatprep.subr.mxu0 0.0
      %7171 = vmatpush2.msra.mxu0 0.0
      %7172 = vmatprep.subr.mxu0 0.0
      %7173 = vmatpush2.msra.mxu0 0.0
      %7174 = vmatprep.subr.mxu0 0.0
      %7175 = vmatpush2.msra.mxu0 0.0
      %7176 = vmatprep.subr.mxu0 0.0
      %7177 = vmatpush2.msra.mxu0 0.0
      %7178 = vmatprep.subr.mxu0 0.0
      %7179 = vmatpush2.msra.mxu0 0.0
      %7180 = vmatprep.subr.mxu0 0.0
      %7181 = vmatpush2.msra.mxu0 0.0
      %7182 = vmatprep.subr.mxu0 0.0
      %7183 = vmatpush2.msra.mxu0 0.0
      %7184 = vmatprep.subr.mxu0 0.0
      %7185 = vmatpush2.msra.mxu0 0.0
      %7186 = vmatprep.mubr.f32.mxu0 0.0
      %7187 = vmatmul.mubr.f32.gmra.mxu0 %v7073
      %v7188 = vpop.f32.mrf.mxu0
      %v7189 = vadd.f32 0.0, %v7188
      %v7190 = vpop.f32.mrf.mxu0
      %7191 = vmatprep.mubr.f32.mxu0 0.0
      %7192 = vmatmul.mubr.f32.gmra.mxu0 %v7074
      %v7193 = vpop.f32.mrf.mxu0
      %v7194 = vadd.f32 0.0, %v7193
      %v7195 = vpop.f32.mrf.mxu0
      %7196 = vmatprep.mubr.f32.mxu0 0.0
      %7197 = vmatmul.mubr.f32.gmra.mxu0 %v7075
      %v7198 = vpop.f32.mrf.mxu0
      %v7199 = vadd.f32 0.0, %v7198
      %v7200 = vpop.f32.mrf.mxu0
      %7201 = vmatprep.mubr.f32.mxu0 0.0
      %7202 = vmatmul.mubr.f32.gmra.mxu0 %v7076
      %v7203 = vpop.f32.mrf.mxu0
      %v7204 = vadd.f32 0.0, %v7203
      %v7205 = vpop.f32.mrf.mxu0
      %7206 = vmatprep.mubr.f32.mxu0 0.0
      %7207 = vmatmul.mubr.f32.gmra.mxu0 %v7077
      %v7208 = vpop.f32.mrf.mxu0
      %v7209 = vadd.f32 0.0, %v7208
      %v7210 = vpop.f32.mrf.mxu0
      %7211 = vmatprep.mubr.f32.mxu0 0.0
      %7212 = vmatmul.mubr.f32.gmra.mxu0 %v7078
      %v7213 = vpop.f32.mrf.mxu0
      %v7214 = vadd.f32 0.0, %v7213
      %v7215 = vpop.f32.mrf.mxu0
      %7216 = vmatprep.mubr.f32.mxu0 0.0
      %7217 = vmatmul.mubr.f32.gmra.mxu0 %v7079
      %v7218 = vpop.f32.mrf.mxu0
      %v7219 = vadd.f32 0.0, %v7218
      %v7220 = vpop.f32.mrf.mxu0
      %7221 = vmatprep.mubr.f32.mxu0 0.0
      %7222 = vmatmul.mubr.f32.gmra.mxu0 %v7080
      %v7223 = vpop.f32.mrf.mxu0
      %v7224 = vadd.f32 0.0, %v7223
      %v7225 = vpop.f32.mrf.mxu0
      %7226 = vmatprep.mubr.f32.mxu0 0.0
      %7227 = vmatmul.mubr.f32.gmra.mxu0 %v7081
      %v7228 = vpop.f32.mrf.mxu0
      %v7229 = vadd.f32 0.0, %v7228
      %v7230 = vpop.f32.mrf.mxu0
      %7231 = vmatprep.mubr.f32.mxu0 0.0
      %7232 = vmatmul.mubr.f32.gmra.mxu0 %v7082
      %v7233 = vpop.f32.mrf.mxu0
      %v7234 = vadd.f32 0.0, %v7233
      %v7235 = vpop.f32.mrf.mxu0
      %7236 = vmatprep.mubr.f32.mxu0 0.0
      %7237 = vmatmul.mubr.f32.gmra.mxu0 %v7083
      %v7238 = vpop.f32.mrf.mxu0
      %v7239 = vadd.f32 0.0, %v7238
      %v7240 = vpop.f32.mrf.mxu0
      %7241 = vmatprep.mubr.f32.mxu0 0.0
      %7242 = vmatmul.mubr.f32.gmra.mxu0 %v7084
      %v7243 = vpop.f32.mrf.mxu0
      %v7244 = vadd.f32 0.0, %v7243
      %v7245 = vpop.f32.mrf.mxu0
      %7246 = vmatprep.mubr.f32.mxu0 0.0
      %7247 = vmatmul.mubr.f32.gmra.mxu0 %v7085
      %v7248 = vpop.f32.mrf.mxu0
      %v7249 = vadd.f32 0.0, %v7248
      %v7250 = vpop.f32.mrf.mxu0
      %7251 = vmatprep.mubr.f32.mxu0 0.0
      %7252 = vmatmul.mubr.f32.gmra.mxu0 %v7086
      %v7253 = vpop.f32.mrf.mxu0
      %v7254 = vadd.f32 0.0, %v7253
      %v7255 = vpop.f32.mrf.mxu0
      %7256 = vmatprep.mubr.f32.mxu0 0.0
      %7257 = vmatmul.mubr.f32.gmra.mxu0 %v7087
      %v7258 = vpop.f32.mrf.mxu0
      %v7259 = vadd.f32 0.0, %v7258
      %v7260 = vpop.f32.mrf.mxu0
      %7261 = vmatprep.mubr.f32.mxu0 0.0
      %7262 = vmatmul.mubr.f32.gmra.mxu0 %v7088
      %v7263 = vpop.f32.mrf.mxu0
      %v7264 = vadd.f32 0.0, %v7263
      %v7265 = vpop.f32.mrf.mxu0
      %7266 = vmatprep.mubr.f32.mxu0 0.0
      %7267 = vmatmul.mubr.f32.gmra.mxu0 %v7089
      %v7268 = vpop.f32.mrf.mxu0
      %v7269 = vadd.f32 0.0, %v7268
      %v7270 = vpop.f32.mrf.mxu0
      %7271 = vmatprep.mubr.f32.mxu0 0.0
      %7272 = vmatmul.mubr.f32.gmra.mxu0 %v7090
      %v7273 = vpop.f32.mrf.mxu0
      %v7274 = vadd.f32 0.0, %v7273
      %v7275 = vpop.f32.mrf.mxu0
      %7276 = vmatprep.mubr.f32.mxu0 0.0
      %7277 = vmatmul.mubr.f32.gmra.mxu0 %v7091
      %v7278 = vpop.f32.mrf.mxu0
      %v7279 = vadd.f32 0.0, %v7278
      %v7280 = vpop.f32.mrf.mxu0
      %7281 = vmatprep.mubr.f32.mxu0 0.0
      %7282 = vmatmul.mubr.f32.gmra.mxu0 %v7092
      %v7283 = vpop.f32.mrf.mxu0
      %v7284 = vadd.f32 0.0, %v7283
      %v7285 = vpop.f32.mrf.mxu0
      %7286 = vmatprep.mubr.f32.mxu0 0.0
      %7287 = vmatmul.mubr.f32.gmra.mxu0 %v7093
      %v7288 = vpop.f32.mrf.mxu0
      %v7289 = vadd.f32 0.0, %v7288
      %v7290 = vpop.f32.mrf.mxu0
      %7291 = vmatprep.mubr.f32.mxu0 0.0
      %7292 = vmatmul.mubr.f32.gmra.mxu0 %v7094
      %v7293 = vpop.f32.mrf.mxu0
      %v7294 = vadd.f32 0.0, %v7293
      %v7295 = vpop.f32.mrf.mxu0
      %7296 = vmatprep.mubr.f32.mxu0 0.0
      %7297 = vmatmul.mubr.f32.gmra.mxu0 %v7095
      %v7298 = vpop.f32.mrf.mxu0
      %v7299 = vadd.f32 0.0, %v7298
      %v7300 = vpop.f32.mrf.mxu0
      %7301 = vmatprep.mubr.f32.mxu0 0.0
      %7302 = vmatmul.mubr.f32.gmra.mxu0 %v7096
      %v7303 = vpop.f32.mrf.mxu0
      %v7304 = vadd.f32 0.0, %v7303
      %v7305 = vpop.f32.mrf.mxu0
      %7306 = vmatprep.mubr.f32.mxu0 0.0
      %7307 = vmatmul.mubr.f32.gmra.mxu0 %v7097
      %v7308 = vpop.f32.mrf.mxu0
      %v7309 = vadd.f32 0.0, %v7308
      %v7310 = vpop.f32.mrf.mxu0
      %7311 = vmatprep.mubr.f32.mxu0 0.0
      %7312 = vmatmul.mubr.f32.gmra.mxu0 %v7098
      %v7313 = vpop.f32.mrf.mxu0
      %v7314 = vadd.f32 0.0, %v7313
      %v7315 = vpop.f32.mrf.mxu0
      %7316 = vmatprep.mubr.f32.mxu0 0.0
      %7317 = vmatmul.mubr.f32.gmra.mxu0 %v7099
      %v7318 = vpop.f32.mrf.mxu0
      %v7319 = vadd.f32 0.0, %v7318
      %v7320 = vpop.f32.mrf.mxu0
      %7321 = vmatprep.mubr.f32.mxu0 0.0
      %7322 = vmatmul.mubr.f32.gmra.mxu0 %v7100
      %v7323 = vpop.f32.mrf.mxu0
      %v7324 = vadd.f32 0.0, %v7323
      %v7325 = vpop.f32.mrf.mxu0
      %7326 = vmatprep.mubr.f32.mxu0 0.0
      %7327 = vmatmul.mubr.f32.gmra.mxu0 %v7101
      %v7328 = vpop.f32.mrf.mxu0
      %v7329 = vadd.f32 0.0, %v7328
      %v7330 = vpop.f32.mrf.mxu0
      %7331 = vmatprep.mubr.f32.mxu0 0.0
      %7332 = vmatmul.mubr.f32.gmra.mxu0 %v7102
      %v7333 = vpop.f32.mrf.mxu0
      %v7334 = vadd.f32 0.0, %v7333
      %v7335 = vpop.f32.mrf.mxu0
      %7336 = vmatprep.mubr.f32.mxu0 0.0
      %7337 = vmatmul.mubr.f32.gmra.mxu0 %v7103
      %v7338 = vpop.f32.mrf.mxu0
      %v7339 = vadd.f32 0.0, %v7338
      %v7340 = vpop.f32.mrf.mxu0
      %7341 = vmatprep.mubr.f32.mxu0 0.0
      %7342 = vmatmul.mubr.f32.gmra.mxu0 %v7104
      %v7343 = vpop.f32.mrf.mxu0
      %v7344 = vadd.f32 0.0, %v7343
      %v7345 = vpop.f32.mrf.mxu0
      %7346 = vdwg.mxu0
      %v7347 = vadd.f32 %v7039, %v7189
      %v7348 = vadd.f32 %v7040, %v7194
      %v7349 = vadd.f32 %v7041, %v7199
      %v7350 = vadd.f32 %v7042, %v7204
      %v7351 = vadd.f32 %v7043, %v7209
      %v7352 = vadd.f32 %v7044, %v7214
      %v7353 = vadd.f32 %v7045, %v7219
      %v7354 = vadd.f32 %v7046, %v7224
      %v7355 = vadd.f32 %v7047, %v7229
      %v7356 = vadd.f32 %v7048, %v7234
      %v7357 = vadd.f32 %v7049, %v7239
      %v7358 = vadd.f32 %v7050, %v7244
      %v7359 = vadd.f32 %v7051, %v7249
      %v7360 = vadd.f32 %v7052, %v7254
      %v7361 = vadd.f32 %v7053, %v7259
      %v7362 = vadd.f32 %v7054, %v7264
      %v7363 = vadd.f32 %v7055, %v7269
      %v7364 = vadd.f32 %v7056, %v7274
      %v7365 = vadd.f32 %v7057, %v7279
      %v7366 = vadd.f32 %v7058, %v7284
      %v7367 = vadd.f32 %v7059, %v7289
      %v7368 = vadd.f32 %v7060, %v7294
      %v7369 = vadd.f32 %v7061, %v7299
      %v7370 = vadd.f32 %v7062, %v7304
      %v7371 = vadd.f32 %v7063, %v7309
      %v7372 = vadd.f32 %v7064, %v7314
      %v7373 = vadd.f32 %v7065, %v7319
      %v7374 = vadd.f32 %v7066, %v7324
      %v7375 = vadd.f32 %v7067, %v7329
      %v7376 = vadd.f32 %v7068, %v7334
      %v7377 = vadd.f32 %v7069, %v7339
      %v7378 = vadd.f32 %v7070, %v7344
      %s7379 = scalar_lea.vmem [#allocation9], %s4671
      %7380 = vst [vmem:[%s7379] sm:$0xff] %v7347
      %7381 = vst [vmem:[%s7379 + $0x8] sm:$0xff] %v7348
      %7382 = vst [vmem:[%s7379 + $0x10] sm:$0xff] %v7349
      %7383 = vst [vmem:[%s7379 + $0x18] sm:$0xff] %v7350
      %7384 = vst [vmem:[%s7379 + $0x20] sm:$0xff] %v7351
      %7385 = vst [vmem:[%s7379 + $0x28] sm:$0xff] %v7352
      %7386 = vst [vmem:[%s7379 + $0x30] sm:$0xff] %v7353
      %7387 = vst [vmem:[%s7379 + $0x38] sm:$0xff] %v7354
      %7388 = vst [vmem:[%s7379 + $0x40] sm:$0xff] %v7355
      %7389 = vst [vmem:[%s7379 + $0x48] sm:$0xff] %v7356
      %7390 = vst [vmem:[%s7379 + $0x50] sm:$0xff] %v7357
      %7391 = vst [vmem:[%s7379 + $0x58] sm:$0xff] %v7358
      %7392 = vst [vmem:[%s7379 + $0x60] sm:$0xff] %v7359
      %7393 = vst [vmem:[%s7379 + $0x68] sm:$0xff] %v7360
      %7394 = vst [vmem:[%s7379 + $0x70] sm:$0xff] %v7361
      %7395 = vst [vmem:[%s7379 + $0x78] sm:$0xff] %v7362
      %7396 = vst [vmem:[%s7379 + $0x80] sm:$0xff] %v7363
      %7397 = vst [vmem:[%s7379 + $0x88] sm:$0xff] %v7364
      %7398 = vst [vmem:[%s7379 + $0x90] sm:$0xff] %v7365
      %7399 = vst [vmem:[%s7379 + $0x98] sm:$0xff] %v7366
      %7400 = vst [vmem:[%s7379 + $0xa0] sm:$0xff] %v7367
      %7401 = vst [vmem:[%s7379 + $0xa8] sm:$0xff] %v7368
      %7402 = vst [vmem:[%s7379 + $0xb0] sm:$0xff] %v7369
      %7403 = vst [vmem:[%s7379 + $0xb8] sm:$0xff] %v7370
      %7404 = vst [vmem:[%s7379 + $0xc0] sm:$0xff] %v7371
      %7405 = vst [vmem:[%s7379 + $0xc8] sm:$0xff] %v7372
      %7406 = vst [vmem:[%s7379 + $0xd0] sm:$0xff] %v7373
      %7407 = vst [vmem:[%s7379 + $0xd8] sm:$0xff] %v7374
      %7408 = vst [vmem:[%s7379 + $0xe0] sm:$0xff] %v7375
      %7409 = vst [vmem:[%s7379 + $0xe8] sm:$0xff] %v7376
      %7410 = vst [vmem:[%s7379 + $0xf0] sm:$0xff] %v7377
      %7411 = vst [vmem:[%s7379 + $0xf8] sm:$0xff] %v7378
      %v7412 = vlaneseq
      %v7413 = vshrl.u32 %v7412, 7
      %v7414 = vadd.s32 %v7413, 8
      %v7415 = vadd.s32 %v7413, 16
      %v7416 = vadd.s32 %v7413, 24
      %v7417 = vadd.s32 %v7413, 32
      %v7418 = vadd.s32 %v7413, 40
      %v7419 = vadd.s32 %v7413, 48
      %v7420 = vadd.s32 %v7413, 56
      %v7421 = vadd.s32 %v7413, 64
      %v7422 = vadd.s32 %v7413, 72
      %v7423 = vadd.s32 %v7413, 80
      %v7424 = vadd.s32 %v7413, 88
      %v7425 = vadd.s32 %v7413, 96
      %v7426 = vadd.s32 %v7413, 104
      %v7427 = vadd.s32 %v7413, 112
      %v7428 = vadd.s32 %v7413, 120
      %v7429 = vadd.s32 %v7413, 128
      %v7430 = vadd.s32 %v7413, 136
      %v7431 = vadd.s32 %v7413, 144
      %v7432 = vadd.s32 %v7413, 152
      %v7433 = vadd.s32 %v7413, 160
      %v7434 = vadd.s32 %v7413, 168
      %v7435 = vadd.s32 %v7413, 176
      %v7436 = vadd.s32 %v7413, 184
      %v7437 = vadd.s32 %v7413, 192
      %v7438 = vadd.s32 %v7413, 200
      %v7439 = vadd.s32 %v7413, 208
      %v7440 = vadd.s32 %v7413, 216
      %v7441 = vadd.s32 %v7413, 224
      %v7442 = vadd.s32 %v7413, 232
      %v7443 = vadd.s32 %v7413, 240
      %v7444 = vadd.s32 %v7413, 248
      %v7445 = vstv %s4671
      %v7446 = vadd.s32 %v7445, %v7413
      %v7447 = vadd.s32 %v7445, %v7414
      %v7448 = vadd.s32 %v7445, %v7415
      %v7449 = vadd.s32 %v7445, %v7416
      %v7450 = vadd.s32 %v7445, %v7417
      %v7451 = vadd.s32 %v7445, %v7418
      %v7452 = vadd.s32 %v7445, %v7419
      %v7453 = vadd.s32 %v7445, %v7420
      %v7454 = vadd.s32 %v7445, %v7421
      %v7455 = vadd.s32 %v7445, %v7422
      %v7456 = vadd.s32 %v7445, %v7423
      %v7457 = vadd.s32 %v7445, %v7424
      %v7458 = vadd.s32 %v7445, %v7425
      %v7459 = vadd.s32 %v7445, %v7426
      %v7460 = vadd.s32 %v7445, %v7427
      %v7461 = vadd.s32 %v7445, %v7428
      %v7462 = vadd.s32 %v7445, %v7429
      %v7463 = vadd.s32 %v7445, %v7430
      %v7464 = vadd.s32 %v7445, %v7431
      %v7465 = vadd.s32 %v7445, %v7432
      %v7466 = vadd.s32 %v7445, %v7433
      %v7467 = vadd.s32 %v7445, %v7434
      %v7468 = vadd.s32 %v7445, %v7435
      %v7469 = vadd.s32 %v7445, %v7436
      %v7470 = vadd.s32 %v7445, %v7437
      %v7471 = vadd.s32 %v7445, %v7438
      %v7472 = vadd.s32 %v7445, %v7439
      %v7473 = vadd.s32 %v7445, %v7440
      %v7474 = vadd.s32 %v7445, %v7441
      %v7475 = vadd.s32 %v7445, %v7442
      %v7476 = vadd.s32 %v7445, %v7443
      %v7477 = vadd.s32 %v7445, %v7444
      %v7478 = vcvt.s32.f32 %v7446
      %v7479 = vcvt.s32.f32 %v7447
      %v7480 = vcvt.s32.f32 %v7448
      %v7481 = vcvt.s32.f32 %v7449
      %v7482 = vcvt.s32.f32 %v7450
      %v7483 = vcvt.s32.f32 %v7451
      %v7484 = vcvt.s32.f32 %v7452
      %v7485 = vcvt.s32.f32 %v7453
      %v7486 = vcvt.s32.f32 %v7454
      %v7487 = vcvt.s32.f32 %v7455
      %v7488 = vcvt.s32.f32 %v7456
      %v7489 = vcvt.s32.f32 %v7457
      %v7490 = vcvt.s32.f32 %v7458
      %v7491 = vcvt.s32.f32 %v7459
      %v7492 = vcvt.s32.f32 %v7460
      %v7493 = vcvt.s32.f32 %v7461
      %v7494 = vcvt.s32.f32 %v7462
      %v7495 = vcvt.s32.f32 %v7463
      %v7496 = vcvt.s32.f32 %v7464
      %v7497 = vcvt.s32.f32 %v7465
      %v7498 = vcvt.s32.f32 %v7466
      %v7499 = vcvt.s32.f32 %v7467
      %v7500 = vcvt.s32.f32 %v7468
      %v7501 = vcvt.s32.f32 %v7469
      %v7502 = vcvt.s32.f32 %v7470
      %v7503 = vcvt.s32.f32 %v7471
      %v7504 = vcvt.s32.f32 %v7472
      %v7505 = vcvt.s32.f32 %v7473
      %v7506 = vcvt.s32.f32 %v7474
      %v7507 = vcvt.s32.f32 %v7475
      %v7508 = vcvt.s32.f32 %v7476
      %v7509 = vcvt.s32.f32 %v7477
      %v7510 = vadd.f32 %v7478, 0.5
      %v7511 = vadd.f32 %v7479, 0.5
      %v7512 = vadd.f32 %v7480, 0.5
      %v7513 = vadd.f32 %v7481, 0.5
      %v7514 = vadd.f32 %v7482, 0.5
      %v7515 = vadd.f32 %v7483, 0.5
      %v7516 = vadd.f32 %v7484, 0.5
      %v7517 = vadd.f32 %v7485, 0.5
      %v7518 = vadd.f32 %v7486, 0.5
      %v7519 = vadd.f32 %v7487, 0.5
      %v7520 = vadd.f32 %v7488, 0.5
      %v7521 = vadd.f32 %v7489, 0.5
      %v7522 = vadd.f32 %v7490, 0.5
      %v7523 = vadd.f32 %v7491, 0.5
      %v7524 = vadd.f32 %v7492, 0.5
      %v7525 = vadd.f32 %v7493, 0.5
      %v7526 = vadd.f32 %v7494, 0.5
      %v7527 = vadd.f32 %v7495, 0.5
      %v7528 = vadd.f32 %v7496, 0.5
      %v7529 = vadd.f32 %v7497, 0.5
      %v7530 = vadd.f32 %v7498, 0.5
      %v7531 = vadd.f32 %v7499, 0.5
      %v7532 = vadd.f32 %v7500, 0.5
      %v7533 = vadd.f32 %v7501, 0.5
      %v7534 = vadd.f32 %v7502, 0.5
      %v7535 = vadd.f32 %v7503, 0.5
      %v7536 = vadd.f32 %v7504, 0.5
      %v7537 = vadd.f32 %v7505, 0.5
      %v7538 = vadd.f32 %v7506, 0.5
      %v7539 = vadd.f32 %v7507, 0.5
      %v7540 = vadd.f32 %v7508, 0.5
      %v7541 = vadd.f32 %v7509, 0.5
      %v7542 = vmul.f32 %v7510, 0.0030864198
      %v7543 = vmul.f32 %v7511, 0.0030864198
      %v7544 = vmul.f32 %v7512, 0.0030864198
      %v7545 = vmul.f32 %v7513, 0.0030864198
      %v7546 = vmul.f32 %v7514, 0.0030864198
      %v7547 = vmul.f32 %v7515, 0.0030864198
      %v7548 = vmul.f32 %v7516, 0.0030864198
      %v7549 = vmul.f32 %v7517, 0.0030864198
      %v7550 = vmul.f32 %v7518, 0.0030864198
      %v7551 = vmul.f32 %v7519, 0.0030864198
      %v7552 = vmul.f32 %v7520, 0.0030864198
      %v7553 = vmul.f32 %v7521, 0.0030864198
      %v7554 = vmul.f32 %v7522, 0.0030864198
      %v7555 = vmul.f32 %v7523, 0.0030864198
      %v7556 = vmul.f32 %v7524, 0.0030864198
      %v7557 = vmul.f32 %v7525, 0.0030864198
      %v7558 = vmul.f32 %v7526, 0.0030864198
      %v7559 = vmul.f32 %v7527, 0.0030864198
      %v7560 = vmul.f32 %v7528, 0.0030864198
      %v7561 = vmul.f32 %v7529, 0.0030864198
      %v7562 = vmul.f32 %v7530, 0.0030864198
      %v7563 = vmul.f32 %v7531, 0.0030864198
      %v7564 = vmul.f32 %v7532, 0.0030864198
      %v7565 = vmul.f32 %v7533, 0.0030864198
      %v7566 = vmul.f32 %v7534, 0.0030864198
      %v7567 = vmul.f32 %v7535, 0.0030864198
      %v7568 = vmul.f32 %v7536, 0.0030864198
      %v7569 = vmul.f32 %v7537, 0.0030864198
      %v7570 = vmul.f32 %v7538, 0.0030864198
      %v7571 = vmul.f32 %v7539, 0.0030864198
      %v7572 = vmul.f32 %v7540, 0.0030864198
      %v7573 = vmul.f32 %v7541, 0.0030864198
      %v7574 = vfloor.f32 %v7542
      %v7575 = vfloor.f32 %v7543
      %v7576 = vfloor.f32 %v7544
      %v7577 = vfloor.f32 %v7545
      %v7578 = vfloor.f32 %v7546
      %v7579 = vfloor.f32 %v7547
      %v7580 = vfloor.f32 %v7548
      %v7581 = vfloor.f32 %v7549
      %v7582 = vfloor.f32 %v7550
      %v7583 = vfloor.f32 %v7551
      %v7584 = vfloor.f32 %v7552
      %v7585 = vfloor.f32 %v7553
      %v7586 = vfloor.f32 %v7554
      %v7587 = vfloor.f32 %v7555
      %v7588 = vfloor.f32 %v7556
      %v7589 = vfloor.f32 %v7557
      %v7590 = vfloor.f32 %v7558
      %v7591 = vfloor.f32 %v7559
      %v7592 = vfloor.f32 %v7560
      %v7593 = vfloor.f32 %v7561
      %v7594 = vfloor.f32 %v7562
      %v7595 = vfloor.f32 %v7563
      %v7596 = vfloor.f32 %v7564
      %v7597 = vfloor.f32 %v7565
      %v7598 = vfloor.f32 %v7566
      %v7599 = vfloor.f32 %v7567
      %v7600 = vfloor.f32 %v7568
      %v7601 = vfloor.f32 %v7569
      %v7602 = vfloor.f32 %v7570
      %v7603 = vfloor.f32 %v7571
      %v7604 = vfloor.f32 %v7572
      %v7605 = vfloor.f32 %v7573
      %v7606 = vmul.f32 %v7574, 324.0
      %v7607 = vmul.f32 %v7575, 324.0
      %v7608 = vmul.f32 %v7576, 324.0
      %v7609 = vmul.f32 %v7577, 324.0
      %v7610 = vmul.f32 %v7578, 324.0
      %v7611 = vmul.f32 %v7579, 324.0
      %v7612 = vmul.f32 %v7580, 324.0
      %v7613 = vmul.f32 %v7581, 324.0
      %v7614 = vmul.f32 %v7582, 324.0
      %v7615 = vmul.f32 %v7583, 324.0
      %v7616 = vmul.f32 %v7584, 324.0
      %v7617 = vmul.f32 %v7585, 324.0
      %v7618 = vmul.f32 %v7586, 324.0
      %v7619 = vmul.f32 %v7587, 324.0
      %v7620 = vmul.f32 %v7588, 324.0
      %v7621 = vmul.f32 %v7589, 324.0
      %v7622 = vmul.f32 %v7590, 324.0
      %v7623 = vmul.f32 %v7591, 324.0
      %v7624 = vmul.f32 %v7592, 324.0
      %v7625 = vmul.f32 %v7593, 324.0
      %v7626 = vmul.f32 %v7594, 324.0
      %v7627 = vmul.f32 %v7595, 324.0
      %v7628 = vmul.f32 %v7596, 324.0
      %v7629 = vmul.f32 %v7597, 324.0
      %v7630 = vmul.f32 %v7598, 324.0
      %v7631 = vmul.f32 %v7599, 324.0
      %v7632 = vmul.f32 %v7600, 324.0
      %v7633 = vmul.f32 %v7601, 324.0
      %v7634 = vmul.f32 %v7602, 324.0
      %v7635 = vmul.f32 %v7603, 324.0
      %v7636 = vmul.f32 %v7604, 324.0
      %v7637 = vmul.f32 %v7605, 324.0
      %v7638 = vsub.f32 %v7478, %v7606
      %v7639 = vsub.f32 %v7479, %v7607
      %v7640 = vsub.f32 %v7480, %v7608
      %v7641 = vsub.f32 %v7481, %v7609
      %v7642 = vsub.f32 %v7482, %v7610
      %v7643 = vsub.f32 %v7483, %v7611
      %v7644 = vsub.f32 %v7484, %v7612
      %v7645 = vsub.f32 %v7485, %v7613
      %v7646 = vsub.f32 %v7486, %v7614
      %v7647 = vsub.f32 %v7487, %v7615
      %v7648 = vsub.f32 %v7488, %v7616
      %v7649 = vsub.f32 %v7489, %v7617
      %v7650 = vsub.f32 %v7490, %v7618
      %v7651 = vsub.f32 %v7491, %v7619
      %v7652 = vsub.f32 %v7492, %v7620
      %v7653 = vsub.f32 %v7493, %v7621
      %v7654 = vsub.f32 %v7494, %v7622
      %v7655 = vsub.f32 %v7495, %v7623
      %v7656 = vsub.f32 %v7496, %v7624
      %v7657 = vsub.f32 %v7497, %v7625
      %v7658 = vsub.f32 %v7498, %v7626
      %v7659 = vsub.f32 %v7499, %v7627
      %v7660 = vsub.f32 %v7500, %v7628
      %v7661 = vsub.f32 %v7501, %v7629
      %v7662 = vsub.f32 %v7502, %v7630
      %v7663 = vsub.f32 %v7503, %v7631
      %v7664 = vsub.f32 %v7504, %v7632
      %v7665 = vsub.f32 %v7505, %v7633
      %v7666 = vsub.f32 %v7506, %v7634
      %v7667 = vsub.f32 %v7507, %v7635
      %v7668 = vsub.f32 %v7508, %v7636
      %v7669 = vsub.f32 %v7509, %v7637
      %v7670 = vadd.f32 %v7638, 0.5
      %v7671 = vadd.f32 %v7639, 0.5
      %v7672 = vadd.f32 %v7640, 0.5
      %v7673 = vadd.f32 %v7641, 0.5
      %v7674 = vadd.f32 %v7642, 0.5
      %v7675 = vadd.f32 %v7643, 0.5
      %v7676 = vadd.f32 %v7644, 0.5
      %v7677 = vadd.f32 %v7645, 0.5
      %v7678 = vadd.f32 %v7646, 0.5
      %v7679 = vadd.f32 %v7647, 0.5
      %v7680 = vadd.f32 %v7648, 0.5
      %v7681 = vadd.f32 %v7649, 0.5
      %v7682 = vadd.f32 %v7650, 0.5
      %v7683 = vadd.f32 %v7651, 0.5
      %v7684 = vadd.f32 %v7652, 0.5
      %v7685 = vadd.f32 %v7653, 0.5
      %v7686 = vadd.f32 %v7654, 0.5
      %v7687 = vadd.f32 %v7655, 0.5
      %v7688 = vadd.f32 %v7656, 0.5
      %v7689 = vadd.f32 %v7657, 0.5
      %v7690 = vadd.f32 %v7658, 0.5
      %v7691 = vadd.f32 %v7659, 0.5
      %v7692 = vadd.f32 %v7660, 0.5
      %v7693 = vadd.f32 %v7661, 0.5
      %v7694 = vadd.f32 %v7662, 0.5
      %v7695 = vadd.f32 %v7663, 0.5
      %v7696 = vadd.f32 %v7664, 0.5
      %v7697 = vadd.f32 %v7665, 0.5
      %v7698 = vadd.f32 %v7666, 0.5
      %v7699 = vadd.f32 %v7667, 0.5
      %v7700 = vadd.f32 %v7668, 0.5
      %v7701 = vadd.f32 %v7669, 0.5
      %v7702 = vmul.f32 %v7670, 0.055555556
      %v7703 = vmul.f32 %v7671, 0.055555556
      %v7704 = vmul.f32 %v7672, 0.055555556
      %v7705 = vmul.f32 %v7673, 0.055555556
      %v7706 = vmul.f32 %v7674, 0.055555556
      %v7707 = vmul.f32 %v7675, 0.055555556
      %v7708 = vmul.f32 %v7676, 0.055555556
      %v7709 = vmul.f32 %v7677, 0.055555556
      %v7710 = vmul.f32 %v7678, 0.055555556
      %v7711 = vmul.f32 %v7679, 0.055555556
      %v7712 = vmul.f32 %v7680, 0.055555556
      %v7713 = vmul.f32 %v7681, 0.055555556
      %v7714 = vmul.f32 %v7682, 0.055555556
      %v7715 = vmul.f32 %v7683, 0.055555556
      %v7716 = vmul.f32 %v7684, 0.055555556
      %v7717 = vmul.f32 %v7685, 0.055555556
      %v7718 = vmul.f32 %v7686, 0.055555556
      %v7719 = vmul.f32 %v7687, 0.055555556
      %v7720 = vmul.f32 %v7688, 0.055555556
      %v7721 = vmul.f32 %v7689, 0.055555556
      %v7722 = vmul.f32 %v7690, 0.055555556
      %v7723 = vmul.f32 %v7691, 0.055555556
      %v7724 = vmul.f32 %v7692, 0.055555556
      %v7725 = vmul.f32 %v7693, 0.055555556
      %v7726 = vmul.f32 %v7694, 0.055555556
      %v7727 = vmul.f32 %v7695, 0.055555556
      %v7728 = vmul.f32 %v7696, 0.055555556
      %v7729 = vmul.f32 %v7697, 0.055555556
      %v7730 = vmul.f32 %v7698, 0.055555556
      %v7731 = vmul.f32 %v7699, 0.055555556
      %v7732 = vmul.f32 %v7700, 0.055555556
      %v7733 = vmul.f32 %v7701, 0.055555556
      %v7734 = vfloor.f32 %v7702
      %v7735 = vfloor.f32 %v7703
      %v7736 = vfloor.f32 %v7704
      %v7737 = vfloor.f32 %v7705
      %v7738 = vfloor.f32 %v7706
      %v7739 = vfloor.f32 %v7707
      %v7740 = vfloor.f32 %v7708
      %v7741 = vfloor.f32 %v7709
      %v7742 = vfloor.f32 %v7710
      %v7743 = vfloor.f32 %v7711
      %v7744 = vfloor.f32 %v7712
      %v7745 = vfloor.f32 %v7713
      %v7746 = vfloor.f32 %v7714
      %v7747 = vfloor.f32 %v7715
      %v7748 = vfloor.f32 %v7716
      %v7749 = vfloor.f32 %v7717
      %v7750 = vfloor.f32 %v7718
      %v7751 = vfloor.f32 %v7719
      %v7752 = vfloor.f32 %v7720
      %v7753 = vfloor.f32 %v7721
      %v7754 = vfloor.f32 %v7722
      %v7755 = vfloor.f32 %v7723
      %v7756 = vfloor.f32 %v7724
      %v7757 = vfloor.f32 %v7725
      %v7758 = vfloor.f32 %v7726
      %v7759 = vfloor.f32 %v7727
      %v7760 = vfloor.f32 %v7728
      %v7761 = vfloor.f32 %v7729
      %v7762 = vfloor.f32 %v7730
      %v7763 = vfloor.f32 %v7731
      %v7764 = vfloor.f32 %v7732
      %v7765 = vfloor.f32 %v7733
      %v7766 = vmul.f32 %v7734, 18.0
      %v7767 = vmul.f32 %v7735, 18.0
      %v7768 = vmul.f32 %v7736, 18.0
      %v7769 = vmul.f32 %v7737, 18.0
      %v7770 = vmul.f32 %v7738, 18.0
      %v7771 = vmul.f32 %v7739, 18.0
      %v7772 = vmul.f32 %v7740, 18.0
      %v7773 = vmul.f32 %v7741, 18.0
      %v7774 = vmul.f32 %v7742, 18.0
      %v7775 = vmul.f32 %v7743, 18.0
      %v7776 = vmul.f32 %v7744, 18.0
      %v7777 = vmul.f32 %v7745, 18.0
      %v7778 = vmul.f32 %v7746, 18.0
      %v7779 = vmul.f32 %v7747, 18.0
      %v7780 = vmul.f32 %v7748, 18.0
      %v7781 = vmul.f32 %v7749, 18.0
      %v7782 = vmul.f32 %v7750, 18.0
      %v7783 = vmul.f32 %v7751, 18.0
      %v7784 = vmul.f32 %v7752, 18.0
      %v7785 = vmul.f32 %v7753, 18.0
      %v7786 = vmul.f32 %v7754, 18.0
      %v7787 = vmul.f32 %v7755, 18.0
      %v7788 = vmul.f32 %v7756, 18.0
      %v7789 = vmul.f32 %v7757, 18.0
      %v7790 = vmul.f32 %v7758, 18.0
      %v7791 = vmul.f32 %v7759, 18.0
      %v7792 = vmul.f32 %v7760, 18.0
      %v7793 = vmul.f32 %v7761, 18.0
      %v7794 = vmul.f32 %v7762, 18.0
      %v7795 = vmul.f32 %v7763, 18.0
      %v7796 = vmul.f32 %v7764, 18.0
      %v7797 = vmul.f32 %v7765, 18.0
      %v7798 = vsub.f32 %v7638, %v7766
      %v7799 = vsub.f32 %v7639, %v7767
      %v7800 = vsub.f32 %v7640, %v7768
      %v7801 = vsub.f32 %v7641, %v7769
      %v7802 = vsub.f32 %v7642, %v7770
      %v7803 = vsub.f32 %v7643, %v7771
      %v7804 = vsub.f32 %v7644, %v7772
      %v7805 = vsub.f32 %v7645, %v7773
      %v7806 = vsub.f32 %v7646, %v7774
      %v7807 = vsub.f32 %v7647, %v7775
      %v7808 = vsub.f32 %v7648, %v7776
      %v7809 = vsub.f32 %v7649, %v7777
      %v7810 = vsub.f32 %v7650, %v7778
      %v7811 = vsub.f32 %v7651, %v7779
      %v7812 = vsub.f32 %v7652, %v7780
      %v7813 = vsub.f32 %v7653, %v7781
      %v7814 = vsub.f32 %v7654, %v7782
      %v7815 = vsub.f32 %v7655, %v7783
      %v7816 = vsub.f32 %v7656, %v7784
      %v7817 = vsub.f32 %v7657, %v7785
      %v7818 = vsub.f32 %v7658, %v7786
      %v7819 = vsub.f32 %v7659, %v7787
      %v7820 = vsub.f32 %v7660, %v7788
      %v7821 = vsub.f32 %v7661, %v7789
      %v7822 = vsub.f32 %v7662, %v7790
      %v7823 = vsub.f32 %v7663, %v7791
      %v7824 = vsub.f32 %v7664, %v7792
      %v7825 = vsub.f32 %v7665, %v7793
      %v7826 = vsub.f32 %v7666, %v7794
      %v7827 = vsub.f32 %v7667, %v7795
      %v7828 = vsub.f32 %v7668, %v7796
      %v7829 = vsub.f32 %v7669, %v7797
      %vm7830 = vcmp.lt.f32.partialorder %v7478, 648.0
      %vm7831 = vcmp.lt.f32.partialorder %v7479, 648.0
      %vm7832 = vcmp.lt.f32.partialorder %v7480, 648.0
      %vm7833 = vcmp.lt.f32.partialorder %v7481, 648.0
      %vm7834 = vcmp.lt.f32.partialorder %v7482, 648.0
      %vm7835 = vcmp.lt.f32.partialorder %v7483, 648.0
      %vm7836 = vcmp.lt.f32.partialorder %v7484, 648.0
      %vm7837 = vcmp.lt.f32.partialorder %v7485, 648.0
      %vm7838 = vcmp.lt.f32.partialorder %v7486, 648.0
      %vm7839 = vcmp.lt.f32.partialorder %v7487, 648.0
      %vm7840 = vcmp.lt.f32.partialorder %v7488, 648.0
      %vm7841 = vcmp.lt.f32.partialorder %v7489, 648.0
      %vm7842 = vcmp.lt.f32.partialorder %v7490, 648.0
      %vm7843 = vcmp.lt.f32.partialorder %v7491, 648.0
      %vm7844 = vcmp.lt.f32.partialorder %v7492, 648.0
      %vm7845 = vcmp.lt.f32.partialorder %v7493, 648.0
      %vm7846 = vcmp.lt.f32.partialorder %v7494, 648.0
      %vm7847 = vcmp.lt.f32.partialorder %v7495, 648.0
      %vm7848 = vcmp.lt.f32.partialorder %v7496, 648.0
      %vm7849 = vcmp.lt.f32.partialorder %v7497, 648.0
      %vm7850 = vcmp.lt.f32.partialorder %v7498, 648.0
      %vm7851 = vcmp.lt.f32.partialorder %v7499, 648.0
      %vm7852 = vcmp.lt.f32.partialorder %v7500, 648.0
      %vm7853 = vcmp.lt.f32.partialorder %v7501, 648.0
      %vm7854 = vcmp.lt.f32.partialorder %v7502, 648.0
      %vm7855 = vcmp.lt.f32.partialorder %v7503, 648.0
      %vm7856 = vcmp.lt.f32.partialorder %v7504, 648.0
      %vm7857 = vcmp.lt.f32.partialorder %v7505, 648.0
      %vm7858 = vcmp.lt.f32.partialorder %v7506, 648.0
      %vm7859 = vcmp.lt.f32.partialorder %v7507, 648.0
      %vm7860 = vcmp.lt.f32.partialorder %v7508, 648.0
      %vm7861 = vcmp.lt.f32.partialorder %v7509, 648.0
      %vm7862 = vcmp.ge.f32.partialorder %v7734, 1.0
      %vm7863 = vcmp.ge.f32.partialorder %v7735, 1.0
      %vm7864 = vcmp.ge.f32.partialorder %v7736, 1.0
      %vm7865 = vcmp.ge.f32.partialorder %v7737, 1.0
      %vm7866 = vcmp.ge.f32.partialorder %v7738, 1.0
      %vm7867 = vcmp.ge.f32.partialorder %v7739, 1.0
      %vm7868 = vcmp.ge.f32.partialorder %v7740, 1.0
      %vm7869 = vcmp.ge.f32.partialorder %v7741, 1.0
      %vm7870 = vcmp.ge.f32.partialorder %v7742, 1.0
      %vm7871 = vcmp.ge.f32.partialorder %v7743, 1.0
      %vm7872 = vcmp.ge.f32.partialorder %v7744, 1.0
      %vm7873 = vcmp.ge.f32.partialorder %v7745, 1.0
      %vm7874 = vcmp.ge.f32.partialorder %v7746, 1.0
      %vm7875 = vcmp.ge.f32.partialorder %v7747, 1.0
      %vm7876 = vcmp.ge.f32.partialorder %v7748, 1.0
      %vm7877 = vcmp.ge.f32.partialorder %v7749, 1.0
      %vm7878 = vcmp.ge.f32.partialorder %v7750, 1.0
      %vm7879 = vcmp.ge.f32.partialorder %v7751, 1.0
      %vm7880 = vcmp.ge.f32.partialorder %v7752, 1.0
      %vm7881 = vcmp.ge.f32.partialorder %v7753, 1.0
      %vm7882 = vcmp.ge.f32.partialorder %v7754, 1.0
      %vm7883 = vcmp.ge.f32.partialorder %v7755, 1.0
      %vm7884 = vcmp.ge.f32.partialorder %v7756, 1.0
      %vm7885 = vcmp.ge.f32.partialorder %v7757, 1.0
      %vm7886 = vcmp.ge.f32.partialorder %v7758, 1.0
      %vm7887 = vcmp.ge.f32.partialorder %v7759, 1.0
      %vm7888 = vcmp.ge.f32.partialorder %v7760, 1.0
      %vm7889 = vcmp.ge.f32.partialorder %v7761, 1.0
      %vm7890 = vcmp.ge.f32.partialorder %v7762, 1.0
      %vm7891 = vcmp.ge.f32.partialorder %v7763, 1.0
      %vm7892 = vcmp.ge.f32.partialorder %v7764, 1.0
      %vm7893 = vcmp.ge.f32.partialorder %v7765, 1.0
      %vm7894 = vmand %vm7830, %vm7862
      %vm7895 = vmand %vm7831, %vm7863
      %vm7896 = vmand %vm7832, %vm7864
      %vm7897 = vmand %vm7833, %vm7865
      %vm7898 = vmand %vm7834, %vm7866
      %vm7899 = vmand %vm7835, %vm7867
      %vm7900 = vmand %vm7836, %vm7868
      %vm7901 = vmand %vm7837, %vm7869
      %vm7902 = vmand %vm7838, %vm7870
      %vm7903 = vmand %vm7839, %vm7871
      %vm7904 = vmand %vm7840, %vm7872
      %vm7905 = vmand %vm7841, %vm7873
      %vm7906 = vmand %vm7842, %vm7874
      %vm7907 = vmand %vm7843, %vm7875
      %vm7908 = vmand %vm7844, %vm7876
      %vm7909 = vmand %vm7845, %vm7877
      %vm7910 = vmand %vm7846, %vm7878
      %vm7911 = vmand %vm7847, %vm7879
      %vm7912 = vmand %vm7848, %vm7880
      %vm7913 = vmand %vm7849, %vm7881
      %vm7914 = vmand %vm7850, %vm7882
      %vm7915 = vmand %vm7851, %vm7883
      %vm7916 = vmand %vm7852, %vm7884
      %vm7917 = vmand %vm7853, %vm7885
      %vm7918 = vmand %vm7854, %vm7886
      %vm7919 = vmand %vm7855, %vm7887
      %vm7920 = vmand %vm7856, %vm7888
      %vm7921 = vmand %vm7857, %vm7889
      %vm7922 = vmand %vm7858, %vm7890
      %vm7923 = vmand %vm7859, %vm7891
      %vm7924 = vmand %vm7860, %vm7892
      %vm7925 = vmand %vm7861, %vm7893
      %vm7926 = vcmp.le.f32.partialorder %v7734, 16.0
      %vm7927 = vcmp.le.f32.partialorder %v7735, 16.0
      %vm7928 = vcmp.le.f32.partialorder %v7736, 16.0
      %vm7929 = vcmp.le.f32.partialorder %v7737, 16.0
      %vm7930 = vcmp.le.f32.partialorder %v7738, 16.0
      %vm7931 = vcmp.le.f32.partialorder %v7739, 16.0
      %vm7932 = vcmp.le.f32.partialorder %v7740, 16.0
      %vm7933 = vcmp.le.f32.partialorder %v7741, 16.0
      %vm7934 = vcmp.le.f32.partialorder %v7742, 16.0
      %vm7935 = vcmp.le.f32.partialorder %v7743, 16.0
      %vm7936 = vcmp.le.f32.partialorder %v7744, 16.0
      %vm7937 = vcmp.le.f32.partialorder %v7745, 16.0
      %vm7938 = vcmp.le.f32.partialorder %v7746, 16.0
      %vm7939 = vcmp.le.f32.partialorder %v7747, 16.0
      %vm7940 = vcmp.le.f32.partialorder %v7748, 16.0
      %vm7941 = vcmp.le.f32.partialorder %v7749, 16.0
      %vm7942 = vcmp.le.f32.partialorder %v7750, 16.0
      %vm7943 = vcmp.le.f32.partialorder %v7751, 16.0
      %vm7944 = vcmp.le.f32.partialorder %v7752, 16.0
      %vm7945 = vcmp.le.f32.partialorder %v7753, 16.0
      %vm7946 = vcmp.le.f32.partialorder %v7754, 16.0
      %vm7947 = vcmp.le.f32.partialorder %v7755, 16.0
      %vm7948 = vcmp.le.f32.partialorder %v7756, 16.0
      %vm7949 = vcmp.le.f32.partialorder %v7757, 16.0
      %vm7950 = vcmp.le.f32.partialorder %v7758, 16.0
      %vm7951 = vcmp.le.f32.partialorder %v7759, 16.0
      %vm7952 = vcmp.le.f32.partialorder %v7760, 16.0
      %vm7953 = vcmp.le.f32.partialorder %v7761, 16.0
      %vm7954 = vcmp.le.f32.partialorder %v7762, 16.0
      %vm7955 = vcmp.le.f32.partialorder %v7763, 16.0
      %vm7956 = vcmp.le.f32.partialorder %v7764, 16.0
      %vm7957 = vcmp.le.f32.partialorder %v7765, 16.0
      %vm7958 = vmand %vm7894, %vm7926
      %vm7959 = vmand %vm7895, %vm7927
      %vm7960 = vmand %vm7896, %vm7928
      %vm7961 = vmand %vm7897, %vm7929
      %vm7962 = vmand %vm7898, %vm7930
      %vm7963 = vmand %vm7899, %vm7931
      %vm7964 = vmand %vm7900, %vm7932
      %vm7965 = vmand %vm7901, %vm7933
      %vm7966 = vmand %vm7902, %vm7934
      %vm7967 = vmand %vm7903, %vm7935
      %vm7968 = vmand %vm7904, %vm7936
      %vm7969 = vmand %vm7905, %vm7937
      %vm7970 = vmand %vm7906, %vm7938
      %vm7971 = vmand %vm7907, %vm7939
      %vm7972 = vmand %vm7908, %vm7940
      %vm7973 = vmand %vm7909, %vm7941
      %vm7974 = vmand %vm7910, %vm7942
      %vm7975 = vmand %vm7911, %vm7943
      %vm7976 = vmand %vm7912, %vm7944
      %vm7977 = vmand %vm7913, %vm7945
      %vm7978 = vmand %vm7914, %vm7946
      %vm7979 = vmand %vm7915, %vm7947
      %vm7980 = vmand %vm7916, %vm7948
      %vm7981 = vmand %vm7917, %vm7949
      %vm7982 = vmand %vm7918, %vm7950
      %vm7983 = vmand %vm7919, %vm7951
      %vm7984 = vmand %vm7920, %vm7952
      %vm7985 = vmand %vm7921, %vm7953
      %vm7986 = vmand %vm7922, %vm7954
      %vm7987 = vmand %vm7923, %vm7955
      %vm7988 = vmand %vm7924, %vm7956
      %vm7989 = vmand %vm7925, %vm7957
      %vm7990 = vcmp.ge.f32.partialorder %v7798, 1.0
      %vm7991 = vcmp.ge.f32.partialorder %v7799, 1.0
      %vm7992 = vcmp.ge.f32.partialorder %v7800, 1.0
      %vm7993 = vcmp.ge.f32.partialorder %v7801, 1.0
      %vm7994 = vcmp.ge.f32.partialorder %v7802, 1.0
      %vm7995 = vcmp.ge.f32.partialorder %v7803, 1.0
      %vm7996 = vcmp.ge.f32.partialorder %v7804, 1.0
      %vm7997 = vcmp.ge.f32.partialorder %v7805, 1.0
      %vm7998 = vcmp.ge.f32.partialorder %v7806, 1.0
      %vm7999 = vcmp.ge.f32.partialorder %v7807, 1.0
      %vm8000 = vcmp.ge.f32.partialorder %v7808, 1.0
      %vm8001 = vcmp.ge.f32.partialorder %v7809, 1.0
      %vm8002 = vcmp.ge.f32.partialorder %v7810, 1.0
      %vm8003 = vcmp.ge.f32.partialorder %v7811, 1.0
      %vm8004 = vcmp.ge.f32.partialorder %v7812, 1.0
      %vm8005 = vcmp.ge.f32.partialorder %v7813, 1.0
      %vm8006 = vcmp.ge.f32.partialorder %v7814, 1.0
      %vm8007 = vcmp.ge.f32.partialorder %v7815, 1.0
      %vm8008 = vcmp.ge.f32.partialorder %v7816, 1.0
      %vm8009 = vcmp.ge.f32.partialorder %v7817, 1.0
      %vm8010 = vcmp.ge.f32.partialorder %v7818, 1.0
      %vm8011 = vcmp.ge.f32.partialorder %v7819, 1.0
      %vm8012 = vcmp.ge.f32.partialorder %v7820, 1.0
      %vm8013 = vcmp.ge.f32.partialorder %v7821, 1.0
      %vm8014 = vcmp.ge.f32.partialorder %v7822, 1.0
      %vm8015 = vcmp.ge.f32.partialorder %v7823, 1.0
      %vm8016 = vcmp.ge.f32.partialorder %v7824, 1.0
      %vm8017 = vcmp.ge.f32.partialorder %v7825, 1.0
      %vm8018 = vcmp.ge.f32.partialorder %v7826, 1.0
      %vm8019 = vcmp.ge.f32.partialorder %v7827, 1.0
      %vm8020 = vcmp.ge.f32.partialorder %v7828, 1.0
      %vm8021 = vcmp.ge.f32.partialorder %v7829, 1.0
      %vm8022 = vmand %vm7958, %vm7990
      %vm8023 = vmand %vm7959, %vm7991
      %vm8024 = vmand %vm7960, %vm7992
      %vm8025 = vmand %vm7961, %vm7993
      %vm8026 = vmand %vm7962, %vm7994
      %vm8027 = vmand %vm7963, %vm7995
      %vm8028 = vmand %vm7964, %vm7996
      %vm8029 = vmand %vm7965, %vm7997
      %vm8030 = vmand %vm7966, %vm7998
      %vm8031 = vmand %vm7967, %vm7999
      %vm8032 = vmand %vm7968, %vm8000
      %vm8033 = vmand %vm7969, %vm8001
      %vm8034 = vmand %vm7970, %vm8002
      %vm8035 = vmand %vm7971, %vm8003
      %vm8036 = vmand %vm7972, %vm8004
      %vm8037 = vmand %vm7973, %vm8005
      %vm8038 = vmand %vm7974, %vm8006
      %vm8039 = vmand %vm7975, %vm8007
      %vm8040 = vmand %vm7976, %vm8008
      %vm8041 = vmand %vm7977, %vm8009
      %vm8042 = vmand %vm7978, %vm8010
      %vm8043 = vmand %vm7979, %vm8011
      %vm8044 = vmand %vm7980, %vm8012
      %vm8045 = vmand %vm7981, %vm8013
      %vm8046 = vmand %vm7982, %vm8014
      %vm8047 = vmand %vm7983, %vm8015
      %vm8048 = vmand %vm7984, %vm8016
      %vm8049 = vmand %vm7985, %vm8017
      %vm8050 = vmand %vm7986, %vm8018
      %vm8051 = vmand %vm7987, %vm8019
      %vm8052 = vmand %vm7988, %vm8020
      %vm8053 = vmand %vm7989, %vm8021
      %vm8054 = vcmp.le.f32.partialorder %v7798, 16.0
      %vm8055 = vcmp.le.f32.partialorder %v7799, 16.0
      %vm8056 = vcmp.le.f32.partialorder %v7800, 16.0
      %vm8057 = vcmp.le.f32.partialorder %v7801, 16.0
      %vm8058 = vcmp.le.f32.partialorder %v7802, 16.0
      %vm8059 = vcmp.le.f32.partialorder %v7803, 16.0
      %vm8060 = vcmp.le.f32.partialorder %v7804, 16.0
      %vm8061 = vcmp.le.f32.partialorder %v7805, 16.0
      %vm8062 = vcmp.le.f32.partialorder %v7806, 16.0
      %vm8063 = vcmp.le.f32.partialorder %v7807, 16.0
      %vm8064 = vcmp.le.f32.partialorder %v7808, 16.0
      %vm8065 = vcmp.le.f32.partialorder %v7809, 16.0
      %vm8066 = vcmp.le.f32.partialorder %v7810, 16.0
      %vm8067 = vcmp.le.f32.partialorder %v7811, 16.0
      %vm8068 = vcmp.le.f32.partialorder %v7812, 16.0
      %vm8069 = vcmp.le.f32.partialorder %v7813, 16.0
      %vm8070 = vcmp.le.f32.partialorder %v7814, 16.0
      %vm8071 = vcmp.le.f32.partialorder %v7815, 16.0
      %vm8072 = vcmp.le.f32.partialorder %v7816, 16.0
      %vm8073 = vcmp.le.f32.partialorder %v7817, 16.0
      %vm8074 = vcmp.le.f32.partialorder %v7818, 16.0
      %vm8075 = vcmp.le.f32.partialorder %v7819, 16.0
      %vm8076 = vcmp.le.f32.partialorder %v7820, 16.0
      %vm8077 = vcmp.le.f32.partialorder %v7821, 16.0
      %vm8078 = vcmp.le.f32.partialorder %v7822, 16.0
      %vm8079 = vcmp.le.f32.partialorder %v7823, 16.0
      %vm8080 = vcmp.le.f32.partialorder %v7824, 16.0
      %vm8081 = vcmp.le.f32.partialorder %v7825, 16.0
      %vm8082 = vcmp.le.f32.partialorder %v7826, 16.0
      %vm8083 = vcmp.le.f32.partialorder %v7827, 16.0
      %vm8084 = vcmp.le.f32.partialorder %v7828, 16.0
      %vm8085 = vcmp.le.f32.partialorder %v7829, 16.0
      %vm8086 = vmand %vm8022, %vm8054
      %vm8087 = vmand %vm8023, %vm8055
      %vm8088 = vmand %vm8024, %vm8056
      %vm8089 = vmand %vm8025, %vm8057
      %vm8090 = vmand %vm8026, %vm8058
      %vm8091 = vmand %vm8027, %vm8059
      %vm8092 = vmand %vm8028, %vm8060
      %vm8093 = vmand %vm8029, %vm8061
      %vm8094 = vmand %vm8030, %vm8062
      %vm8095 = vmand %vm8031, %vm8063
      %vm8096 = vmand %vm8032, %vm8064
      %vm8097 = vmand %vm8033, %vm8065
      %vm8098 = vmand %vm8034, %vm8066
      %vm8099 = vmand %vm8035, %vm8067
      %vm8100 = vmand %vm8036, %vm8068
      %vm8101 = vmand %vm8037, %vm8069
      %vm8102 = vmand %vm8038, %vm8070
      %vm8103 = vmand %vm8039, %vm8071
      %vm8104 = vmand %vm8040, %vm8072
      %vm8105 = vmand %vm8041, %vm8073
      %vm8106 = vmand %vm8042, %vm8074
      %vm8107 = vmand %vm8043, %vm8075
      %vm8108 = vmand %vm8044, %vm8076
      %vm8109 = vmand %vm8045, %vm8077
      %vm8110 = vmand %vm8046, %vm8078
      %vm8111 = vmand %vm8047, %vm8079
      %vm8112 = vmand %vm8048, %vm8080
      %vm8113 = vmand %vm8049, %vm8081
      %vm8114 = vmand %vm8050, %vm8082
      %vm8115 = vmand %vm8051, %vm8083
      %vm8116 = vmand %vm8052, %vm8084
      %vm8117 = vmand %vm8053, %vm8085
      %v8118 = vsel %vm8086, 1.0, 0.0
      %v8119 = vsel %vm8087, 1.0, 0.0
      %v8120 = vsel %vm8088, 1.0, 0.0
      %v8121 = vsel %vm8089, 1.0, 0.0
      %v8122 = vsel %vm8090, 1.0, 0.0
      %v8123 = vsel %vm8091, 1.0, 0.0
      %v8124 = vsel %vm8092, 1.0, 0.0
      %v8125 = vsel %vm8093, 1.0, 0.0
      %v8126 = vsel %vm8094, 1.0, 0.0
      %v8127 = vsel %vm8095, 1.0, 0.0
      %v8128 = vsel %vm8096, 1.0, 0.0
      %v8129 = vsel %vm8097, 1.0, 0.0
      %v8130 = vsel %vm8098, 1.0, 0.0
      %v8131 = vsel %vm8099, 1.0, 0.0
      %v8132 = vsel %vm8100, 1.0, 0.0
      %v8133 = vsel %vm8101, 1.0, 0.0
      %v8134 = vsel %vm8102, 1.0, 0.0
      %v8135 = vsel %vm8103, 1.0, 0.0
      %v8136 = vsel %vm8104, 1.0, 0.0
      %v8137 = vsel %vm8105, 1.0, 0.0
      %v8138 = vsel %vm8106, 1.0, 0.0
      %v8139 = vsel %vm8107, 1.0, 0.0
      %v8140 = vsel %vm8108, 1.0, 0.0
      %v8141 = vsel %vm8109, 1.0, 0.0
      %v8142 = vsel %vm8110, 1.0, 0.0
      %v8143 = vsel %vm8111, 1.0, 0.0
      %v8144 = vsel %vm8112, 1.0, 0.0
      %v8145 = vsel %vm8113, 1.0, 0.0
      %v8146 = vsel %vm8114, 1.0, 0.0
      %v8147 = vsel %vm8115, 1.0, 0.0
      %v8148 = vsel %vm8116, 1.0, 0.0
      %v8149 = vsel %vm8117, 1.0, 0.0
      %v8150 = vmul.f32 %v7347, %v8118
      %v8151 = vmul.f32 %v7348, %v8119
      %v8152 = vmul.f32 %v7349, %v8120
      %v8153 = vmul.f32 %v7350, %v8121
      %v8154 = vmul.f32 %v7351, %v8122
      %v8155 = vmul.f32 %v7352, %v8123
      %v8156 = vmul.f32 %v7353, %v8124
      %v8157 = vmul.f32 %v7354, %v8125
      %v8158 = vmul.f32 %v7355, %v8126
      %v8159 = vmul.f32 %v7356, %v8127
      %v8160 = vmul.f32 %v7357, %v8128
      %v8161 = vmul.f32 %v7358, %v8129
      %v8162 = vmul.f32 %v7359, %v8130
      %v8163 = vmul.f32 %v7360, %v8131
      %v8164 = vmul.f32 %v7361, %v8132
      %v8165 = vmul.f32 %v7362, %v8133
      %v8166 = vmul.f32 %v7363, %v8134
      %v8167 = vmul.f32 %v7364, %v8135
      %v8168 = vmul.f32 %v7365, %v8136
      %v8169 = vmul.f32 %v7366, %v8137
      %v8170 = vmul.f32 %v7367, %v8138
      %v8171 = vmul.f32 %v7368, %v8139
      %v8172 = vmul.f32 %v7369, %v8140
      %v8173 = vmul.f32 %v7370, %v8141
      %v8174 = vmul.f32 %v7371, %v8142
      %v8175 = vmul.f32 %v7372, %v8143
      %v8176 = vmul.f32 %v7373, %v8144
      %v8177 = vmul.f32 %v7374, %v8145
      %v8178 = vmul.f32 %v7375, %v8146
      %v8179 = vmul.f32 %v7376, %v8147
      %v8180 = vmul.f32 %v7377, %v8148
      %v8181 = vmul.f32 %v7378, %v8149
      %v8182 = vadd.f32 %v8150, %v8151
      %v8183 = vadd.f32 %v8182, %v8152
      %v8184 = vadd.f32 %v8183, %v8153
      %v8185 = vadd.f32 %v8184, %v8154
      %v8186 = vadd.f32 %v8185, %v8155
      %v8187 = vadd.f32 %v8186, %v8156
      %v8188 = vadd.f32 %v8187, %v8157
      %v8189 = vadd.f32 %v8188, %v8158
      %v8190 = vadd.f32 %v8189, %v8159
      %v8191 = vadd.f32 %v8190, %v8160
      %v8192 = vadd.f32 %v8191, %v8161
      %v8193 = vadd.f32 %v8192, %v8162
      %v8194 = vadd.f32 %v8193, %v8163
      %v8195 = vadd.f32 %v8194, %v8164
      %v8196 = vadd.f32 %v8195, %v8165
      %v8197 = vadd.f32 %v8196, %v8166
      %v8198 = vadd.f32 %v8197, %v8167
      %v8199 = vadd.f32 %v8198, %v8168
      %v8200 = vadd.f32 %v8199, %v8169
      %v8201 = vadd.f32 %v8200, %v8170
      %v8202 = vadd.f32 %v8201, %v8171
      %v8203 = vadd.f32 %v8202, %v8172
      %v8204 = vadd.f32 %v8203, %v8173
      %v8205 = vadd.f32 %v8204, %v8174
      %v8206 = vadd.f32 %v8205, %v8175
      %v8207 = vadd.f32 %v8206, %v8176
      %v8208 = vadd.f32 %v8207, %v8177
      %v8209 = vadd.f32 %v8208, %v8178
      %v8210 = vadd.f32 %v8209, %v8179
      %v8211 = vadd.f32 %v8210, %v8180
      %v8212 = vadd.f32 %v8211, %v8181
      %v8213 = vrot.slane %v8212, 4
      %v8214 = vadd.f32 %v8212, %v8213
      %v8215 = vrot.slane %v8214, 2
      %v8216 = vadd.f32 %v8214, %v8215
      %v8217 = vrot.slane %v8216, 1
      %v8218 = vadd.f32 %v8216, %v8217
      %v8219 = vadd.f32 %v4669, %v8218
      %v8220 = vmul.f32 %v8150, %v7347
      %v8221 = vmul.f32 %v8151, %v7348
      %v8222 = vmul.f32 %v8152, %v7349
      %v8223 = vmul.f32 %v8153, %v7350
      %v8224 = vmul.f32 %v8154, %v7351
      %v8225 = vmul.f32 %v8155, %v7352
      %v8226 = vmul.f32 %v8156, %v7353
      %v8227 = vmul.f32 %v8157, %v7354
      %v8228 = vmul.f32 %v8158, %v7355
      %v8229 = vmul.f32 %v8159, %v7356
      %v8230 = vmul.f32 %v8160, %v7357
      %v8231 = vmul.f32 %v8161, %v7358
      %v8232 = vmul.f32 %v8162, %v7359
      %v8233 = vmul.f32 %v8163, %v7360
      %v8234 = vmul.f32 %v8164, %v7361
      %v8235 = vmul.f32 %v8165, %v7362
      %v8236 = vmul.f32 %v8166, %v7363
      %v8237 = vmul.f32 %v8167, %v7364
      %v8238 = vmul.f32 %v8168, %v7365
      %v8239 = vmul.f32 %v8169, %v7366
      %v8240 = vmul.f32 %v8170, %v7367
      %v8241 = vmul.f32 %v8171, %v7368
      %v8242 = vmul.f32 %v8172, %v7369
      %v8243 = vmul.f32 %v8173, %v7370
      %v8244 = vmul.f32 %v8174, %v7371
      %v8245 = vmul.f32 %v8175, %v7372
      %v8246 = vmul.f32 %v8176, %v7373
      %v8247 = vmul.f32 %v8177, %v7374
      %v8248 = vmul.f32 %v8178, %v7375
      %v8249 = vmul.f32 %v8179, %v7376
      %v8250 = vmul.f32 %v8180, %v7377
      %v8251 = vmul.f32 %v8181, %v7378
      %v8252 = vadd.f32 %v8220, %v8221
      %v8253 = vadd.f32 %v8252, %v8222
      %v8254 = vadd.f32 %v8253, %v8223
      %v8255 = vadd.f32 %v8254, %v8224
      %v8256 = vadd.f32 %v8255, %v8225
      %v8257 = vadd.f32 %v8256, %v8226
      %v8258 = vadd.f32 %v8257, %v8227
      %v8259 = vadd.f32 %v8258, %v8228
      %v8260 = vadd.f32 %v8259, %v8229
      %v8261 = vadd.f32 %v8260, %v8230
      %v8262 = vadd.f32 %v8261, %v8231
      %v8263 = vadd.f32 %v8262, %v8232
      %v8264 = vadd.f32 %v8263, %v8233
      %v8265 = vadd.f32 %v8264, %v8234
      %v8266 = vadd.f32 %v8265, %v8235
      %v8267 = vadd.f32 %v8266, %v8236
      %v8268 = vadd.f32 %v8267, %v8237
      %v8269 = vadd.f32 %v8268, %v8238
      %v8270 = vadd.f32 %v8269, %v8239
      %v8271 = vadd.f32 %v8270, %v8240
      %v8272 = vadd.f32 %v8271, %v8241
      %v8273 = vadd.f32 %v8272, %v8242
      %v8274 = vadd.f32 %v8273, %v8243
      %v8275 = vadd.f32 %v8274, %v8244
      %v8276 = vadd.f32 %v8275, %v8245
      %v8277 = vadd.f32 %v8276, %v8246
      %v8278 = vadd.f32 %v8277, %v8247
      %v8279 = vadd.f32 %v8278, %v8248
      %v8280 = vadd.f32 %v8279, %v8249
      %v8281 = vadd.f32 %v8280, %v8250
      %v8282 = vadd.f32 %v8281, %v8251
      %v8283 = vrot.slane %v8282, 4
      %v8284 = vadd.f32 %v8282, %v8283
      %v8285 = vrot.slane %v8284, 2
      %v8286 = vadd.f32 %v8284, %v8285
      %v8287 = vrot.slane %v8286, 1
      %v8288 = vadd.f32 %v8286, %v8287
      %v8289 = vadd.f32 %v4670, %v8288
    $region60: #{tpu_custom_call.1} parent=1 // loop_footer
      %s4668 = sadd.s32 1, %s4664
    $region61: #{tpu_custom_call.1} parent=1 // loop_footer_branch
      %4663 = sbr.rel target = $region57
    $region62: #{tpu_custom_call.1} parent=1 // loop_exit
      _
    %v8290 = vmul.f32 %v4669, 0.001953125
    %v8291 = vmul.f32 %v4670, 0.001953125
    %v8292 = vmul.f32 %v8290, %v8290
    %v8293 = vsub.f32 %v8291, %v8292
    %v8294 = vld [vmem:[%s5] sm:$0x1]
    %v8295 = vadd.f32 %v8293, 1e-05
    %v8296 = vrsqrt.pop %v8295
    %v8297 = vmul.f32 %v8294, %v8296
    %v8298 = vld [vmem:[%s6] sm:$0x1]
    %v8299 = vmul.f32 %v8290, %v8297
    %v8300 = vsub.f32 %v8298, %v8299
    loop: start=0, step=1, limit=3
    $region63: #{tpu_custom_call.1} parent=1 // loop_pre_header
      _
    $region64: #{tpu_custom_call.1} parent=1 // loop_header
      %s8302 = sphi 0, %s8306
      %p8303 = scmp.ge.s32.totalorder %s8302, 3
    $region65: #{tpu_custom_call.1} parent=1 // loop_header_branch
      %8305 = sbr.rel (%p8303) target = $region69
    $region66: #{tpu_custom_call.1} parent=1 // loop_body
      %s8307 = smul.u32 %s8302, 256
      %s8308 = scalar_lea.vmem [#allocation9], %s8307
      %v8309 = vld [vmem:[%s8308] sm:$0xff]
      %v8310 = vld [vmem:[%s8308 + $0x8] sm:$0xff]
      %v8311 = vld [vmem:[%s8308 + $0x10] sm:$0xff]
      %v8312 = vld [vmem:[%s8308 + $0x18] sm:$0xff]
      %v8313 = vld [vmem:[%s8308 + $0x20] sm:$0xff]
      %v8314 = vld [vmem:[%s8308 + $0x28] sm:$0xff]
      %v8315 = vld [vmem:[%s8308 + $0x30] sm:$0xff]
      %v8316 = vld [vmem:[%s8308 + $0x38] sm:$0xff]
      %v8317 = vld [vmem:[%s8308 + $0x40] sm:$0xff]
      %v8318 = vld [vmem:[%s8308 + $0x48] sm:$0xff]
      %v8319 = vld [vmem:[%s8308 + $0x50] sm:$0xff]
      %v8320 = vld [vmem:[%s8308 + $0x58] sm:$0xff]
      %v8321 = vld [vmem:[%s8308 + $0x60] sm:$0xff]
      %v8322 = vld [vmem:[%s8308 + $0x68] sm:$0xff]
      %v8323 = vld [vmem:[%s8308 + $0x70] sm:$0xff]
      %v8324 = vld [vmem:[%s8308 + $0x78] sm:$0xff]
      %v8325 = vld [vmem:[%s8308 + $0x80] sm:$0xff]
      %v8326 = vld [vmem:[%s8308 + $0x88] sm:$0xff]
      %v8327 = vld [vmem:[%s8308 + $0x90] sm:$0xff]
      %v8328 = vld [vmem:[%s8308 + $0x98] sm:$0xff]
      %v8329 = vld [vmem:[%s8308 + $0xa0] sm:$0xff]
      %v8330 = vld [vmem:[%s8308 + $0xa8] sm:$0xff]
      %v8331 = vld [vmem:[%s8308 + $0xb0] sm:$0xff]
      %v8332 = vld [vmem:[%s8308 + $0xb8] sm:$0xff]
      %v8333 = vld [vmem:[%s8308 + $0xc0] sm:$0xff]
      %v8334 = vld [vmem:[%s8308 + $0xc8] sm:$0xff]
      %v8335 = vld [vmem:[%s8308 + $0xd0] sm:$0xff]
      %v8336 = vld [vmem:[%s8308 + $0xd8] sm:$0xff]
      %v8337 = vld [vmem:[%s8308 + $0xe0] sm:$0xff]
      %v8338 = vld [vmem:[%s8308 + $0xe8] sm:$0xff]
      %v8339 = vld [vmem:[%s8308 + $0xf0] sm:$0xff]
      %v8340 = vld [vmem:[%s8308 + $0xf8] sm:$0xff]
      %s8341 = sadd.s32 %s8307, 24
      %s8342 = scalar_lea.vmem [#allocation3], %s8341
      %v8343 = vld [vmem:[%s8342] sm:$0xff]
      %v8344 = vld [vmem:[%s8342 + $0x8] sm:$0xff]
      %v8345 = vld [vmem:[%s8342 + $0x10] sm:$0xff]
      %v8346 = vld [vmem:[%s8342 + $0x18] sm:$0xff]
      %v8347 = vld [vmem:[%s8342 + $0x20] sm:$0xff]
      %v8348 = vld [vmem:[%s8342 + $0x28] sm:$0xff]
      %v8349 = vld [vmem:[%s8342 + $0x30] sm:$0xff]
      %v8350 = vld [vmem:[%s8342 + $0x38] sm:$0xff]
      %v8351 = vld [vmem:[%s8342 + $0x40] sm:$0xff]
      %v8352 = vld [vmem:[%s8342 + $0x48] sm:$0xff]
      %v8353 = vld [vmem:[%s8342 + $0x50] sm:$0xff]
      %v8354 = vld [vmem:[%s8342 + $0x58] sm:$0xff]
      %v8355 = vld [vmem:[%s8342 + $0x60] sm:$0xff]
      %v8356 = vld [vmem:[%s8342 + $0x68] sm:$0xff]
      %v8357 = vld [vmem:[%s8342 + $0x70] sm:$0xff]
      %v8358 = vld [vmem:[%s8342 + $0x78] sm:$0xff]
      %v8359 = vld [vmem:[%s8342 + $0x80] sm:$0xff]
      %v8360 = vld [vmem:[%s8342 + $0x88] sm:$0xff]
      %v8361 = vld [vmem:[%s8342 + $0x90] sm:$0xff]
      %v8362 = vld [vmem:[%s8342 + $0x98] sm:$0xff]
      %v8363 = vld [vmem:[%s8342 + $0xa0] sm:$0xff]
      %v8364 = vld [vmem:[%s8342 + $0xa8] sm:$0xff]
      %v8365 = vld [vmem:[%s8342 + $0xb0] sm:$0xff]
      %v8366 = vld [vmem:[%s8342 + $0xb8] sm:$0xff]
      %v8367 = vld [vmem:[%s8342 + $0xc0] sm:$0xff]
      %v8368 = vld [vmem:[%s8342 + $0xc8] sm:$0xff]
      %v8369 = vld [vmem:[%s8342 + $0xd0] sm:$0xff]
      %v8370 = vld [vmem:[%s8342 + $0xd8] sm:$0xff]
      %v8371 = vld [vmem:[%s8342 + $0xe0] sm:$0xff]
      %v8372 = vld [vmem:[%s8342 + $0xe8] sm:$0xff]
      %v8373 = vld [vmem:[%s8342 + $0xf0] sm:$0xff]
      %v8374 = vld [vmem:[%s8342 + $0xf8] sm:$0xff]
      %v8376 = vlaneseq
      %v8377 = vshrl.u32 %v8376, 7
      %v8378 = vsub.s32 0, %v8377
      %v8379 = vrot.slane %v8297, %v8378
      %v8381 = vmul.f32 %v8309, %v8379
      %v8382 = vmul.f32 %v8310, %v8379
      %v8383 = vmul.f32 %v8311, %v8379
      %v8384 = vmul.f32 %v8312, %v8379
      %v8385 = vmul.f32 %v8313, %v8379
      %v8386 = vmul.f32 %v8314, %v8379
      %v8387 = vmul.f32 %v8315, %v8379
      %v8388 = vmul.f32 %v8316, %v8379
      %v8389 = vmul.f32 %v8317, %v8379
      %v8390 = vmul.f32 %v8318, %v8379
      %v8391 = vmul.f32 %v8319, %v8379
      %v8392 = vmul.f32 %v8320, %v8379
      %v8393 = vmul.f32 %v8321, %v8379
      %v8394 = vmul.f32 %v8322, %v8379
      %v8395 = vmul.f32 %v8323, %v8379
      %v8396 = vmul.f32 %v8324, %v8379
      %v8397 = vmul.f32 %v8325, %v8379
      %v8398 = vmul.f32 %v8326, %v8379
      %v8399 = vmul.f32 %v8327, %v8379
      %v8400 = vmul.f32 %v8328, %v8379
      %v8401 = vmul.f32 %v8329, %v8379
      %v8402 = vmul.f32 %v8330, %v8379
      %v8403 = vmul.f32 %v8331, %v8379
      %v8404 = vmul.f32 %v8332, %v8379
      %v8405 = vmul.f32 %v8333, %v8379
      %v8406 = vmul.f32 %v8334, %v8379
      %v8407 = vmul.f32 %v8335, %v8379
      %v8408 = vmul.f32 %v8336, %v8379
      %v8409 = vmul.f32 %v8337, %v8379
      %v8410 = vmul.f32 %v8338, %v8379
      %v8411 = vmul.f32 %v8339, %v8379
      %v8412 = vmul.f32 %v8340, %v8379
      %v8414 = vlaneseq
      %v8415 = vshrl.u32 %v8414, 7
      %v8416 = vsub.s32 0, %v8415
      %v8417 = vrot.slane %v8300, %v8416
      %v8419 = vadd.f32 %v8381, %v8417
      %v8420 = vadd.f32 %v8382, %v8417
      %v8421 = vadd.f32 %v8383, %v8417
      %v8422 = vadd.f32 %v8384, %v8417
      %v8423 = vadd.f32 %v8385, %v8417
      %v8424 = vadd.f32 %v8386, %v8417
      %v8425 = vadd.f32 %v8387, %v8417
      %v8426 = vadd.f32 %v8388, %v8417
      %v8427 = vadd.f32 %v8389, %v8417
      %v8428 = vadd.f32 %v8390, %v8417
      %v8429 = vadd.f32 %v8391, %v8417
      %v8430 = vadd.f32 %v8392, %v8417
      %v8431 = vadd.f32 %v8393, %v8417
      %v8432 = vadd.f32 %v8394, %v8417
      %v8433 = vadd.f32 %v8395, %v8417
      %v8434 = vadd.f32 %v8396, %v8417
      %v8435 = vadd.f32 %v8397, %v8417
      %v8436 = vadd.f32 %v8398, %v8417
      %v8437 = vadd.f32 %v8399, %v8417
      %v8438 = vadd.f32 %v8400, %v8417
      %v8439 = vadd.f32 %v8401, %v8417
      %v8440 = vadd.f32 %v8402, %v8417
      %v8441 = vadd.f32 %v8403, %v8417
      %v8442 = vadd.f32 %v8404, %v8417
      %v8443 = vadd.f32 %v8405, %v8417
      %v8444 = vadd.f32 %v8406, %v8417
      %v8445 = vadd.f32 %v8407, %v8417
      %v8446 = vadd.f32 %v8408, %v8417
      %v8447 = vadd.f32 %v8409, %v8417
      %v8448 = vadd.f32 %v8410, %v8417
      %v8449 = vadd.f32 %v8411, %v8417
      %v8450 = vadd.f32 %v8412, %v8417
      %v8451 = vadd.f32 %v8419, %v8343
      %v8452 = vadd.f32 %v8420, %v8344
      %v8453 = vadd.f32 %v8421, %v8345
      %v8454 = vadd.f32 %v8422, %v8346
      %v8455 = vadd.f32 %v8423, %v8347
      %v8456 = vadd.f32 %v8424, %v8348
      %v8457 = vadd.f32 %v8425, %v8349
      %v8458 = vadd.f32 %v8426, %v8350
      %v8459 = vadd.f32 %v8427, %v8351
      %v8460 = vadd.f32 %v8428, %v8352
      %v8461 = vadd.f32 %v8429, %v8353
      %v8462 = vadd.f32 %v8430, %v8354
      %v8463 = vadd.f32 %v8431, %v8355
      %v8464 = vadd.f32 %v8432, %v8356
      %v8465 = vadd.f32 %v8433, %v8357
      %v8466 = vadd.f32 %v8434, %v8358
      %v8467 = vadd.f32 %v8435, %v8359
      %v8468 = vadd.f32 %v8436, %v8360
      %v8469 = vadd.f32 %v8437, %v8361
      %v8470 = vadd.f32 %v8438, %v8362
      %v8471 = vadd.f32 %v8439, %v8363
      %v8472 = vadd.f32 %v8440, %v8364
      %v8473 = vadd.f32 %v8441, %v8365
      %v8474 = vadd.f32 %v8442, %v8366
      %v8475 = vadd.f32 %v8443, %v8367
      %v8476 = vadd.f32 %v8444, %v8368
      %v8477 = vadd.f32 %v8445, %v8369
      %v8478 = vadd.f32 %v8446, %v8370
      %v8479 = vadd.f32 %v8447, %v8371
      %v8480 = vadd.f32 %v8448, %v8372
      %v8481 = vadd.f32 %v8449, %v8373
      %v8482 = vadd.f32 %v8450, %v8374
      %v8483 = vmax.f32 %v8451, 0.0
      %v8484 = vmax.f32 %v8452, 0.0
      %v8485 = vmax.f32 %v8453, 0.0
      %v8486 = vmax.f32 %v8454, 0.0
      %v8487 = vmax.f32 %v8455, 0.0
      %v8488 = vmax.f32 %v8456, 0.0
      %v8489 = vmax.f32 %v8457, 0.0
      %v8490 = vmax.f32 %v8458, 0.0
      %v8491 = vmax.f32 %v8459, 0.0
      %v8492 = vmax.f32 %v8460, 0.0
      %v8493 = vmax.f32 %v8461, 0.0
      %v8494 = vmax.f32 %v8462, 0.0
      %v8495 = vmax.f32 %v8463, 0.0
      %v8496 = vmax.f32 %v8464, 0.0
      %v8497 = vmax.f32 %v8465, 0.0
      %v8498 = vmax.f32 %v8466, 0.0
      %v8499 = vmax.f32 %v8467, 0.0
      %v8500 = vmax.f32 %v8468, 0.0
      %v8501 = vmax.f32 %v8469, 0.0
      %v8502 = vmax.f32 %v8470, 0.0
      %v8503 = vmax.f32 %v8471, 0.0
      %v8504 = vmax.f32 %v8472, 0.0
      %v8505 = vmax.f32 %v8473, 0.0
      %v8506 = vmax.f32 %v8474, 0.0
      %v8507 = vmax.f32 %v8475, 0.0
      %v8508 = vmax.f32 %v8476, 0.0
      %v8509 = vmax.f32 %v8477, 0.0
      %v8510 = vmax.f32 %v8478, 0.0
      %v8511 = vmax.f32 %v8479, 0.0
      %v8512 = vmax.f32 %v8480, 0.0
      %v8513 = vmax.f32 %v8481, 0.0
      %v8514 = vmax.f32 %v8482, 0.0
      %8515 = vst [vmem:[%s8308] sm:$0xff] %v8483
      %8516 = vst [vmem:[%s8308 + $0x8] sm:$0xff] %v8484
      %8517 = vst [vmem:[%s8308 + $0x10] sm:$0xff] %v8485
      %8518 = vst [vmem:[%s8308 + $0x18] sm:$0xff] %v8486
      %8519 = vst [vmem:[%s8308 + $0x20] sm:$0xff] %v8487
      %8520 = vst [vmem:[%s8308 + $0x28] sm:$0xff] %v8488
      %8521 = vst [vmem:[%s8308 + $0x30] sm:$0xff] %v8489
      %8522 = vst [vmem:[%s8308 + $0x38] sm:$0xff] %v8490
      %8523 = vst [vmem:[%s8308 + $0x40] sm:$0xff] %v8491
      %8524 = vst [vmem:[%s8308 + $0x48] sm:$0xff] %v8492
      %8525 = vst [vmem:[%s8308 + $0x50] sm:$0xff] %v8493
      %8526 = vst [vmem:[%s8308 + $0x58] sm:$0xff] %v8494
      %8527 = vst [vmem:[%s8308 + $0x60] sm:$0xff] %v8495
      %8528 = vst [vmem:[%s8308 + $0x68] sm:$0xff] %v8496
      %8529 = vst [vmem:[%s8308 + $0x70] sm:$0xff] %v8497
      %8530 = vst [vmem:[%s8308 + $0x78] sm:$0xff] %v8498
      %8531 = vst [vmem:[%s8308 + $0x80] sm:$0xff] %v8499
      %8532 = vst [vmem:[%s8308 + $0x88] sm:$0xff] %v8500
      %8533 = vst [vmem:[%s8308 + $0x90] sm:$0xff] %v8501
      %8534 = vst [vmem:[%s8308 + $0x98] sm:$0xff] %v8502
      %8535 = vst [vmem:[%s8308 + $0xa0] sm:$0xff] %v8503
      %8536 = vst [vmem:[%s8308 + $0xa8] sm:$0xff] %v8504
      %8537 = vst [vmem:[%s8308 + $0xb0] sm:$0xff] %v8505
      %8538 = vst [vmem:[%s8308 + $0xb8] sm:$0xff] %v8506
      %8539 = vst [vmem:[%s8308 + $0xc0] sm:$0xff] %v8507
      %8540 = vst [vmem:[%s8308 + $0xc8] sm:$0xff] %v8508
      %8541 = vst [vmem:[%s8308 + $0xd0] sm:$0xff] %v8509
      %8542 = vst [vmem:[%s8308 + $0xd8] sm:$0xff] %v8510
      %8543 = vst [vmem:[%s8308 + $0xe0] sm:$0xff] %v8511
      %8544 = vst [vmem:[%s8308 + $0xe8] sm:$0xff] %v8512
      %8545 = vst [vmem:[%s8308 + $0xf0] sm:$0xff] %v8513
      %8546 = vst [vmem:[%s8308 + $0xf8] sm:$0xff] %v8514
    $region67: #{tpu_custom_call.1} parent=1 // loop_footer
      %s8306 = sadd.s32 1, %s8302
    $region68: #{tpu_custom_call.1} parent=1 // loop_footer_branch
      %8301 = sbr.rel target = $region64
    $region69: #{tpu_custom_call.1} parent=1 // loop_exit
      _
    // Predicated region
    $region70: #{tpu_custom_call.1} parent=1 // pred_check
      _
    $region71: #{tpu_custom_call.1} parent=1 // pred_check_branch
      %8548 = sbr.rel (0) target = $region73
    $region72: #{tpu_custom_call.1} parent=1 // pred_region
      %s8550 = ssub.s32 12288, 12288
      %8551 = vsyncadd [#allocation5], %s8550
      %s8552 = sshll.u32 [#allocation9], 4
      %s8553 = int_to_ptr.vmem [resolvable:$true] %s8552
      %8558 = dma.vmem_to_hbm [thread:$0]  %s8553, 12288, %s7, [#allocation5], 128, 128, 8
    $region73: #{tpu_custom_call.1} parent=1 // pred_fallthru
      _
    // Predicated region
    $region74: #{tpu_custom_call.1} parent=1 // pred_check
      _
    $region75: #{tpu_custom_call.1} parent=1 // pred_check_branch
      %8560 = sbr.rel (0) target = $region77
    $region76: #{tpu_custom_call.1} parent=1 // pred_region
      %8561 = dma.done [#allocation5], 12288
    $region77: #{tpu_custom_call.1} parent=1 // pred_fallthru
      _
    %8562 = vsyncpa [#allocation4], 1
    %8563 = vsyncpa [#allocation7], 1
    %8564 = vsyncpa [#allocation5], 1

</llo_original>
